<compile_context>
chip_gen: v5e
topology: v5e:2x2
jax: 0.10.0
libtpu: 0.0.40
codegen_flags: <defaults>
</compile_context>

<pallas_src>
import jax
import jax.numpy as jnp
import numpy as np
from jax.experimental import pallas as pl
from jax.experimental.pallas import tpu as pltpu

NOUT_PAD = 128                       # lane-dense padding for the final Q output
X_TILE_BYTES = 4 * 1024 * 1024       # target bytes of patch rows per grid step


def _vmem_limit_bytes():
    """Generation-aware scoped-VMEM budget (~60% of physical VMEM)."""
    try:
        cap = int(pltpu.get_tpu_info().vmem_capacity_bytes)
        return min(96 * 1024 * 1024, max(32 * 1024 * 1024, (cap * 3) // 5))
    except Exception:  # fall back to a budget that is safe on every generation
        return 32 * 1024 * 1024


VMEM_LIMIT = _vmem_limit_bytes()


# ----------------------------------------------------------------------------
# Pallas kernels
# ----------------------------------------------------------------------------
def _make_conv_matmul_kernel(n_parts):
    """relu( sum_i x_i @ w_i + b ) with f32 accumulation, bf16 store."""
    def kernel(*refs):
        xs = refs[:n_parts]
        ws = refs[n_parts:2 * n_parts]
        b_ref = refs[2 * n_parts]
        o_ref = refs[2 * n_parts + 1]
        acc = jnp.dot(xs[0][...], ws[0][...], preferred_element_type=jnp.float32)
        for i in range(1, n_parts):
            acc = acc + jnp.dot(xs[i][...], ws[i][...],
                                preferred_element_type=jnp.float32)
        o_ref[...] = jnp.maximum(acc + b_ref[...], 0.0).astype(o_ref.dtype)
    return kernel


def _mlp_head_kernel(x_ref, w1_ref, b1_ref, w2_ref, b2_ref, o_ref):
    # Fused fc1 (+ReLU) + fc2: the 512-wide hidden layer never leaves VMEM.
    h = jnp.dot(x_ref[...], w1_ref[...], preferred_element_type=jnp.float32)
    h = jnp.maximum(h + b1_ref[...], 0.0)
    y = jnp.dot(h.astype(jnp.bfloat16), w2_ref[...],
                preferred_element_type=jnp.float32)
    o_ref[...] = (y + b2_ref[...]).astype(o_ref.dtype)


# ----------------------------------------------------------------------------
# Pallas wrappers
# ----------------------------------------------------------------------------
def _pick_tile_m(m, k_total, x_tile_bytes):
    tm = max(8, (x_tile_bytes // (k_total * 2)) // 8 * 8)
    return m if m <= tm else tm


def conv_matmul(x_parts, w_parts, b, *, x_tile_bytes=X_TILE_BYTES):
    """relu( sum_i x_i @ w_i + b ).  x_i:(M,K_i) bf16, w_i:(K_i,N) bf16,
    b:(1,N) f32 -> (M,N) bf16.  Tiled over M; weights resident across tiles."""
    n = len(x_parts)
    M = x_parts[0].shape[0]
    N = w_parts[0].shape[1]
    k_total = sum(p.shape[1] for p in x_parts)
    tm = _pick_tile_m(M, k_total, x_tile_bytes)
    grid = (pl.cdiv(M, tm),)

    in_specs = (
        [pl.BlockSpec((tm, p.shape[1]), lambda i: (i, 0)) for p in x_parts]
        + [pl.BlockSpec(w.shape, lambda i: (0, 0)) for w in w_parts]
        + [pl.BlockSpec(b.shape, lambda i: (0, 0))]
    )
    cost = pl.CostEstimate(
        flops=2 * M * k_total * N,
        transcendentals=0,
        bytes_accessed=2 * M * k_total + 2 * k_total * N + 4 * N + 2 * M * N,
    )
    return pl.pallas_call(
        _make_conv_matmul_kernel(n),
        out_shape=jax.ShapeDtypeStruct((M, N), jnp.bfloat16),
        grid_spec=pltpu.PrefetchScalarGridSpec(
            num_scalar_prefetch=0,
            grid=grid,
            in_specs=in_specs,
            out_specs=pl.BlockSpec((tm, N), lambda i: (i, 0)),
        ),
        compiler_params=pltpu.CompilerParams(
            dimension_semantics=("parallel",),
            vmem_limit_bytes=VMEM_LIMIT,
        ),
        cost_estimate=cost,
    )(*x_parts, *w_parts, b)


def mlp_head(x, w1, b1, w2, b2, *, x_tile_bytes=X_TILE_BYTES):
    """Fused relu(x@w1+b1) @ w2 + b2.  x:(B,3136) bf16 -> (B,128) f32."""
    M, K = x.shape
    H = w1.shape[1]
    N = w2.shape[1]
    tm = _pick_tile_m(M, K, x_tile_bytes)
    grid = (pl.cdiv(M, tm),)
    cost = pl.CostEstimate(
        flops=2 * M * (K * H + H * N),
        transcendentals=0,
        bytes_accessed=2 * (M * K + K * H + H * N) + 4 * (H + N) + 4 * M * N,
    )
    return pl.pallas_call(
        _mlp_head_kernel,
        out_shape=jax.ShapeDtypeStruct((M, N), jnp.float32),
        grid_spec=pltpu.PrefetchScalarGridSpec(
            num_scalar_prefetch=0,
            grid=grid,
            in_specs=[
                pl.BlockSpec((tm, K), lambda i: (i, 0)),  # X tiled over batch
                pl.BlockSpec((K, H), lambda i: (0, 0)),   # W1 resident (bf16)
                pl.BlockSpec((1, H), lambda i: (0, 0)),   # b1 (f32)
                pl.BlockSpec((H, N), lambda i: (0, 0)),   # W2 resident (bf16)
                pl.BlockSpec((1, N), lambda i: (0, 0)),   # b2 (f32)
            ],
            out_specs=pl.BlockSpec((tm, N), lambda i: (i, 0)),
        ),
        compiler_params=pltpu.CompilerParams(
            dimension_semantics=("parallel",),
            vmem_limit_bytes=VMEM_LIMIT,
        ),
        cost_estimate=cost,
    )(x, w1, b1, w2, b2)


# ----------------------------------------------------------------------------
# Patch ("im2col part") extraction -- reshape-only, no strided slicing,
# no lane-width-1 concatenation, never materialized as one big patch matrix.
# ----------------------------------------------------------------------------
def conv1_parts(x):
    """x:(B,84,84) bf16 raw pixels.  k=8, s=4 -> 4 non-overlapping sub-blocks
    (a,c) in {0,1}^2 with kernel offsets kh=4a+p, kw=4c+q.  -> 4 x (B*400,16)."""
    B = x.shape[0]
    parts = []
    for a in (0, 1):
        for c in (0, 1):
            xs = x[:, 4 * a:4 * a + 80, 4 * c:4 * c + 80]          # (B,80,80)
            xs = xs.reshape(B, 20, 4, 20, 4).transpose(0, 1, 3, 2, 4)
            parts.append(xs.reshape(B * 400, 16))                  # feat (p,q)
    return parts


def conv2_parts(a1):
    """a1:(B,20,20,32).  k=4, s=2 -> 4 sub-blocks, features (p,q,ci),
    each part lane-dense at 128 columns.  -> 4 x (B*81,128)."""
    B = a1.shape[0]
    parts = []
    for a in (0, 1):
        for c in (0, 1):
            xs = a1[:, 2 * a:2 * a + 18, 2 * c:2 * c + 18, :]      # (B,18,18,32)
            xs = xs.reshape(B, 9, 2, 9, 2, 32).transpose(0, 1, 3, 2, 4, 5)
            parts.append(xs.reshape(B * 81, 128))
    return parts


def conv3_parts(a2):
    """a2:(B,9,9,64).  k=3, s=1 -> 9 unit-stride shifted slices -> 9 x (B*49,64)."""
    B = a2.shape[0]
    return [a2[:, kh:kh + 7, kw:kw + 7, :].reshape(B * 49, 64)
            for kh in range(3) for kw in range(3)]


# ----------------------------------------------------------------------------
# Parameter init (PyTorch layout, uniform +-1/sqrt(fan_in)) + one-time prep
# ----------------------------------------------------------------------------
def init_params(key):
    def u(k, shape, fan_in):
        bound = 1.0 / np.sqrt(fan_in)
        return jax.random.uniform(k, shape, jnp.float32, -bound, bound)

    ks = jax.random.split(key, 10)
    flat = 7 * 7 * 64  # 3136 (conv2d_size_out chain for the 84x84 input)
    return {
        "conv1_w": u(ks[0], (32, 1, 8, 8), 1 * 8 * 8),
        "conv1_b": u(ks[1], (32,), 1 * 8 * 8),
        "conv2_w": u(ks[2], (64, 32, 4, 4), 32 * 4 * 4),
        "conv2_b": u(ks[3], (64,), 32 * 4 * 4),
        "conv3_w": u(ks[4], (64, 64, 3, 3), 64 * 3 * 3),
        "conv3_b": u(ks[5], (64,), 64 * 3 * 3),
        "fc1_w": u(ks[6], (512, flat), flat),
        "fc1_b": u(ks[7], (512,), flat),
        "fc2_w": u(ks[8], (18, 512), 512),
        "fc2_b": u(ks[9], (18,), 512),
    }


def prepare_params(raw):
    """One-time (init/load-time) repack: sub-kernel splits, transposes, bf16
    casts, 1/255 fold into conv1 -- none of this runs in the forward path."""
    # conv1: (co,1,kh,kw), kh=4a+p, kw=4c+q.  Fold the 1/255 normalization in.
    w = raw["conv1_w"][:, 0] * (1.0 / 255.0)                # (co, kh, kw)
    w = w.reshape(32, 2, 4, 2, 4)                           # (co, a, p, c, q)
    w = jnp.transpose(w, (1, 3, 2, 4, 0)).reshape(4, 16, 32)
    c1_w = [w[i].astype(jnp.bfloat16) for i in range(4)]
    c1_b = raw["conv1_b"].astype(jnp.float32).reshape(1, 32)

    # conv2: (co,ci,kh,kw), kh=2a+p, kw=2c+q; features (p,q,ci) per part.
    w = raw["conv2_w"].reshape(64, 32, 2, 2, 2, 2)          # (co, ci, a, p, c, q)
    w = jnp.transpose(w, (2, 4, 3, 5, 1, 0)).reshape(4, 128, 64)
    c2_w = [w[i].astype(jnp.bfloat16) for i in range(4)]
    c2_b = raw["conv2_b"].astype(jnp.float32).reshape(1, 64)

    # conv3: (co,ci,kh,kw) -> per-(kh,kw) parts with features (ci).
    w = jnp.transpose(raw["conv3_w"], (2, 3, 1, 0)).reshape(9, 64, 64)
    c3_w = [w[i].astype(jnp.bfloat16) for i in range(9)]
    c3_b = raw["conv3_b"].astype(jnp.float32).reshape(1, 64)

    # fc1: PyTorch flatten order is (C,H,W); ours is NHWC flatten (H,W,C).
    w = raw["fc1_w"].reshape(512, 64, 7, 7)                 # (out, c, h, w)
    w = jnp.transpose(w, (2, 3, 1, 0)).reshape(3136, 512).astype(jnp.bfloat16)
    f1_b = raw["fc1_b"].astype(jnp.float32).reshape(1, 512)

    # fc2: (512, 18) padded to (512, 128) for a lane-dense output store.
    w2 = jnp.pad(jnp.transpose(raw["fc2_w"]), ((0, 0), (0, NOUT_PAD - 18)))
    f2_w = w2.astype(jnp.bfloat16)
    f2_b = jnp.pad(raw["fc2_b"], (0, NOUT_PAD - 18)).astype(jnp.float32)
    f2_b = f2_b.reshape(1, NOUT_PAD)

    return {"c1_w": c1_w, "c1_b": c1_b, "c2_w": c2_w, "c2_b": c2_b,
            "c3_w": c3_w, "c3_b": c3_b, "fc1_w": w, "fc1_b": f1_b,
            "fc2_w": f2_w, "fc2_b": f2_b}


# ----------------------------------------------------------------------------
# Forward pass (mirrors Network.forward)
# ----------------------------------------------------------------------------
def forward(p, state):
    # state: (B, 1, 84, 84) uint8, NCHW (PyTorch-style external API).
    B = state.shape[0]
    x = state[:, 0].astype(jnp.bfloat16)       # raw 0..255 pixels; /255 folded in c1_w

    a1 = conv_matmul(conv1_parts(x), p["c1_w"], p["c1_b"])        # (B*400, 32)
    a1 = a1.reshape(B, 20, 20, 32)
    a2 = conv_matmul(conv2_parts(a1), p["c2_w"], p["c2_b"])       # (B*81, 64)
    a2 = a2.reshape(B, 9, 9, 64)
    a3 = conv_matmul(conv3_parts(a2), p["c3_w"], p["c3_b"])       # (B*49, 64)
    flat = a3.reshape(B, 7 * 7 * 64)                              # (B, 3136) HWC order

    q = mlp_head(flat, p["fc1_w"], p["fc1_b"], p["fc2_w"], p["fc2_b"])  # (B, 128) f32
    return q[:, :18]                                              # drop output padding


if __name__ == "__main__":
    key = jax.random.PRNGKey(0)
    kp, kx = jax.random.split(key)
    params = prepare_params(init_params(kp))

    # Input: batch of 2 grayscale 84x84 "frames" (uint8 pixel values), NCHW.
    state = jax.random.randint(kx, (2, 1, 84, 84), 0, 256, dtype=jnp.int32).astype(
        jnp.uint8
    )

    qvalues = jax.block_until_ready(jax.jit(forward)(params, state))
    assert qvalues.shape == (2, 18) and qvalues.dtype == jnp.float32
    assert bool(jnp.all(jnp.isfinite(qvalues)))
    print("KERNEL_OK")
</pallas_src>

<mosaic_0001>
module attributes {stable_mosaic.version = 11 : i64} {
  func.func @kernel(%arg0: i32, %arg1: memref<800x16xbf16, #tpu.memory_space<vmem>>, %arg2: memref<800x16xbf16, #tpu.memory_space<vmem>>, %arg3: memref<800x16xbf16, #tpu.memory_space<vmem>>, %arg4: memref<800x16xbf16, #tpu.memory_space<vmem>>, %arg5: memref<16x32xbf16, #tpu.memory_space<vmem>>, %arg6: memref<16x32xbf16, #tpu.memory_space<vmem>>, %arg7: memref<16x32xbf16, #tpu.memory_space<vmem>>, %arg8: memref<16x32xbf16, #tpu.memory_space<vmem>>, %arg9: memref<1x32xf32, #tpu.memory_space<vmem>>, %arg10: memref<800x32xbf16, #tpu.memory_space<vmem>>) attributes {dimension_semantics = [#tpu.dimension_semantics<parallel>], iteration_bounds = array<i64: 1>, scalar_prefetch = 0 : i64, scratch_operands = 0 : i64, tpu.core_type = #tpu.core_type<tc>, window_params = [{transform_indices = @transform_0, window_bounds = array<i64: 800, 16>}, {transform_indices = @transform_1, window_bounds = array<i64: 800, 16>}, {transform_indices = @transform_2, window_bounds = array<i64: 800, 16>}, {transform_indices = @transform_3, window_bounds = array<i64: 800, 16>}, {pipeline_mode = #tpu.pipeline_mode<synchronous>, transform_indices = @transform_4, window_bounds = array<i64: 16, 32>}, {pipeline_mode = #tpu.pipeline_mode<synchronous>, transform_indices = @transform_5, window_bounds = array<i64: 16, 32>}, {pipeline_mode = #tpu.pipeline_mode<synchronous>, transform_indices = @transform_6, window_bounds = array<i64: 16, 32>}, {pipeline_mode = #tpu.pipeline_mode<synchronous>, transform_indices = @transform_7, window_bounds = array<i64: 16, 32>}, {pipeline_mode = #tpu.pipeline_mode<synchronous>, transform_indices = @transform_8, window_bounds = array<i64: 1, 32>}, {transform_indices = @transform_9, window_bounds = array<i64: 800, 32>}]} {
    %c0 = arith.constant 0 : index
    %c0_0 = arith.constant 0 : index
    %0 = vector.load %arg1[%c0, %c0_0] : memref<800x16xbf16, #tpu.memory_space<vmem>>, vector<800x16xbf16>
    %c0_1 = arith.constant 0 : index
    %c0_2 = arith.constant 0 : index
    %1 = vector.load %arg5[%c0_1, %c0_2] : memref<16x32xbf16, #tpu.memory_space<vmem>>, vector<16x32xbf16>
    %cst = arith.constant dense<0.000000e+00> : vector<800x32xf32>
    %2 = tpu.matmul %0, %1, %cst {dimension_numbers = #tpu.dot_dimension_numbers<[1], [0], [0], [1], [0, 0, 1, 1], [], []>} : vector<800x16xbf16>, vector<16x32xbf16>, vector<800x32xf32> -> vector<800x32xf32>
    %c0_3 = arith.constant 0 : index
    %c0_4 = arith.constant 0 : index
    %3 = vector.load %arg2[%c0_3, %c0_4] : memref<800x16xbf16, #tpu.memory_space<vmem>>, vector<800x16xbf16>
    %c0_5 = arith.constant 0 : index
    %c0_6 = arith.constant 0 : index
    %4 = vector.load %arg6[%c0_5, %c0_6] : memref<16x32xbf16, #tpu.memory_space<vmem>>, vector<16x32xbf16>
    %cst_7 = arith.constant dense<0.000000e+00> : vector<800x32xf32>
    %5 = tpu.matmul %3, %4, %cst_7 {dimension_numbers = #tpu.dot_dimension_numbers<[1], [0], [0], [1], [0, 0, 1, 1], [], []>} : vector<800x16xbf16>, vector<16x32xbf16>, vector<800x32xf32> -> vector<800x32xf32>
    %6 = arith.addf %2, %5 : vector<800x32xf32>
    %c0_8 = arith.constant 0 : index
    %c0_9 = arith.constant 0 : index
    %7 = vector.load %arg3[%c0_8, %c0_9] : memref<800x16xbf16, #tpu.memory_space<vmem>>, vector<800x16xbf16>
    %c0_10 = arith.constant 0 : index
    %c0_11 = arith.constant 0 : index
    %8 = vector.load %arg7[%c0_10, %c0_11] : memref<16x32xbf16, #tpu.memory_space<vmem>>, vector<16x32xbf16>
    %cst_12 = arith.constant dense<0.000000e+00> : vector<800x32xf32>
    %9 = tpu.matmul %7, %8, %cst_12 {dimension_numbers = #tpu.dot_dimension_numbers<[1], [0], [0], [1], [0, 0, 1, 1], [], []>} : vector<800x16xbf16>, vector<16x32xbf16>, vector<800x32xf32> -> vector<800x32xf32>
    %10 = arith.addf %6, %9 : vector<800x32xf32>
    %c0_13 = arith.constant 0 : index
    %c0_14 = arith.constant 0 : index
    %11 = vector.load %arg4[%c0_13, %c0_14] : memref<800x16xbf16, #tpu.memory_space<vmem>>, vector<800x16xbf16>
    %c0_15 = arith.constant 0 : index
    %c0_16 = arith.constant 0 : index
    %12 = vector.load %arg8[%c0_15, %c0_16] : memref<16x32xbf16, #tpu.memory_space<vmem>>, vector<16x32xbf16>
    %cst_17 = arith.constant dense<0.000000e+00> : vector<800x32xf32>
    %13 = tpu.matmul %11, %12, %cst_17 {dimension_numbers = #tpu.dot_dimension_numbers<[1], [0], [0], [1], [0, 0, 1, 1], [], []>} : vector<800x16xbf16>, vector<16x32xbf16>, vector<800x32xf32> -> vector<800x32xf32>
    %14 = arith.addf %10, %13 : vector<800x32xf32>
    %c0_18 = arith.constant 0 : index
    %c0_19 = arith.constant 0 : index
    %15 = vector.load %arg9[%c0_18, %c0_19] : memref<1x32xf32, #tpu.memory_space<vmem>>, vector<1x32xf32>
    %16 = vector.broadcast %15 : vector<1x32xf32> to vector<800x32xf32>
    %17 = arith.addf %14, %16 : vector<800x32xf32>
    %cst_20 = arith.constant 0.000000e+00 : f32
    %18 = vector.broadcast %cst_20 : f32 to vector<800x32xf32>
    %19 = arith.maximumf %17, %18 : vector<800x32xf32>
    %20 = arith.truncf %19 : vector<800x32xf32> to vector<800x32xbf16>
    %c0_21 = arith.constant 0 : index
    %c0_22 = arith.constant 0 : index
    %21 = vector.load %arg10[%c0_21, %c0_22] : memref<800x32xbf16, #tpu.memory_space<vmem>>, vector<800x32xbf16>
    tpu.vector_store %arg10[%c0_21, %c0_22], %20 {strides = array<i32>} : memref<800x32xbf16, #tpu.memory_space<vmem>>, vector<800x32xbf16>,
    return
  }
  func.func @transform_0(%arg0: i32) -> (i32, i32) {
    %c0_i32 = arith.constant 0 : i32
    %c0_i32_0 = arith.constant 0 : i32
    return %arg0, %c0_i32 : i32, i32
  }
  func.func @transform_1(%arg0: i32) -> (i32, i32) {
    %c0_i32 = arith.constant 0 : i32
    %c0_i32_0 = arith.constant 0 : i32
    return %arg0, %c0_i32 : i32, i32
  }
  func.func @transform_2(%arg0: i32) -> (i32, i32) {
    %c0_i32 = arith.constant 0 : i32
    %c0_i32_0 = arith.constant 0 : i32
    return %arg0, %c0_i32 : i32, i32
  }
  func.func @transform_3(%arg0: i32) -> (i32, i32) {
    %c0_i32 = arith.constant 0 : i32
    %c0_i32_0 = arith.constant 0 : i32
    return %arg0, %c0_i32 : i32, i32
  }
  func.func @transform_4(%arg0: i32) -> (i32, i32) {
    %c0_i32 = arith.constant 0 : i32
    %c0_i32_0 = arith.constant 0 : i32
    %c0_i32_1 = arith.constant 0 : i32
    return %c0_i32, %c0_i32_0 : i32, i32
  }
  func.func @transform_5(%arg0: i32) -> (i32, i32) {
    %c0_i32 = arith.constant 0 : i32
    %c0_i32_0 = arith.constant 0 : i32
    %c0_i32_1 = arith.constant 0 : i32
    return %c0_i32, %c0_i32_0 : i32, i32
  }
  func.func @transform_6(%arg0: i32) -> (i32, i32) {
    %c0_i32 = arith.constant 0 : i32
    %c0_i32_0 = arith.constant 0 : i32
    %c0_i32_1 = arith.constant 0 : i32
    return %c0_i32, %c0_i32_0 : i32, i32
  }
  func.func @transform_7(%arg0: i32) -> (i32, i32) {
    %c0_i32 = arith.constant 0 : i32
    %c0_i32_0 = arith.constant 0 : i32
    %c0_i32_1 = arith.constant 0 : i32
    return %c0_i32, %c0_i32_0 : i32, i32
  }
  func.func @transform_8(%arg0: i32) -> (i32, i32) {
    %c0_i32 = arith.constant 0 : i32
    %c0_i32_0 = arith.constant 0 : i32
    %c0_i32_1 = arith.constant 0 : i32
    return %c0_i32, %c0_i32_0 : i32, i32
  }
  func.func @transform_9(%arg0: i32) -> (i32, i32) {
    %c0_i32 = arith.constant 0 : i32
    %c0_i32_0 = arith.constant 0 : i32
    return %arg0, %c0_i32 : i32, i32
  }
}

module attributes {stable_mosaic.version = 11 : i64} {
  func.func @kernel(%arg0: i32, %arg1: memref<162x128xbf16, #tpu.memory_space<vmem>>, %arg2: memref<162x128xbf16, #tpu.memory_space<vmem>>, %arg3: memref<162x128xbf16, #tpu.memory_space<vmem>>, %arg4: memref<162x128xbf16, #tpu.memory_space<vmem>>, %arg5: memref<128x64xbf16, #tpu.memory_space<vmem>>, %arg6: memref<128x64xbf16, #tpu.memory_space<vmem>>, %arg7: memref<128x64xbf16, #tpu.memory_space<vmem>>, %arg8: memref<128x64xbf16, #tpu.memory_space<vmem>>, %arg9: memref<1x64xf32, #tpu.memory_space<vmem>>, %arg10: memref<162x64xbf16, #tpu.memory_space<vmem>>) attributes {dimension_semantics = [#tpu.dimension_semantics<parallel>], iteration_bounds = array<i64: 1>, scalar_prefetch = 0 : i64, scratch_operands = 0 : i64, tpu.core_type = #tpu.core_type<tc>, window_params = [{transform_indices = @transform_0, window_bounds = array<i64: 162, 128>}, {transform_indices = @transform_1, window_bounds = array<i64: 162, 128>}, {transform_indices = @transform_2, window_bounds = array<i64: 162, 128>}, {transform_indices = @transform_3, window_bounds = array<i64: 162, 128>}, {pipeline_mode = #tpu.pipeline_mode<synchronous>, transform_indices = @transform_4, window_bounds = array<i64: 128, 64>}, {pipeline_mode = #tpu.pipeline_mode<synchronous>, transform_indices = @transform_5, window_bounds = array<i64: 128, 64>}, {pipeline_mode = #tpu.pipeline_mode<synchronous>, transform_indices = @transform_6, window_bounds = array<i64: 128, 64>}, {pipeline_mode = #tpu.pipeline_mode<synchronous>, transform_indices = @transform_7, window_bounds = array<i64: 128, 64>}, {pipeline_mode = #tpu.pipeline_mode<synchronous>, transform_indices = @transform_8, window_bounds = array<i64: 1, 64>}, {transform_indices = @transform_9, window_bounds = array<i64: 162, 64>}]} {
    %c0 = arith.constant 0 : index
    %c0_0 = arith.constant 0 : index
    %0 = vector.load %arg1[%c0, %c0_0] : memref<162x128xbf16, #tpu.memory_space<vmem>>, vector<162x128xbf16>
    %c0_1 = arith.constant 0 : index
    %c0_2 = arith.constant 0 : index
    %1 = vector.load %arg5[%c0_1, %c0_2] : memref<128x64xbf16, #tpu.memory_space<vmem>>, vector<128x64xbf16>
    %cst = arith.constant dense<0.000000e+00> : vector<162x64xf32>
    %2 = tpu.matmul %0, %1, %cst {dimension_numbers = #tpu.dot_dimension_numbers<[1], [0], [0], [1], [0, 0, 1, 1], [], []>} : vector<162x128xbf16>, vector<128x64xbf16>, vector<162x64xf32> -> vector<162x64xf32>
    %c0_3 = arith.constant 0 : index
    %c0_4 = arith.constant 0 : index
    %3 = vector.load %arg2[%c0_3, %c0_4] : memref<162x128xbf16, #tpu.memory_space<vmem>>, vector<162x128xbf16>
    %c0_5 = arith.constant 0 : index
    %c0_6 = arith.constant 0 : index
    %4 = vector.load %arg6[%c0_5, %c0_6] : memref<128x64xbf16, #tpu.memory_space<vmem>>, vector<128x64xbf16>
    %cst_7 = arith.constant dense<0.000000e+00> : vector<162x64xf32>
    %5 = tpu.matmul %3, %4, %cst_7 {dimension_numbers = #tpu.dot_dimension_numbers<[1], [0], [0], [1], [0, 0, 1, 1], [], []>} : vector<162x128xbf16>, vector<128x64xbf16>, vector<162x64xf32> -> vector<162x64xf32>
    %6 = arith.addf %2, %5 : vector<162x64xf32>
    %c0_8 = arith.constant 0 : index
    %c0_9 = arith.constant 0 : index
    %7 = vector.load %arg3[%c0_8, %c0_9] : memref<162x128xbf16, #tpu.memory_space<vmem>>, vector<162x128xbf16>
    %c0_10 = arith.constant 0 : index
    %c0_11 = arith.constant 0 : index
    %8 = vector.load %arg7[%c0_10, %c0_11] : memref<128x64xbf16, #tpu.memory_space<vmem>>, vector<128x64xbf16>
    %cst_12 = arith.constant dense<0.000000e+00> : vector<162x64xf32>
    %9 = tpu.matmul %7, %8, %cst_12 {dimension_numbers = #tpu.dot_dimension_numbers<[1], [0], [0], [1], [0, 0, 1, 1], [], []>} : vector<162x128xbf16>, vector<128x64xbf16>, vector<162x64xf32> -> vector<162x64xf32>
    %10 = arith.addf %6, %9 : vector<162x64xf32>
    %c0_13 = arith.constant 0 : index
    %c0_14 = arith.constant 0 : index
    %11 = vector.load %arg4[%c0_13, %c0_14] : memref<162x128xbf16, #tpu.memory_space<vmem>>, vector<162x128xbf16>
    %c0_15 = arith.constant 0 : index
    %c0_16 = arith.constant 0 : index
    %12 = vector.load %arg8[%c0_15, %c0_16] : memref<128x64xbf16, #tpu.memory_space<vmem>>, vector<128x64xbf16>
    %cst_17 = arith.constant dense<0.000000e+00> : vector<162x64xf32>
    %13 = tpu.matmul %11, %12, %cst_17 {dimension_numbers = #tpu.dot_dimension_numbers<[1], [0], [0], [1], [0, 0, 1, 1], [], []>} : vector<162x128xbf16>, vector<128x64xbf16>, vector<162x64xf32> -> vector<162x64xf32>
    %14 = arith.addf %10, %13 : vector<162x64xf32>
    %c0_18 = arith.constant 0 : index
    %c0_19 = arith.constant 0 : index
    %15 = vector.load %arg9[%c0_18, %c0_19] : memref<1x64xf32, #tpu.memory_space<vmem>>, vector<1x64xf32>
    %16 = vector.broadcast %15 : vector<1x64xf32> to vector<162x64xf32>
    %17 = arith.addf %14, %16 : vector<162x64xf32>
    %cst_20 = arith.constant 0.000000e+00 : f32
    %18 = vector.broadcast %cst_20 : f32 to vector<162x64xf32>
    %19 = arith.maximumf %17, %18 : vector<162x64xf32>
    %20 = arith.truncf %19 : vector<162x64xf32> to vector<162x64xbf16>
    %c0_21 = arith.constant 0 : index
    %c0_22 = arith.constant 0 : index
    %21 = vector.load %arg10[%c0_21, %c0_22] : memref<162x64xbf16, #tpu.memory_space<vmem>>, vector<162x64xbf16>
    tpu.vector_store %arg10[%c0_21, %c0_22], %20 {strides = array<i32>} : memref<162x64xbf16, #tpu.memory_space<vmem>>, vector<162x64xbf16>,
    return
  }
  func.func @transform_0(%arg0: i32) -> (i32, i32) {
    %c0_i32 = arith.constant 0 : i32
    %c0_i32_0 = arith.constant 0 : i32
    return %arg0, %c0_i32 : i32, i32
  }
  func.func @transform_1(%arg0: i32) -> (i32, i32) {
    %c0_i32 = arith.constant 0 : i32
    %c0_i32_0 = arith.constant 0 : i32
    return %arg0, %c0_i32 : i32, i32
  }
  func.func @transform_2(%arg0: i32) -> (i32, i32) {
    %c0_i32 = arith.constant 0 : i32
    %c0_i32_0 = arith.constant 0 : i32
    return %arg0, %c0_i32 : i32, i32
  }
  func.func @transform_3(%arg0: i32) -> (i32, i32) {
    %c0_i32 = arith.constant 0 : i32
    %c0_i32_0 = arith.constant 0 : i32
    return %arg0, %c0_i32 : i32, i32
  }
  func.func @transform_4(%arg0: i32) -> (i32, i32) {
    %c0_i32 = arith.constant 0 : i32
    %c0_i32_0 = arith.constant 0 : i32
    %c0_i32_1 = arith.constant 0 : i32
    return %c0_i32, %c0_i32_0 : i32, i32
  }
  func.func @transform_5(%arg0: i32) -> (i32, i32) {
    %c0_i32 = arith.constant 0 : i32
    %c0_i32_0 = arith.constant 0 : i32
    %c0_i32_1 = arith.constant 0 : i32
    return %c0_i32, %c0_i32_0 : i32, i32
  }
  func.func @transform_6(%arg0: i32) -> (i32, i32) {
    %c0_i32 = arith.constant 0 : i32
    %c0_i32_0 = arith.constant 0 : i32
    %c0_i32_1 = arith.constant 0 : i32
    return %c0_i32, %c0_i32_0 : i32, i32
  }
  func.func @transform_7(%arg0: i32) -> (i32, i32) {
    %c0_i32 = arith.constant 0 : i32
    %c0_i32_0 = arith.constant 0 : i32
    %c0_i32_1 = arith.constant 0 : i32
    return %c0_i32, %c0_i32_0 : i32, i32
  }
  func.func @transform_8(%arg0: i32) -> (i32, i32) {
    %c0_i32 = arith.constant 0 : i32
    %c0_i32_0 = arith.constant 0 : i32
    %c0_i32_1 = arith.constant 0 : i32
    return %c0_i32, %c0_i32_0 : i32, i32
  }
  func.func @transform_9(%arg0: i32) -> (i32, i32) {
    %c0_i32 = arith.constant 0 : i32
    %c0_i32_0 = arith.constant 0 : i32
    return %arg0, %c0_i32 : i32, i32
  }
}

module attributes {stable_mosaic.version = 11 : i64} {
  func.func @kernel(%arg0: i32, %arg1: memref<98x64xbf16, #tpu.memory_space<vmem>>, %arg2: memref<98x64xbf16, #tpu.memory_space<vmem>>, %arg3: memref<98x64xbf16, #tpu.memory_space<vmem>>, %arg4: memref<98x64xbf16, #tpu.memory_space<vmem>>, %arg5: memref<98x64xbf16, #tpu.memory_space<vmem>>, %arg6: memref<98x64xbf16, #tpu.memory_space<vmem>>, %arg7: memref<98x64xbf16, #tpu.memory_space<vmem>>, %arg8: memref<98x64xbf16, #tpu.memory_space<vmem>>, %arg9: memref<98x64xbf16, #tpu.memory_space<vmem>>, %arg10: memref<64x64xbf16, #tpu.memory_space<vmem>>, %arg11: memref<64x64xbf16, #tpu.memory_space<vmem>>, %arg12: memref<64x64xbf16, #tpu.memory_space<vmem>>, %arg13: memref<64x64xbf16, #tpu.memory_space<vmem>>, %arg14: memref<64x64xbf16, #tpu.memory_space<vmem>>, %arg15: memref<64x64xbf16, #tpu.memory_space<vmem>>, %arg16: memref<64x64xbf16, #tpu.memory_space<vmem>>, %arg17: memref<64x64xbf16, #tpu.memory_space<vmem>>, %arg18: memref<64x64xbf16, #tpu.memory_space<vmem>>, %arg19: memref<1x64xf32, #tpu.memory_space<vmem>>, %arg20: memref<98x64xbf16, #tpu.memory_space<vmem>>) attributes {dimension_semantics = [#tpu.dimension_semantics<parallel>], iteration_bounds = array<i64: 1>, scalar_prefetch = 0 : i64, scratch_operands = 0 : i64, tpu.core_type = #tpu.core_type<tc>, window_params = [{transform_indices = @transform_0, window_bounds = array<i64: 98, 64>}, {transform_indices = @transform_1, window_bounds = array<i64: 98, 64>}, {transform_indices = @transform_2, window_bounds = array<i64: 98, 64>}, {transform_indices = @transform_3, window_bounds = array<i64: 98, 64>}, {transform_indices = @transform_4, window_bounds = array<i64: 98, 64>}, {transform_indices = @transform_5, window_bounds = array<i64: 98, 64>}, {transform_indices = @transform_6, window_bounds = array<i64: 98, 64>}, {transform_indices = @transform_7, window_bounds = array<i64: 98, 64>}, {transform_indices = @transform_8, window_bounds = array<i64: 98, 64>}, {pipeline_mode = #tpu.pipeline_mode<synchronous>, transform_indices = @transform_9, window_bounds = array<i64: 64, 64>}, {pipeline_mode = #tpu.pipeline_mode<synchronous>, transform_indices = @transform_10, window_bounds = array<i64: 64, 64>}, {pipeline_mode = #tpu.pipeline_mode<synchronous>, transform_indices = @transform_11, window_bounds = array<i64: 64, 64>}, {pipeline_mode = #tpu.pipeline_mode<synchronous>, transform_indices = @transform_12, window_bounds = array<i64: 64, 64>}, {pipeline_mode = #tpu.pipeline_mode<synchronous>, transform_indices = @transform_13, window_bounds = array<i64: 64, 64>}, {pipeline_mode = #tpu.pipeline_mode<synchronous>, transform_indices = @transform_14, window_bounds = array<i64: 64, 64>}, {pipeline_mode = #tpu.pipeline_mode<synchronous>, transform_indices = @transform_15, window_bounds = array<i64: 64, 64>}, {pipeline_mode = #tpu.pipeline_mode<synchronous>, transform_indices = @transform_16, window_bounds = array<i64: 64, 64>}, {pipeline_mode = #tpu.pipeline_mode<synchronous>, transform_indices = @transform_17, window_bounds = array<i64: 64, 64>}, {pipeline_mode = #tpu.pipeline_mode<synchronous>, transform_indices = @transform_18, window_bounds = array<i64: 1, 64>}, {transform_indices = @transform_19, window_bounds = array<i64: 98, 64>}]} {
    %c0 = arith.constant 0 : index
    %c0_0 = arith.constant 0 : index
    %0 = vector.load %arg1[%c0, %c0_0] : memref<98x64xbf16, #tpu.memory_space<vmem>>, vector<98x64xbf16>
    %c0_1 = arith.constant 0 : index
    %c0_2 = arith.constant 0 : index
    %1 = vector.load %arg10[%c0_1, %c0_2] : memref<64x64xbf16, #tpu.memory_space<vmem>>, vector<64x64xbf16>
    %cst = arith.constant dense<0.000000e+00> : vector<98x64xf32>
    %2 = tpu.matmul %0, %1, %cst {dimension_numbers = #tpu.dot_dimension_numbers<[1], [0], [0], [1], [0, 0, 1, 1], [], []>} : vector<98x64xbf16>, vector<64x64xbf16>, vector<98x64xf32> -> vector<98x64xf32>
    %c0_3 = arith.constant 0 : index
    %c0_4 = arith.constant 0 : index
    %3 = vector.load %arg2[%c0_3, %c0_4] : memref<98x64xbf16, #tpu.memory_space<vmem>>, vector<98x64xbf16>
    %c0_5 = arith.constant 0 : index
    %c0_6 = arith.constant 0 : index
    %4 = vector.load %arg11[%c0_5, %c0_6] : memref<64x64xbf16, #tpu.memory_space<vmem>>, vector<64x64xbf16>
    %cst_7 = arith.constant dense<0.000000e+00> : vector<98x64xf32>
    %5 = tpu.matmul %3, %4, %cst_7 {dimension_numbers = #tpu.dot_dimension_numbers<[1], [0], [0], [1], [0, 0, 1, 1], [], []>} : vector<98x64xbf16>, vector<64x64xbf16>, vector<98x64xf32> -> vector<98x64xf32>
    %6 = arith.addf %2, %5 : vector<98x64xf32>
    %c0_8 = arith.constant 0 : index
    %c0_9 = arith.constant 0 : index
    %7 = vector.load %arg3[%c0_8, %c0_9] : memref<98x64xbf16, #tpu.memory_space<vmem>>, vector<98x64xbf16>
    %c0_10 = arith.constant 0 : index
    %c0_11 = arith.constant 0 : index
    %8 = vector.load %arg12[%c0_10, %c0_11] : memref<64x64xbf16, #tpu.memory_space<vmem>>, vector<64x64xbf16>
    %cst_12 = arith.constant dense<0.000000e+00> : vector<98x64xf32>
    %9 = tpu.matmul %7, %8, %cst_12 {dimension_numbers = #tpu.dot_dimension_numbers<[1], [0], [0], [1], [0, 0, 1, 1], [], []>} : vector<98x64xbf16>, vector<64x64xbf16>, vector<98x64xf32> -> vector<98x64xf32>
    %10 = arith.addf %6, %9 : vector<98x64xf32>
    %c0_13 = arith.constant 0 : index
    %c0_14 = arith.constant 0 : index
    %11 = vector.load %arg4[%c0_13, %c0_14] : memref<98x64xbf16, #tpu.memory_space<vmem>>, vector<98x64xbf16>
    %c0_15 = arith.constant 0 : index
    %c0_16 = arith.constant 0 : index
    %12 = vector.load %arg13[%c0_15, %c0_16] : memref<64x64xbf16, #tpu.memory_space<vmem>>, vector<64x64xbf16>
    %cst_17 = arith.constant dense<0.000000e+00> : vector<98x64xf32>
    %13 = tpu.matmul %11, %12, %cst_17 {dimension_numbers = #tpu.dot_dimension_numbers<[1], [0], [0], [1], [0, 0, 1, 1], [], []>} : vector<98x64xbf16>, vector<64x64xbf16>, vector<98x64xf32> -> vector<98x64xf32>
    %14 = arith.addf %10, %13 : vector<98x64xf32>
    %c0_18 = arith.constant 0 : index
    %c0_19 = arith.constant 0 : index
    %15 = vector.load %arg5[%c0_18, %c0_19] : memref<98x64xbf16, #tpu.memory_space<vmem>>, vector<98x64xbf16>
    %c0_20 = arith.constant 0 : index
    %c0_21 = arith.constant 0 : index
    %16 = vector.load %arg14[%c0_20, %c0_21] : memref<64x64xbf16, #tpu.memory_space<vmem>>, vector<64x64xbf16>
    %cst_22 = arith.constant dense<0.000000e+00> : vector<98x64xf32>
    %17 = tpu.matmul %15, %16, %cst_22 {dimension_numbers = #tpu.dot_dimension_numbers<[1], [0], [0], [1], [0, 0, 1, 1], [], []>} : vector<98x64xbf16>, vector<64x64xbf16>, vector<98x64xf32> -> vector<98x64xf32>
    %18 = arith.addf %14, %17 : vector<98x64xf32>
    %c0_23 = arith.constant 0 : index
    %c0_24 = arith.constant 0 : index
    %19 = vector.load %arg6[%c0_23, %c0_24] : memref<98x64xbf16, #tpu.memory_space<vmem>>, vector<98x64xbf16>
    %c0_25 = arith.constant 0 : index
    %c0_26 = arith.constant 0 : index
    %20 = vector.load %arg15[%c0_25, %c0_26] : memref<64x64xbf16, #tpu.memory_space<vmem>>, vector<64x64xbf16>
    %cst_27 = arith.constant dense<0.000000e+00> : vector<98x64xf32>
    %21 = tpu.matmul %19, %20, %cst_27 {dimension_numbers = #tpu.dot_dimension_numbers<[1], [0], [0], [1], [0, 0, 1, 1], [], []>} : vector<98x64xbf16>, vector<64x64xbf16>, vector<98x64xf32> -> vector<98x64xf32>
    %22 = arith.addf %18, %21 : vector<98x64xf32>
    %c0_28 = arith.constant 0 : index
    %c0_29 = arith.constant 0 : index
    %23 = vector.load %arg7[%c0_28, %c0_29] : memref<98x64xbf16, #tpu.memory_space<vmem>>, vector<98x64xbf16>
    %c0_30 = arith.constant 0 : index
    %c0_31 = arith.constant 0 : index
    %24 = vector.load %arg16[%c0_30, %c0_31] : memref<64x64xbf16, #tpu.memory_space<vmem>>, vector<64x64xbf16>
    %cst_32 = arith.constant dense<0.000000e+00> : vector<98x64xf32>
    %25 = tpu.matmul %23, %24, %cst_32 {dimension_numbers = #tpu.dot_dimension_numbers<[1], [0], [0], [1], [0, 0, 1, 1], [], []>} : vector<98x64xbf16>, vector<64x64xbf16>, vector<98x64xf32> -> vector<98x64xf32>
    %26 = arith.addf %22, %25 : vector<98x64xf32>
    %c0_33 = arith.constant 0 : index
    %c0_34 = arith.constant 0 : index
    %27 = vector.load %arg8[%c0_33, %c0_34] : memref<98x64xbf16, #tpu.memory_space<vmem>>, vector<98x64xbf16>
    %c0_35 = arith.constant 0 : index
    %c0_36 = arith.constant 0 : index
    %28 = vector.load %arg17[%c0_35, %c0_36] : memref<64x64xbf16, #tpu.memory_space<vmem>>, vector<64x64xbf16>
    %cst_37 = arith.constant dense<0.000000e+00> : vector<98x64xf32>
    %29 = tpu.matmul %27, %28, %cst_37 {dimension_numbers = #tpu.dot_dimension_numbers<[1], [0], [0], [1], [0, 0, 1, 1], [], []>} : vector<98x64xbf16>, vector<64x64xbf16>, vector<98x64xf32> -> vector<98x64xf32>
    %30 = arith.addf %26, %29 : vector<98x64xf32>
    %c0_38 = arith.constant 0 : index
    %c0_39 = arith.constant 0 : index
    %31 = vector.load %arg9[%c0_38, %c0_39] : memref<98x64xbf16, #tpu.memory_space<vmem>>, vector<98x64xbf16>
    %c0_40 = arith.constant 0 : index
    %c0_41 = arith.constant 0 : index
    %32 = vector.load %arg18[%c0_40, %c0_41] : memref<64x64xbf16, #tpu.memory_space<vmem>>, vector<64x64xbf16>
    %cst_42 = arith.constant dense<0.000000e+00> : vector<98x64xf32>
    %33 = tpu.matmul %31, %32, %cst_42 {dimension_numbers = #tpu.dot_dimension_numbers<[1], [0], [0], [1], [0, 0, 1, 1], [], []>} : vector<98x64xbf16>, vector<64x64xbf16>, vector<98x64xf32> -> vector<98x64xf32>
    %34 = arith.addf %30, %33 : vector<98x64xf32>
    %c0_43 = arith.constant 0 : index
    %c0_44 = arith.constant 0 : index
    %35 = vector.load %arg19[%c0_43, %c0_44] : memref<1x64xf32, #tpu.memory_space<vmem>>, vector<1x64xf32>
    %36 = vector.broadcast %35 : vector<1x64xf32> to vector<98x64xf32>
    %37 = arith.addf %34, %36 : vector<98x64xf32>
    %cst_45 = arith.constant 0.000000e+00 : f32
    %38 = vector.broadcast %cst_45 : f32 to vector<98x64xf32>
    %39 = arith.maximumf %37, %38 : vector<98x64xf32>
    %40 = arith.truncf %39 : vector<98x64xf32> to vector<98x64xbf16>
    %c0_46 = arith.constant 0 : index
    %c0_47 = arith.constant 0 : index
    %41 = vector.load %arg20[%c0_46, %c0_47] : memref<98x64xbf16, #tpu.memory_space<vmem>>, vector<98x64xbf16>
    tpu.vector_store %arg20[%c0_46, %c0_47], %40 {strides = array<i32>} : memref<98x64xbf16, #tpu.memory_space<vmem>>, vector<98x64xbf16>,
    return
  }
  func.func @transform_0(%arg0: i32) -> (i32, i32) {
    %c0_i32 = arith.constant 0 : i32
    %c0_i32_0 = arith.constant 0 : i32
    return %arg0, %c0_i32 : i32, i32
  }
  func.func @transform_1(%arg0: i32) -> (i32, i32) {
    %c0_i32 = arith.constant 0 : i32
    %c0_i32_0 = arith.constant 0 : i32
    return %arg0, %c0_i32 : i32, i32
  }
  func.func @transform_2(%arg0: i32) -> (i32, i32) {
    %c0_i32 = arith.constant 0 : i32
    %c0_i32_0 = arith.constant 0 : i32
    return %arg0, %c0_i32 : i32, i32
  }
  func.func @transform_3(%arg0: i32) -> (i32, i32) {
    %c0_i32 = arith.constant 0 : i32
    %c0_i32_0 = arith.constant 0 : i32
    return %arg0, %c0_i32 : i32, i32
  }
  func.func @transform_4(%arg0: i32) -> (i32, i32) {
    %c0_i32 = arith.constant 0 : i32
    %c0_i32_0 = arith.constant 0 : i32
    return %arg0, %c0_i32 : i32, i32
  }
  func.func @transform_5(%arg0: i32) -> (i32, i32) {
    %c0_i32 = arith.constant 0 : i32
    %c0_i32_0 = arith.constant 0 : i32
    return %arg0, %c0_i32 : i32, i32
  }
  func.func @transform_6(%arg0: i32) -> (i32, i32) {
    %c0_i32 = arith.constant 0 : i32
    %c0_i32_0 = arith.constant 0 : i32
    return %arg0, %c0_i32 : i32, i32
  }
  func.func @transform_7(%arg0: i32) -> (i32, i32) {
    %c0_i32 = arith.constant 0 : i32
    %c0_i32_0 = arith.constant 0 : i32
    return %arg0, %c0_i32 : i32, i32
  }
  func.func @transform_8(%arg0: i32) -> (i32, i32) {
    %c0_i32 = arith.constant 0 : i32
    %c0_i32_0 = arith.constant 0 : i32
    return %arg0, %c0_i32 : i32, i32
  }
  func.func @transform_9(%arg0: i32) -> (i32, i32) {
    %c0_i32 = arith.constant 0 : i32
    %c0_i32_0 = arith.constant 0 : i32
    %c0_i32_1 = arith.constant 0 : i32
    return %c0_i32, %c0_i32_0 : i32, i32
  }
  func.func @transform_10(%arg0: i32) -> (i32, i32) {
    %c0_i32 = arith.constant 0 : i32
    %c0_i32_0 = arith.constant 0 : i32
    %c0_i32_1 = arith.constant 0 : i32
    return %c0_i32, %c0_i32_0 : i32, i32
  }
  func.func @transform_11(%arg0: i32) -> (i32, i32) {
    %c0_i32 = arith.constant 0 : i32
    %c0_i32_0 = arith.constant 0 : i32
    %c0_i32_1 = arith.constant 0 : i32
    return %c0_i32, %c0_i32_0 : i32, i32
  }
  func.func @transform_12(%arg0: i32) -> (i32, i32) {
    %c0_i32 = arith.constant 0 : i32
    %c0_i32_0 = arith.constant 0 : i32
    %c0_i32_1 = arith.constant 0 : i32
    return %c0_i32, %c0_i32_0 : i32, i32
  }
  func.func @transform_13(%arg0: i32) -> (i32, i32) {
    %c0_i32 = arith.constant 0 : i32
    %c0_i32_0 = arith.constant 0 : i32
    %c0_i32_1 = arith.constant 0 : i32
    return %c0_i32, %c0_i32_0 : i32, i32
  }
  func.func @transform_14(%arg0: i32) -> (i32, i32) {
    %c0_i32 = arith.constant 0 : i32
    %c0_i32_0 = arith.constant 0 : i32
    %c0_i32_1 = arith.constant 0 : i32
    return %c0_i32, %c0_i32_0 : i32, i32
  }
  func.func @transform_15(%arg0: i32) -> (i32, i32) {
    %c0_i32 = arith.constant 0 : i32
    %c0_i32_0 = arith.constant 0 : i32
    %c0_i32_1 = arith.constant 0 : i32
    return %c0_i32, %c0_i32_0 : i32, i32
  }
  func.func @transform_16(%arg0: i32) -> (i32, i32) {
    %c0_i32 = arith.constant 0 : i32
    %c0_i32_0 = arith.constant 0 : i32
    %c0_i32_1 = arith.constant 0 : i32
    return %c0_i32, %c0_i32_0 : i32, i32
  }
  func.func @transform_17(%arg0: i32) -> (i32, i32) {
    %c0_i32 = arith.constant 0 : i32
    %c0_i32_0 = arith.constant 0 : i32
    %c0_i32_1 = arith.constant 0 : i32
    return %c0_i32, %c0_i32_0 : i32, i32
  }
  func.func @transform_18(%arg0: i32) -> (i32, i32) {
    %c0_i32 = arith.constant 0 : i32
    %c0_i32_0 = arith.constant 0 : i32
    %c0_i32_1 = arith.constant 0 : i32
    return %c0_i32, %c0_i32_0 : i32, i32
  }
  func.func @transform_19(%arg0: i32) -> (i32, i32) {
    %c0_i32 = arith.constant 0 : i32
    %c0_i32_0 = arith.constant 0 : i32
    return %arg0, %c0_i32 : i32, i32
  }
}

module attributes {stable_mosaic.version = 11 : i64} {
  func.func @_mlp_head_kernel(%arg0: i32, %arg1: memref<2x3136xbf16, #tpu.memory_space<vmem>>, %arg2: memref<3136x512xbf16, #tpu.memory_space<vmem>>, %arg3: memref<1x512xf32, #tpu.memory_space<vmem>>, %arg4: memref<512x128xbf16, #tpu.memory_space<vmem>>, %arg5: memref<1x128xf32, #tpu.memory_space<vmem>>, %arg6: memref<2x128xf32, #tpu.memory_space<vmem>>) attributes {dimension_semantics = [#tpu.dimension_semantics<parallel>], iteration_bounds = array<i64: 1>, scalar_prefetch = 0 : i64, scratch_operands = 0 : i64, tpu.core_type = #tpu.core_type<tc>, window_params = [{transform_indices = @transform_0, window_bounds = array<i64: 2, 3136>}, {pipeline_mode = #tpu.pipeline_mode<synchronous>, transform_indices = @transform_1, window_bounds = array<i64: 3136, 512>}, {pipeline_mode = #tpu.pipeline_mode<synchronous>, transform_indices = @transform_2, window_bounds = array<i64: 1, 512>}, {pipeline_mode = #tpu.pipeline_mode<synchronous>, transform_indices = @transform_3, window_bounds = array<i64: 512, 128>}, {pipeline_mode = #tpu.pipeline_mode<synchronous>, transform_indices = @transform_4, window_bounds = array<i64: 1, 128>}, {transform_indices = @transform_5, window_bounds = array<i64: 2, 128>}]} {
    %c0 = arith.constant 0 : index
    %c0_0 = arith.constant 0 : index
    %0 = vector.load %arg1[%c0, %c0_0] : memref<2x3136xbf16, #tpu.memory_space<vmem>>, vector<2x3136xbf16>
    %c0_1 = arith.constant 0 : index
    %c0_2 = arith.constant 0 : index
    %1 = vector.load %arg2[%c0_1, %c0_2] : memref<3136x512xbf16, #tpu.memory_space<vmem>>, vector<3136x512xbf16>
    %cst = arith.constant dense<0.000000e+00> : vector<2x512xf32>
    %2 = tpu.matmul %0, %1, %cst {dimension_numbers = #tpu.dot_dimension_numbers<[1], [0], [0], [1], [0, 0, 1, 1], [], []>} : vector<2x3136xbf16>, vector<3136x512xbf16>, vector<2x512xf32> -> vector<2x512xf32>
    %c0_3 = arith.constant 0 : index
    %c0_4 = arith.constant 0 : index
    %3 = vector.load %arg3[%c0_3, %c0_4] : memref<1x512xf32, #tpu.memory_space<vmem>>, vector<1x512xf32>
    %4 = vector.broadcast %3 : vector<1x512xf32> to vector<2x512xf32>
    %5 = arith.addf %2, %4 : vector<2x512xf32>
    %cst_5 = arith.constant 0.000000e+00 : f32
    %6 = vector.broadcast %cst_5 : f32 to vector<2x512xf32>
    %7 = arith.maximumf %5, %6 : vector<2x512xf32>
    %8 = arith.truncf %7 : vector<2x512xf32> to vector<2x512xbf16>
    %c0_6 = arith.constant 0 : index
    %c0_7 = arith.constant 0 : index
    %9 = vector.load %arg4[%c0_6, %c0_7] : memref<512x128xbf16, #tpu.memory_space<vmem>>, vector<512x128xbf16>
    %cst_8 = arith.constant dense<0.000000e+00> : vector<2x128xf32>
    %10 = tpu.matmul %8, %9, %cst_8 {dimension_numbers = #tpu.dot_dimension_numbers<[1], [0], [0], [1], [0, 0, 1, 1], [], []>} : vector<2x512xbf16>, vector<512x128xbf16>, vector<2x128xf32> -> vector<2x128xf32>
    %c0_9 = arith.constant 0 : index
    %c0_10 = arith.constant 0 : index
    %11 = vector.load %arg5[%c0_9, %c0_10] : memref<1x128xf32, #tpu.memory_space<vmem>>, vector<1x128xf32>
    %12 = vector.broadcast %11 : vector<1x128xf32> to vector<2x128xf32>
    %13 = arith.addf %10, %12 : vector<2x128xf32>
    %c0_11 = arith.constant 0 : index
    %c0_12 = arith.constant 0 : index
    %14 = vector.load %arg6[%c0_11, %c0_12] : memref<2x128xf32, #tpu.memory_space<vmem>>, vector<2x128xf32>
    tpu.vector_store %arg6[%c0_11, %c0_12], %13 {strides = array<i32>} : memref<2x128xf32, #tpu.memory_space<vmem>>, vector<2x128xf32>,
    return
  }
  func.func @transform_0(%arg0: i32) -> (i32, i32) {
    %c0_i32 = arith.constant 0 : i32
    %c0_i32_0 = arith.constant 0 : i32
    return %arg0, %c0_i32 : i32, i32
  }
  func.func @transform_1(%arg0: i32) -> (i32, i32) {
    %c0_i32 = arith.constant 0 : i32
    %c0_i32_0 = arith.constant 0 : i32
    %c0_i32_1 = arith.constant 0 : i32
    return %c0_i32, %c0_i32_0 : i32, i32
  }
  func.func @transform_2(%arg0: i32) -> (i32, i32) {
    %c0_i32 = arith.constant 0 : i32
    %c0_i32_0 = arith.constant 0 : i32
    %c0_i32_1 = arith.constant 0 : i32
    return %c0_i32, %c0_i32_0 : i32, i32
  }
  func.func @transform_3(%arg0: i32) -> (i32, i32) {
    %c0_i32 = arith.constant 0 : i32
    %c0_i32_0 = arith.constant 0 : i32
    %c0_i32_1 = arith.constant 0 : i32
    return %c0_i32, %c0_i32_0 : i32, i32
  }
  func.func @transform_4(%arg0: i32) -> (i32, i32) {
    %c0_i32 = arith.constant 0 : i32
    %c0_i32_0 = arith.constant 0 : i32
    %c0_i32_1 = arith.constant 0 : i32
    return %c0_i32, %c0_i32_0 : i32, i32
  }
  func.func @transform_5(%arg0: i32) -> (i32, i32) {
    %c0_i32 = arith.constant 0 : i32
    %c0_i32_0 = arith.constant 0 : i32
    return %arg0, %c0_i32 : i32, i32
  }
}

</mosaic_0001>

<llo_original>
// kernel: forward.4
$region0: #{forward.4}
  #allocation0 [shape = 'u32[]', space=smem, size = 0x4, offset = 0x4, fixed_abs, tag = 'smem constant byte address 0x4 - core index']
  #allocation1 [shape = 'u32[72,128]{1,0:T(1,128)}', space=vmem, size = 0x9000, scoped, tag = 'internal scratch']
  %s0 = inlined_call_operand.vmem [shape: bf16[800,16], index: 0, kind: input, shape index: {}]
  %s1 = inlined_call_operand.vmem [shape: bf16[800,16], index: 1, kind: input, shape index: {}]
  %s2 = inlined_call_operand.vmem [shape: bf16[800,16], index: 2, kind: input, shape index: {}]
  %s3 = inlined_call_operand.vmem [shape: bf16[800,16], index: 3, kind: input, shape index: {}]
  %s4 = inlined_call_operand.vmem [shape: bf16[16,32], index: 4, kind: input, shape index: {}]
  %s5 = inlined_call_operand.vmem [shape: bf16[16,32], index: 5, kind: input, shape index: {}]
  %s6 = inlined_call_operand.vmem [shape: bf16[16,32], index: 6, kind: input, shape index: {}]
  %s7 = inlined_call_operand.vmem [shape: bf16[16,32], index: 7, kind: input, shape index: {}]
  %s8 = inlined_call_operand.vmem [shape: f32[1,32], index: 8, kind: input, shape index: {}]
  %s9 = inlined_call_operand.vmem [shape: bf16[800,32], index: 9, kind: output, shape index: {}]
  %s10 = sld [smem:[#allocation0]]
  $region46: #{forward.4} parent=0
    _
  %s12 = ssub.s32 1, %s10
  %s13 = scalar_select 0, %s12, %s10
  // Predicated region
  $region2: #{forward.4} parent=0 // pred_check
    _
  $region3: #{forward.4} parent=0 // pred_check_branch
    %15 = sbr.rel (0) target = $region5
  $region4: #{forward.4} parent=0 // pred_region
    _
  $region5: #{forward.4} parent=0 // pred_fallthru
    _
  // Predicated region
  $region6: #{forward.4} parent=0 // pred_check
    _
  $region7: #{forward.4} parent=0 // pred_check_branch
    %17 = sbr.rel (0) target = $region9
  $region8: #{forward.4} parent=0 // pred_region
    _
  $region9: #{forward.4} parent=0 // pred_fallthru
    _
  // Predicated region
  $region10: #{forward.4} parent=0 // pred_check
    _
  $region11: #{forward.4} parent=0 // pred_check_branch
    %19 = sbr.rel (0) target = $region13
  $region12: #{forward.4} parent=0 // pred_region
    _
  $region13: #{forward.4} parent=0 // pred_fallthru
    _
  // Predicated region
  $region14: #{forward.4} parent=0 // pred_check
    _
  $region15: #{forward.4} parent=0 // pred_check_branch
    %21 = sbr.rel (0) target = $region17
  $region16: #{forward.4} parent=0 // pred_region
    _
  $region17: #{forward.4} parent=0 // pred_fallthru
    _
  // Predicated region
  $region18: #{forward.4} parent=0 // pred_check
    _
  $region19: #{forward.4} parent=0 // pred_check_branch
    %23 = sbr.rel (0) target = $region21
  $region20: #{forward.4} parent=0 // pred_region
    _
  $region21: #{forward.4} parent=0 // pred_fallthru
    _
  // Predicated region
  $region22: #{forward.4} parent=0 // pred_check
    _
  $region23: #{forward.4} parent=0 // pred_check_branch
    %25 = sbr.rel (0) target = $region25
  $region24: #{forward.4} parent=0 // pred_region
    _
  $region25: #{forward.4} parent=0 // pred_fallthru
    _
  // Predicated region
  $region26: #{forward.4} parent=0 // pred_check
    _
  $region27: #{forward.4} parent=0 // pred_check_branch
    %27 = sbr.rel (0) target = $region29
  $region28: #{forward.4} parent=0 // pred_region
    _
  $region29: #{forward.4} parent=0 // pred_fallthru
    _
  // Predicated region
  $region30: #{forward.4} parent=0 // pred_check
    _
  $region31: #{forward.4} parent=0 // pred_check_branch
    %29 = sbr.rel (0) target = $region33
  $region32: #{forward.4} parent=0 // pred_region
    _
  $region33: #{forward.4} parent=0 // pred_fallthru
    _
  // Predicated region
  $region34: #{forward.4} parent=0 // pred_check
    _
  $region35: #{forward.4} parent=0 // pred_check_branch
    %31 = sbr.rel (0) target = $region37
  $region36: #{forward.4} parent=0 // pred_region
    _
  $region37: #{forward.4} parent=0 // pred_fallthru
    _
  %v33 = vld [vmem:[%s0] sm:$0xf]
  %v34 = vld [vmem:[%s0 + $0x4] sm:$0xf]
  %v35 = vld [vmem:[%s0 + $0x8] sm:$0xf]
  %v36 = vld [vmem:[%s0 + $0xc] sm:$0xf]
  %v37 = vld [vmem:[%s0 + $0x10] sm:$0xf]
  %v38 = vld [vmem:[%s0 + $0x14] sm:$0xf]
  %v39 = vld [vmem:[%s0 + $0x18] sm:$0xf]
  %v40 = vld [vmem:[%s0 + $0x1c] sm:$0xf]
  %v41 = vld [vmem:[%s0 + $0x20] sm:$0xf]
  %v42 = vld [vmem:[%s0 + $0x24] sm:$0xf]
  %v43 = vld [vmem:[%s0 + $0x28] sm:$0xf]
  %v44 = vld [vmem:[%s0 + $0x2c] sm:$0xf]
  %v45 = vld [vmem:[%s0 + $0x30] sm:$0xf]
  %v46 = vld [vmem:[%s0 + $0x34] sm:$0xf]
  %v47 = vld [vmem:[%s0 + $0x38] sm:$0xf]
  %v48 = vld [vmem:[%s0 + $0x3c] sm:$0xf]
  %v49 = vld [vmem:[%s0 + $0x40] sm:$0xf]
  %v50 = vld [vmem:[%s0 + $0x44] sm:$0xf]
  %v51 = vld [vmem:[%s0 + $0x48] sm:$0xf]
  %v52 = vld [vmem:[%s0 + $0x4c] sm:$0xf]
  %v53 = vld [vmem:[%s0 + $0x50] sm:$0xf]
  %v54 = vld [vmem:[%s0 + $0x54] sm:$0xf]
  %v55 = vld [vmem:[%s0 + $0x58] sm:$0xf]
  %v56 = vld [vmem:[%s0 + $0x5c] sm:$0xf]
  %v57 = vld [vmem:[%s0 + $0x60] sm:$0xf]
  %v58 = vld [vmem:[%s0 + $0x64] sm:$0xf]
  %v59 = vld [vmem:[%s0 + $0x68] sm:$0xf]
  %v60 = vld [vmem:[%s0 + $0x6c] sm:$0xf]
  %v61 = vld [vmem:[%s0 + $0x70] sm:$0xf]
  %v62 = vld [vmem:[%s0 + $0x74] sm:$0xf]
  %v63 = vld [vmem:[%s0 + $0x78] sm:$0xf]
  %v64 = vld [vmem:[%s0 + $0x7c] sm:$0xf]
  %v65 = vld [vmem:[%s0 + $0x80] sm:$0xf]
  %v66 = vld [vmem:[%s0 + $0x84] sm:$0xf]
  %v67 = vld [vmem:[%s0 + $0x88] sm:$0xf]
  %v68 = vld [vmem:[%s0 + $0x8c] sm:$0xf]
  %v69 = vld [vmem:[%s0 + $0x90] sm:$0xf]
  %v70 = vld [vmem:[%s0 + $0x94] sm:$0xf]
  %v71 = vld [vmem:[%s0 + $0x98] sm:$0xf]
  %v72 = vld [vmem:[%s0 + $0x9c] sm:$0xf]
  %v73 = vld [vmem:[%s0 + $0xa0] sm:$0xf]
  %v74 = vld [vmem:[%s0 + $0xa4] sm:$0xf]
  %v75 = vld [vmem:[%s0 + $0xa8] sm:$0xf]
  %v76 = vld [vmem:[%s0 + $0xac] sm:$0xf]
  %v77 = vld [vmem:[%s0 + $0xb0] sm:$0xf]
  %v78 = vld [vmem:[%s0 + $0xb4] sm:$0xf]
  %v79 = vld [vmem:[%s0 + $0xb8] sm:$0xf]
  %v80 = vld [vmem:[%s0 + $0xbc] sm:$0xf]
  %v81 = vld [vmem:[%s0 + $0xc0] sm:$0xf]
  %v82 = vld [vmem:[%s0 + $0xc4] sm:$0xf]
  %v83 = vld [vmem:[%s0 + $0xc8] sm:$0xf]
  %v84 = vld [vmem:[%s0 + $0xcc] sm:$0xf]
  %v85 = vld [vmem:[%s0 + $0xd0] sm:$0xf]
  %v86 = vld [vmem:[%s0 + $0xd4] sm:$0xf]
  %v87 = vld [vmem:[%s0 + $0xd8] sm:$0xf]
  %v88 = vld [vmem:[%s0 + $0xdc] sm:$0xf]
  %v89 = vld [vmem:[%s0 + $0xe0] sm:$0xf]
  %v90 = vld [vmem:[%s0 + $0xe4] sm:$0xf]
  %v91 = vld [vmem:[%s0 + $0xe8] sm:$0xf]
  %v92 = vld [vmem:[%s0 + $0xec] sm:$0xf]
  %v93 = vld [vmem:[%s0 + $0xf0] sm:$0xf]
  %v94 = vld [vmem:[%s0 + $0xf4] sm:$0xf]
  %v95 = vld [vmem:[%s0 + $0xf8] sm:$0xf]
  %v96 = vld [vmem:[%s0 + $0xfc] sm:$0xf]
  %v97 = vld [vmem:[%s0 + $0x100] sm:$0xf]
  %v98 = vld [vmem:[%s0 + $0x104] sm:$0xf]
  %v99 = vld [vmem:[%s0 + $0x108] sm:$0xf]
  %v100 = vld [vmem:[%s0 + $0x10c] sm:$0xf]
  %v101 = vld [vmem:[%s0 + $0x110] sm:$0xf]
  %v102 = vld [vmem:[%s0 + $0x114] sm:$0xf]
  %v103 = vld [vmem:[%s0 + $0x118] sm:$0xf]
  %v104 = vld [vmem:[%s0 + $0x11c] sm:$0xf]
  %v105 = vld [vmem:[%s0 + $0x120] sm:$0xf]
  %v106 = vld [vmem:[%s0 + $0x124] sm:$0xf]
  %v107 = vld [vmem:[%s0 + $0x128] sm:$0xf]
  %v108 = vld [vmem:[%s0 + $0x12c] sm:$0xf]
  %v109 = vld [vmem:[%s0 + $0x130] sm:$0xf]
  %v110 = vld [vmem:[%s0 + $0x134] sm:$0xf]
  %v111 = vld [vmem:[%s0 + $0x138] sm:$0xf]
  %v112 = vld [vmem:[%s0 + $0x13c] sm:$0xf]
  %v113 = vld [vmem:[%s0 + $0x140] sm:$0xf]
  %v114 = vld [vmem:[%s0 + $0x144] sm:$0xf]
  %v115 = vld [vmem:[%s0 + $0x148] sm:$0xf]
  %v116 = vld [vmem:[%s0 + $0x14c] sm:$0xf]
  %v117 = vld [vmem:[%s0 + $0x150] sm:$0xf]
  %v118 = vld [vmem:[%s0 + $0x154] sm:$0xf]
  %v119 = vld [vmem:[%s0 + $0x158] sm:$0xf]
  %v120 = vld [vmem:[%s0 + $0x15c] sm:$0xf]
  %v121 = vld [vmem:[%s0 + $0x160] sm:$0xf]
  %v122 = vld [vmem:[%s0 + $0x164] sm:$0xf]
  %v123 = vld [vmem:[%s0 + $0x168] sm:$0xf]
  %v124 = vld [vmem:[%s0 + $0x16c] sm:$0xf]
  %v125 = vld [vmem:[%s0 + $0x170] sm:$0xf]
  %v126 = vld [vmem:[%s0 + $0x174] sm:$0xf]
  %v127 = vld [vmem:[%s0 + $0x178] sm:$0xf]
  %v128 = vld [vmem:[%s0 + $0x17c] sm:$0xf]
  %v129 = vld [vmem:[%s0 + $0x180] sm:$0xf]
  %v130 = vld [vmem:[%s0 + $0x184] sm:$0xf]
  %v131 = vld [vmem:[%s0 + $0x188] sm:$0xf]
  %v132 = vld [vmem:[%s0 + $0x18c] sm:$0xf]
  %v133 = vld [vmem:[%s4] sm:$0xf]
  %v134 = vld [vmem:[%s4 + $0x4] sm:$0xf]
  %v135 = vld [vmem:[%s1] sm:$0xf]
  %v136 = vld [vmem:[%s1 + $0x4] sm:$0xf]
  %v137 = vld [vmem:[%s1 + $0x8] sm:$0xf]
  %v138 = vld [vmem:[%s1 + $0xc] sm:$0xf]
  %v139 = vld [vmem:[%s1 + $0x10] sm:$0xf]
  %v140 = vld [vmem:[%s1 + $0x14] sm:$0xf]
  %v141 = vld [vmem:[%s1 + $0x18] sm:$0xf]
  %v142 = vld [vmem:[%s1 + $0x1c] sm:$0xf]
  %v143 = vld [vmem:[%s1 + $0x20] sm:$0xf]
  %v144 = vld [vmem:[%s1 + $0x24] sm:$0xf]
  %v145 = vld [vmem:[%s1 + $0x28] sm:$0xf]
  %v146 = vld [vmem:[%s1 + $0x2c] sm:$0xf]
  %v147 = vld [vmem:[%s1 + $0x30] sm:$0xf]
  %v148 = vld [vmem:[%s1 + $0x34] sm:$0xf]
  %v149 = vld [vmem:[%s1 + $0x38] sm:$0xf]
  %v150 = vld [vmem:[%s1 + $0x3c] sm:$0xf]
  %v151 = vld [vmem:[%s1 + $0x40] sm:$0xf]
  %v152 = vld [vmem:[%s1 + $0x44] sm:$0xf]
  %v153 = vld [vmem:[%s1 + $0x48] sm:$0xf]
  %v154 = vld [vmem:[%s1 + $0x4c] sm:$0xf]
  %v155 = vld [vmem:[%s1 + $0x50] sm:$0xf]
  %v156 = vld [vmem:[%s1 + $0x54] sm:$0xf]
  %v157 = vld [vmem:[%s1 + $0x58] sm:$0xf]
  %v158 = vld [vmem:[%s1 + $0x5c] sm:$0xf]
  %v159 = vld [vmem:[%s1 + $0x60] sm:$0xf]
  %v160 = vld [vmem:[%s1 + $0x64] sm:$0xf]
  %v161 = vld [vmem:[%s1 + $0x68] sm:$0xf]
  %v162 = vld [vmem:[%s1 + $0x6c] sm:$0xf]
  %v163 = vld [vmem:[%s1 + $0x70] sm:$0xf]
  %v164 = vld [vmem:[%s1 + $0x74] sm:$0xf]
  %v165 = vld [vmem:[%s1 + $0x78] sm:$0xf]
  %v166 = vld [vmem:[%s1 + $0x7c] sm:$0xf]
  %v167 = vld [vmem:[%s1 + $0x80] sm:$0xf]
  %v168 = vld [vmem:[%s1 + $0x84] sm:$0xf]
  %v169 = vld [vmem:[%s1 + $0x88] sm:$0xf]
  %v170 = vld [vmem:[%s1 + $0x8c] sm:$0xf]
  %v171 = vld [vmem:[%s1 + $0x90] sm:$0xf]
  %v172 = vld [vmem:[%s1 + $0x94] sm:$0xf]
  %v173 = vld [vmem:[%s1 + $0x98] sm:$0xf]
  %v174 = vld [vmem:[%s1 + $0x9c] sm:$0xf]
  %v175 = vld [vmem:[%s1 + $0xa0] sm:$0xf]
  %v176 = vld [vmem:[%s1 + $0xa4] sm:$0xf]
  %v177 = vld [vmem:[%s1 + $0xa8] sm:$0xf]
  %v178 = vld [vmem:[%s1 + $0xac] sm:$0xf]
  %v179 = vld [vmem:[%s1 + $0xb0] sm:$0xf]
  %v180 = vld [vmem:[%s1 + $0xb4] sm:$0xf]
  %v181 = vld [vmem:[%s1 + $0xb8] sm:$0xf]
  %v182 = vld [vmem:[%s1 + $0xbc] sm:$0xf]
  %v183 = vld [vmem:[%s1 + $0xc0] sm:$0xf]
  %v184 = vld [vmem:[%s1 + $0xc4] sm:$0xf]
  %v185 = vld [vmem:[%s1 + $0xc8] sm:$0xf]
  %v186 = vld [vmem:[%s1 + $0xcc] sm:$0xf]
  %v187 = vld [vmem:[%s1 + $0xd0] sm:$0xf]
  %v188 = vld [vmem:[%s1 + $0xd4] sm:$0xf]
  %v189 = vld [vmem:[%s1 + $0xd8] sm:$0xf]
  %v190 = vld [vmem:[%s1 + $0xdc] sm:$0xf]
  %v191 = vld [vmem:[%s1 + $0xe0] sm:$0xf]
  %v192 = vld [vmem:[%s1 + $0xe4] sm:$0xf]
  %v193 = vld [vmem:[%s1 + $0xe8] sm:$0xf]
  %v194 = vld [vmem:[%s1 + $0xec] sm:$0xf]
  %v195 = vld [vmem:[%s1 + $0xf0] sm:$0xf]
  %v196 = vld [vmem:[%s1 + $0xf4] sm:$0xf]
  %v197 = vld [vmem:[%s1 + $0xf8] sm:$0xf]
  %v198 = vld [vmem:[%s1 + $0xfc] sm:$0xf]
  %v199 = vld [vmem:[%s1 + $0x100] sm:$0xf]
  %v200 = vld [vmem:[%s1 + $0x104] sm:$0xf]
  %v201 = vld [vmem:[%s1 + $0x108] sm:$0xf]
  %v202 = vld [vmem:[%s1 + $0x10c] sm:$0xf]
  %v203 = vld [vmem:[%s1 + $0x110] sm:$0xf]
  %v204 = vld [vmem:[%s1 + $0x114] sm:$0xf]
  %v205 = vld [vmem:[%s1 + $0x118] sm:$0xf]
  %v206 = vld [vmem:[%s1 + $0x11c] sm:$0xf]
  %v207 = vld [vmem:[%s1 + $0x120] sm:$0xf]
  %v208 = vld [vmem:[%s1 + $0x124] sm:$0xf]
  %v209 = vld [vmem:[%s1 + $0x128] sm:$0xf]
  %v210 = vld [vmem:[%s1 + $0x12c] sm:$0xf]
  %v211 = vld [vmem:[%s1 + $0x130] sm:$0xf]
  %v212 = vld [vmem:[%s1 + $0x134] sm:$0xf]
  %v213 = vld [vmem:[%s1 + $0x138] sm:$0xf]
  %v214 = vld [vmem:[%s1 + $0x13c] sm:$0xf]
  %v215 = vld [vmem:[%s1 + $0x140] sm:$0xf]
  %v216 = vld [vmem:[%s1 + $0x144] sm:$0xf]
  %v217 = vld [vmem:[%s1 + $0x148] sm:$0xf]
  %v218 = vld [vmem:[%s1 + $0x14c] sm:$0xf]
  %v219 = vld [vmem:[%s1 + $0x150] sm:$0xf]
  %v220 = vld [vmem:[%s1 + $0x154] sm:$0xf]
  %v221 = vld [vmem:[%s1 + $0x158] sm:$0xf]
  %v222 = vld [vmem:[%s1 + $0x15c] sm:$0xf]
  %v223 = vld [vmem:[%s1 + $0x160] sm:$0xf]
  %v224 = vld [vmem:[%s1 + $0x164] sm:$0xf]
  %v225 = vld [vmem:[%s1 + $0x168] sm:$0xf]
  %v226 = vld [vmem:[%s1 + $0x16c] sm:$0xf]
  %v227 = vld [vmem:[%s1 + $0x170] sm:$0xf]
  %v228 = vld [vmem:[%s1 + $0x174] sm:$0xf]
  %v229 = vld [vmem:[%s1 + $0x178] sm:$0xf]
  %v230 = vld [vmem:[%s1 + $0x17c] sm:$0xf]
  %v231 = vld [vmem:[%s1 + $0x180] sm:$0xf]
  %v232 = vld [vmem:[%s1 + $0x184] sm:$0xf]
  %v233 = vld [vmem:[%s1 + $0x188] sm:$0xf]
  %v234 = vld [vmem:[%s1 + $0x18c] sm:$0xf]
  %v235 = vld [vmem:[%s5] sm:$0xf]
  %v236 = vld [vmem:[%s5 + $0x4] sm:$0xf]
  %v337 = vunpack.c.l.b16 %v135
  %v338 = vunpack.c.l.b16 %v136
  %v339 = vunpack.c.l.b16 %v137
  %v340 = vunpack.c.l.b16 %v138
  %v341 = vunpack.c.l.b16 %v139
  %v342 = vunpack.c.l.b16 %v140
  %v343 = vunpack.c.l.b16 %v141
  %v344 = vunpack.c.l.b16 %v142
  %v345 = vunpack.c.l.b16 %v143
  %v346 = vunpack.c.l.b16 %v144
  %v347 = vunpack.c.l.b16 %v145
  %v348 = vunpack.c.l.b16 %v146
  %v349 = vunpack.c.l.b16 %v147
  %v350 = vunpack.c.l.b16 %v148
  %v351 = vunpack.c.l.b16 %v149
  %v352 = vunpack.c.l.b16 %v150
  %v353 = vunpack.c.l.b16 %v151
  %v354 = vunpack.c.l.b16 %v152
  %v355 = vunpack.c.l.b16 %v153
  %v356 = vunpack.c.l.b16 %v154
  %v357 = vunpack.c.l.b16 %v155
  %v358 = vunpack.c.l.b16 %v156
  %v359 = vunpack.c.l.b16 %v157
  %v360 = vunpack.c.l.b16 %v158
  %v361 = vunpack.c.l.b16 %v159
  %v362 = vunpack.c.l.b16 %v160
  %v363 = vunpack.c.l.b16 %v161
  %v364 = vunpack.c.l.b16 %v162
  %v365 = vunpack.c.l.b16 %v163
  %v366 = vunpack.c.l.b16 %v164
  %v367 = vunpack.c.l.b16 %v165
  %v368 = vunpack.c.l.b16 %v166
  %v369 = vunpack.c.l.b16 %v167
  %v370 = vunpack.c.l.b16 %v168
  %v371 = vunpack.c.l.b16 %v169
  %v372 = vunpack.c.l.b16 %v170
  %v373 = vunpack.c.l.b16 %v171
  %v374 = vunpack.c.l.b16 %v172
  %v375 = vunpack.c.l.b16 %v173
  %v376 = vunpack.c.l.b16 %v174
  %v377 = vunpack.c.l.b16 %v175
  %v378 = vunpack.c.l.b16 %v176
  %v379 = vunpack.c.l.b16 %v177
  %v380 = vunpack.c.l.b16 %v178
  %v381 = vunpack.c.l.b16 %v179
  %v382 = vunpack.c.l.b16 %v180
  %v383 = vunpack.c.l.b16 %v181
  %v384 = vunpack.c.l.b16 %v182
  %v385 = vunpack.c.l.b16 %v183
  %v386 = vunpack.c.l.b16 %v184
  %v387 = vunpack.c.l.b16 %v185
  %v388 = vunpack.c.l.b16 %v186
  %v389 = vunpack.c.l.b16 %v187
  %v390 = vunpack.c.l.b16 %v188
  %v391 = vunpack.c.l.b16 %v189
  %v392 = vunpack.c.l.b16 %v190
  %v393 = vunpack.c.l.b16 %v191
  %v394 = vunpack.c.l.b16 %v192
  %v395 = vunpack.c.l.b16 %v193
  %v396 = vunpack.c.l.b16 %v194
  %v397 = vunpack.c.l.b16 %v195
  %v398 = vunpack.c.l.b16 %v196
  %v399 = vunpack.c.l.b16 %v197
  %v400 = vunpack.c.l.b16 %v198
  %v401 = vunpack.c.l.b16 %v199
  %v402 = vunpack.c.l.b16 %v200
  %v403 = vunpack.c.l.b16 %v201
  %v404 = vunpack.c.l.b16 %v202
  %v405 = vunpack.c.l.b16 %v203
  %v406 = vunpack.c.l.b16 %v204
  %v407 = vunpack.c.l.b16 %v205
  %v408 = vunpack.c.l.b16 %v206
  %v409 = vunpack.c.l.b16 %v207
  %v410 = vunpack.c.l.b16 %v208
  %v411 = vunpack.c.l.b16 %v209
  %v412 = vunpack.c.l.b16 %v210
  %v413 = vunpack.c.l.b16 %v211
  %v414 = vunpack.c.l.b16 %v212
  %v415 = vunpack.c.l.b16 %v213
  %v416 = vunpack.c.l.b16 %v214
  %v417 = vunpack.c.l.b16 %v215
  %v418 = vunpack.c.l.b16 %v216
  %v419 = vunpack.c.l.b16 %v217
  %v420 = vunpack.c.l.b16 %v218
  %v421 = vunpack.c.l.b16 %v219
  %v422 = vunpack.c.l.b16 %v220
  %v423 = vunpack.c.l.b16 %v221
  %v424 = vunpack.c.l.b16 %v222
  %v425 = vunpack.c.l.b16 %v223
  %v426 = vunpack.c.l.b16 %v224
  %v427 = vunpack.c.l.b16 %v225
  %v428 = vunpack.c.l.b16 %v226
  %v429 = vunpack.c.l.b16 %v227
  %v430 = vunpack.c.l.b16 %v228
  %v431 = vunpack.c.l.b16 %v229
  %v432 = vunpack.c.l.b16 %v230
  %v433 = vunpack.c.l.b16 %v231
  %v434 = vunpack.c.l.b16 %v232
  %v435 = vunpack.c.l.b16 %v233
  %v436 = vunpack.c.l.b16 %v234
  %v437 = vpack.c.b16 %v338, %v337
  %v438 = vpack.c.b16 %v340, %v339
  %v439 = vpack.c.b16 %v342, %v341
  %v440 = vpack.c.b16 %v344, %v343
  %v441 = vpack.c.b16 %v346, %v345
  %v442 = vpack.c.b16 %v348, %v347
  %v443 = vpack.c.b16 %v350, %v349
  %v444 = vpack.c.b16 %v352, %v351
  %v445 = vpack.c.b16 %v354, %v353
  %v446 = vpack.c.b16 %v356, %v355
  %v447 = vpack.c.b16 %v358, %v357
  %v448 = vpack.c.b16 %v360, %v359
  %v449 = vpack.c.b16 %v362, %v361
  %v450 = vpack.c.b16 %v364, %v363
  %v451 = vpack.c.b16 %v366, %v365
  %v452 = vpack.c.b16 %v368, %v367
  %v453 = vpack.c.b16 %v370, %v369
  %v454 = vpack.c.b16 %v372, %v371
  %v455 = vpack.c.b16 %v374, %v373
  %v456 = vpack.c.b16 %v376, %v375
  %v457 = vpack.c.b16 %v378, %v377
  %v458 = vpack.c.b16 %v380, %v379
  %v459 = vpack.c.b16 %v382, %v381
  %v460 = vpack.c.b16 %v384, %v383
  %v461 = vpack.c.b16 %v386, %v385
  %v462 = vpack.c.b16 %v388, %v387
  %v463 = vpack.c.b16 %v390, %v389
  %v464 = vpack.c.b16 %v392, %v391
  %v465 = vpack.c.b16 %v394, %v393
  %v466 = vpack.c.b16 %v396, %v395
  %v467 = vpack.c.b16 %v398, %v397
  %v468 = vpack.c.b16 %v400, %v399
  %v469 = vpack.c.b16 %v402, %v401
  %v470 = vpack.c.b16 %v404, %v403
  %v471 = vpack.c.b16 %v406, %v405
  %v472 = vpack.c.b16 %v408, %v407
  %v473 = vpack.c.b16 %v410, %v409
  %v474 = vpack.c.b16 %v412, %v411
  %v475 = vpack.c.b16 %v414, %v413
  %v476 = vpack.c.b16 %v416, %v415
  %v477 = vpack.c.b16 %v418, %v417
  %v478 = vpack.c.b16 %v420, %v419
  %v479 = vpack.c.b16 %v422, %v421
  %v480 = vpack.c.b16 %v424, %v423
  %v481 = vpack.c.b16 %v426, %v425
  %v482 = vpack.c.b16 %v428, %v427
  %v483 = vpack.c.b16 %v430, %v429
  %v484 = vpack.c.b16 %v432, %v431
  %v485 = vpack.c.b16 %v434, %v433
  %v486 = vpack.c.b16 %v436, %v435
  %v489 = vunpack.c.l.b16 %v235
  %v490 = vunpack.c.l.b16 %v236
  %v491 = vpack.c.b16 %v490, %v489
  %vm493 = vcmask 130048
  %v495 = vsel %vm493, %v437, 0
  %v498 = vsel %vm493, %v438, 0
  %v501 = vsel %vm493, %v439, 0
  %v504 = vsel %vm493, %v440, 0
  %v507 = vsel %vm493, %v441, 0
  %v510 = vsel %vm493, %v442, 0
  %v513 = vsel %vm493, %v443, 0
  %v516 = vsel %vm493, %v444, 0
  %v519 = vsel %vm493, %v445, 0
  %v522 = vsel %vm493, %v446, 0
  %v525 = vsel %vm493, %v447, 0
  %v528 = vsel %vm493, %v448, 0
  %v531 = vsel %vm493, %v449, 0
  %v534 = vsel %vm493, %v450, 0
  %v537 = vsel %vm493, %v451, 0
  %v540 = vsel %vm493, %v452, 0
  %v543 = vsel %vm493, %v453, 0
  %v546 = vsel %vm493, %v454, 0
  %v549 = vsel %vm493, %v455, 0
  %v552 = vsel %vm493, %v456, 0
  %v555 = vsel %vm493, %v457, 0
  %v558 = vsel %vm493, %v458, 0
  %v561 = vsel %vm493, %v459, 0
  %v564 = vsel %vm493, %v460, 0
  %v567 = vsel %vm493, %v461, 0
  %v570 = vsel %vm493, %v462, 0
  %v573 = vsel %vm493, %v463, 0
  %v576 = vsel %vm493, %v464, 0
  %v579 = vsel %vm493, %v465, 0
  %v582 = vsel %vm493, %v466, 0
  %v585 = vsel %vm493, %v467, 0
  %v588 = vsel %vm493, %v468, 0
  %v591 = vsel %vm493, %v469, 0
  %v594 = vsel %vm493, %v470, 0
  %v597 = vsel %vm493, %v471, 0
  %v600 = vsel %vm493, %v472, 0
  %v603 = vsel %vm493, %v473, 0
  %v606 = vsel %vm493, %v474, 0
  %v609 = vsel %vm493, %v475, 0
  %v612 = vsel %vm493, %v476, 0
  %v615 = vsel %vm493, %v477, 0
  %v618 = vsel %vm493, %v478, 0
  %v621 = vsel %vm493, %v479, 0
  %v624 = vsel %vm493, %v480, 0
  %v627 = vsel %vm493, %v481, 0
  %v630 = vsel %vm493, %v482, 0
  %v633 = vsel %vm493, %v483, 0
  %v636 = vsel %vm493, %v484, 0
  %v639 = vsel %vm493, %v485, 0
  %v642 = vsel %vm493, %v486, 0
  %644 = vmatpush.bf16.msra.mxu0 0
  %645 = vmatpush.bf16.msra.mxu0 0
  %646 = vmatpush.bf16.msra.mxu0 0
  %647 = vmatpush.bf16.msra.mxu0 0
  %648 = vmatpush.bf16.msra.mxu0 0
  %649 = vmatpush.bf16.msra.mxu0 0
  %650 = vmatpush.bf16.msra.mxu0 0
  %651 = vmatpush.bf16.msra.mxu0 %v491
  %652 = vmatmul.bf16.gmra.mxu0 %v495
  %v653 = vpop.f32.mrf.mxu0
  %v654 = vadd.f32 0.0, %v653
  %v655 = vpop.f32.mrf.mxu0
  %v656 = vadd.f32 0.0, %v655
  %657 = vmatmul.bf16.gmra.mxu0 %v498
  %v658 = vpop.f32.mrf.mxu0
  %v659 = vadd.f32 0.0, %v658
  %v660 = vpop.f32.mrf.mxu0
  %v661 = vadd.f32 0.0, %v660
  %662 = vmatmul.bf16.gmra.mxu0 %v501
  %v663 = vpop.f32.mrf.mxu0
  %v664 = vadd.f32 0.0, %v663
  %v665 = vpop.f32.mrf.mxu0
  %v666 = vadd.f32 0.0, %v665
  %667 = vmatmul.bf16.gmra.mxu0 %v504
  %v668 = vpop.f32.mrf.mxu0
  %v669 = vadd.f32 0.0, %v668
  %v670 = vpop.f32.mrf.mxu0
  %v671 = vadd.f32 0.0, %v670
  %672 = vmatmul.bf16.gmra.mxu0 %v507
  %v673 = vpop.f32.mrf.mxu0
  %v674 = vadd.f32 0.0, %v673
  %v675 = vpop.f32.mrf.mxu0
  %v676 = vadd.f32 0.0, %v675
  %677 = vmatmul.bf16.gmra.mxu0 %v510
  %v678 = vpop.f32.mrf.mxu0
  %v679 = vadd.f32 0.0, %v678
  %v680 = vpop.f32.mrf.mxu0
  %v681 = vadd.f32 0.0, %v680
  %682 = vmatmul.bf16.gmra.mxu0 %v513
  %v683 = vpop.f32.mrf.mxu0
  %v684 = vadd.f32 0.0, %v683
  %v685 = vpop.f32.mrf.mxu0
  %v686 = vadd.f32 0.0, %v685
  %687 = vmatmul.bf16.gmra.mxu0 %v516
  %v688 = vpop.f32.mrf.mxu0
  %v689 = vadd.f32 0.0, %v688
  %v690 = vpop.f32.mrf.mxu0
  %v691 = vadd.f32 0.0, %v690
  %692 = vmatmul.bf16.gmra.mxu0 %v519
  %v693 = vpop.f32.mrf.mxu0
  %v694 = vadd.f32 0.0, %v693
  %v695 = vpop.f32.mrf.mxu0
  %v696 = vadd.f32 0.0, %v695
  %697 = vmatmul.bf16.gmra.mxu0 %v522
  %v698 = vpop.f32.mrf.mxu0
  %v699 = vadd.f32 0.0, %v698
  %v700 = vpop.f32.mrf.mxu0
  %v701 = vadd.f32 0.0, %v700
  %702 = vmatmul.bf16.gmra.mxu0 %v525
  %v703 = vpop.f32.mrf.mxu0
  %v704 = vadd.f32 0.0, %v703
  %v705 = vpop.f32.mrf.mxu0
  %v706 = vadd.f32 0.0, %v705
  %707 = vmatmul.bf16.gmra.mxu0 %v528
  %v708 = vpop.f32.mrf.mxu0
  %v709 = vadd.f32 0.0, %v708
  %v710 = vpop.f32.mrf.mxu0
  %v711 = vadd.f32 0.0, %v710
  %712 = vmatmul.bf16.gmra.mxu0 %v531
  %v713 = vpop.f32.mrf.mxu0
  %v714 = vadd.f32 0.0, %v713
  %v715 = vpop.f32.mrf.mxu0
  %v716 = vadd.f32 0.0, %v715
  %717 = vmatmul.bf16.gmra.mxu0 %v534
  %v718 = vpop.f32.mrf.mxu0
  %v719 = vadd.f32 0.0, %v718
  %v720 = vpop.f32.mrf.mxu0
  %v721 = vadd.f32 0.0, %v720
  %722 = vmatmul.bf16.gmra.mxu0 %v537
  %v723 = vpop.f32.mrf.mxu0
  %v724 = vadd.f32 0.0, %v723
  %v725 = vpop.f32.mrf.mxu0
  %v726 = vadd.f32 0.0, %v725
  %727 = vmatmul.bf16.gmra.mxu0 %v540
  %v728 = vpop.f32.mrf.mxu0
  %v729 = vadd.f32 0.0, %v728
  %v730 = vpop.f32.mrf.mxu0
  %v731 = vadd.f32 0.0, %v730
  %732 = vmatmul.bf16.gmra.mxu0 %v543
  %v733 = vpop.f32.mrf.mxu0
  %v734 = vadd.f32 0.0, %v733
  %v735 = vpop.f32.mrf.mxu0
  %v736 = vadd.f32 0.0, %v735
  %737 = vmatmul.bf16.gmra.mxu0 %v546
  %v738 = vpop.f32.mrf.mxu0
  %v739 = vadd.f32 0.0, %v738
  %v740 = vpop.f32.mrf.mxu0
  %v741 = vadd.f32 0.0, %v740
  %742 = vmatmul.bf16.gmra.mxu0 %v549
  %v743 = vpop.f32.mrf.mxu0
  %v744 = vadd.f32 0.0, %v743
  %v745 = vpop.f32.mrf.mxu0
  %v746 = vadd.f32 0.0, %v745
  %747 = vmatmul.bf16.gmra.mxu0 %v552
  %v748 = vpop.f32.mrf.mxu0
  %v749 = vadd.f32 0.0, %v748
  %v750 = vpop.f32.mrf.mxu0
  %v751 = vadd.f32 0.0, %v750
  %752 = vmatmul.bf16.gmra.mxu0 %v555
  %v753 = vpop.f32.mrf.mxu0
  %v754 = vadd.f32 0.0, %v753
  %v755 = vpop.f32.mrf.mxu0
  %v756 = vadd.f32 0.0, %v755
  %757 = vmatmul.bf16.gmra.mxu0 %v558
  %v758 = vpop.f32.mrf.mxu0
  %v759 = vadd.f32 0.0, %v758
  %v760 = vpop.f32.mrf.mxu0
  %v761 = vadd.f32 0.0, %v760
  %762 = vmatmul.bf16.gmra.mxu0 %v561
  %v763 = vpop.f32.mrf.mxu0
  %v764 = vadd.f32 0.0, %v763
  %v765 = vpop.f32.mrf.mxu0
  %v766 = vadd.f32 0.0, %v765
  %767 = vmatmul.bf16.gmra.mxu0 %v564
  %v768 = vpop.f32.mrf.mxu0
  %v769 = vadd.f32 0.0, %v768
  %v770 = vpop.f32.mrf.mxu0
  %v771 = vadd.f32 0.0, %v770
  %772 = vmatmul.bf16.gmra.mxu0 %v567
  %v773 = vpop.f32.mrf.mxu0
  %v774 = vadd.f32 0.0, %v773
  %v775 = vpop.f32.mrf.mxu0
  %v776 = vadd.f32 0.0, %v775
  %777 = vmatmul.bf16.gmra.mxu0 %v570
  %v778 = vpop.f32.mrf.mxu0
  %v779 = vadd.f32 0.0, %v778
  %v780 = vpop.f32.mrf.mxu0
  %v781 = vadd.f32 0.0, %v780
  %782 = vmatmul.bf16.gmra.mxu0 %v573
  %v783 = vpop.f32.mrf.mxu0
  %v784 = vadd.f32 0.0, %v783
  %v785 = vpop.f32.mrf.mxu0
  %v786 = vadd.f32 0.0, %v785
  %787 = vmatmul.bf16.gmra.mxu0 %v576
  %v788 = vpop.f32.mrf.mxu0
  %v789 = vadd.f32 0.0, %v788
  %v790 = vpop.f32.mrf.mxu0
  %v791 = vadd.f32 0.0, %v790
  %792 = vmatmul.bf16.gmra.mxu0 %v579
  %v793 = vpop.f32.mrf.mxu0
  %v794 = vadd.f32 0.0, %v793
  %v795 = vpop.f32.mrf.mxu0
  %v796 = vadd.f32 0.0, %v795
  %797 = vmatmul.bf16.gmra.mxu0 %v582
  %v798 = vpop.f32.mrf.mxu0
  %v799 = vadd.f32 0.0, %v798
  %v800 = vpop.f32.mrf.mxu0
  %v801 = vadd.f32 0.0, %v800
  %802 = vmatmul.bf16.gmra.mxu0 %v585
  %v803 = vpop.f32.mrf.mxu0
  %v804 = vadd.f32 0.0, %v803
  %v805 = vpop.f32.mrf.mxu0
  %v806 = vadd.f32 0.0, %v805
  %807 = vmatmul.bf16.gmra.mxu0 %v588
  %v808 = vpop.f32.mrf.mxu0
  %v809 = vadd.f32 0.0, %v808
  %v810 = vpop.f32.mrf.mxu0
  %v811 = vadd.f32 0.0, %v810
  %812 = vmatmul.bf16.gmra.mxu0 %v591
  %v813 = vpop.f32.mrf.mxu0
  %v814 = vadd.f32 0.0, %v813
  %v815 = vpop.f32.mrf.mxu0
  %v816 = vadd.f32 0.0, %v815
  %817 = vmatmul.bf16.gmra.mxu0 %v594
  %v818 = vpop.f32.mrf.mxu0
  %v819 = vadd.f32 0.0, %v818
  %v820 = vpop.f32.mrf.mxu0
  %v821 = vadd.f32 0.0, %v820
  %822 = vmatmul.bf16.gmra.mxu0 %v597
  %v823 = vpop.f32.mrf.mxu0
  %v824 = vadd.f32 0.0, %v823
  %v825 = vpop.f32.mrf.mxu0
  %v826 = vadd.f32 0.0, %v825
  %827 = vmatmul.bf16.gmra.mxu0 %v600
  %v828 = vpop.f32.mrf.mxu0
  %v829 = vadd.f32 0.0, %v828
  %v830 = vpop.f32.mrf.mxu0
  %v831 = vadd.f32 0.0, %v830
  %832 = vmatmul.bf16.gmra.mxu0 %v603
  %v833 = vpop.f32.mrf.mxu0
  %v834 = vadd.f32 0.0, %v833
  %v835 = vpop.f32.mrf.mxu0
  %v836 = vadd.f32 0.0, %v835
  %837 = vmatmul.bf16.gmra.mxu0 %v606
  %v838 = vpop.f32.mrf.mxu0
  %v839 = vadd.f32 0.0, %v838
  %v840 = vpop.f32.mrf.mxu0
  %v841 = vadd.f32 0.0, %v840
  %842 = vmatmul.bf16.gmra.mxu0 %v609
  %v843 = vpop.f32.mrf.mxu0
  %v844 = vadd.f32 0.0, %v843
  %v845 = vpop.f32.mrf.mxu0
  %v846 = vadd.f32 0.0, %v845
  %847 = vmatmul.bf16.gmra.mxu0 %v612
  %v848 = vpop.f32.mrf.mxu0
  %v849 = vadd.f32 0.0, %v848
  %v850 = vpop.f32.mrf.mxu0
  %v851 = vadd.f32 0.0, %v850
  %852 = vmatmul.bf16.gmra.mxu0 %v615
  %v853 = vpop.f32.mrf.mxu0
  %v854 = vadd.f32 0.0, %v853
  %v855 = vpop.f32.mrf.mxu0
  %v856 = vadd.f32 0.0, %v855
  %857 = vmatmul.bf16.gmra.mxu0 %v618
  %v858 = vpop.f32.mrf.mxu0
  %v859 = vadd.f32 0.0, %v858
  %v860 = vpop.f32.mrf.mxu0
  %v861 = vadd.f32 0.0, %v860
  %862 = vmatmul.bf16.gmra.mxu0 %v621
  %v863 = vpop.f32.mrf.mxu0
  %v864 = vadd.f32 0.0, %v863
  %v865 = vpop.f32.mrf.mxu0
  %v866 = vadd.f32 0.0, %v865
  %867 = vmatmul.bf16.gmra.mxu0 %v624
  %v868 = vpop.f32.mrf.mxu0
  %v869 = vadd.f32 0.0, %v868
  %v870 = vpop.f32.mrf.mxu0
  %v871 = vadd.f32 0.0, %v870
  %872 = vmatmul.bf16.gmra.mxu0 %v627
  %v873 = vpop.f32.mrf.mxu0
  %v874 = vadd.f32 0.0, %v873
  %v875 = vpop.f32.mrf.mxu0
  %v876 = vadd.f32 0.0, %v875
  %877 = vmatmul.bf16.gmra.mxu0 %v630
  %v878 = vpop.f32.mrf.mxu0
  %v879 = vadd.f32 0.0, %v878
  %v880 = vpop.f32.mrf.mxu0
  %v881 = vadd.f32 0.0, %v880
  %882 = vmatmul.bf16.gmra.mxu0 %v633
  %v883 = vpop.f32.mrf.mxu0
  %v884 = vadd.f32 0.0, %v883
  %v885 = vpop.f32.mrf.mxu0
  %v886 = vadd.f32 0.0, %v885
  %887 = vmatmul.bf16.gmra.mxu0 %v636
  %v888 = vpop.f32.mrf.mxu0
  %v889 = vadd.f32 0.0, %v888
  %v890 = vpop.f32.mrf.mxu0
  %v891 = vadd.f32 0.0, %v890
  %892 = vmatmul.bf16.gmra.mxu0 %v639
  %v893 = vpop.f32.mrf.mxu0
  %v894 = vadd.f32 0.0, %v893
  %v895 = vpop.f32.mrf.mxu0
  %v896 = vadd.f32 0.0, %v895
  %897 = vmatmul.bf16.gmra.mxu0 %v642
  %v898 = vpop.f32.mrf.mxu0
  %v899 = vadd.f32 0.0, %v898
  %v900 = vpop.f32.mrf.mxu0
  %v901 = vadd.f32 0.0, %v900
  %902 = vdwg.mxu0
  %v1003 = vunpack.c.l.b16 %v33
  %v1004 = vunpack.c.l.b16 %v34
  %v1005 = vunpack.c.l.b16 %v35
  %v1006 = vunpack.c.l.b16 %v36
  %v1007 = vunpack.c.l.b16 %v37
  %v1008 = vunpack.c.l.b16 %v38
  %v1009 = vunpack.c.l.b16 %v39
  %v1010 = vunpack.c.l.b16 %v40
  %v1011 = vunpack.c.l.b16 %v41
  %v1012 = vunpack.c.l.b16 %v42
  %v1013 = vunpack.c.l.b16 %v43
  %v1014 = vunpack.c.l.b16 %v44
  %v1015 = vunpack.c.l.b16 %v45
  %v1016 = vunpack.c.l.b16 %v46
  %v1017 = vunpack.c.l.b16 %v47
  %v1018 = vunpack.c.l.b16 %v48
  %v1019 = vunpack.c.l.b16 %v49
  %v1020 = vunpack.c.l.b16 %v50
  %v1021 = vunpack.c.l.b16 %v51
  %v1022 = vunpack.c.l.b16 %v52
  %v1023 = vunpack.c.l.b16 %v53
  %v1024 = vunpack.c.l.b16 %v54
  %v1025 = vunpack.c.l.b16 %v55
  %v1026 = vunpack.c.l.b16 %v56
  %v1027 = vunpack.c.l.b16 %v57
  %v1028 = vunpack.c.l.b16 %v58
  %v1029 = vunpack.c.l.b16 %v59
  %v1030 = vunpack.c.l.b16 %v60
  %v1031 = vunpack.c.l.b16 %v61
  %v1032 = vunpack.c.l.b16 %v62
  %v1033 = vunpack.c.l.b16 %v63
  %v1034 = vunpack.c.l.b16 %v64
  %v1035 = vunpack.c.l.b16 %v65
  %v1036 = vunpack.c.l.b16 %v66
  %v1037 = vunpack.c.l.b16 %v67
  %v1038 = vunpack.c.l.b16 %v68
  %v1039 = vunpack.c.l.b16 %v69
  %v1040 = vunpack.c.l.b16 %v70
  %v1041 = vunpack.c.l.b16 %v71
  %v1042 = vunpack.c.l.b16 %v72
  %v1043 = vunpack.c.l.b16 %v73
  %v1044 = vunpack.c.l.b16 %v74
  %v1045 = vunpack.c.l.b16 %v75
  %v1046 = vunpack.c.l.b16 %v76
  %v1047 = vunpack.c.l.b16 %v77
  %v1048 = vunpack.c.l.b16 %v78
  %v1049 = vunpack.c.l.b16 %v79
  %v1050 = vunpack.c.l.b16 %v80
  %v1051 = vunpack.c.l.b16 %v81
  %v1052 = vunpack.c.l.b16 %v82
  %v1053 = vunpack.c.l.b16 %v83
  %v1054 = vunpack.c.l.b16 %v84
  %v1055 = vunpack.c.l.b16 %v85
  %v1056 = vunpack.c.l.b16 %v86
  %v1057 = vunpack.c.l.b16 %v87
  %v1058 = vunpack.c.l.b16 %v88
  %v1059 = vunpack.c.l.b16 %v89
  %v1060 = vunpack.c.l.b16 %v90
  %v1061 = vunpack.c.l.b16 %v91
  %v1062 = vunpack.c.l.b16 %v92
  %v1063 = vunpack.c.l.b16 %v93
  %v1064 = vunpack.c.l.b16 %v94
  %v1065 = vunpack.c.l.b16 %v95
  %v1066 = vunpack.c.l.b16 %v96
  %v1067 = vunpack.c.l.b16 %v97
  %v1068 = vunpack.c.l.b16 %v98
  %v1069 = vunpack.c.l.b16 %v99
  %v1070 = vunpack.c.l.b16 %v100
  %v1071 = vunpack.c.l.b16 %v101
  %v1072 = vunpack.c.l.b16 %v102
  %v1073 = vunpack.c.l.b16 %v103
  %v1074 = vunpack.c.l.b16 %v104
  %v1075 = vunpack.c.l.b16 %v105
  %v1076 = vunpack.c.l.b16 %v106
  %v1077 = vunpack.c.l.b16 %v107
  %v1078 = vunpack.c.l.b16 %v108
  %v1079 = vunpack.c.l.b16 %v109
  %v1080 = vunpack.c.l.b16 %v110
  %v1081 = vunpack.c.l.b16 %v111
  %v1082 = vunpack.c.l.b16 %v112
  %v1083 = vunpack.c.l.b16 %v113
  %v1084 = vunpack.c.l.b16 %v114
  %v1085 = vunpack.c.l.b16 %v115
  %v1086 = vunpack.c.l.b16 %v116
  %v1087 = vunpack.c.l.b16 %v117
  %v1088 = vunpack.c.l.b16 %v118
  %v1089 = vunpack.c.l.b16 %v119
  %v1090 = vunpack.c.l.b16 %v120
  %v1091 = vunpack.c.l.b16 %v121
  %v1092 = vunpack.c.l.b16 %v122
  %v1093 = vunpack.c.l.b16 %v123
  %v1094 = vunpack.c.l.b16 %v124
  %v1095 = vunpack.c.l.b16 %v125
  %v1096 = vunpack.c.l.b16 %v126
  %v1097 = vunpack.c.l.b16 %v127
  %v1098 = vunpack.c.l.b16 %v128
  %v1099 = vunpack.c.l.b16 %v129
  %v1100 = vunpack.c.l.b16 %v130
  %v1101 = vunpack.c.l.b16 %v131
  %v1102 = vunpack.c.l.b16 %v132
  %v1103 = vpack.c.b16 %v1004, %v1003
  %v1104 = vpack.c.b16 %v1006, %v1005
  %v1105 = vpack.c.b16 %v1008, %v1007
  %v1106 = vpack.c.b16 %v1010, %v1009
  %v1107 = vpack.c.b16 %v1012, %v1011
  %v1108 = vpack.c.b16 %v1014, %v1013
  %v1109 = vpack.c.b16 %v1016, %v1015
  %v1110 = vpack.c.b16 %v1018, %v1017
  %v1111 = vpack.c.b16 %v1020, %v1019
  %v1112 = vpack.c.b16 %v1022, %v1021
  %v1113 = vpack.c.b16 %v1024, %v1023
  %v1114 = vpack.c.b16 %v1026, %v1025
  %v1115 = vpack.c.b16 %v1028, %v1027
  %v1116 = vpack.c.b16 %v1030, %v1029
  %v1117 = vpack.c.b16 %v1032, %v1031
  %v1118 = vpack.c.b16 %v1034, %v1033
  %v1119 = vpack.c.b16 %v1036, %v1035
  %v1120 = vpack.c.b16 %v1038, %v1037
  %v1121 = vpack.c.b16 %v1040, %v1039
  %v1122 = vpack.c.b16 %v1042, %v1041
  %v1123 = vpack.c.b16 %v1044, %v1043
  %v1124 = vpack.c.b16 %v1046, %v1045
  %v1125 = vpack.c.b16 %v1048, %v1047
  %v1126 = vpack.c.b16 %v1050, %v1049
  %v1127 = vpack.c.b16 %v1052, %v1051
  %v1128 = vpack.c.b16 %v1054, %v1053
  %v1129 = vpack.c.b16 %v1056, %v1055
  %v1130 = vpack.c.b16 %v1058, %v1057
  %v1131 = vpack.c.b16 %v1060, %v1059
  %v1132 = vpack.c.b16 %v1062, %v1061
  %v1133 = vpack.c.b16 %v1064, %v1063
  %v1134 = vpack.c.b16 %v1066, %v1065
  %v1135 = vpack.c.b16 %v1068, %v1067
  %v1136 = vpack.c.b16 %v1070, %v1069
  %v1137 = vpack.c.b16 %v1072, %v1071
  %v1138 = vpack.c.b16 %v1074, %v1073
  %v1139 = vpack.c.b16 %v1076, %v1075
  %v1140 = vpack.c.b16 %v1078, %v1077
  %v1141 = vpack.c.b16 %v1080, %v1079
  %v1142 = vpack.c.b16 %v1082, %v1081
  %v1143 = vpack.c.b16 %v1084, %v1083
  %v1144 = vpack.c.b16 %v1086, %v1085
  %v1145 = vpack.c.b16 %v1088, %v1087
  %v1146 = vpack.c.b16 %v1090, %v1089
  %v1147 = vpack.c.b16 %v1092, %v1091
  %v1148 = vpack.c.b16 %v1094, %v1093
  %v1149 = vpack.c.b16 %v1096, %v1095
  %v1150 = vpack.c.b16 %v1098, %v1097
  %v1151 = vpack.c.b16 %v1100, %v1099
  %v1152 = vpack.c.b16 %v1102, %v1101
  %v1155 = vunpack.c.l.b16 %v133
  %v1156 = vunpack.c.l.b16 %v134
  %v1157 = vpack.c.b16 %v1156, %v1155
  %v1160 = vsel %vm493, %v1103, 0
  %v1163 = vsel %vm493, %v1104, 0
  %v1166 = vsel %vm493, %v1105, 0
  %v1169 = vsel %vm493, %v1106, 0
  %v1172 = vsel %vm493, %v1107, 0
  %v1175 = vsel %vm493, %v1108, 0
  %v1178 = vsel %vm493, %v1109, 0
  %v1181 = vsel %vm493, %v1110, 0
  %v1184 = vsel %vm493, %v1111, 0
  %v1187 = vsel %vm493, %v1112, 0
  %v1190 = vsel %vm493, %v1113, 0
  %v1193 = vsel %vm493, %v1114, 0
  %v1196 = vsel %vm493, %v1115, 0
  %v1199 = vsel %vm493, %v1116, 0
  %v1202 = vsel %vm493, %v1117, 0
  %v1205 = vsel %vm493, %v1118, 0
  %v1208 = vsel %vm493, %v1119, 0
  %v1211 = vsel %vm493, %v1120, 0
  %v1214 = vsel %vm493, %v1121, 0
  %v1217 = vsel %vm493, %v1122, 0
  %v1220 = vsel %vm493, %v1123, 0
  %v1223 = vsel %vm493, %v1124, 0
  %v1226 = vsel %vm493, %v1125, 0
  %v1229 = vsel %vm493, %v1126, 0
  %v1232 = vsel %vm493, %v1127, 0
  %v1235 = vsel %vm493, %v1128, 0
  %v1238 = vsel %vm493, %v1129, 0
  %v1241 = vsel %vm493, %v1130, 0
  %v1244 = vsel %vm493, %v1131, 0
  %v1247 = vsel %vm493, %v1132, 0
  %v1250 = vsel %vm493, %v1133, 0
  %v1253 = vsel %vm493, %v1134, 0
  %v1256 = vsel %vm493, %v1135, 0
  %v1259 = vsel %vm493, %v1136, 0
  %v1262 = vsel %vm493, %v1137, 0
  %v1265 = vsel %vm493, %v1138, 0
  %v1268 = vsel %vm493, %v1139, 0
  %v1271 = vsel %vm493, %v1140, 0
  %v1274 = vsel %vm493, %v1141, 0
  %v1277 = vsel %vm493, %v1142, 0
  %v1280 = vsel %vm493, %v1143, 0
  %v1283 = vsel %vm493, %v1144, 0
  %v1286 = vsel %vm493, %v1145, 0
  %v1289 = vsel %vm493, %v1146, 0
  %v1292 = vsel %vm493, %v1147, 0
  %v1295 = vsel %vm493, %v1148, 0
  %v1298 = vsel %vm493, %v1149, 0
  %v1301 = vsel %vm493, %v1150, 0
  %v1304 = vsel %vm493, %v1151, 0
  %v1307 = vsel %vm493, %v1152, 0
  %1309 = vmatpush.bf16.msra.mxu0 0
  %1310 = vmatpush.bf16.msra.mxu0 0
  %1311 = vmatpush.bf16.msra.mxu0 0
  %1312 = vmatpush.bf16.msra.mxu0 0
  %1313 = vmatpush.bf16.msra.mxu0 0
  %1314 = vmatpush.bf16.msra.mxu0 0
  %1315 = vmatpush.bf16.msra.mxu0 0
  %1316 = vmatpush.bf16.msra.mxu0 %v1157
  %1317 = vmatmul.bf16.gmra.mxu0 %v1160
  %v1318 = vpop.f32.mrf.mxu0
  %v1319 = vadd.f32 %v654, %v1318
  %v1320 = vpop.f32.mrf.mxu0
  %v1321 = vadd.f32 %v656, %v1320
  %1322 = vmatmul.bf16.gmra.mxu0 %v1163
  %v1323 = vpop.f32.mrf.mxu0
  %v1324 = vadd.f32 %v659, %v1323
  %v1325 = vpop.f32.mrf.mxu0
  %v1326 = vadd.f32 %v661, %v1325
  %1327 = vmatmul.bf16.gmra.mxu0 %v1166
  %v1328 = vpop.f32.mrf.mxu0
  %v1329 = vadd.f32 %v664, %v1328
  %v1330 = vpop.f32.mrf.mxu0
  %v1331 = vadd.f32 %v666, %v1330
  %1332 = vmatmul.bf16.gmra.mxu0 %v1169
  %v1333 = vpop.f32.mrf.mxu0
  %v1334 = vadd.f32 %v669, %v1333
  %v1335 = vpop.f32.mrf.mxu0
  %v1336 = vadd.f32 %v671, %v1335
  %1337 = vmatmul.bf16.gmra.mxu0 %v1172
  %v1338 = vpop.f32.mrf.mxu0
  %v1339 = vadd.f32 %v674, %v1338
  %v1340 = vpop.f32.mrf.mxu0
  %v1341 = vadd.f32 %v676, %v1340
  %1342 = vmatmul.bf16.gmra.mxu0 %v1175
  %v1343 = vpop.f32.mrf.mxu0
  %v1344 = vadd.f32 %v679, %v1343
  %v1345 = vpop.f32.mrf.mxu0
  %v1346 = vadd.f32 %v681, %v1345
  %1347 = vmatmul.bf16.gmra.mxu0 %v1178
  %v1348 = vpop.f32.mrf.mxu0
  %v1349 = vadd.f32 %v684, %v1348
  %v1350 = vpop.f32.mrf.mxu0
  %v1351 = vadd.f32 %v686, %v1350
  %1352 = vmatmul.bf16.gmra.mxu0 %v1181
  %v1353 = vpop.f32.mrf.mxu0
  %v1354 = vadd.f32 %v689, %v1353
  %v1355 = vpop.f32.mrf.mxu0
  %v1356 = vadd.f32 %v691, %v1355
  %1357 = vmatmul.bf16.gmra.mxu0 %v1184
  %v1358 = vpop.f32.mrf.mxu0
  %v1359 = vadd.f32 %v694, %v1358
  %v1360 = vpop.f32.mrf.mxu0
  %v1361 = vadd.f32 %v696, %v1360
  %1362 = vmatmul.bf16.gmra.mxu0 %v1187
  %v1363 = vpop.f32.mrf.mxu0
  %v1364 = vadd.f32 %v699, %v1363
  %v1365 = vpop.f32.mrf.mxu0
  %v1366 = vadd.f32 %v701, %v1365
  %1367 = vmatmul.bf16.gmra.mxu0 %v1190
  %v1368 = vpop.f32.mrf.mxu0
  %v1369 = vadd.f32 %v704, %v1368
  %v1370 = vpop.f32.mrf.mxu0
  %v1371 = vadd.f32 %v706, %v1370
  %1372 = vmatmul.bf16.gmra.mxu0 %v1193
  %v1373 = vpop.f32.mrf.mxu0
  %v1374 = vadd.f32 %v709, %v1373
  %v1375 = vpop.f32.mrf.mxu0
  %v1376 = vadd.f32 %v711, %v1375
  %1377 = vmatmul.bf16.gmra.mxu0 %v1196
  %v1378 = vpop.f32.mrf.mxu0
  %v1379 = vadd.f32 %v714, %v1378
  %v1380 = vpop.f32.mrf.mxu0
  %v1381 = vadd.f32 %v716, %v1380
  %1382 = vmatmul.bf16.gmra.mxu0 %v1199
  %v1383 = vpop.f32.mrf.mxu0
  %v1384 = vadd.f32 %v719, %v1383
  %v1385 = vpop.f32.mrf.mxu0
  %v1386 = vadd.f32 %v721, %v1385
  %1387 = vmatmul.bf16.gmra.mxu0 %v1202
  %v1388 = vpop.f32.mrf.mxu0
  %v1389 = vadd.f32 %v724, %v1388
  %v1390 = vpop.f32.mrf.mxu0
  %v1391 = vadd.f32 %v726, %v1390
  %1392 = vmatmul.bf16.gmra.mxu0 %v1205
  %v1393 = vpop.f32.mrf.mxu0
  %v1394 = vadd.f32 %v729, %v1393
  %v1395 = vpop.f32.mrf.mxu0
  %v1396 = vadd.f32 %v731, %v1395
  %1397 = vmatmul.bf16.gmra.mxu0 %v1208
  %v1398 = vpop.f32.mrf.mxu0
  %v1399 = vadd.f32 %v734, %v1398
  %v1400 = vpop.f32.mrf.mxu0
  %v1401 = vadd.f32 %v736, %v1400
  %1402 = vmatmul.bf16.gmra.mxu0 %v1211
  %v1403 = vpop.f32.mrf.mxu0
  %v1404 = vadd.f32 %v739, %v1403
  %v1405 = vpop.f32.mrf.mxu0
  %v1406 = vadd.f32 %v741, %v1405
  %1407 = vmatmul.bf16.gmra.mxu0 %v1214
  %v1408 = vpop.f32.mrf.mxu0
  %v1409 = vadd.f32 %v744, %v1408
  %v1410 = vpop.f32.mrf.mxu0
  %v1411 = vadd.f32 %v746, %v1410
  %1412 = vmatmul.bf16.gmra.mxu0 %v1217
  %v1413 = vpop.f32.mrf.mxu0
  %v1414 = vadd.f32 %v749, %v1413
  %v1415 = vpop.f32.mrf.mxu0
  %v1416 = vadd.f32 %v751, %v1415
  %1417 = vmatmul.bf16.gmra.mxu0 %v1220
  %v1418 = vpop.f32.mrf.mxu0
  %v1419 = vadd.f32 %v754, %v1418
  %v1420 = vpop.f32.mrf.mxu0
  %v1421 = vadd.f32 %v756, %v1420
  %1422 = vmatmul.bf16.gmra.mxu0 %v1223
  %v1423 = vpop.f32.mrf.mxu0
  %v1424 = vadd.f32 %v759, %v1423
  %v1425 = vpop.f32.mrf.mxu0
  %v1426 = vadd.f32 %v761, %v1425
  %1427 = vmatmul.bf16.gmra.mxu0 %v1226
  %v1428 = vpop.f32.mrf.mxu0
  %v1429 = vadd.f32 %v764, %v1428
  %v1430 = vpop.f32.mrf.mxu0
  %v1431 = vadd.f32 %v766, %v1430
  %1432 = vmatmul.bf16.gmra.mxu0 %v1229
  %v1433 = vpop.f32.mrf.mxu0
  %v1434 = vadd.f32 %v769, %v1433
  %v1435 = vpop.f32.mrf.mxu0
  %v1436 = vadd.f32 %v771, %v1435
  %1437 = vmatmul.bf16.gmra.mxu0 %v1232
  %v1438 = vpop.f32.mrf.mxu0
  %v1439 = vadd.f32 %v774, %v1438
  %v1440 = vpop.f32.mrf.mxu0
  %v1441 = vadd.f32 %v776, %v1440
  %1442 = vmatmul.bf16.gmra.mxu0 %v1235
  %v1443 = vpop.f32.mrf.mxu0
  %v1444 = vadd.f32 %v779, %v1443
  %v1445 = vpop.f32.mrf.mxu0
  %v1446 = vadd.f32 %v781, %v1445
  %1447 = vmatmul.bf16.gmra.mxu0 %v1238
  %v1448 = vpop.f32.mrf.mxu0
  %v1449 = vadd.f32 %v784, %v1448
  %v1450 = vpop.f32.mrf.mxu0
  %v1451 = vadd.f32 %v786, %v1450
  %1452 = vmatmul.bf16.gmra.mxu0 %v1241
  %v1453 = vpop.f32.mrf.mxu0
  %v1454 = vadd.f32 %v789, %v1453
  %v1455 = vpop.f32.mrf.mxu0
  %v1456 = vadd.f32 %v791, %v1455
  %1457 = vmatmul.bf16.gmra.mxu0 %v1244
  %v1458 = vpop.f32.mrf.mxu0
  %v1459 = vadd.f32 %v794, %v1458
  %v1460 = vpop.f32.mrf.mxu0
  %v1461 = vadd.f32 %v796, %v1460
  %1462 = vmatmul.bf16.gmra.mxu0 %v1247
  %v1463 = vpop.f32.mrf.mxu0
  %v1464 = vadd.f32 %v799, %v1463
  %v1465 = vpop.f32.mrf.mxu0
  %v1466 = vadd.f32 %v801, %v1465
  %1467 = vmatmul.bf16.gmra.mxu0 %v1250
  %v1468 = vpop.f32.mrf.mxu0
  %v1469 = vadd.f32 %v804, %v1468
  %v1470 = vpop.f32.mrf.mxu0
  %v1471 = vadd.f32 %v806, %v1470
  %1472 = vmatmul.bf16.gmra.mxu0 %v1253
  %v1473 = vpop.f32.mrf.mxu0
  %v1474 = vadd.f32 %v809, %v1473
  %v1475 = vpop.f32.mrf.mxu0
  %v1476 = vadd.f32 %v811, %v1475
  %1477 = vmatmul.bf16.gmra.mxu0 %v1256
  %v1478 = vpop.f32.mrf.mxu0
  %v1479 = vadd.f32 %v814, %v1478
  %v1480 = vpop.f32.mrf.mxu0
  %v1481 = vadd.f32 %v816, %v1480
  %1482 = vmatmul.bf16.gmra.mxu0 %v1259
  %v1483 = vpop.f32.mrf.mxu0
  %v1484 = vadd.f32 %v819, %v1483
  %v1485 = vpop.f32.mrf.mxu0
  %v1486 = vadd.f32 %v821, %v1485
  %1487 = vmatmul.bf16.gmra.mxu0 %v1262
  %v1488 = vpop.f32.mrf.mxu0
  %v1489 = vadd.f32 %v824, %v1488
  %v1490 = vpop.f32.mrf.mxu0
  %v1491 = vadd.f32 %v826, %v1490
  %1492 = vmatmul.bf16.gmra.mxu0 %v1265
  %v1493 = vpop.f32.mrf.mxu0
  %v1494 = vadd.f32 %v829, %v1493
  %v1495 = vpop.f32.mrf.mxu0
  %v1496 = vadd.f32 %v831, %v1495
  %1497 = vmatmul.bf16.gmra.mxu0 %v1268
  %v1498 = vpop.f32.mrf.mxu0
  %v1499 = vadd.f32 %v834, %v1498
  %v1500 = vpop.f32.mrf.mxu0
  %v1501 = vadd.f32 %v836, %v1500
  %1502 = vmatmul.bf16.gmra.mxu0 %v1271
  %v1503 = vpop.f32.mrf.mxu0
  %v1504 = vadd.f32 %v839, %v1503
  %v1505 = vpop.f32.mrf.mxu0
  %v1506 = vadd.f32 %v841, %v1505
  %1507 = vmatmul.bf16.gmra.mxu0 %v1274
  %v1508 = vpop.f32.mrf.mxu0
  %v1509 = vadd.f32 %v844, %v1508
  %v1510 = vpop.f32.mrf.mxu0
  %v1511 = vadd.f32 %v846, %v1510
  %1512 = vmatmul.bf16.gmra.mxu0 %v1277
  %v1513 = vpop.f32.mrf.mxu0
  %v1514 = vadd.f32 %v849, %v1513
  %v1515 = vpop.f32.mrf.mxu0
  %v1516 = vadd.f32 %v851, %v1515
  %1517 = vmatmul.bf16.gmra.mxu0 %v1280
  %v1518 = vpop.f32.mrf.mxu0
  %v1519 = vadd.f32 %v854, %v1518
  %v1520 = vpop.f32.mrf.mxu0
  %v1521 = vadd.f32 %v856, %v1520
  %1522 = vmatmul.bf16.gmra.mxu0 %v1283
  %v1523 = vpop.f32.mrf.mxu0
  %v1524 = vadd.f32 %v859, %v1523
  %v1525 = vpop.f32.mrf.mxu0
  %v1526 = vadd.f32 %v861, %v1525
  %1527 = vmatmul.bf16.gmra.mxu0 %v1286
  %v1528 = vpop.f32.mrf.mxu0
  %v1529 = vadd.f32 %v864, %v1528
  %v1530 = vpop.f32.mrf.mxu0
  %v1531 = vadd.f32 %v866, %v1530
  %1532 = vmatmul.bf16.gmra.mxu0 %v1289
  %v1533 = vpop.f32.mrf.mxu0
  %v1534 = vadd.f32 %v869, %v1533
  %v1535 = vpop.f32.mrf.mxu0
  %v1536 = vadd.f32 %v871, %v1535
  %1537 = vmatmul.bf16.gmra.mxu0 %v1292
  %v1538 = vpop.f32.mrf.mxu0
  %v1539 = vadd.f32 %v874, %v1538
  %v1540 = vpop.f32.mrf.mxu0
  %v1541 = vadd.f32 %v876, %v1540
  %1542 = vmatmul.bf16.gmra.mxu0 %v1295
  %v1543 = vpop.f32.mrf.mxu0
  %v1544 = vadd.f32 %v879, %v1543
  %v1545 = vpop.f32.mrf.mxu0
  %v1546 = vadd.f32 %v881, %v1545
  %1547 = vmatmul.bf16.gmra.mxu0 %v1298
  %v1548 = vpop.f32.mrf.mxu0
  %v1549 = vadd.f32 %v884, %v1548
  %v1550 = vpop.f32.mrf.mxu0
  %v1551 = vadd.f32 %v886, %v1550
  %1552 = vmatmul.bf16.gmra.mxu0 %v1301
  %v1553 = vpop.f32.mrf.mxu0
  %v1554 = vadd.f32 %v889, %v1553
  %v1555 = vpop.f32.mrf.mxu0
  %v1556 = vadd.f32 %v891, %v1555
  %1557 = vmatmul.bf16.gmra.mxu0 %v1304
  %v1558 = vpop.f32.mrf.mxu0
  %v1559 = vadd.f32 %v894, %v1558
  %v1560 = vpop.f32.mrf.mxu0
  %v1561 = vadd.f32 %v896, %v1560
  %1562 = vmatmul.bf16.gmra.mxu0 %v1307
  %v1563 = vpop.f32.mrf.mxu0
  %v1564 = vadd.f32 %v899, %v1563
  %v1565 = vpop.f32.mrf.mxu0
  %v1566 = vadd.f32 %v901, %v1565
  %1567 = vdwg.mxu0
  %v1568 = vld [vmem:[%s2] sm:$0xf]
  %v1569 = vld [vmem:[%s2 + $0x4] sm:$0xf]
  %v1570 = vld [vmem:[%s2 + $0x8] sm:$0xf]
  %v1571 = vld [vmem:[%s2 + $0xc] sm:$0xf]
  %v1572 = vld [vmem:[%s2 + $0x10] sm:$0xf]
  %v1573 = vld [vmem:[%s2 + $0x14] sm:$0xf]
  %v1574 = vld [vmem:[%s2 + $0x18] sm:$0xf]
  %v1575 = vld [vmem:[%s2 + $0x1c] sm:$0xf]
  %v1576 = vld [vmem:[%s2 + $0x20] sm:$0xf]
  %v1577 = vld [vmem:[%s2 + $0x24] sm:$0xf]
  %v1578 = vld [vmem:[%s2 + $0x28] sm:$0xf]
  %v1579 = vld [vmem:[%s2 + $0x2c] sm:$0xf]
  %v1580 = vld [vmem:[%s2 + $0x30] sm:$0xf]
  %v1581 = vld [vmem:[%s2 + $0x34] sm:$0xf]
  %v1582 = vld [vmem:[%s2 + $0x38] sm:$0xf]
  %v1583 = vld [vmem:[%s2 + $0x3c] sm:$0xf]
  %v1584 = vld [vmem:[%s2 + $0x40] sm:$0xf]
  %v1585 = vld [vmem:[%s2 + $0x44] sm:$0xf]
  %v1586 = vld [vmem:[%s2 + $0x48] sm:$0xf]
  %v1587 = vld [vmem:[%s2 + $0x4c] sm:$0xf]
  %v1588 = vld [vmem:[%s2 + $0x50] sm:$0xf]
  %v1589 = vld [vmem:[%s2 + $0x54] sm:$0xf]
  %v1590 = vld [vmem:[%s2 + $0x58] sm:$0xf]
  %v1591 = vld [vmem:[%s2 + $0x5c] sm:$0xf]
  %v1592 = vld [vmem:[%s2 + $0x60] sm:$0xf]
  %v1593 = vld [vmem:[%s2 + $0x64] sm:$0xf]
  %v1594 = vld [vmem:[%s2 + $0x68] sm:$0xf]
  %v1595 = vld [vmem:[%s2 + $0x6c] sm:$0xf]
  %v1596 = vld [vmem:[%s2 + $0x70] sm:$0xf]
  %v1597 = vld [vmem:[%s2 + $0x74] sm:$0xf]
  %v1598 = vld [vmem:[%s2 + $0x78] sm:$0xf]
  %v1599 = vld [vmem:[%s2 + $0x7c] sm:$0xf]
  %v1600 = vld [vmem:[%s2 + $0x80] sm:$0xf]
  %v1601 = vld [vmem:[%s2 + $0x84] sm:$0xf]
  %v1602 = vld [vmem:[%s2 + $0x88] sm:$0xf]
  %v1603 = vld [vmem:[%s2 + $0x8c] sm:$0xf]
  %v1604 = vld [vmem:[%s2 + $0x90] sm:$0xf]
  %v1605 = vld [vmem:[%s2 + $0x94] sm:$0xf]
  %v1606 = vld [vmem:[%s2 + $0x98] sm:$0xf]
  %v1607 = vld [vmem:[%s2 + $0x9c] sm:$0xf]
  %v1608 = vld [vmem:[%s2 + $0xa0] sm:$0xf]
  %v1609 = vld [vmem:[%s2 + $0xa4] sm:$0xf]
  %v1610 = vld [vmem:[%s2 + $0xa8] sm:$0xf]
  %v1611 = vld [vmem:[%s2 + $0xac] sm:$0xf]
  %v1612 = vld [vmem:[%s2 + $0xb0] sm:$0xf]
  %v1613 = vld [vmem:[%s2 + $0xb4] sm:$0xf]
  %v1614 = vld [vmem:[%s2 + $0xb8] sm:$0xf]
  %v1615 = vld [vmem:[%s2 + $0xbc] sm:$0xf]
  %v1616 = vld [vmem:[%s2 + $0xc0] sm:$0xf]
  %v1617 = vld [vmem:[%s2 + $0xc4] sm:$0xf]
  %v1618 = vld [vmem:[%s2 + $0xc8] sm:$0xf]
  %v1619 = vld [vmem:[%s2 + $0xcc] sm:$0xf]
  %v1620 = vld [vmem:[%s2 + $0xd0] sm:$0xf]
  %v1621 = vld [vmem:[%s2 + $0xd4] sm:$0xf]
  %v1622 = vld [vmem:[%s2 + $0xd8] sm:$0xf]
  %v1623 = vld [vmem:[%s2 + $0xdc] sm:$0xf]
  %v1624 = vld [vmem:[%s2 + $0xe0] sm:$0xf]
  %v1625 = vld [vmem:[%s2 + $0xe4] sm:$0xf]
  %v1626 = vld [vmem:[%s2 + $0xe8] sm:$0xf]
  %v1627 = vld [vmem:[%s2 + $0xec] sm:$0xf]
  %v1628 = vld [vmem:[%s2 + $0xf0] sm:$0xf]
  %v1629 = vld [vmem:[%s2 + $0xf4] sm:$0xf]
  %v1630 = vld [vmem:[%s2 + $0xf8] sm:$0xf]
  %v1631 = vld [vmem:[%s2 + $0xfc] sm:$0xf]
  %v1632 = vld [vmem:[%s2 + $0x100] sm:$0xf]
  %v1633 = vld [vmem:[%s2 + $0x104] sm:$0xf]
  %v1634 = vld [vmem:[%s2 + $0x108] sm:$0xf]
  %v1635 = vld [vmem:[%s2 + $0x10c] sm:$0xf]
  %v1636 = vld [vmem:[%s2 + $0x110] sm:$0xf]
  %v1637 = vld [vmem:[%s2 + $0x114] sm:$0xf]
  %v1638 = vld [vmem:[%s2 + $0x118] sm:$0xf]
  %v1639 = vld [vmem:[%s2 + $0x11c] sm:$0xf]
  %v1640 = vld [vmem:[%s2 + $0x120] sm:$0xf]
  %v1641 = vld [vmem:[%s2 + $0x124] sm:$0xf]
  %v1642 = vld [vmem:[%s2 + $0x128] sm:$0xf]
  %v1643 = vld [vmem:[%s2 + $0x12c] sm:$0xf]
  %v1644 = vld [vmem:[%s2 + $0x130] sm:$0xf]
  %v1645 = vld [vmem:[%s2 + $0x134] sm:$0xf]
  %v1646 = vld [vmem:[%s2 + $0x138] sm:$0xf]
  %v1647 = vld [vmem:[%s2 + $0x13c] sm:$0xf]
  %v1648 = vld [vmem:[%s2 + $0x140] sm:$0xf]
  %v1649 = vld [vmem:[%s2 + $0x144] sm:$0xf]
  %v1650 = vld [vmem:[%s2 + $0x148] sm:$0xf]
  %v1651 = vld [vmem:[%s2 + $0x14c] sm:$0xf]
  %v1652 = vld [vmem:[%s2 + $0x150] sm:$0xf]
  %v1653 = vld [vmem:[%s2 + $0x154] sm:$0xf]
  %v1654 = vld [vmem:[%s2 + $0x158] sm:$0xf]
  %v1655 = vld [vmem:[%s2 + $0x15c] sm:$0xf]
  %v1656 = vld [vmem:[%s2 + $0x160] sm:$0xf]
  %v1657 = vld [vmem:[%s2 + $0x164] sm:$0xf]
  %v1658 = vld [vmem:[%s2 + $0x168] sm:$0xf]
  %v1659 = vld [vmem:[%s2 + $0x16c] sm:$0xf]
  %v1660 = vld [vmem:[%s2 + $0x170] sm:$0xf]
  %v1661 = vld [vmem:[%s2 + $0x174] sm:$0xf]
  %v1662 = vld [vmem:[%s2 + $0x178] sm:$0xf]
  %v1663 = vld [vmem:[%s2 + $0x17c] sm:$0xf]
  %v1664 = vld [vmem:[%s2 + $0x180] sm:$0xf]
  %v1665 = vld [vmem:[%s2 + $0x184] sm:$0xf]
  %v1666 = vld [vmem:[%s2 + $0x188] sm:$0xf]
  %v1667 = vld [vmem:[%s2 + $0x18c] sm:$0xf]
  %v1668 = vld [vmem:[%s6] sm:$0xf]
  %v1669 = vld [vmem:[%s6 + $0x4] sm:$0xf]
  %v1770 = vunpack.c.l.b16 %v1568
  %v1771 = vunpack.c.l.b16 %v1569
  %v1772 = vunpack.c.l.b16 %v1570
  %v1773 = vunpack.c.l.b16 %v1571
  %v1774 = vunpack.c.l.b16 %v1572
  %v1775 = vunpack.c.l.b16 %v1573
  %v1776 = vunpack.c.l.b16 %v1574
  %v1777 = vunpack.c.l.b16 %v1575
  %v1778 = vunpack.c.l.b16 %v1576
  %v1779 = vunpack.c.l.b16 %v1577
  %v1780 = vunpack.c.l.b16 %v1578
  %v1781 = vunpack.c.l.b16 %v1579
  %v1782 = vunpack.c.l.b16 %v1580
  %v1783 = vunpack.c.l.b16 %v1581
  %v1784 = vunpack.c.l.b16 %v1582
  %v1785 = vunpack.c.l.b16 %v1583
  %v1786 = vunpack.c.l.b16 %v1584
  %v1787 = vunpack.c.l.b16 %v1585
  %v1788 = vunpack.c.l.b16 %v1586
  %v1789 = vunpack.c.l.b16 %v1587
  %v1790 = vunpack.c.l.b16 %v1588
  %v1791 = vunpack.c.l.b16 %v1589
  %v1792 = vunpack.c.l.b16 %v1590
  %v1793 = vunpack.c.l.b16 %v1591
  %v1794 = vunpack.c.l.b16 %v1592
  %v1795 = vunpack.c.l.b16 %v1593
  %v1796 = vunpack.c.l.b16 %v1594
  %v1797 = vunpack.c.l.b16 %v1595
  %v1798 = vunpack.c.l.b16 %v1596
  %v1799 = vunpack.c.l.b16 %v1597
  %v1800 = vunpack.c.l.b16 %v1598
  %v1801 = vunpack.c.l.b16 %v1599
  %v1802 = vunpack.c.l.b16 %v1600
  %v1803 = vunpack.c.l.b16 %v1601
  %v1804 = vunpack.c.l.b16 %v1602
  %v1805 = vunpack.c.l.b16 %v1603
  %v1806 = vunpack.c.l.b16 %v1604
  %v1807 = vunpack.c.l.b16 %v1605
  %v1808 = vunpack.c.l.b16 %v1606
  %v1809 = vunpack.c.l.b16 %v1607
  %v1810 = vunpack.c.l.b16 %v1608
  %v1811 = vunpack.c.l.b16 %v1609
  %v1812 = vunpack.c.l.b16 %v1610
  %v1813 = vunpack.c.l.b16 %v1611
  %v1814 = vunpack.c.l.b16 %v1612
  %v1815 = vunpack.c.l.b16 %v1613
  %v1816 = vunpack.c.l.b16 %v1614
  %v1817 = vunpack.c.l.b16 %v1615
  %v1818 = vunpack.c.l.b16 %v1616
  %v1819 = vunpack.c.l.b16 %v1617
  %v1820 = vunpack.c.l.b16 %v1618
  %v1821 = vunpack.c.l.b16 %v1619
  %v1822 = vunpack.c.l.b16 %v1620
  %v1823 = vunpack.c.l.b16 %v1621
  %v1824 = vunpack.c.l.b16 %v1622
  %v1825 = vunpack.c.l.b16 %v1623
  %v1826 = vunpack.c.l.b16 %v1624
  %v1827 = vunpack.c.l.b16 %v1625
  %v1828 = vunpack.c.l.b16 %v1626
  %v1829 = vunpack.c.l.b16 %v1627
  %v1830 = vunpack.c.l.b16 %v1628
  %v1831 = vunpack.c.l.b16 %v1629
  %v1832 = vunpack.c.l.b16 %v1630
  %v1833 = vunpack.c.l.b16 %v1631
  %v1834 = vunpack.c.l.b16 %v1632
  %v1835 = vunpack.c.l.b16 %v1633
  %v1836 = vunpack.c.l.b16 %v1634
  %v1837 = vunpack.c.l.b16 %v1635
  %v1838 = vunpack.c.l.b16 %v1636
  %v1839 = vunpack.c.l.b16 %v1637
  %v1840 = vunpack.c.l.b16 %v1638
  %v1841 = vunpack.c.l.b16 %v1639
  %v1842 = vunpack.c.l.b16 %v1640
  %v1843 = vunpack.c.l.b16 %v1641
  %v1844 = vunpack.c.l.b16 %v1642
  %v1845 = vunpack.c.l.b16 %v1643
  %v1846 = vunpack.c.l.b16 %v1644
  %v1847 = vunpack.c.l.b16 %v1645
  %v1848 = vunpack.c.l.b16 %v1646
  %v1849 = vunpack.c.l.b16 %v1647
  %v1850 = vunpack.c.l.b16 %v1648
  %v1851 = vunpack.c.l.b16 %v1649
  %v1852 = vunpack.c.l.b16 %v1650
  %v1853 = vunpack.c.l.b16 %v1651
  %v1854 = vunpack.c.l.b16 %v1652
  %v1855 = vunpack.c.l.b16 %v1653
  %v1856 = vunpack.c.l.b16 %v1654
  %v1857 = vunpack.c.l.b16 %v1655
  %v1858 = vunpack.c.l.b16 %v1656
  %v1859 = vunpack.c.l.b16 %v1657
  %v1860 = vunpack.c.l.b16 %v1658
  %v1861 = vunpack.c.l.b16 %v1659
  %v1862 = vunpack.c.l.b16 %v1660
  %v1863 = vunpack.c.l.b16 %v1661
  %v1864 = vunpack.c.l.b16 %v1662
  %v1865 = vunpack.c.l.b16 %v1663
  %v1866 = vunpack.c.l.b16 %v1664
  %v1867 = vunpack.c.l.b16 %v1665
  %v1868 = vunpack.c.l.b16 %v1666
  %v1869 = vunpack.c.l.b16 %v1667
  %v1870 = vpack.c.b16 %v1771, %v1770
  %v1871 = vpack.c.b16 %v1773, %v1772
  %v1872 = vpack.c.b16 %v1775, %v1774
  %v1873 = vpack.c.b16 %v1777, %v1776
  %v1874 = vpack.c.b16 %v1779, %v1778
  %v1875 = vpack.c.b16 %v1781, %v1780
  %v1876 = vpack.c.b16 %v1783, %v1782
  %v1877 = vpack.c.b16 %v1785, %v1784
  %v1878 = vpack.c.b16 %v1787, %v1786
  %v1879 = vpack.c.b16 %v1789, %v1788
  %v1880 = vpack.c.b16 %v1791, %v1790
  %v1881 = vpack.c.b16 %v1793, %v1792
  %v1882 = vpack.c.b16 %v1795, %v1794
  %v1883 = vpack.c.b16 %v1797, %v1796
  %v1884 = vpack.c.b16 %v1799, %v1798
  %v1885 = vpack.c.b16 %v1801, %v1800
  %v1886 = vpack.c.b16 %v1803, %v1802
  %v1887 = vpack.c.b16 %v1805, %v1804
  %v1888 = vpack.c.b16 %v1807, %v1806
  %v1889 = vpack.c.b16 %v1809, %v1808
  %v1890 = vpack.c.b16 %v1811, %v1810
  %v1891 = vpack.c.b16 %v1813, %v1812
  %v1892 = vpack.c.b16 %v1815, %v1814
  %v1893 = vpack.c.b16 %v1817, %v1816
  %v1894 = vpack.c.b16 %v1819, %v1818
  %v1895 = vpack.c.b16 %v1821, %v1820
  %v1896 = vpack.c.b16 %v1823, %v1822
  %v1897 = vpack.c.b16 %v1825, %v1824
  %v1898 = vpack.c.b16 %v1827, %v1826
  %v1899 = vpack.c.b16 %v1829, %v1828
  %v1900 = vpack.c.b16 %v1831, %v1830
  %v1901 = vpack.c.b16 %v1833, %v1832
  %v1902 = vpack.c.b16 %v1835, %v1834
  %v1903 = vpack.c.b16 %v1837, %v1836
  %v1904 = vpack.c.b16 %v1839, %v1838
  %v1905 = vpack.c.b16 %v1841, %v1840
  %v1906 = vpack.c.b16 %v1843, %v1842
  %v1907 = vpack.c.b16 %v1845, %v1844
  %v1908 = vpack.c.b16 %v1847, %v1846
  %v1909 = vpack.c.b16 %v1849, %v1848
  %v1910 = vpack.c.b16 %v1851, %v1850
  %v1911 = vpack.c.b16 %v1853, %v1852
  %v1912 = vpack.c.b16 %v1855, %v1854
  %v1913 = vpack.c.b16 %v1857, %v1856
  %v1914 = vpack.c.b16 %v1859, %v1858
  %v1915 = vpack.c.b16 %v1861, %v1860
  %v1916 = vpack.c.b16 %v1863, %v1862
  %v1917 = vpack.c.b16 %v1865, %v1864
  %v1918 = vpack.c.b16 %v1867, %v1866
  %v1919 = vpack.c.b16 %v1869, %v1868
  %v1922 = vunpack.c.l.b16 %v1668
  %v1923 = vunpack.c.l.b16 %v1669
  %v1924 = vpack.c.b16 %v1923, %v1922
  %v1927 = vsel %vm493, %v1870, 0
  %v1930 = vsel %vm493, %v1871, 0
  %v1933 = vsel %vm493, %v1872, 0
  %v1936 = vsel %vm493, %v1873, 0
  %v1939 = vsel %vm493, %v1874, 0
  %v1942 = vsel %vm493, %v1875, 0
  %v1945 = vsel %vm493, %v1876, 0
  %v1948 = vsel %vm493, %v1877, 0
  %v1951 = vsel %vm493, %v1878, 0
  %v1954 = vsel %vm493, %v1879, 0
  %v1957 = vsel %vm493, %v1880, 0
  %v1960 = vsel %vm493, %v1881, 0
  %v1963 = vsel %vm493, %v1882, 0
  %v1966 = vsel %vm493, %v1883, 0
  %v1969 = vsel %vm493, %v1884, 0
  %v1972 = vsel %vm493, %v1885, 0
  %v1975 = vsel %vm493, %v1886, 0
  %v1978 = vsel %vm493, %v1887, 0
  %v1981 = vsel %vm493, %v1888, 0
  %v1984 = vsel %vm493, %v1889, 0
  %v1987 = vsel %vm493, %v1890, 0
  %v1990 = vsel %vm493, %v1891, 0
  %v1993 = vsel %vm493, %v1892, 0
  %v1996 = vsel %vm493, %v1893, 0
  %v1999 = vsel %vm493, %v1894, 0
  %v2002 = vsel %vm493, %v1895, 0
  %v2005 = vsel %vm493, %v1896, 0
  %v2008 = vsel %vm493, %v1897, 0
  %v2011 = vsel %vm493, %v1898, 0
  %v2014 = vsel %vm493, %v1899, 0
  %v2017 = vsel %vm493, %v1900, 0
  %v2020 = vsel %vm493, %v1901, 0
  %v2023 = vsel %vm493, %v1902, 0
  %v2026 = vsel %vm493, %v1903, 0
  %v2029 = vsel %vm493, %v1904, 0
  %v2032 = vsel %vm493, %v1905, 0
  %v2035 = vsel %vm493, %v1906, 0
  %v2038 = vsel %vm493, %v1907, 0
  %v2041 = vsel %vm493, %v1908, 0
  %v2044 = vsel %vm493, %v1909, 0
  %v2047 = vsel %vm493, %v1910, 0
  %v2050 = vsel %vm493, %v1911, 0
  %v2053 = vsel %vm493, %v1912, 0
  %v2056 = vsel %vm493, %v1913, 0
  %v2059 = vsel %vm493, %v1914, 0
  %v2062 = vsel %vm493, %v1915, 0
  %v2065 = vsel %vm493, %v1916, 0
  %v2068 = vsel %vm493, %v1917, 0
  %v2071 = vsel %vm493, %v1918, 0
  %v2074 = vsel %vm493, %v1919, 0
  %2076 = vmatpush.bf16.msra.mxu0 0
  %2077 = vmatpush.bf16.msra.mxu0 0
  %2078 = vmatpush.bf16.msra.mxu0 0
  %2079 = vmatpush.bf16.msra.mxu0 0
  %2080 = vmatpush.bf16.msra.mxu0 0
  %2081 = vmatpush.bf16.msra.mxu0 0
  %2082 = vmatpush.bf16.msra.mxu0 0
  %2083 = vmatpush.bf16.msra.mxu0 %v1924
  %2084 = vmatmul.bf16.gmra.mxu0 %v1927
  %v2085 = vpop.f32.mrf.mxu0
  %v2086 = vadd.f32 0.0, %v2085
  %v2087 = vpop.f32.mrf.mxu0
  %v2088 = vadd.f32 0.0, %v2087
  %2089 = vmatmul.bf16.gmra.mxu0 %v1930
  %v2090 = vpop.f32.mrf.mxu0
  %v2091 = vadd.f32 0.0, %v2090
  %v2092 = vpop.f32.mrf.mxu0
  %v2093 = vadd.f32 0.0, %v2092
  %2094 = vmatmul.bf16.gmra.mxu0 %v1933
  %v2095 = vpop.f32.mrf.mxu0
  %v2096 = vadd.f32 0.0, %v2095
  %v2097 = vpop.f32.mrf.mxu0
  %v2098 = vadd.f32 0.0, %v2097
  %2099 = vmatmul.bf16.gmra.mxu0 %v1936
  %v2100 = vpop.f32.mrf.mxu0
  %v2101 = vadd.f32 0.0, %v2100
  %v2102 = vpop.f32.mrf.mxu0
  %v2103 = vadd.f32 0.0, %v2102
  %2104 = vmatmul.bf16.gmra.mxu0 %v1939
  %v2105 = vpop.f32.mrf.mxu0
  %v2106 = vadd.f32 0.0, %v2105
  %v2107 = vpop.f32.mrf.mxu0
  %v2108 = vadd.f32 0.0, %v2107
  %2109 = vmatmul.bf16.gmra.mxu0 %v1942
  %v2110 = vpop.f32.mrf.mxu0
  %v2111 = vadd.f32 0.0, %v2110
  %v2112 = vpop.f32.mrf.mxu0
  %v2113 = vadd.f32 0.0, %v2112
  %2114 = vmatmul.bf16.gmra.mxu0 %v1945
  %v2115 = vpop.f32.mrf.mxu0
  %v2116 = vadd.f32 0.0, %v2115
  %v2117 = vpop.f32.mrf.mxu0
  %v2118 = vadd.f32 0.0, %v2117
  %2119 = vmatmul.bf16.gmra.mxu0 %v1948
  %v2120 = vpop.f32.mrf.mxu0
  %v2121 = vadd.f32 0.0, %v2120
  %v2122 = vpop.f32.mrf.mxu0
  %v2123 = vadd.f32 0.0, %v2122
  %2124 = vmatmul.bf16.gmra.mxu0 %v1951
  %v2125 = vpop.f32.mrf.mxu0
  %v2126 = vadd.f32 0.0, %v2125
  %v2127 = vpop.f32.mrf.mxu0
  %v2128 = vadd.f32 0.0, %v2127
  %2129 = vmatmul.bf16.gmra.mxu0 %v1954
  %v2130 = vpop.f32.mrf.mxu0
  %v2131 = vadd.f32 0.0, %v2130
  %v2132 = vpop.f32.mrf.mxu0
  %v2133 = vadd.f32 0.0, %v2132
  %2134 = vmatmul.bf16.gmra.mxu0 %v1957
  %v2135 = vpop.f32.mrf.mxu0
  %v2136 = vadd.f32 0.0, %v2135
  %v2137 = vpop.f32.mrf.mxu0
  %v2138 = vadd.f32 0.0, %v2137
  %2139 = vmatmul.bf16.gmra.mxu0 %v1960
  %v2140 = vpop.f32.mrf.mxu0
  %v2141 = vadd.f32 0.0, %v2140
  %v2142 = vpop.f32.mrf.mxu0
  %v2143 = vadd.f32 0.0, %v2142
  %2144 = vmatmul.bf16.gmra.mxu0 %v1963
  %v2145 = vpop.f32.mrf.mxu0
  %v2146 = vadd.f32 0.0, %v2145
  %v2147 = vpop.f32.mrf.mxu0
  %v2148 = vadd.f32 0.0, %v2147
  %2149 = vmatmul.bf16.gmra.mxu0 %v1966
  %v2150 = vpop.f32.mrf.mxu0
  %v2151 = vadd.f32 0.0, %v2150
  %v2152 = vpop.f32.mrf.mxu0
  %v2153 = vadd.f32 0.0, %v2152
  %2154 = vmatmul.bf16.gmra.mxu0 %v1969
  %v2155 = vpop.f32.mrf.mxu0
  %v2156 = vadd.f32 0.0, %v2155
  %v2157 = vpop.f32.mrf.mxu0
  %v2158 = vadd.f32 0.0, %v2157
  %2159 = vmatmul.bf16.gmra.mxu0 %v1972
  %v2160 = vpop.f32.mrf.mxu0
  %v2161 = vadd.f32 0.0, %v2160
  %v2162 = vpop.f32.mrf.mxu0
  %v2163 = vadd.f32 0.0, %v2162
  %2164 = vmatmul.bf16.gmra.mxu0 %v1975
  %v2165 = vpop.f32.mrf.mxu0
  %v2166 = vadd.f32 0.0, %v2165
  %v2167 = vpop.f32.mrf.mxu0
  %v2168 = vadd.f32 0.0, %v2167
  %2169 = vmatmul.bf16.gmra.mxu0 %v1978
  %v2170 = vpop.f32.mrf.mxu0
  %v2171 = vadd.f32 0.0, %v2170
  %v2172 = vpop.f32.mrf.mxu0
  %v2173 = vadd.f32 0.0, %v2172
  %2174 = vmatmul.bf16.gmra.mxu0 %v1981
  %v2175 = vpop.f32.mrf.mxu0
  %v2176 = vadd.f32 0.0, %v2175
  %v2177 = vpop.f32.mrf.mxu0
  %v2178 = vadd.f32 0.0, %v2177
  %2179 = vmatmul.bf16.gmra.mxu0 %v1984
  %v2180 = vpop.f32.mrf.mxu0
  %v2181 = vadd.f32 0.0, %v2180
  %v2182 = vpop.f32.mrf.mxu0
  %v2183 = vadd.f32 0.0, %v2182
  %2184 = vmatmul.bf16.gmra.mxu0 %v1987
  %v2185 = vpop.f32.mrf.mxu0
  %v2186 = vadd.f32 0.0, %v2185
  %v2187 = vpop.f32.mrf.mxu0
  %v2188 = vadd.f32 0.0, %v2187
  %2189 = vmatmul.bf16.gmra.mxu0 %v1990
  %v2190 = vpop.f32.mrf.mxu0
  %v2191 = vadd.f32 0.0, %v2190
  %v2192 = vpop.f32.mrf.mxu0
  %v2193 = vadd.f32 0.0, %v2192
  %2194 = vmatmul.bf16.gmra.mxu0 %v1993
  %v2195 = vpop.f32.mrf.mxu0
  %v2196 = vadd.f32 0.0, %v2195
  %v2197 = vpop.f32.mrf.mxu0
  %v2198 = vadd.f32 0.0, %v2197
  %2199 = vmatmul.bf16.gmra.mxu0 %v1996
  %v2200 = vpop.f32.mrf.mxu0
  %v2201 = vadd.f32 0.0, %v2200
  %v2202 = vpop.f32.mrf.mxu0
  %v2203 = vadd.f32 0.0, %v2202
  %2204 = vmatmul.bf16.gmra.mxu0 %v1999
  %v2205 = vpop.f32.mrf.mxu0
  %v2206 = vadd.f32 0.0, %v2205
  %v2207 = vpop.f32.mrf.mxu0
  %v2208 = vadd.f32 0.0, %v2207
  %2209 = vmatmul.bf16.gmra.mxu0 %v2002
  %v2210 = vpop.f32.mrf.mxu0
  %v2211 = vadd.f32 0.0, %v2210
  %v2212 = vpop.f32.mrf.mxu0
  %v2213 = vadd.f32 0.0, %v2212
  %2214 = vmatmul.bf16.gmra.mxu0 %v2005
  %v2215 = vpop.f32.mrf.mxu0
  %v2216 = vadd.f32 0.0, %v2215
  %v2217 = vpop.f32.mrf.mxu0
  %v2218 = vadd.f32 0.0, %v2217
  %2219 = vmatmul.bf16.gmra.mxu0 %v2008
  %v2220 = vpop.f32.mrf.mxu0
  %v2221 = vadd.f32 0.0, %v2220
  %v2222 = vpop.f32.mrf.mxu0
  %v2223 = vadd.f32 0.0, %v2222
  %2224 = vmatmul.bf16.gmra.mxu0 %v2011
  %v2225 = vpop.f32.mrf.mxu0
  %v2226 = vadd.f32 0.0, %v2225
  %v2227 = vpop.f32.mrf.mxu0
  %v2228 = vadd.f32 0.0, %v2227
  %2229 = vmatmul.bf16.gmra.mxu0 %v2014
  %v2230 = vpop.f32.mrf.mxu0
  %v2231 = vadd.f32 0.0, %v2230
  %v2232 = vpop.f32.mrf.mxu0
  %v2233 = vadd.f32 0.0, %v2232
  %2234 = vmatmul.bf16.gmra.mxu0 %v2017
  %v2235 = vpop.f32.mrf.mxu0
  %v2236 = vadd.f32 0.0, %v2235
  %v2237 = vpop.f32.mrf.mxu0
  %v2238 = vadd.f32 0.0, %v2237
  %2239 = vmatmul.bf16.gmra.mxu0 %v2020
  %v2240 = vpop.f32.mrf.mxu0
  %v2241 = vadd.f32 0.0, %v2240
  %v2242 = vpop.f32.mrf.mxu0
  %v2243 = vadd.f32 0.0, %v2242
  %2244 = vmatmul.bf16.gmra.mxu0 %v2023
  %v2245 = vpop.f32.mrf.mxu0
  %v2246 = vadd.f32 0.0, %v2245
  %v2247 = vpop.f32.mrf.mxu0
  %v2248 = vadd.f32 0.0, %v2247
  %2249 = vmatmul.bf16.gmra.mxu0 %v2026
  %v2250 = vpop.f32.mrf.mxu0
  %v2251 = vadd.f32 0.0, %v2250
  %v2252 = vpop.f32.mrf.mxu0
  %v2253 = vadd.f32 0.0, %v2252
  %2254 = vmatmul.bf16.gmra.mxu0 %v2029
  %v2255 = vpop.f32.mrf.mxu0
  %v2256 = vadd.f32 0.0, %v2255
  %v2257 = vpop.f32.mrf.mxu0
  %v2258 = vadd.f32 0.0, %v2257
  %2259 = vmatmul.bf16.gmra.mxu0 %v2032
  %v2260 = vpop.f32.mrf.mxu0
  %v2261 = vadd.f32 0.0, %v2260
  %v2262 = vpop.f32.mrf.mxu0
  %v2263 = vadd.f32 0.0, %v2262
  %2264 = vmatmul.bf16.gmra.mxu0 %v2035
  %v2265 = vpop.f32.mrf.mxu0
  %v2266 = vadd.f32 0.0, %v2265
  %v2267 = vpop.f32.mrf.mxu0
  %v2268 = vadd.f32 0.0, %v2267
  %2269 = vmatmul.bf16.gmra.mxu0 %v2038
  %v2270 = vpop.f32.mrf.mxu0
  %v2271 = vadd.f32 0.0, %v2270
  %v2272 = vpop.f32.mrf.mxu0
  %v2273 = vadd.f32 0.0, %v2272
  %2274 = vmatmul.bf16.gmra.mxu0 %v2041
  %v2275 = vpop.f32.mrf.mxu0
  %v2276 = vadd.f32 0.0, %v2275
  %v2277 = vpop.f32.mrf.mxu0
  %v2278 = vadd.f32 0.0, %v2277
  %2279 = vmatmul.bf16.gmra.mxu0 %v2044
  %v2280 = vpop.f32.mrf.mxu0
  %v2281 = vadd.f32 0.0, %v2280
  %v2282 = vpop.f32.mrf.mxu0
  %v2283 = vadd.f32 0.0, %v2282
  %2284 = vmatmul.bf16.gmra.mxu0 %v2047
  %v2285 = vpop.f32.mrf.mxu0
  %v2286 = vadd.f32 0.0, %v2285
  %v2287 = vpop.f32.mrf.mxu0
  %v2288 = vadd.f32 0.0, %v2287
  %2289 = vmatmul.bf16.gmra.mxu0 %v2050
  %v2290 = vpop.f32.mrf.mxu0
  %v2291 = vadd.f32 0.0, %v2290
  %v2292 = vpop.f32.mrf.mxu0
  %v2293 = vadd.f32 0.0, %v2292
  %2294 = vmatmul.bf16.gmra.mxu0 %v2053
  %v2295 = vpop.f32.mrf.mxu0
  %v2296 = vadd.f32 0.0, %v2295
  %v2297 = vpop.f32.mrf.mxu0
  %v2298 = vadd.f32 0.0, %v2297
  %2299 = vmatmul.bf16.gmra.mxu0 %v2056
  %v2300 = vpop.f32.mrf.mxu0
  %v2301 = vadd.f32 0.0, %v2300
  %v2302 = vpop.f32.mrf.mxu0
  %v2303 = vadd.f32 0.0, %v2302
  %2304 = vmatmul.bf16.gmra.mxu0 %v2059
  %v2305 = vpop.f32.mrf.mxu0
  %v2306 = vadd.f32 0.0, %v2305
  %v2307 = vpop.f32.mrf.mxu0
  %v2308 = vadd.f32 0.0, %v2307
  %2309 = vmatmul.bf16.gmra.mxu0 %v2062
  %v2310 = vpop.f32.mrf.mxu0
  %v2311 = vadd.f32 0.0, %v2310
  %v2312 = vpop.f32.mrf.mxu0
  %v2313 = vadd.f32 0.0, %v2312
  %2314 = vmatmul.bf16.gmra.mxu0 %v2065
  %v2315 = vpop.f32.mrf.mxu0
  %v2316 = vadd.f32 0.0, %v2315
  %v2317 = vpop.f32.mrf.mxu0
  %v2318 = vadd.f32 0.0, %v2317
  %2319 = vmatmul.bf16.gmra.mxu0 %v2068
  %v2320 = vpop.f32.mrf.mxu0
  %v2321 = vadd.f32 0.0, %v2320
  %v2322 = vpop.f32.mrf.mxu0
  %v2323 = vadd.f32 0.0, %v2322
  %2324 = vmatmul.bf16.gmra.mxu0 %v2071
  %v2325 = vpop.f32.mrf.mxu0
  %v2326 = vadd.f32 0.0, %v2325
  %v2327 = vpop.f32.mrf.mxu0
  %v2328 = vadd.f32 0.0, %v2327
  %2329 = vmatmul.bf16.gmra.mxu0 %v2074
  %v2330 = vpop.f32.mrf.mxu0
  %v2331 = vadd.f32 0.0, %v2330
  %v2332 = vpop.f32.mrf.mxu0
  %v2333 = vadd.f32 0.0, %v2332
  %2334 = vdwg.mxu0
  %v2335 = vadd.f32 %v1319, %v2086
  %v2336 = vadd.f32 %v1321, %v2088
  %v2337 = vadd.f32 %v1324, %v2091
  %v2338 = vadd.f32 %v1326, %v2093
  %v2339 = vadd.f32 %v1329, %v2096
  %v2340 = vadd.f32 %v1331, %v2098
  %v2341 = vadd.f32 %v1334, %v2101
  %v2342 = vadd.f32 %v1336, %v2103
  %v2343 = vadd.f32 %v1339, %v2106
  %v2344 = vadd.f32 %v1341, %v2108
  %v2345 = vadd.f32 %v1344, %v2111
  %v2346 = vadd.f32 %v1346, %v2113
  %v2347 = vadd.f32 %v1349, %v2116
  %v2348 = vadd.f32 %v1351, %v2118
  %v2349 = vadd.f32 %v1354, %v2121
  %v2350 = vadd.f32 %v1356, %v2123
  %v2351 = vadd.f32 %v1359, %v2126
  %v2352 = vadd.f32 %v1361, %v2128
  %v2353 = vadd.f32 %v1364, %v2131
  %v2354 = vadd.f32 %v1366, %v2133
  %v2355 = vadd.f32 %v1369, %v2136
  %v2356 = vadd.f32 %v1371, %v2138
  %v2357 = vadd.f32 %v1374, %v2141
  %v2358 = vadd.f32 %v1376, %v2143
  %v2359 = vadd.f32 %v1379, %v2146
  %v2360 = vadd.f32 %v1381, %v2148
  %v2361 = vadd.f32 %v1384, %v2151
  %v2362 = vadd.f32 %v1386, %v2153
  %v2363 = vadd.f32 %v1389, %v2156
  %v2364 = vadd.f32 %v1391, %v2158
  %v2365 = vadd.f32 %v1394, %v2161
  %v2366 = vadd.f32 %v1396, %v2163
  %v2367 = vadd.f32 %v1399, %v2166
  %v2368 = vadd.f32 %v1401, %v2168
  %v2369 = vadd.f32 %v1404, %v2171
  %v2370 = vadd.f32 %v1406, %v2173
  %v2371 = vadd.f32 %v1409, %v2176
  %v2372 = vadd.f32 %v1411, %v2178
  %v2373 = vadd.f32 %v1414, %v2181
  %v2374 = vadd.f32 %v1416, %v2183
  %v2375 = vadd.f32 %v1419, %v2186
  %v2376 = vadd.f32 %v1421, %v2188
  %v2377 = vadd.f32 %v1424, %v2191
  %v2378 = vadd.f32 %v1426, %v2193
  %v2379 = vadd.f32 %v1429, %v2196
  %v2380 = vadd.f32 %v1431, %v2198
  %v2381 = vadd.f32 %v1434, %v2201
  %v2382 = vadd.f32 %v1436, %v2203
  %v2383 = vadd.f32 %v1439, %v2206
  %v2384 = vadd.f32 %v1441, %v2208
  %v2385 = vadd.f32 %v1444, %v2211
  %v2386 = vadd.f32 %v1446, %v2213
  %v2387 = vadd.f32 %v1449, %v2216
  %v2388 = vadd.f32 %v1451, %v2218
  %v2389 = vadd.f32 %v1454, %v2221
  %v2390 = vadd.f32 %v1456, %v2223
  %v2391 = vadd.f32 %v1459, %v2226
  %v2392 = vadd.f32 %v1461, %v2228
  %v2393 = vadd.f32 %v1464, %v2231
  %v2394 = vadd.f32 %v1466, %v2233
  %v2395 = vadd.f32 %v1469, %v2236
  %v2396 = vadd.f32 %v1471, %v2238
  %v2397 = vadd.f32 %v1474, %v2241
  %v2398 = vadd.f32 %v1476, %v2243
  %v2399 = vadd.f32 %v1479, %v2246
  %v2400 = vadd.f32 %v1481, %v2248
  %v2401 = vadd.f32 %v1484, %v2251
  %v2402 = vadd.f32 %v1486, %v2253
  %v2403 = vadd.f32 %v1489, %v2256
  %v2404 = vadd.f32 %v1491, %v2258
  %v2405 = vadd.f32 %v1494, %v2261
  %v2406 = vadd.f32 %v1496, %v2263
  %v2407 = vadd.f32 %v1499, %v2266
  %v2408 = vadd.f32 %v1501, %v2268
  %v2409 = vadd.f32 %v1504, %v2271
  %v2410 = vadd.f32 %v1506, %v2273
  %v2411 = vadd.f32 %v1509, %v2276
  %v2412 = vadd.f32 %v1511, %v2278
  %v2413 = vadd.f32 %v1514, %v2281
  %v2414 = vadd.f32 %v1516, %v2283
  %v2415 = vadd.f32 %v1519, %v2286
  %v2416 = vadd.f32 %v1521, %v2288
  %v2417 = vadd.f32 %v1524, %v2291
  %v2418 = vadd.f32 %v1526, %v2293
  %v2419 = vadd.f32 %v1529, %v2296
  %v2420 = vadd.f32 %v1531, %v2298
  %v2421 = vadd.f32 %v1534, %v2301
  %v2422 = vadd.f32 %v1536, %v2303
  %v2423 = vadd.f32 %v1539, %v2306
  %v2424 = vadd.f32 %v1541, %v2308
  %v2425 = vadd.f32 %v1544, %v2311
  %v2426 = vadd.f32 %v1546, %v2313
  %v2427 = vadd.f32 %v1549, %v2316
  %v2428 = vadd.f32 %v1551, %v2318
  %v2429 = vadd.f32 %v1554, %v2321
  %v2430 = vadd.f32 %v1556, %v2323
  %v2431 = vadd.f32 %v1559, %v2326
  %v2432 = vadd.f32 %v1561, %v2328
  %v2433 = vadd.f32 %v1564, %v2331
  %v2434 = vadd.f32 %v1566, %v2333
  %v2435 = vld [vmem:[%s3] sm:$0xf]
  %v2436 = vld [vmem:[%s3 + $0x4] sm:$0xf]
  %v2437 = vld [vmem:[%s3 + $0x8] sm:$0xf]
  %v2438 = vld [vmem:[%s3 + $0xc] sm:$0xf]
  %v2439 = vld [vmem:[%s3 + $0x10] sm:$0xf]
  %v2440 = vld [vmem:[%s3 + $0x14] sm:$0xf]
  %v2441 = vld [vmem:[%s3 + $0x18] sm:$0xf]
  %v2442 = vld [vmem:[%s3 + $0x1c] sm:$0xf]
  %v2443 = vld [vmem:[%s3 + $0x20] sm:$0xf]
  %v2444 = vld [vmem:[%s3 + $0x24] sm:$0xf]
  %v2445 = vld [vmem:[%s3 + $0x28] sm:$0xf]
  %v2446 = vld [vmem:[%s3 + $0x2c] sm:$0xf]
  %v2447 = vld [vmem:[%s3 + $0x30] sm:$0xf]
  %v2448 = vld [vmem:[%s3 + $0x34] sm:$0xf]
  %v2449 = vld [vmem:[%s3 + $0x38] sm:$0xf]
  %v2450 = vld [vmem:[%s3 + $0x3c] sm:$0xf]
  %v2451 = vld [vmem:[%s3 + $0x40] sm:$0xf]
  %v2452 = vld [vmem:[%s3 + $0x44] sm:$0xf]
  %v2453 = vld [vmem:[%s3 + $0x48] sm:$0xf]
  %v2454 = vld [vmem:[%s3 + $0x4c] sm:$0xf]
  %v2455 = vld [vmem:[%s3 + $0x50] sm:$0xf]
  %v2456 = vld [vmem:[%s3 + $0x54] sm:$0xf]
  %v2457 = vld [vmem:[%s3 + $0x58] sm:$0xf]
  %v2458 = vld [vmem:[%s3 + $0x5c] sm:$0xf]
  %v2459 = vld [vmem:[%s3 + $0x60] sm:$0xf]
  %v2460 = vld [vmem:[%s3 + $0x64] sm:$0xf]
  %v2461 = vld [vmem:[%s3 + $0x68] sm:$0xf]
  %v2462 = vld [vmem:[%s3 + $0x6c] sm:$0xf]
  %v2463 = vld [vmem:[%s3 + $0x70] sm:$0xf]
  %v2464 = vld [vmem:[%s3 + $0x74] sm:$0xf]
  %v2465 = vld [vmem:[%s3 + $0x78] sm:$0xf]
  %v2466 = vld [vmem:[%s3 + $0x7c] sm:$0xf]
  %v2467 = vld [vmem:[%s3 + $0x80] sm:$0xf]
  %v2468 = vld [vmem:[%s3 + $0x84] sm:$0xf]
  %v2469 = vld [vmem:[%s3 + $0x88] sm:$0xf]
  %v2470 = vld [vmem:[%s3 + $0x8c] sm:$0xf]
  %v2471 = vld [vmem:[%s3 + $0x90] sm:$0xf]
  %v2472 = vld [vmem:[%s3 + $0x94] sm:$0xf]
  %v2473 = vld [vmem:[%s3 + $0x98] sm:$0xf]
  %v2474 = vld [vmem:[%s3 + $0x9c] sm:$0xf]
  %v2475 = vld [vmem:[%s3 + $0xa0] sm:$0xf]
  %v2476 = vld [vmem:[%s3 + $0xa4] sm:$0xf]
  %v2477 = vld [vmem:[%s3 + $0xa8] sm:$0xf]
  %v2478 = vld [vmem:[%s3 + $0xac] sm:$0xf]
  %v2479 = vld [vmem:[%s3 + $0xb0] sm:$0xf]
  %v2480 = vld [vmem:[%s3 + $0xb4] sm:$0xf]
  %v2481 = vld [vmem:[%s3 + $0xb8] sm:$0xf]
  %v2482 = vld [vmem:[%s3 + $0xbc] sm:$0xf]
  %v2483 = vld [vmem:[%s3 + $0xc0] sm:$0xf]
  %v2484 = vld [vmem:[%s3 + $0xc4] sm:$0xf]
  %v2485 = vld [vmem:[%s3 + $0xc8] sm:$0xf]
  %v2486 = vld [vmem:[%s3 + $0xcc] sm:$0xf]
  %v2487 = vld [vmem:[%s3 + $0xd0] sm:$0xf]
  %v2488 = vld [vmem:[%s3 + $0xd4] sm:$0xf]
  %v2489 = vld [vmem:[%s3 + $0xd8] sm:$0xf]
  %v2490 = vld [vmem:[%s3 + $0xdc] sm:$0xf]
  %v2491 = vld [vmem:[%s3 + $0xe0] sm:$0xf]
  %v2492 = vld [vmem:[%s3 + $0xe4] sm:$0xf]
  %v2493 = vld [vmem:[%s3 + $0xe8] sm:$0xf]
  %v2494 = vld [vmem:[%s3 + $0xec] sm:$0xf]
  %v2495 = vld [vmem:[%s3 + $0xf0] sm:$0xf]
  %v2496 = vld [vmem:[%s3 + $0xf4] sm:$0xf]
  %v2497 = vld [vmem:[%s3 + $0xf8] sm:$0xf]
  %v2498 = vld [vmem:[%s3 + $0xfc] sm:$0xf]
  %v2499 = vld [vmem:[%s3 + $0x100] sm:$0xf]
  %v2500 = vld [vmem:[%s3 + $0x104] sm:$0xf]
  %v2501 = vld [vmem:[%s3 + $0x108] sm:$0xf]
  %v2502 = vld [vmem:[%s3 + $0x10c] sm:$0xf]
  %v2503 = vld [vmem:[%s3 + $0x110] sm:$0xf]
  %v2504 = vld [vmem:[%s3 + $0x114] sm:$0xf]
  %v2505 = vld [vmem:[%s3 + $0x118] sm:$0xf]
  %v2506 = vld [vmem:[%s3 + $0x11c] sm:$0xf]
  %v2507 = vld [vmem:[%s3 + $0x120] sm:$0xf]
  %v2508 = vld [vmem:[%s3 + $0x124] sm:$0xf]
  %v2509 = vld [vmem:[%s3 + $0x128] sm:$0xf]
  %v2510 = vld [vmem:[%s3 + $0x12c] sm:$0xf]
  %v2511 = vld [vmem:[%s3 + $0x130] sm:$0xf]
  %v2512 = vld [vmem:[%s3 + $0x134] sm:$0xf]
  %v2513 = vld [vmem:[%s3 + $0x138] sm:$0xf]
  %v2514 = vld [vmem:[%s3 + $0x13c] sm:$0xf]
  %v2515 = vld [vmem:[%s3 + $0x140] sm:$0xf]
  %v2516 = vld [vmem:[%s3 + $0x144] sm:$0xf]
  %v2517 = vld [vmem:[%s3 + $0x148] sm:$0xf]
  %v2518 = vld [vmem:[%s3 + $0x14c] sm:$0xf]
  %v2519 = vld [vmem:[%s3 + $0x150] sm:$0xf]
  %v2520 = vld [vmem:[%s3 + $0x154] sm:$0xf]
  %v2521 = vld [vmem:[%s3 + $0x158] sm:$0xf]
  %v2522 = vld [vmem:[%s3 + $0x15c] sm:$0xf]
  %v2523 = vld [vmem:[%s3 + $0x160] sm:$0xf]
  %v2524 = vld [vmem:[%s3 + $0x164] sm:$0xf]
  %v2525 = vld [vmem:[%s3 + $0x168] sm:$0xf]
  %v2526 = vld [vmem:[%s3 + $0x16c] sm:$0xf]
  %v2527 = vld [vmem:[%s3 + $0x170] sm:$0xf]
  %v2528 = vld [vmem:[%s3 + $0x174] sm:$0xf]
  %v2529 = vld [vmem:[%s3 + $0x178] sm:$0xf]
  %v2530 = vld [vmem:[%s3 + $0x17c] sm:$0xf]
  %v2531 = vld [vmem:[%s3 + $0x180] sm:$0xf]
  %v2532 = vld [vmem:[%s3 + $0x184] sm:$0xf]
  %v2533 = vld [vmem:[%s3 + $0x188] sm:$0xf]
  %v2534 = vld [vmem:[%s3 + $0x18c] sm:$0xf]
  %v2535 = vld [vmem:[%s7] sm:$0xf]
  %v2536 = vld [vmem:[%s7 + $0x4] sm:$0xf]
  %v2637 = vunpack.c.l.b16 %v2435
  %v2638 = vunpack.c.l.b16 %v2436
  %v2639 = vunpack.c.l.b16 %v2437
  %v2640 = vunpack.c.l.b16 %v2438
  %v2641 = vunpack.c.l.b16 %v2439
  %v2642 = vunpack.c.l.b16 %v2440
  %v2643 = vunpack.c.l.b16 %v2441
  %v2644 = vunpack.c.l.b16 %v2442
  %v2645 = vunpack.c.l.b16 %v2443
  %v2646 = vunpack.c.l.b16 %v2444
  %v2647 = vunpack.c.l.b16 %v2445
  %v2648 = vunpack.c.l.b16 %v2446
  %v2649 = vunpack.c.l.b16 %v2447
  %v2650 = vunpack.c.l.b16 %v2448
  %v2651 = vunpack.c.l.b16 %v2449
  %v2652 = vunpack.c.l.b16 %v2450
  %v2653 = vunpack.c.l.b16 %v2451
  %v2654 = vunpack.c.l.b16 %v2452
  %v2655 = vunpack.c.l.b16 %v2453
  %v2656 = vunpack.c.l.b16 %v2454
  %v2657 = vunpack.c.l.b16 %v2455
  %v2658 = vunpack.c.l.b16 %v2456
  %v2659 = vunpack.c.l.b16 %v2457
  %v2660 = vunpack.c.l.b16 %v2458
  %v2661 = vunpack.c.l.b16 %v2459
  %v2662 = vunpack.c.l.b16 %v2460
  %v2663 = vunpack.c.l.b16 %v2461
  %v2664 = vunpack.c.l.b16 %v2462
  %v2665 = vunpack.c.l.b16 %v2463
  %v2666 = vunpack.c.l.b16 %v2464
  %v2667 = vunpack.c.l.b16 %v2465
  %v2668 = vunpack.c.l.b16 %v2466
  %v2669 = vunpack.c.l.b16 %v2467
  %v2670 = vunpack.c.l.b16 %v2468
  %v2671 = vunpack.c.l.b16 %v2469
  %v2672 = vunpack.c.l.b16 %v2470
  %v2673 = vunpack.c.l.b16 %v2471
  %v2674 = vunpack.c.l.b16 %v2472
  %v2675 = vunpack.c.l.b16 %v2473
  %v2676 = vunpack.c.l.b16 %v2474
  %v2677 = vunpack.c.l.b16 %v2475
  %v2678 = vunpack.c.l.b16 %v2476
  %v2679 = vunpack.c.l.b16 %v2477
  %v2680 = vunpack.c.l.b16 %v2478
  %v2681 = vunpack.c.l.b16 %v2479
  %v2682 = vunpack.c.l.b16 %v2480
  %v2683 = vunpack.c.l.b16 %v2481
  %v2684 = vunpack.c.l.b16 %v2482
  %v2685 = vunpack.c.l.b16 %v2483
  %v2686 = vunpack.c.l.b16 %v2484
  %v2687 = vunpack.c.l.b16 %v2485
  %v2688 = vunpack.c.l.b16 %v2486
  %v2689 = vunpack.c.l.b16 %v2487
  %v2690 = vunpack.c.l.b16 %v2488
  %v2691 = vunpack.c.l.b16 %v2489
  %v2692 = vunpack.c.l.b16 %v2490
  %v2693 = vunpack.c.l.b16 %v2491
  %v2694 = vunpack.c.l.b16 %v2492
  %v2695 = vunpack.c.l.b16 %v2493
  %v2696 = vunpack.c.l.b16 %v2494
  %v2697 = vunpack.c.l.b16 %v2495
  %v2698 = vunpack.c.l.b16 %v2496
  %v2699 = vunpack.c.l.b16 %v2497
  %v2700 = vunpack.c.l.b16 %v2498
  %v2701 = vunpack.c.l.b16 %v2499
  %v2702 = vunpack.c.l.b16 %v2500
  %v2703 = vunpack.c.l.b16 %v2501
  %v2704 = vunpack.c.l.b16 %v2502
  %v2705 = vunpack.c.l.b16 %v2503
  %v2706 = vunpack.c.l.b16 %v2504
  %v2707 = vunpack.c.l.b16 %v2505
  %v2708 = vunpack.c.l.b16 %v2506
  %v2709 = vunpack.c.l.b16 %v2507
  %v2710 = vunpack.c.l.b16 %v2508
  %v2711 = vunpack.c.l.b16 %v2509
  %v2712 = vunpack.c.l.b16 %v2510
  %v2713 = vunpack.c.l.b16 %v2511
  %v2714 = vunpack.c.l.b16 %v2512
  %v2715 = vunpack.c.l.b16 %v2513
  %v2716 = vunpack.c.l.b16 %v2514
  %v2717 = vunpack.c.l.b16 %v2515
  %v2718 = vunpack.c.l.b16 %v2516
  %v2719 = vunpack.c.l.b16 %v2517
  %v2720 = vunpack.c.l.b16 %v2518
  %v2721 = vunpack.c.l.b16 %v2519
  %v2722 = vunpack.c.l.b16 %v2520
  %v2723 = vunpack.c.l.b16 %v2521
  %v2724 = vunpack.c.l.b16 %v2522
  %v2725 = vunpack.c.l.b16 %v2523
  %v2726 = vunpack.c.l.b16 %v2524
  %v2727 = vunpack.c.l.b16 %v2525
  %v2728 = vunpack.c.l.b16 %v2526
  %v2729 = vunpack.c.l.b16 %v2527
  %v2730 = vunpack.c.l.b16 %v2528
  %v2731 = vunpack.c.l.b16 %v2529
  %v2732 = vunpack.c.l.b16 %v2530
  %v2733 = vunpack.c.l.b16 %v2531
  %v2734 = vunpack.c.l.b16 %v2532
  %v2735 = vunpack.c.l.b16 %v2533
  %v2736 = vunpack.c.l.b16 %v2534
  %v2737 = vpack.c.b16 %v2638, %v2637
  %v2738 = vpack.c.b16 %v2640, %v2639
  %v2739 = vpack.c.b16 %v2642, %v2641
  %v2740 = vpack.c.b16 %v2644, %v2643
  %v2741 = vpack.c.b16 %v2646, %v2645
  %v2742 = vpack.c.b16 %v2648, %v2647
  %v2743 = vpack.c.b16 %v2650, %v2649
  %v2744 = vpack.c.b16 %v2652, %v2651
  %v2745 = vpack.c.b16 %v2654, %v2653
  %v2746 = vpack.c.b16 %v2656, %v2655
  %v2747 = vpack.c.b16 %v2658, %v2657
  %v2748 = vpack.c.b16 %v2660, %v2659
  %v2749 = vpack.c.b16 %v2662, %v2661
  %v2750 = vpack.c.b16 %v2664, %v2663
  %v2751 = vpack.c.b16 %v2666, %v2665
  %v2752 = vpack.c.b16 %v2668, %v2667
  %v2753 = vpack.c.b16 %v2670, %v2669
  %v2754 = vpack.c.b16 %v2672, %v2671
  %v2755 = vpack.c.b16 %v2674, %v2673
  %v2756 = vpack.c.b16 %v2676, %v2675
  %v2757 = vpack.c.b16 %v2678, %v2677
  %v2758 = vpack.c.b16 %v2680, %v2679
  %v2759 = vpack.c.b16 %v2682, %v2681
  %v2760 = vpack.c.b16 %v2684, %v2683
  %v2761 = vpack.c.b16 %v2686, %v2685
  %v2762 = vpack.c.b16 %v2688, %v2687
  %v2763 = vpack.c.b16 %v2690, %v2689
  %v2764 = vpack.c.b16 %v2692, %v2691
  %v2765 = vpack.c.b16 %v2694, %v2693
  %v2766 = vpack.c.b16 %v2696, %v2695
  %v2767 = vpack.c.b16 %v2698, %v2697
  %v2768 = vpack.c.b16 %v2700, %v2699
  %v2769 = vpack.c.b16 %v2702, %v2701
  %v2770 = vpack.c.b16 %v2704, %v2703
  %v2771 = vpack.c.b16 %v2706, %v2705
  %v2772 = vpack.c.b16 %v2708, %v2707
  %v2773 = vpack.c.b16 %v2710, %v2709
  %v2774 = vpack.c.b16 %v2712, %v2711
  %v2775 = vpack.c.b16 %v2714, %v2713
  %v2776 = vpack.c.b16 %v2716, %v2715
  %v2777 = vpack.c.b16 %v2718, %v2717
  %v2778 = vpack.c.b16 %v2720, %v2719
  %v2779 = vpack.c.b16 %v2722, %v2721
  %v2780 = vpack.c.b16 %v2724, %v2723
  %v2781 = vpack.c.b16 %v2726, %v2725
  %v2782 = vpack.c.b16 %v2728, %v2727
  %v2783 = vpack.c.b16 %v2730, %v2729
  %v2784 = vpack.c.b16 %v2732, %v2731
  %v2785 = vpack.c.b16 %v2734, %v2733
  %v2786 = vpack.c.b16 %v2736, %v2735
  %v2789 = vunpack.c.l.b16 %v2535
  %v2790 = vunpack.c.l.b16 %v2536
  %v2791 = vpack.c.b16 %v2790, %v2789
  %v2794 = vsel %vm493, %v2737, 0
  %v2797 = vsel %vm493, %v2738, 0
  %v2800 = vsel %vm493, %v2739, 0
  %v2803 = vsel %vm493, %v2740, 0
  %v2806 = vsel %vm493, %v2741, 0
  %v2809 = vsel %vm493, %v2742, 0
  %v2812 = vsel %vm493, %v2743, 0
  %v2815 = vsel %vm493, %v2744, 0
  %v2818 = vsel %vm493, %v2745, 0
  %v2821 = vsel %vm493, %v2746, 0
  %v2824 = vsel %vm493, %v2747, 0
  %v2827 = vsel %vm493, %v2748, 0
  %v2830 = vsel %vm493, %v2749, 0
  %v2833 = vsel %vm493, %v2750, 0
  %v2836 = vsel %vm493, %v2751, 0
  %v2839 = vsel %vm493, %v2752, 0
  %v2842 = vsel %vm493, %v2753, 0
  %v2845 = vsel %vm493, %v2754, 0
  %v2848 = vsel %vm493, %v2755, 0
  %v2851 = vsel %vm493, %v2756, 0
  %v2854 = vsel %vm493, %v2757, 0
  %v2857 = vsel %vm493, %v2758, 0
  %v2860 = vsel %vm493, %v2759, 0
  %v2863 = vsel %vm493, %v2760, 0
  %v2866 = vsel %vm493, %v2761, 0
  %v2869 = vsel %vm493, %v2762, 0
  %v2872 = vsel %vm493, %v2763, 0
  %v2875 = vsel %vm493, %v2764, 0
  %v2878 = vsel %vm493, %v2765, 0
  %v2881 = vsel %vm493, %v2766, 0
  %v2884 = vsel %vm493, %v2767, 0
  %v2887 = vsel %vm493, %v2768, 0
  %v2890 = vsel %vm493, %v2769, 0
  %v2893 = vsel %vm493, %v2770, 0
  %v2896 = vsel %vm493, %v2771, 0
  %v2899 = vsel %vm493, %v2772, 0
  %v2902 = vsel %vm493, %v2773, 0
  %v2905 = vsel %vm493, %v2774, 0
  %v2908 = vsel %vm493, %v2775, 0
  %v2911 = vsel %vm493, %v2776, 0
  %v2914 = vsel %vm493, %v2777, 0
  %v2917 = vsel %vm493, %v2778, 0
  %v2920 = vsel %vm493, %v2779, 0
  %v2923 = vsel %vm493, %v2780, 0
  %v2926 = vsel %vm493, %v2781, 0
  %v2929 = vsel %vm493, %v2782, 0
  %v2932 = vsel %vm493, %v2783, 0
  %v2935 = vsel %vm493, %v2784, 0
  %v2938 = vsel %vm493, %v2785, 0
  %v2941 = vsel %vm493, %v2786, 0
  %2943 = vmatpush.bf16.msra.mxu0 0
  %2944 = vmatpush.bf16.msra.mxu0 0
  %2945 = vmatpush.bf16.msra.mxu0 0
  %2946 = vmatpush.bf16.msra.mxu0 0
  %2947 = vmatpush.bf16.msra.mxu0 0
  %2948 = vmatpush.bf16.msra.mxu0 0
  %2949 = vmatpush.bf16.msra.mxu0 0
  %2950 = vmatpush.bf16.msra.mxu0 %v2791
  %2951 = vmatmul.bf16.gmra.mxu0 %v2794
  %v2952 = vpop.f32.mrf.mxu0
  %v2953 = vadd.f32 0.0, %v2952
  %v2954 = vpop.f32.mrf.mxu0
  %v2955 = vadd.f32 0.0, %v2954
  %2956 = vmatmul.bf16.gmra.mxu0 %v2797
  %v2957 = vpop.f32.mrf.mxu0
  %v2958 = vadd.f32 0.0, %v2957
  %v2959 = vpop.f32.mrf.mxu0
  %v2960 = vadd.f32 0.0, %v2959
  %2961 = vmatmul.bf16.gmra.mxu0 %v2800
  %v2962 = vpop.f32.mrf.mxu0
  %v2963 = vadd.f32 0.0, %v2962
  %v2964 = vpop.f32.mrf.mxu0
  %v2965 = vadd.f32 0.0, %v2964
  %2966 = vmatmul.bf16.gmra.mxu0 %v2803
  %v2967 = vpop.f32.mrf.mxu0
  %v2968 = vadd.f32 0.0, %v2967
  %v2969 = vpop.f32.mrf.mxu0
  %v2970 = vadd.f32 0.0, %v2969
  %2971 = vmatmul.bf16.gmra.mxu0 %v2806
  %v2972 = vpop.f32.mrf.mxu0
  %v2973 = vadd.f32 0.0, %v2972
  %v2974 = vpop.f32.mrf.mxu0
  %v2975 = vadd.f32 0.0, %v2974
  %2976 = vmatmul.bf16.gmra.mxu0 %v2809
  %v2977 = vpop.f32.mrf.mxu0
  %v2978 = vadd.f32 0.0, %v2977
  %v2979 = vpop.f32.mrf.mxu0
  %v2980 = vadd.f32 0.0, %v2979
  %2981 = vmatmul.bf16.gmra.mxu0 %v2812
  %v2982 = vpop.f32.mrf.mxu0
  %v2983 = vadd.f32 0.0, %v2982
  %v2984 = vpop.f32.mrf.mxu0
  %v2985 = vadd.f32 0.0, %v2984
  %2986 = vmatmul.bf16.gmra.mxu0 %v2815
  %v2987 = vpop.f32.mrf.mxu0
  %v2988 = vadd.f32 0.0, %v2987
  %v2989 = vpop.f32.mrf.mxu0
  %v2990 = vadd.f32 0.0, %v2989
  %2991 = vmatmul.bf16.gmra.mxu0 %v2818
  %v2992 = vpop.f32.mrf.mxu0
  %v2993 = vadd.f32 0.0, %v2992
  %v2994 = vpop.f32.mrf.mxu0
  %v2995 = vadd.f32 0.0, %v2994
  %2996 = vmatmul.bf16.gmra.mxu0 %v2821
  %v2997 = vpop.f32.mrf.mxu0
  %v2998 = vadd.f32 0.0, %v2997
  %v2999 = vpop.f32.mrf.mxu0
  %v3000 = vadd.f32 0.0, %v2999
  %3001 = vmatmul.bf16.gmra.mxu0 %v2824
  %v3002 = vpop.f32.mrf.mxu0
  %v3003 = vadd.f32 0.0, %v3002
  %v3004 = vpop.f32.mrf.mxu0
  %v3005 = vadd.f32 0.0, %v3004
  %3006 = vmatmul.bf16.gmra.mxu0 %v2827
  %v3007 = vpop.f32.mrf.mxu0
  %v3008 = vadd.f32 0.0, %v3007
  %v3009 = vpop.f32.mrf.mxu0
  %v3010 = vadd.f32 0.0, %v3009
  %3011 = vmatmul.bf16.gmra.mxu0 %v2830
  %v3012 = vpop.f32.mrf.mxu0
  %v3013 = vadd.f32 0.0, %v3012
  %v3014 = vpop.f32.mrf.mxu0
  %v3015 = vadd.f32 0.0, %v3014
  %3016 = vmatmul.bf16.gmra.mxu0 %v2833
  %v3017 = vpop.f32.mrf.mxu0
  %v3018 = vadd.f32 0.0, %v3017
  %v3019 = vpop.f32.mrf.mxu0
  %v3020 = vadd.f32 0.0, %v3019
  %3021 = vmatmul.bf16.gmra.mxu0 %v2836
  %v3022 = vpop.f32.mrf.mxu0
  %v3023 = vadd.f32 0.0, %v3022
  %v3024 = vpop.f32.mrf.mxu0
  %v3025 = vadd.f32 0.0, %v3024
  %3026 = vmatmul.bf16.gmra.mxu0 %v2839
  %v3027 = vpop.f32.mrf.mxu0
  %v3028 = vadd.f32 0.0, %v3027
  %v3029 = vpop.f32.mrf.mxu0
  %v3030 = vadd.f32 0.0, %v3029
  %3031 = vmatmul.bf16.gmra.mxu0 %v2842
  %v3032 = vpop.f32.mrf.mxu0
  %v3033 = vadd.f32 0.0, %v3032
  %v3034 = vpop.f32.mrf.mxu0
  %v3035 = vadd.f32 0.0, %v3034
  %3036 = vmatmul.bf16.gmra.mxu0 %v2845
  %v3037 = vpop.f32.mrf.mxu0
  %v3038 = vadd.f32 0.0, %v3037
  %v3039 = vpop.f32.mrf.mxu0
  %v3040 = vadd.f32 0.0, %v3039
  %3041 = vmatmul.bf16.gmra.mxu0 %v2848
  %v3042 = vpop.f32.mrf.mxu0
  %v3043 = vadd.f32 0.0, %v3042
  %v3044 = vpop.f32.mrf.mxu0
  %v3045 = vadd.f32 0.0, %v3044
  %3046 = vmatmul.bf16.gmra.mxu0 %v2851
  %v3047 = vpop.f32.mrf.mxu0
  %v3048 = vadd.f32 0.0, %v3047
  %v3049 = vpop.f32.mrf.mxu0
  %v3050 = vadd.f32 0.0, %v3049
  %3051 = vmatmul.bf16.gmra.mxu0 %v2854
  %v3052 = vpop.f32.mrf.mxu0
  %v3053 = vadd.f32 0.0, %v3052
  %v3054 = vpop.f32.mrf.mxu0
  %v3055 = vadd.f32 0.0, %v3054
  %3056 = vmatmul.bf16.gmra.mxu0 %v2857
  %v3057 = vpop.f32.mrf.mxu0
  %v3058 = vadd.f32 0.0, %v3057
  %v3059 = vpop.f32.mrf.mxu0
  %v3060 = vadd.f32 0.0, %v3059
  %3061 = vmatmul.bf16.gmra.mxu0 %v2860
  %v3062 = vpop.f32.mrf.mxu0
  %v3063 = vadd.f32 0.0, %v3062
  %v3064 = vpop.f32.mrf.mxu0
  %v3065 = vadd.f32 0.0, %v3064
  %3066 = vmatmul.bf16.gmra.mxu0 %v2863
  %v3067 = vpop.f32.mrf.mxu0
  %v3068 = vadd.f32 0.0, %v3067
  %v3069 = vpop.f32.mrf.mxu0
  %v3070 = vadd.f32 0.0, %v3069
  %3071 = vmatmul.bf16.gmra.mxu0 %v2866
  %v3072 = vpop.f32.mrf.mxu0
  %v3073 = vadd.f32 0.0, %v3072
  %v3074 = vpop.f32.mrf.mxu0
  %v3075 = vadd.f32 0.0, %v3074
  %3076 = vmatmul.bf16.gmra.mxu0 %v2869
  %v3077 = vpop.f32.mrf.mxu0
  %v3078 = vadd.f32 0.0, %v3077
  %v3079 = vpop.f32.mrf.mxu0
  %v3080 = vadd.f32 0.0, %v3079
  %3081 = vmatmul.bf16.gmra.mxu0 %v2872
  %v3082 = vpop.f32.mrf.mxu0
  %v3083 = vadd.f32 0.0, %v3082
  %v3084 = vpop.f32.mrf.mxu0
  %v3085 = vadd.f32 0.0, %v3084
  %3086 = vmatmul.bf16.gmra.mxu0 %v2875
  %v3087 = vpop.f32.mrf.mxu0
  %v3088 = vadd.f32 0.0, %v3087
  %v3089 = vpop.f32.mrf.mxu0
  %v3090 = vadd.f32 0.0, %v3089
  %3091 = vmatmul.bf16.gmra.mxu0 %v2878
  %v3092 = vpop.f32.mrf.mxu0
  %v3093 = vadd.f32 0.0, %v3092
  %v3094 = vpop.f32.mrf.mxu0
  %v3095 = vadd.f32 0.0, %v3094
  %3096 = vmatmul.bf16.gmra.mxu0 %v2881
  %v3097 = vpop.f32.mrf.mxu0
  %v3098 = vadd.f32 0.0, %v3097
  %v3099 = vpop.f32.mrf.mxu0
  %v3100 = vadd.f32 0.0, %v3099
  %3101 = vmatmul.bf16.gmra.mxu0 %v2884
  %v3102 = vpop.f32.mrf.mxu0
  %v3103 = vadd.f32 0.0, %v3102
  %v3104 = vpop.f32.mrf.mxu0
  %v3105 = vadd.f32 0.0, %v3104
  %3106 = vmatmul.bf16.gmra.mxu0 %v2887
  %v3107 = vpop.f32.mrf.mxu0
  %v3108 = vadd.f32 0.0, %v3107
  %v3109 = vpop.f32.mrf.mxu0
  %v3110 = vadd.f32 0.0, %v3109
  %3111 = vmatmul.bf16.gmra.mxu0 %v2890
  %v3112 = vpop.f32.mrf.mxu0
  %v3113 = vadd.f32 0.0, %v3112
  %v3114 = vpop.f32.mrf.mxu0
  %v3115 = vadd.f32 0.0, %v3114
  %3116 = vmatmul.bf16.gmra.mxu0 %v2893
  %v3117 = vpop.f32.mrf.mxu0
  %v3118 = vadd.f32 0.0, %v3117
  %v3119 = vpop.f32.mrf.mxu0
  %v3120 = vadd.f32 0.0, %v3119
  %3121 = vmatmul.bf16.gmra.mxu0 %v2896
  %v3122 = vpop.f32.mrf.mxu0
  %v3123 = vadd.f32 0.0, %v3122
  %v3124 = vpop.f32.mrf.mxu0
  %v3125 = vadd.f32 0.0, %v3124
  %3126 = vmatmul.bf16.gmra.mxu0 %v2899
  %v3127 = vpop.f32.mrf.mxu0
  %v3128 = vadd.f32 0.0, %v3127
  %v3129 = vpop.f32.mrf.mxu0
  %v3130 = vadd.f32 0.0, %v3129
  %3131 = vmatmul.bf16.gmra.mxu0 %v2902
  %v3132 = vpop.f32.mrf.mxu0
  %v3133 = vadd.f32 0.0, %v3132
  %v3134 = vpop.f32.mrf.mxu0
  %v3135 = vadd.f32 0.0, %v3134
  %3136 = vmatmul.bf16.gmra.mxu0 %v2905
  %v3137 = vpop.f32.mrf.mxu0
  %v3138 = vadd.f32 0.0, %v3137
  %v3139 = vpop.f32.mrf.mxu0
  %v3140 = vadd.f32 0.0, %v3139
  %3141 = vmatmul.bf16.gmra.mxu0 %v2908
  %v3142 = vpop.f32.mrf.mxu0
  %v3143 = vadd.f32 0.0, %v3142
  %v3144 = vpop.f32.mrf.mxu0
  %v3145 = vadd.f32 0.0, %v3144
  %3146 = vmatmul.bf16.gmra.mxu0 %v2911
  %v3147 = vpop.f32.mrf.mxu0
  %v3148 = vadd.f32 0.0, %v3147
  %v3149 = vpop.f32.mrf.mxu0
  %v3150 = vadd.f32 0.0, %v3149
  %3151 = vmatmul.bf16.gmra.mxu0 %v2914
  %v3152 = vpop.f32.mrf.mxu0
  %v3153 = vadd.f32 0.0, %v3152
  %v3154 = vpop.f32.mrf.mxu0
  %v3155 = vadd.f32 0.0, %v3154
  %3156 = vmatmul.bf16.gmra.mxu0 %v2917
  %v3157 = vpop.f32.mrf.mxu0
  %v3158 = vadd.f32 0.0, %v3157
  %v3159 = vpop.f32.mrf.mxu0
  %v3160 = vadd.f32 0.0, %v3159
  %3161 = vmatmul.bf16.gmra.mxu0 %v2920
  %v3162 = vpop.f32.mrf.mxu0
  %v3163 = vadd.f32 0.0, %v3162
  %v3164 = vpop.f32.mrf.mxu0
  %v3165 = vadd.f32 0.0, %v3164
  %3166 = vmatmul.bf16.gmra.mxu0 %v2923
  %v3167 = vpop.f32.mrf.mxu0
  %v3168 = vadd.f32 0.0, %v3167
  %v3169 = vpop.f32.mrf.mxu0
  %v3170 = vadd.f32 0.0, %v3169
  %3171 = vmatmul.bf16.gmra.mxu0 %v2926
  %v3172 = vpop.f32.mrf.mxu0
  %v3173 = vadd.f32 0.0, %v3172
  %v3174 = vpop.f32.mrf.mxu0
  %v3175 = vadd.f32 0.0, %v3174
  %3176 = vmatmul.bf16.gmra.mxu0 %v2929
  %v3177 = vpop.f32.mrf.mxu0
  %v3178 = vadd.f32 0.0, %v3177
  %v3179 = vpop.f32.mrf.mxu0
  %v3180 = vadd.f32 0.0, %v3179
  %3181 = vmatmul.bf16.gmra.mxu0 %v2932
  %v3182 = vpop.f32.mrf.mxu0
  %v3183 = vadd.f32 0.0, %v3182
  %v3184 = vpop.f32.mrf.mxu0
  %v3185 = vadd.f32 0.0, %v3184
  %3186 = vmatmul.bf16.gmra.mxu0 %v2935
  %v3187 = vpop.f32.mrf.mxu0
  %v3188 = vadd.f32 0.0, %v3187
  %v3189 = vpop.f32.mrf.mxu0
  %v3190 = vadd.f32 0.0, %v3189
  %3191 = vmatmul.bf16.gmra.mxu0 %v2938
  %v3192 = vpop.f32.mrf.mxu0
  %v3193 = vadd.f32 0.0, %v3192
  %v3194 = vpop.f32.mrf.mxu0
  %v3195 = vadd.f32 0.0, %v3194
  %3196 = vmatmul.bf16.gmra.mxu0 %v2941
  %v3197 = vpop.f32.mrf.mxu0
  %v3198 = vadd.f32 0.0, %v3197
  %v3199 = vpop.f32.mrf.mxu0
  %v3200 = vadd.f32 0.0, %v3199
  %3201 = vdwg.mxu0
  %v3202 = vadd.f32 %v2335, %v2953
  %v3203 = vadd.f32 %v2336, %v2955
  %v3204 = vadd.f32 %v2337, %v2958
  %v3205 = vadd.f32 %v2338, %v2960
  %v3206 = vadd.f32 %v2339, %v2963
  %v3207 = vadd.f32 %v2340, %v2965
  %v3208 = vadd.f32 %v2341, %v2968
  %v3209 = vadd.f32 %v2342, %v2970
  %v3210 = vadd.f32 %v2343, %v2973
  %v3211 = vadd.f32 %v2344, %v2975
  %v3212 = vadd.f32 %v2345, %v2978
  %v3213 = vadd.f32 %v2346, %v2980
  %v3214 = vadd.f32 %v2347, %v2983
  %v3215 = vadd.f32 %v2348, %v2985
  %v3216 = vadd.f32 %v2349, %v2988
  %v3217 = vadd.f32 %v2350, %v2990
  %v3218 = vadd.f32 %v2351, %v2993
  %v3219 = vadd.f32 %v2352, %v2995
  %v3220 = vadd.f32 %v2353, %v2998
  %v3221 = vadd.f32 %v2354, %v3000
  %v3222 = vadd.f32 %v2355, %v3003
  %v3223 = vadd.f32 %v2356, %v3005
  %v3224 = vadd.f32 %v2357, %v3008
  %v3225 = vadd.f32 %v2358, %v3010
  %v3226 = vadd.f32 %v2359, %v3013
  %v3227 = vadd.f32 %v2360, %v3015
  %v3228 = vadd.f32 %v2361, %v3018
  %v3229 = vadd.f32 %v2362, %v3020
  %v3230 = vadd.f32 %v2363, %v3023
  %v3231 = vadd.f32 %v2364, %v3025
  %v3232 = vadd.f32 %v2365, %v3028
  %v3233 = vadd.f32 %v2366, %v3030
  %v3234 = vadd.f32 %v2367, %v3033
  %v3235 = vadd.f32 %v2368, %v3035
  %v3236 = vadd.f32 %v2369, %v3038
  %v3237 = vadd.f32 %v2370, %v3040
  %v3238 = vadd.f32 %v2371, %v3043
  %v3239 = vadd.f32 %v2372, %v3045
  %v3240 = vadd.f32 %v2373, %v3048
  %v3241 = vadd.f32 %v2374, %v3050
  %v3242 = vadd.f32 %v2375, %v3053
  %v3243 = vadd.f32 %v2376, %v3055
  %v3244 = vadd.f32 %v2377, %v3058
  %v3245 = vadd.f32 %v2378, %v3060
  %v3246 = vadd.f32 %v2379, %v3063
  %v3247 = vadd.f32 %v2380, %v3065
  %v3248 = vadd.f32 %v2381, %v3068
  %v3249 = vadd.f32 %v2382, %v3070
  %v3250 = vadd.f32 %v2383, %v3073
  %v3251 = vadd.f32 %v2384, %v3075
  %v3252 = vadd.f32 %v2385, %v3078
  %v3253 = vadd.f32 %v2386, %v3080
  %v3254 = vadd.f32 %v2387, %v3083
  %v3255 = vadd.f32 %v2388, %v3085
  %v3256 = vadd.f32 %v2389, %v3088
  %v3257 = vadd.f32 %v2390, %v3090
  %v3258 = vadd.f32 %v2391, %v3093
  %v3259 = vadd.f32 %v2392, %v3095
  %v3260 = vadd.f32 %v2393, %v3098
  %v3261 = vadd.f32 %v2394, %v3100
  %v3262 = vadd.f32 %v2395, %v3103
  %v3263 = vadd.f32 %v2396, %v3105
  %v3264 = vadd.f32 %v2397, %v3108
  %v3265 = vadd.f32 %v2398, %v3110
  %v3266 = vadd.f32 %v2399, %v3113
  %v3267 = vadd.f32 %v2400, %v3115
  %v3268 = vadd.f32 %v2401, %v3118
  %v3269 = vadd.f32 %v2402, %v3120
  %v3270 = vadd.f32 %v2403, %v3123
  %v3271 = vadd.f32 %v2404, %v3125
  %v3272 = vadd.f32 %v2405, %v3128
  %v3273 = vadd.f32 %v2406, %v3130
  %v3274 = vadd.f32 %v2407, %v3133
  %v3275 = vadd.f32 %v2408, %v3135
  %v3276 = vadd.f32 %v2409, %v3138
  %v3277 = vadd.f32 %v2410, %v3140
  %v3278 = vadd.f32 %v2411, %v3143
  %v3279 = vadd.f32 %v2412, %v3145
  %v3280 = vadd.f32 %v2413, %v3148
  %v3281 = vadd.f32 %v2414, %v3150
  %v3282 = vadd.f32 %v2415, %v3153
  %v3283 = vadd.f32 %v2416, %v3155
  %v3284 = vadd.f32 %v2417, %v3158
  %v3285 = vadd.f32 %v2418, %v3160
  %v3286 = vadd.f32 %v2419, %v3163
  %v3287 = vadd.f32 %v2420, %v3165
  %v3288 = vadd.f32 %v2421, %v3168
  %v3289 = vadd.f32 %v2422, %v3170
  %v3290 = vadd.f32 %v2423, %v3173
  %v3291 = vadd.f32 %v2424, %v3175
  %v3292 = vadd.f32 %v2425, %v3178
  %v3293 = vadd.f32 %v2426, %v3180
  %v3294 = vadd.f32 %v2427, %v3183
  %v3295 = vadd.f32 %v2428, %v3185
  %v3296 = vadd.f32 %v2429, %v3188
  %v3297 = vadd.f32 %v2430, %v3190
  %v3298 = vadd.f32 %v2431, %v3193
  %v3299 = vadd.f32 %v2432, %v3195
  %v3300 = vadd.f32 %v2433, %v3198
  %v3301 = vadd.f32 %v2434, %v3200
  %v3302 = vld [vmem:[%s8] sm:$0x1]
  %v3304 = vperm.slane %v3302, 0
  %v3306 = vadd.f32 %v3202, %v3304
  %v3307 = vadd.f32 %v3203, %v3304
  %v3308 = vadd.f32 %v3204, %v3304
  %v3309 = vadd.f32 %v3205, %v3304
  %v3310 = vadd.f32 %v3206, %v3304
  %v3311 = vadd.f32 %v3207, %v3304
  %v3312 = vadd.f32 %v3208, %v3304
  %v3313 = vadd.f32 %v3209, %v3304
  %v3314 = vadd.f32 %v3210, %v3304
  %v3315 = vadd.f32 %v3211, %v3304
  %v3316 = vadd.f32 %v3212, %v3304
  %v3317 = vadd.f32 %v3213, %v3304
  %v3318 = vadd.f32 %v3214, %v3304
  %v3319 = vadd.f32 %v3215, %v3304
  %v3320 = vadd.f32 %v3216, %v3304
  %v3321 = vadd.f32 %v3217, %v3304
  %v3322 = vadd.f32 %v3218, %v3304
  %v3323 = vadd.f32 %v3219, %v3304
  %v3324 = vadd.f32 %v3220, %v3304
  %v3325 = vadd.f32 %v3221, %v3304
  %v3326 = vadd.f32 %v3222, %v3304
  %v3327 = vadd.f32 %v3223, %v3304
  %v3328 = vadd.f32 %v3224, %v3304
  %v3329 = vadd.f32 %v3225, %v3304
  %v3330 = vadd.f32 %v3226, %v3304
  %v3331 = vadd.f32 %v3227, %v3304
  %v3332 = vadd.f32 %v3228, %v3304
  %v3333 = vadd.f32 %v3229, %v3304
  %v3334 = vadd.f32 %v3230, %v3304
  %v3335 = vadd.f32 %v3231, %v3304
  %v3336 = vadd.f32 %v3232, %v3304
  %v3337 = vadd.f32 %v3233, %v3304
  %v3338 = vadd.f32 %v3234, %v3304
  %v3339 = vadd.f32 %v3235, %v3304
  %v3340 = vadd.f32 %v3236, %v3304
  %v3341 = vadd.f32 %v3237, %v3304
  %v3342 = vadd.f32 %v3238, %v3304
  %v3343 = vadd.f32 %v3239, %v3304
  %v3344 = vadd.f32 %v3240, %v3304
  %v3345 = vadd.f32 %v3241, %v3304
  %v3346 = vadd.f32 %v3242, %v3304
  %v3347 = vadd.f32 %v3243, %v3304
  %v3348 = vadd.f32 %v3244, %v3304
  %v3349 = vadd.f32 %v3245, %v3304
  %v3350 = vadd.f32 %v3246, %v3304
  %v3351 = vadd.f32 %v3247, %v3304
  %v3352 = vadd.f32 %v3248, %v3304
  %v3353 = vadd.f32 %v3249, %v3304
  %v3354 = vadd.f32 %v3250, %v3304
  %v3355 = vadd.f32 %v3251, %v3304
  %v3356 = vadd.f32 %v3252, %v3304
  %v3357 = vadd.f32 %v3253, %v3304
  %v3358 = vadd.f32 %v3254, %v3304
  %v3359 = vadd.f32 %v3255, %v3304
  %v3360 = vadd.f32 %v3256, %v3304
  %v3361 = vadd.f32 %v3257, %v3304
  %v3362 = vadd.f32 %v3258, %v3304
  %v3363 = vadd.f32 %v3259, %v3304
  %v3364 = vadd.f32 %v3260, %v3304
  %v3365 = vadd.f32 %v3261, %v3304
  %v3366 = vadd.f32 %v3262, %v3304
  %v3367 = vadd.f32 %v3263, %v3304
  %v3368 = vadd.f32 %v3264, %v3304
  %v3369 = vadd.f32 %v3265, %v3304
  %v3370 = vadd.f32 %v3266, %v3304
  %v3371 = vadd.f32 %v3267, %v3304
  %v3372 = vadd.f32 %v3268, %v3304
  %v3373 = vadd.f32 %v3269, %v3304
  %v3374 = vadd.f32 %v3270, %v3304
  %v3375 = vadd.f32 %v3271, %v3304
  %v3376 = vadd.f32 %v3272, %v3304
  %v3377 = vadd.f32 %v3273, %v3304
  %v3378 = vadd.f32 %v3274, %v3304
  %v3379 = vadd.f32 %v3275, %v3304
  %v3380 = vadd.f32 %v3276, %v3304
  %v3381 = vadd.f32 %v3277, %v3304
  %v3382 = vadd.f32 %v3278, %v3304
  %v3383 = vadd.f32 %v3279, %v3304
  %v3384 = vadd.f32 %v3280, %v3304
  %v3385 = vadd.f32 %v3281, %v3304
  %v3386 = vadd.f32 %v3282, %v3304
  %v3387 = vadd.f32 %v3283, %v3304
  %v3388 = vadd.f32 %v3284, %v3304
  %v3389 = vadd.f32 %v3285, %v3304
  %v3390 = vadd.f32 %v3286, %v3304
  %v3391 = vadd.f32 %v3287, %v3304
  %v3392 = vadd.f32 %v3288, %v3304
  %v3393 = vadd.f32 %v3289, %v3304
  %v3394 = vadd.f32 %v3290, %v3304
  %v3395 = vadd.f32 %v3291, %v3304
  %v3396 = vadd.f32 %v3292, %v3304
  %v3397 = vadd.f32 %v3293, %v3304
  %v3398 = vadd.f32 %v3294, %v3304
  %v3399 = vadd.f32 %v3295, %v3304
  %v3400 = vadd.f32 %v3296, %v3304
  %v3401 = vadd.f32 %v3297, %v3304
  %v3402 = vadd.f32 %v3298, %v3304
  %v3403 = vadd.f32 %v3299, %v3304
  %v3404 = vadd.f32 %v3300, %v3304
  %v3405 = vadd.f32 %v3301, %v3304
  %v3406 = vmax.f32 %v3306, 0.0
  %v3407 = vmax.f32 %v3307, 0.0
  %v3408 = vmax.f32 %v3308, 0.0
  %v3409 = vmax.f32 %v3309, 0.0
  %v3410 = vmax.f32 %v3310, 0.0
  %v3411 = vmax.f32 %v3311, 0.0
  %v3412 = vmax.f32 %v3312, 0.0
  %v3413 = vmax.f32 %v3313, 0.0
  %v3414 = vmax.f32 %v3314, 0.0
  %v3415 = vmax.f32 %v3315, 0.0
  %v3416 = vmax.f32 %v3316, 0.0
  %v3417 = vmax.f32 %v3317, 0.0
  %v3418 = vmax.f32 %v3318, 0.0
  %v3419 = vmax.f32 %v3319, 0.0
  %v3420 = vmax.f32 %v3320, 0.0
  %v3421 = vmax.f32 %v3321, 0.0
  %v3422 = vmax.f32 %v3322, 0.0
  %v3423 = vmax.f32 %v3323, 0.0
  %v3424 = vmax.f32 %v3324, 0.0
  %v3425 = vmax.f32 %v3325, 0.0
  %v3426 = vmax.f32 %v3326, 0.0
  %v3427 = vmax.f32 %v3327, 0.0
  %v3428 = vmax.f32 %v3328, 0.0
  %v3429 = vmax.f32 %v3329, 0.0
  %v3430 = vmax.f32 %v3330, 0.0
  %v3431 = vmax.f32 %v3331, 0.0
  %v3432 = vmax.f32 %v3332, 0.0
  %v3433 = vmax.f32 %v3333, 0.0
  %v3434 = vmax.f32 %v3334, 0.0
  %v3435 = vmax.f32 %v3335, 0.0
  %v3436 = vmax.f32 %v3336, 0.0
  %v3437 = vmax.f32 %v3337, 0.0
  %v3438 = vmax.f32 %v3338, 0.0
  %v3439 = vmax.f32 %v3339, 0.0
  %v3440 = vmax.f32 %v3340, 0.0
  %v3441 = vmax.f32 %v3341, 0.0
  %v3442 = vmax.f32 %v3342, 0.0
  %v3443 = vmax.f32 %v3343, 0.0
  %v3444 = vmax.f32 %v3344, 0.0
  %v3445 = vmax.f32 %v3345, 0.0
  %v3446 = vmax.f32 %v3346, 0.0
  %v3447 = vmax.f32 %v3347, 0.0
  %v3448 = vmax.f32 %v3348, 0.0
  %v3449 = vmax.f32 %v3349, 0.0
  %v3450 = vmax.f32 %v3350, 0.0
  %v3451 = vmax.f32 %v3351, 0.0
  %v3452 = vmax.f32 %v3352, 0.0
  %v3453 = vmax.f32 %v3353, 0.0
  %v3454 = vmax.f32 %v3354, 0.0
  %v3455 = vmax.f32 %v3355, 0.0
  %v3456 = vmax.f32 %v3356, 0.0
  %v3457 = vmax.f32 %v3357, 0.0
  %v3458 = vmax.f32 %v3358, 0.0
  %v3459 = vmax.f32 %v3359, 0.0
  %v3460 = vmax.f32 %v3360, 0.0
  %v3461 = vmax.f32 %v3361, 0.0
  %v3462 = vmax.f32 %v3362, 0.0
  %v3463 = vmax.f32 %v3363, 0.0
  %v3464 = vmax.f32 %v3364, 0.0
  %v3465 = vmax.f32 %v3365, 0.0
  %v3466 = vmax.f32 %v3366, 0.0
  %v3467 = vmax.f32 %v3367, 0.0
  %v3468 = vmax.f32 %v3368, 0.0
  %v3469 = vmax.f32 %v3369, 0.0
  %v3470 = vmax.f32 %v3370, 0.0
  %v3471 = vmax.f32 %v3371, 0.0
  %v3472 = vmax.f32 %v3372, 0.0
  %v3473 = vmax.f32 %v3373, 0.0
  %v3474 = vmax.f32 %v3374, 0.0
  %v3475 = vmax.f32 %v3375, 0.0
  %v3476 = vmax.f32 %v3376, 0.0
  %v3477 = vmax.f32 %v3377, 0.0
  %v3478 = vmax.f32 %v3378, 0.0
  %v3479 = vmax.f32 %v3379, 0.0
  %v3480 = vmax.f32 %v3380, 0.0
  %v3481 = vmax.f32 %v3381, 0.0
  %v3482 = vmax.f32 %v3382, 0.0
  %v3483 = vmax.f32 %v3383, 0.0
  %v3484 = vmax.f32 %v3384, 0.0
  %v3485 = vmax.f32 %v3385, 0.0
  %v3486 = vmax.f32 %v3386, 0.0
  %v3487 = vmax.f32 %v3387, 0.0
  %v3488 = vmax.f32 %v3388, 0.0
  %v3489 = vmax.f32 %v3389, 0.0
  %v3490 = vmax.f32 %v3390, 0.0
  %v3491 = vmax.f32 %v3391, 0.0
  %v3492 = vmax.f32 %v3392, 0.0
  %v3493 = vmax.f32 %v3393, 0.0
  %v3494 = vmax.f32 %v3394, 0.0
  %v3495 = vmax.f32 %v3395, 0.0
  %v3496 = vmax.f32 %v3396, 0.0
  %v3497 = vmax.f32 %v3397, 0.0
  %v3498 = vmax.f32 %v3398, 0.0
  %v3499 = vmax.f32 %v3399, 0.0
  %v3500 = vmax.f32 %v3400, 0.0
  %v3501 = vmax.f32 %v3401, 0.0
  %v3502 = vmax.f32 %v3402, 0.0
  %v3503 = vmax.f32 %v3403, 0.0
  %v3504 = vmax.f32 %v3404, 0.0
  %v3505 = vmax.f32 %v3405, 0.0
  %v3506 = vpack.c.bf16 %v3406, %v3406
  %v3507 = vpack.c.bf16 %v3407, %v3407
  %v3508 = vpack.c.bf16 %v3408, %v3408
  %v3509 = vpack.c.bf16 %v3409, %v3409
  %v3510 = vpack.c.bf16 %v3410, %v3410
  %v3511 = vpack.c.bf16 %v3411, %v3411
  %v3512 = vpack.c.bf16 %v3412, %v3412
  %v3513 = vpack.c.bf16 %v3413, %v3413
  %v3514 = vpack.c.bf16 %v3414, %v3414
  %v3515 = vpack.c.bf16 %v3415, %v3415
  %v3516 = vpack.c.bf16 %v3416, %v3416
  %v3517 = vpack.c.bf16 %v3417, %v3417
  %v3518 = vpack.c.bf16 %v3418, %v3418
  %v3519 = vpack.c.bf16 %v3419, %v3419
  %v3520 = vpack.c.bf16 %v3420, %v3420
  %v3521 = vpack.c.bf16 %v3421, %v3421
  %v3522 = vpack.c.bf16 %v3422, %v3422
  %v3523 = vpack.c.bf16 %v3423, %v3423
  %v3524 = vpack.c.bf16 %v3424, %v3424
  %v3525 = vpack.c.bf16 %v3425, %v3425
  %v3526 = vpack.c.bf16 %v3426, %v3426
  %v3527 = vpack.c.bf16 %v3427, %v3427
  %v3528 = vpack.c.bf16 %v3428, %v3428
  %v3529 = vpack.c.bf16 %v3429, %v3429
  %v3530 = vpack.c.bf16 %v3430, %v3430
  %v3531 = vpack.c.bf16 %v3431, %v3431
  %v3532 = vpack.c.bf16 %v3432, %v3432
  %v3533 = vpack.c.bf16 %v3433, %v3433
  %v3534 = vpack.c.bf16 %v3434, %v3434
  %v3535 = vpack.c.bf16 %v3435, %v3435
  %v3536 = vpack.c.bf16 %v3436, %v3436
  %v3537 = vpack.c.bf16 %v3437, %v3437
  %v3538 = vpack.c.bf16 %v3438, %v3438
  %v3539 = vpack.c.bf16 %v3439, %v3439
  %v3540 = vpack.c.bf16 %v3440, %v3440
  %v3541 = vpack.c.bf16 %v3441, %v3441
  %v3542 = vpack.c.bf16 %v3442, %v3442
  %v3543 = vpack.c.bf16 %v3443, %v3443
  %v3544 = vpack.c.bf16 %v3444, %v3444
  %v3545 = vpack.c.bf16 %v3445, %v3445
  %v3546 = vpack.c.bf16 %v3446, %v3446
  %v3547 = vpack.c.bf16 %v3447, %v3447
  %v3548 = vpack.c.bf16 %v3448, %v3448
  %v3549 = vpack.c.bf16 %v3449, %v3449
  %v3550 = vpack.c.bf16 %v3450, %v3450
  %v3551 = vpack.c.bf16 %v3451, %v3451
  %v3552 = vpack.c.bf16 %v3452, %v3452
  %v3553 = vpack.c.bf16 %v3453, %v3453
  %v3554 = vpack.c.bf16 %v3454, %v3454
  %v3555 = vpack.c.bf16 %v3455, %v3455
  %v3556 = vpack.c.bf16 %v3456, %v3456
  %v3557 = vpack.c.bf16 %v3457, %v3457
  %v3558 = vpack.c.bf16 %v3458, %v3458
  %v3559 = vpack.c.bf16 %v3459, %v3459
  %v3560 = vpack.c.bf16 %v3460, %v3460
  %v3561 = vpack.c.bf16 %v3461, %v3461
  %v3562 = vpack.c.bf16 %v3462, %v3462
  %v3563 = vpack.c.bf16 %v3463, %v3463
  %v3564 = vpack.c.bf16 %v3464, %v3464
  %v3565 = vpack.c.bf16 %v3465, %v3465
  %v3566 = vpack.c.bf16 %v3466, %v3466
  %v3567 = vpack.c.bf16 %v3467, %v3467
  %v3568 = vpack.c.bf16 %v3468, %v3468
  %v3569 = vpack.c.bf16 %v3469, %v3469
  %v3570 = vpack.c.bf16 %v3470, %v3470
  %v3571 = vpack.c.bf16 %v3471, %v3471
  %v3572 = vpack.c.bf16 %v3472, %v3472
  %v3573 = vpack.c.bf16 %v3473, %v3473
  %v3574 = vpack.c.bf16 %v3474, %v3474
  %v3575 = vpack.c.bf16 %v3475, %v3475
  %v3576 = vpack.c.bf16 %v3476, %v3476
  %v3577 = vpack.c.bf16 %v3477, %v3477
  %v3578 = vpack.c.bf16 %v3478, %v3478
  %v3579 = vpack.c.bf16 %v3479, %v3479
  %v3580 = vpack.c.bf16 %v3480, %v3480
  %v3581 = vpack.c.bf16 %v3481, %v3481
  %v3582 = vpack.c.bf16 %v3482, %v3482
  %v3583 = vpack.c.bf16 %v3483, %v3483
  %v3584 = vpack.c.bf16 %v3484, %v3484
  %v3585 = vpack.c.bf16 %v3485, %v3485
  %v3586 = vpack.c.bf16 %v3486, %v3486
  %v3587 = vpack.c.bf16 %v3487, %v3487
  %v3588 = vpack.c.bf16 %v3488, %v3488
  %v3589 = vpack.c.bf16 %v3489, %v3489
  %v3590 = vpack.c.bf16 %v3490, %v3490
  %v3591 = vpack.c.bf16 %v3491, %v3491
  %v3592 = vpack.c.bf16 %v3492, %v3492
  %v3593 = vpack.c.bf16 %v3493, %v3493
  %v3594 = vpack.c.bf16 %v3494, %v3494
  %v3595 = vpack.c.bf16 %v3495, %v3495
  %v3596 = vpack.c.bf16 %v3496, %v3496
  %v3597 = vpack.c.bf16 %v3497, %v3497
  %v3598 = vpack.c.bf16 %v3498, %v3498
  %v3599 = vpack.c.bf16 %v3499, %v3499
  %v3600 = vpack.c.bf16 %v3500, %v3500
  %v3601 = vpack.c.bf16 %v3501, %v3501
  %v3602 = vpack.c.bf16 %v3502, %v3502
  %v3603 = vpack.c.bf16 %v3503, %v3503
  %v3604 = vpack.c.bf16 %v3504, %v3504
  %v3605 = vpack.c.bf16 %v3505, %v3505
  %vm3606 = vcmask 257024
  %3607 = vst.msk [vmem:[%s9] sm:$0xf] %vm3606, %v3506
  %3608 = vst.msk [vmem:[%s9 + $0x4] sm:$0xf] %vm3606, %v3507
  %3609 = vst.msk [vmem:[%s9 + $0x8] sm:$0xf] %vm3606, %v3508
  %3610 = vst.msk [vmem:[%s9 + $0xc] sm:$0xf] %vm3606, %v3509
  %3611 = vst.msk [vmem:[%s9 + $0x10] sm:$0xf] %vm3606, %v3510
  %3612 = vst.msk [vmem:[%s9 + $0x14] sm:$0xf] %vm3606, %v3511
  %3613 = vst.msk [vmem:[%s9 + $0x18] sm:$0xf] %vm3606, %v3512
  %3614 = vst.msk [vmem:[%s9 + $0x1c] sm:$0xf] %vm3606, %v3513
  %3615 = vst.msk [vmem:[%s9 + $0x20] sm:$0xf] %vm3606, %v3514
  %3616 = vst.msk [vmem:[%s9 + $0x24] sm:$0xf] %vm3606, %v3515
  %3617 = vst.msk [vmem:[%s9 + $0x28] sm:$0xf] %vm3606, %v3516
  %3618 = vst.msk [vmem:[%s9 + $0x2c] sm:$0xf] %vm3606, %v3517
  %3619 = vst.msk [vmem:[%s9 + $0x30] sm:$0xf] %vm3606, %v3518
  %3620 = vst.msk [vmem:[%s9 + $0x34] sm:$0xf] %vm3606, %v3519
  %3621 = vst.msk [vmem:[%s9 + $0x38] sm:$0xf] %vm3606, %v3520
  %3622 = vst.msk [vmem:[%s9 + $0x3c] sm:$0xf] %vm3606, %v3521
  %3623 = vst.msk [vmem:[%s9 + $0x40] sm:$0xf] %vm3606, %v3522
  %3624 = vst.msk [vmem:[%s9 + $0x44] sm:$0xf] %vm3606, %v3523
  %3625 = vst.msk [vmem:[%s9 + $0x48] sm:$0xf] %vm3606, %v3524
  %3626 = vst.msk [vmem:[%s9 + $0x4c] sm:$0xf] %vm3606, %v3525
  %3627 = vst.msk [vmem:[%s9 + $0x50] sm:$0xf] %vm3606, %v3526
  %3628 = vst.msk [vmem:[%s9 + $0x54] sm:$0xf] %vm3606, %v3527
  %3629 = vst.msk [vmem:[%s9 + $0x58] sm:$0xf] %vm3606, %v3528
  %3630 = vst.msk [vmem:[%s9 + $0x5c] sm:$0xf] %vm3606, %v3529
  %3631 = vst.msk [vmem:[%s9 + $0x60] sm:$0xf] %vm3606, %v3530
  %3632 = vst.msk [vmem:[%s9 + $0x64] sm:$0xf] %vm3606, %v3531
  %3633 = vst.msk [vmem:[%s9 + $0x68] sm:$0xf] %vm3606, %v3532
  %3634 = vst.msk [vmem:[%s9 + $0x6c] sm:$0xf] %vm3606, %v3533
  %3635 = vst.msk [vmem:[%s9 + $0x70] sm:$0xf] %vm3606, %v3534
  %3636 = vst.msk [vmem:[%s9 + $0x74] sm:$0xf] %vm3606, %v3535
  %3637 = vst.msk [vmem:[%s9 + $0x78] sm:$0xf] %vm3606, %v3536
  %3638 = vst.msk [vmem:[%s9 + $0x7c] sm:$0xf] %vm3606, %v3537
  %3639 = vst.msk [vmem:[%s9 + $0x80] sm:$0xf] %vm3606, %v3538
  %3640 = vst.msk [vmem:[%s9 + $0x84] sm:$0xf] %vm3606, %v3539
  %3641 = vst.msk [vmem:[%s9 + $0x88] sm:$0xf] %vm3606, %v3540
  %3642 = vst.msk [vmem:[%s9 + $0x8c] sm:$0xf] %vm3606, %v3541
  %3643 = vst.msk [vmem:[%s9 + $0x90] sm:$0xf] %vm3606, %v3542
  %3644 = vst.msk [vmem:[%s9 + $0x94] sm:$0xf] %vm3606, %v3543
  %3645 = vst.msk [vmem:[%s9 + $0x98] sm:$0xf] %vm3606, %v3544
  %3646 = vst.msk [vmem:[%s9 + $0x9c] sm:$0xf] %vm3606, %v3545
  %3647 = vst.msk [vmem:[%s9 + $0xa0] sm:$0xf] %vm3606, %v3546
  %3648 = vst.msk [vmem:[%s9 + $0xa4] sm:$0xf] %vm3606, %v3547
  %3649 = vst.msk [vmem:[%s9 + $0xa8] sm:$0xf] %vm3606, %v3548
  %3650 = vst.msk [vmem:[%s9 + $0xac] sm:$0xf] %vm3606, %v3549
  %3651 = vst.msk [vmem:[%s9 + $0xb0] sm:$0xf] %vm3606, %v3550
  %3652 = vst.msk [vmem:[%s9 + $0xb4] sm:$0xf] %vm3606, %v3551
  %3653 = vst.msk [vmem:[%s9 + $0xb8] sm:$0xf] %vm3606, %v3552
  %3654 = vst.msk [vmem:[%s9 + $0xbc] sm:$0xf] %vm3606, %v3553
  %3655 = vst.msk [vmem:[%s9 + $0xc0] sm:$0xf] %vm3606, %v3554
  %3656 = vst.msk [vmem:[%s9 + $0xc4] sm:$0xf] %vm3606, %v3555
  %3657 = vst.msk [vmem:[%s9 + $0xc8] sm:$0xf] %vm3606, %v3556
  %3658 = vst.msk [vmem:[%s9 + $0xcc] sm:$0xf] %vm3606, %v3557
  %3659 = vst.msk [vmem:[%s9 + $0xd0] sm:$0xf] %vm3606, %v3558
  %3660 = vst.msk [vmem:[%s9 + $0xd4] sm:$0xf] %vm3606, %v3559
  %3661 = vst.msk [vmem:[%s9 + $0xd8] sm:$0xf] %vm3606, %v3560
  %3662 = vst.msk [vmem:[%s9 + $0xdc] sm:$0xf] %vm3606, %v3561
  %3663 = vst.msk [vmem:[%s9 + $0xe0] sm:$0xf] %vm3606, %v3562
  %3664 = vst.msk [vmem:[%s9 + $0xe4] sm:$0xf] %vm3606, %v3563
  %3665 = vst.msk [vmem:[%s9 + $0xe8] sm:$0xf] %vm3606, %v3564
  %3666 = vst.msk [vmem:[%s9 + $0xec] sm:$0xf] %vm3606, %v3565
  %3667 = vst.msk [vmem:[%s9 + $0xf0] sm:$0xf] %vm3606, %v3566
  %3668 = vst.msk [vmem:[%s9 + $0xf4] sm:$0xf] %vm3606, %v3567
  %3669 = vst.msk [vmem:[%s9 + $0xf8] sm:$0xf] %vm3606, %v3568
  %3670 = vst.msk [vmem:[%s9 + $0xfc] sm:$0xf] %vm3606, %v3569
  %3671 = vst.msk [vmem:[%s9 + $0x100] sm:$0xf] %vm3606, %v3570
  %3672 = vst.msk [vmem:[%s9 + $0x104] sm:$0xf] %vm3606, %v3571
  %3673 = vst.msk [vmem:[%s9 + $0x108] sm:$0xf] %vm3606, %v3572
  %3674 = vst.msk [vmem:[%s9 + $0x10c] sm:$0xf] %vm3606, %v3573
  %3675 = vst.msk [vmem:[%s9 + $0x110] sm:$0xf] %vm3606, %v3574
  %3676 = vst.msk [vmem:[%s9 + $0x114] sm:$0xf] %vm3606, %v3575
  %3677 = vst.msk [vmem:[%s9 + $0x118] sm:$0xf] %vm3606, %v3576
  %3678 = vst.msk [vmem:[%s9 + $0x11c] sm:$0xf] %vm3606, %v3577
  %3679 = vst.msk [vmem:[%s9 + $0x120] sm:$0xf] %vm3606, %v3578
  %3680 = vst.msk [vmem:[%s9 + $0x124] sm:$0xf] %vm3606, %v3579
  %3681 = vst.msk [vmem:[%s9 + $0x128] sm:$0xf] %vm3606, %v3580
  %3682 = vst.msk [vmem:[%s9 + $0x12c] sm:$0xf] %vm3606, %v3581
  %3683 = vst.msk [vmem:[%s9 + $0x130] sm:$0xf] %vm3606, %v3582
  %3684 = vst.msk [vmem:[%s9 + $0x134] sm:$0xf] %vm3606, %v3583
  %3685 = vst.msk [vmem:[%s9 + $0x138] sm:$0xf] %vm3606, %v3584
  %3686 = vst.msk [vmem:[%s9 + $0x13c] sm:$0xf] %vm3606, %v3585
  %3687 = vst.msk [vmem:[%s9 + $0x140] sm:$0xf] %vm3606, %v3586
  %3688 = vst.msk [vmem:[%s9 + $0x144] sm:$0xf] %vm3606, %v3587
  %3689 = vst.msk [vmem:[%s9 + $0x148] sm:$0xf] %vm3606, %v3588
  %3690 = vst.msk [vmem:[%s9 + $0x14c] sm:$0xf] %vm3606, %v3589
  %3691 = vst.msk [vmem:[%s9 + $0x150] sm:$0xf] %vm3606, %v3590
  %3692 = vst.msk [vmem:[%s9 + $0x154] sm:$0xf] %vm3606, %v3591
  %3693 = vst.msk [vmem:[%s9 + $0x158] sm:$0xf] %vm3606, %v3592
  %3694 = vst.msk [vmem:[%s9 + $0x15c] sm:$0xf] %vm3606, %v3593
  %3695 = vst.msk [vmem:[%s9 + $0x160] sm:$0xf] %vm3606, %v3594
  %3696 = vst.msk [vmem:[%s9 + $0x164] sm:$0xf] %vm3606, %v3595
  %3697 = vst.msk [vmem:[%s9 + $0x168] sm:$0xf] %vm3606, %v3596
  %3698 = vst.msk [vmem:[%s9 + $0x16c] sm:$0xf] %vm3606, %v3597
  %3699 = vst.msk [vmem:[%s9 + $0x170] sm:$0xf] %vm3606, %v3598
  %3700 = vst.msk [vmem:[%s9 + $0x174] sm:$0xf] %vm3606, %v3599
  %3701 = vst.msk [vmem:[%s9 + $0x178] sm:$0xf] %vm3606, %v3600
  %3702 = vst.msk [vmem:[%s9 + $0x17c] sm:$0xf] %vm3606, %v3601
  %3703 = vst.msk [vmem:[%s9 + $0x180] sm:$0xf] %vm3606, %v3602
  %3704 = vst.msk [vmem:[%s9 + $0x184] sm:$0xf] %vm3606, %v3603
  %3705 = vst.msk [vmem:[%s9 + $0x188] sm:$0xf] %vm3606, %v3604
  %3706 = vst.msk [vmem:[%s9 + $0x18c] sm:$0xf] %vm3606, %v3605
  // Predicated region
  $region38: #{forward.4} parent=0 // pred_check
    _
  $region39: #{forward.4} parent=0 // pred_check_branch
    %3708 = sbr.rel (0) target = $region41
  $region40: #{forward.4} parent=0 // pred_region
    _
  $region41: #{forward.4} parent=0 // pred_fallthru
    _
  // Predicated region
  $region42: #{forward.4} parent=0 // pred_check
    _
  $region43: #{forward.4} parent=0 // pred_check_branch
    %3710 = sbr.rel (0) target = $region45
  $region44: #{forward.4} parent=0 // pred_region
    _
  $region45: #{forward.4} parent=0 // pred_fallthru
    _

// kernel: forward.5
$region0: #{forward.5}
  #allocation0 [shape = 'u32[]', space=smem, size = 0x4, offset = 0x4, fixed_abs, tag = 'smem constant byte address 0x4 - core index']
  #allocation1 [shape = 'u32[72,128]{1,0:T(1,128)}', space=vmem, size = 0x9000, scoped, tag = 'internal scratch']
  %s0 = inlined_call_operand.vmem [shape: bf16[162,128], index: 0, kind: input, shape index: {}]
  %s1 = inlined_call_operand.vmem [shape: bf16[162,128], index: 1, kind: input, shape index: {}]
  %s2 = inlined_call_operand.vmem [shape: bf16[162,128], index: 2, kind: input, shape index: {}]
  %s3 = inlined_call_operand.vmem [shape: bf16[162,128], index: 3, kind: input, shape index: {}]
  %s4 = inlined_call_operand.vmem [shape: bf16[128,64], index: 4, kind: input, shape index: {}]
  %s5 = inlined_call_operand.vmem [shape: bf16[128,64], index: 5, kind: input, shape index: {}]
  %s6 = inlined_call_operand.vmem [shape: bf16[128,64], index: 6, kind: input, shape index: {}]
  %s7 = inlined_call_operand.vmem [shape: bf16[128,64], index: 7, kind: input, shape index: {}]
  %s8 = inlined_call_operand.vmem [shape: f32[1,64], index: 8, kind: input, shape index: {}]
  %s9 = inlined_call_operand.vmem [shape: bf16[162,64], index: 9, kind: output, shape index: {}]
  %s10 = sld [smem:[#allocation0]]
  $region46: #{forward.5} parent=0
    _
  %s12 = ssub.s32 1, %s10
  %s13 = scalar_select 0, %s12, %s10
  // Predicated region
  $region2: #{forward.5} parent=0 // pred_check
    _
  $region3: #{forward.5} parent=0 // pred_check_branch
    %15 = sbr.rel (0) target = $region5
  $region4: #{forward.5} parent=0 // pred_region
    _
  $region5: #{forward.5} parent=0 // pred_fallthru
    _
  // Predicated region
  $region6: #{forward.5} parent=0 // pred_check
    _
  $region7: #{forward.5} parent=0 // pred_check_branch
    %17 = sbr.rel (0) target = $region9
  $region8: #{forward.5} parent=0 // pred_region
    _
  $region9: #{forward.5} parent=0 // pred_fallthru
    _
  // Predicated region
  $region10: #{forward.5} parent=0 // pred_check
    _
  $region11: #{forward.5} parent=0 // pred_check_branch
    %19 = sbr.rel (0) target = $region13
  $region12: #{forward.5} parent=0 // pred_region
    _
  $region13: #{forward.5} parent=0 // pred_fallthru
    _
  // Predicated region
  $region14: #{forward.5} parent=0 // pred_check
    _
  $region15: #{forward.5} parent=0 // pred_check_branch
    %21 = sbr.rel (0) target = $region17
  $region16: #{forward.5} parent=0 // pred_region
    _
  $region17: #{forward.5} parent=0 // pred_fallthru
    _
  // Predicated region
  $region18: #{forward.5} parent=0 // pred_check
    _
  $region19: #{forward.5} parent=0 // pred_check_branch
    %23 = sbr.rel (0) target = $region21
  $region20: #{forward.5} parent=0 // pred_region
    _
  $region21: #{forward.5} parent=0 // pred_fallthru
    _
  // Predicated region
  $region22: #{forward.5} parent=0 // pred_check
    _
  $region23: #{forward.5} parent=0 // pred_check_branch
    %25 = sbr.rel (0) target = $region25
  $region24: #{forward.5} parent=0 // pred_region
    _
  $region25: #{forward.5} parent=0 // pred_fallthru
    _
  // Predicated region
  $region26: #{forward.5} parent=0 // pred_check
    _
  $region27: #{forward.5} parent=0 // pred_check_branch
    %27 = sbr.rel (0) target = $region29
  $region28: #{forward.5} parent=0 // pred_region
    _
  $region29: #{forward.5} parent=0 // pred_fallthru
    _
  // Predicated region
  $region30: #{forward.5} parent=0 // pred_check
    _
  $region31: #{forward.5} parent=0 // pred_check_branch
    %29 = sbr.rel (0) target = $region33
  $region32: #{forward.5} parent=0 // pred_region
    _
  $region33: #{forward.5} parent=0 // pred_fallthru
    _
  // Predicated region
  $region34: #{forward.5} parent=0 // pred_check
    _
  $region35: #{forward.5} parent=0 // pred_check_branch
    %31 = sbr.rel (0) target = $region37
  $region36: #{forward.5} parent=0 // pred_region
    _
  $region37: #{forward.5} parent=0 // pred_fallthru
    _
  %v32 = vld [vmem:[%s0] sm:$0xf]
  %v33 = vld [vmem:[%s0 + $0x4] sm:$0xf]
  %v34 = vld [vmem:[%s0 + $0x8] sm:$0xf]
  %v35 = vld [vmem:[%s0 + $0xc] sm:$0xf]
  %v36 = vld [vmem:[%s0 + $0x10] sm:$0xf]
  %v37 = vld [vmem:[%s0 + $0x14] sm:$0xf]
  %v38 = vld [vmem:[%s0 + $0x18] sm:$0xf]
  %v39 = vld [vmem:[%s0 + $0x1c] sm:$0xf]
  %v40 = vld [vmem:[%s0 + $0x20] sm:$0xf]
  %v41 = vld [vmem:[%s0 + $0x24] sm:$0xf]
  %v42 = vld [vmem:[%s0 + $0x28] sm:$0xf]
  %v43 = vld [vmem:[%s0 + $0x2c] sm:$0xf]
  %v44 = vld [vmem:[%s0 + $0x30] sm:$0xf]
  %v45 = vld [vmem:[%s0 + $0x34] sm:$0xf]
  %v46 = vld [vmem:[%s0 + $0x38] sm:$0xf]
  %v47 = vld [vmem:[%s0 + $0x3c] sm:$0xf]
  %v48 = vld [vmem:[%s0 + $0x40] sm:$0xf]
  %v49 = vld [vmem:[%s0 + $0x44] sm:$0xf]
  %v50 = vld [vmem:[%s0 + $0x48] sm:$0xf]
  %v51 = vld [vmem:[%s0 + $0x4c] sm:$0xf]
  %v52 = vld [vmem:[%s0 + $0x50] sm:$0x1]
  %v53 = vld [vmem:[%s4] sm:$0xf]
  %v54 = vld [vmem:[%s4 + $0x4] sm:$0xf]
  %v55 = vld [vmem:[%s4 + $0x8] sm:$0xf]
  %v56 = vld [vmem:[%s4 + $0xc] sm:$0xf]
  %v57 = vld [vmem:[%s4 + $0x10] sm:$0xf]
  %v58 = vld [vmem:[%s4 + $0x14] sm:$0xf]
  %v59 = vld [vmem:[%s4 + $0x18] sm:$0xf]
  %v60 = vld [vmem:[%s4 + $0x1c] sm:$0xf]
  %v61 = vld [vmem:[%s4 + $0x20] sm:$0xf]
  %v62 = vld [vmem:[%s4 + $0x24] sm:$0xf]
  %v63 = vld [vmem:[%s4 + $0x28] sm:$0xf]
  %v64 = vld [vmem:[%s4 + $0x2c] sm:$0xf]
  %v65 = vld [vmem:[%s4 + $0x30] sm:$0xf]
  %v66 = vld [vmem:[%s4 + $0x34] sm:$0xf]
  %v67 = vld [vmem:[%s4 + $0x38] sm:$0xf]
  %v68 = vld [vmem:[%s4 + $0x3c] sm:$0xf]
  %v69 = vld [vmem:[%s1] sm:$0xf]
  %v70 = vld [vmem:[%s1 + $0x4] sm:$0xf]
  %v71 = vld [vmem:[%s1 + $0x8] sm:$0xf]
  %v72 = vld [vmem:[%s1 + $0xc] sm:$0xf]
  %v73 = vld [vmem:[%s1 + $0x10] sm:$0xf]
  %v74 = vld [vmem:[%s1 + $0x14] sm:$0xf]
  %v75 = vld [vmem:[%s1 + $0x18] sm:$0xf]
  %v76 = vld [vmem:[%s1 + $0x1c] sm:$0xf]
  %v77 = vld [vmem:[%s1 + $0x20] sm:$0xf]
  %v78 = vld [vmem:[%s1 + $0x24] sm:$0xf]
  %v79 = vld [vmem:[%s1 + $0x28] sm:$0xf]
  %v80 = vld [vmem:[%s1 + $0x2c] sm:$0xf]
  %v81 = vld [vmem:[%s1 + $0x30] sm:$0xf]
  %v82 = vld [vmem:[%s1 + $0x34] sm:$0xf]
  %v83 = vld [vmem:[%s1 + $0x38] sm:$0xf]
  %v84 = vld [vmem:[%s1 + $0x3c] sm:$0xf]
  %v85 = vld [vmem:[%s1 + $0x40] sm:$0xf]
  %v86 = vld [vmem:[%s1 + $0x44] sm:$0xf]
  %v87 = vld [vmem:[%s1 + $0x48] sm:$0xf]
  %v88 = vld [vmem:[%s1 + $0x4c] sm:$0xf]
  %v89 = vld [vmem:[%s1 + $0x50] sm:$0x1]
  %v90 = vld [vmem:[%s5] sm:$0xf]
  %v91 = vld [vmem:[%s5 + $0x4] sm:$0xf]
  %v92 = vld [vmem:[%s5 + $0x8] sm:$0xf]
  %v93 = vld [vmem:[%s5 + $0xc] sm:$0xf]
  %v94 = vld [vmem:[%s5 + $0x10] sm:$0xf]
  %v95 = vld [vmem:[%s5 + $0x14] sm:$0xf]
  %v96 = vld [vmem:[%s5 + $0x18] sm:$0xf]
  %v97 = vld [vmem:[%s5 + $0x1c] sm:$0xf]
  %v98 = vld [vmem:[%s5 + $0x20] sm:$0xf]
  %v99 = vld [vmem:[%s5 + $0x24] sm:$0xf]
  %v100 = vld [vmem:[%s5 + $0x28] sm:$0xf]
  %v101 = vld [vmem:[%s5 + $0x2c] sm:$0xf]
  %v102 = vld [vmem:[%s5 + $0x30] sm:$0xf]
  %v103 = vld [vmem:[%s5 + $0x34] sm:$0xf]
  %v104 = vld [vmem:[%s5 + $0x38] sm:$0xf]
  %v105 = vld [vmem:[%s5 + $0x3c] sm:$0xf]
  %v127 = vunpack.c.l.b16 %v69
  %v128 = vunpack.c.l.b16 %v70
  %v129 = vunpack.c.l.b16 %v71
  %v130 = vunpack.c.l.b16 %v72
  %v131 = vunpack.c.l.b16 %v73
  %v132 = vunpack.c.l.b16 %v74
  %v133 = vunpack.c.l.b16 %v75
  %v134 = vunpack.c.l.b16 %v76
  %v135 = vunpack.c.l.b16 %v77
  %v136 = vunpack.c.l.b16 %v78
  %v137 = vunpack.c.l.b16 %v79
  %v138 = vunpack.c.l.b16 %v80
  %v139 = vunpack.c.l.b16 %v81
  %v140 = vunpack.c.l.b16 %v82
  %v141 = vunpack.c.l.b16 %v83
  %v142 = vunpack.c.l.b16 %v84
  %v143 = vunpack.c.l.b16 %v85
  %v144 = vunpack.c.l.b16 %v86
  %v145 = vunpack.c.l.b16 %v87
  %v146 = vunpack.c.l.b16 %v88
  %v147 = vunpack.c.l.b16 %v89
  %v148 = vpack.c.b16 %v128, %v127
  %v149 = vpack.c.b16 %v130, %v129
  %v150 = vpack.c.b16 %v132, %v131
  %v151 = vpack.c.b16 %v134, %v133
  %v152 = vpack.c.b16 %v136, %v135
  %v153 = vpack.c.b16 %v138, %v137
  %v154 = vpack.c.b16 %v140, %v139
  %v155 = vpack.c.b16 %v142, %v141
  %v156 = vpack.c.b16 %v144, %v143
  %v157 = vpack.c.b16 %v146, %v145
  %v158 = vpack.c.b16 %v147, %v147
  %v186 = vunpack.c.l.b16 %v90
  %v187 = vunpack.c.l.b16 %v91
  %v188 = vunpack.c.l.b16 %v92
  %v189 = vunpack.c.l.b16 %v93
  %v190 = vunpack.c.l.b16 %v94
  %v191 = vunpack.c.l.b16 %v95
  %v192 = vunpack.c.l.b16 %v96
  %v193 = vunpack.c.l.b16 %v97
  %v194 = vunpack.c.l.b16 %v98
  %v195 = vunpack.c.l.b16 %v99
  %v196 = vunpack.c.l.b16 %v100
  %v197 = vunpack.c.l.b16 %v101
  %v198 = vunpack.c.l.b16 %v102
  %v199 = vunpack.c.l.b16 %v103
  %v200 = vunpack.c.l.b16 %v104
  %v201 = vunpack.c.l.b16 %v105
  %v202 = vpack.c.b16 %v187, %v186
  %v203 = vpack.c.b16 %v189, %v188
  %v204 = vpack.c.b16 %v191, %v190
  %v205 = vpack.c.b16 %v193, %v192
  %v206 = vpack.c.b16 %v195, %v194
  %v207 = vpack.c.b16 %v197, %v196
  %v208 = vpack.c.b16 %v199, %v198
  %v209 = vpack.c.b16 %v201, %v200
  %218 = vmatpush.bf16.msra.mxu0 %v209
  %219 = vmatpush.bf16.msra.mxu0 %v208
  %220 = vmatpush.bf16.msra.mxu0 %v207
  %221 = vmatpush.bf16.msra.mxu0 %v206
  %222 = vmatpush.bf16.msra.mxu0 %v205
  %223 = vmatpush.bf16.msra.mxu0 %v204
  %224 = vmatpush.bf16.msra.mxu0 %v203
  %225 = vmatpush.bf16.msra.mxu0 %v202
  %226 = vmatmul.bf16.gmra.mxu0 %v148
  %v227 = vpop.f32.mrf.mxu0
  %v228 = vadd.f32 0.0, %v227
  %v229 = vpop.f32.mrf.mxu0
  %v230 = vadd.f32 0.0, %v229
  %231 = vmatmul.bf16.gmra.mxu0 %v149
  %v232 = vpop.f32.mrf.mxu0
  %v233 = vadd.f32 0.0, %v232
  %v234 = vpop.f32.mrf.mxu0
  %v235 = vadd.f32 0.0, %v234
  %236 = vmatmul.bf16.gmra.mxu0 %v150
  %v237 = vpop.f32.mrf.mxu0
  %v238 = vadd.f32 0.0, %v237
  %v239 = vpop.f32.mrf.mxu0
  %v240 = vadd.f32 0.0, %v239
  %241 = vmatmul.bf16.gmra.mxu0 %v151
  %v242 = vpop.f32.mrf.mxu0
  %v243 = vadd.f32 0.0, %v242
  %v244 = vpop.f32.mrf.mxu0
  %v245 = vadd.f32 0.0, %v244
  %246 = vmatmul.bf16.gmra.mxu0 %v152
  %v247 = vpop.f32.mrf.mxu0
  %v248 = vadd.f32 0.0, %v247
  %v249 = vpop.f32.mrf.mxu0
  %v250 = vadd.f32 0.0, %v249
  %251 = vmatmul.bf16.gmra.mxu0 %v153
  %v252 = vpop.f32.mrf.mxu0
  %v253 = vadd.f32 0.0, %v252
  %v254 = vpop.f32.mrf.mxu0
  %v255 = vadd.f32 0.0, %v254
  %256 = vmatmul.bf16.gmra.mxu0 %v154
  %v257 = vpop.f32.mrf.mxu0
  %v258 = vadd.f32 0.0, %v257
  %v259 = vpop.f32.mrf.mxu0
  %v260 = vadd.f32 0.0, %v259
  %261 = vmatmul.bf16.gmra.mxu0 %v155
  %v262 = vpop.f32.mrf.mxu0
  %v263 = vadd.f32 0.0, %v262
  %v264 = vpop.f32.mrf.mxu0
  %v265 = vadd.f32 0.0, %v264
  %266 = vmatmul.bf16.gmra.mxu0 %v156
  %v267 = vpop.f32.mrf.mxu0
  %v268 = vadd.f32 0.0, %v267
  %v269 = vpop.f32.mrf.mxu0
  %v270 = vadd.f32 0.0, %v269
  %271 = vmatmul.bf16.gmra.mxu0 %v157
  %v272 = vpop.f32.mrf.mxu0
  %v273 = vadd.f32 0.0, %v272
  %v274 = vpop.f32.mrf.mxu0
  %v275 = vadd.f32 0.0, %v274
  %276 = vmatmul.bf16.gmra.mxu0 %v158
  %v277 = vpop.f32.mrf.mxu0
  %v278 = vadd.f32 0.0, %v277
  %v279 = vpop.f32.mrf.mxu0
  %280 = vdwg.mxu0
  %v302 = vunpack.c.l.b16 %v32
  %v303 = vunpack.c.l.b16 %v33
  %v304 = vunpack.c.l.b16 %v34
  %v305 = vunpack.c.l.b16 %v35
  %v306 = vunpack.c.l.b16 %v36
  %v307 = vunpack.c.l.b16 %v37
  %v308 = vunpack.c.l.b16 %v38
  %v309 = vunpack.c.l.b16 %v39
  %v310 = vunpack.c.l.b16 %v40
  %v311 = vunpack.c.l.b16 %v41
  %v312 = vunpack.c.l.b16 %v42
  %v313 = vunpack.c.l.b16 %v43
  %v314 = vunpack.c.l.b16 %v44
  %v315 = vunpack.c.l.b16 %v45
  %v316 = vunpack.c.l.b16 %v46
  %v317 = vunpack.c.l.b16 %v47
  %v318 = vunpack.c.l.b16 %v48
  %v319 = vunpack.c.l.b16 %v49
  %v320 = vunpack.c.l.b16 %v50
  %v321 = vunpack.c.l.b16 %v51
  %v322 = vunpack.c.l.b16 %v52
  %v323 = vpack.c.b16 %v303, %v302
  %v324 = vpack.c.b16 %v305, %v304
  %v325 = vpack.c.b16 %v307, %v306
  %v326 = vpack.c.b16 %v309, %v308
  %v327 = vpack.c.b16 %v311, %v310
  %v328 = vpack.c.b16 %v313, %v312
  %v329 = vpack.c.b16 %v315, %v314
  %v330 = vpack.c.b16 %v317, %v316
  %v331 = vpack.c.b16 %v319, %v318
  %v332 = vpack.c.b16 %v321, %v320
  %v333 = vpack.c.b16 %v322, %v322
  %v361 = vunpack.c.l.b16 %v53
  %v362 = vunpack.c.l.b16 %v54
  %v363 = vunpack.c.l.b16 %v55
  %v364 = vunpack.c.l.b16 %v56
  %v365 = vunpack.c.l.b16 %v57
  %v366 = vunpack.c.l.b16 %v58
  %v367 = vunpack.c.l.b16 %v59
  %v368 = vunpack.c.l.b16 %v60
  %v369 = vunpack.c.l.b16 %v61
  %v370 = vunpack.c.l.b16 %v62
  %v371 = vunpack.c.l.b16 %v63
  %v372 = vunpack.c.l.b16 %v64
  %v373 = vunpack.c.l.b16 %v65
  %v374 = vunpack.c.l.b16 %v66
  %v375 = vunpack.c.l.b16 %v67
  %v376 = vunpack.c.l.b16 %v68
  %v377 = vpack.c.b16 %v362, %v361
  %v378 = vpack.c.b16 %v364, %v363
  %v379 = vpack.c.b16 %v366, %v365
  %v380 = vpack.c.b16 %v368, %v367
  %v381 = vpack.c.b16 %v370, %v369
  %v382 = vpack.c.b16 %v372, %v371
  %v383 = vpack.c.b16 %v374, %v373
  %v384 = vpack.c.b16 %v376, %v375
  %393 = vmatpush.bf16.msra.mxu0 %v384
  %394 = vmatpush.bf16.msra.mxu0 %v383
  %395 = vmatpush.bf16.msra.mxu0 %v382
  %396 = vmatpush.bf16.msra.mxu0 %v381
  %397 = vmatpush.bf16.msra.mxu0 %v380
  %398 = vmatpush.bf16.msra.mxu0 %v379
  %399 = vmatpush.bf16.msra.mxu0 %v378
  %400 = vmatpush.bf16.msra.mxu0 %v377
  %401 = vmatmul.bf16.gmra.mxu0 %v323
  %v402 = vpop.f32.mrf.mxu0
  %v403 = vadd.f32 %v228, %v402
  %v404 = vpop.f32.mrf.mxu0
  %v405 = vadd.f32 %v230, %v404
  %406 = vmatmul.bf16.gmra.mxu0 %v324
  %v407 = vpop.f32.mrf.mxu0
  %v408 = vadd.f32 %v233, %v407
  %v409 = vpop.f32.mrf.mxu0
  %v410 = vadd.f32 %v235, %v409
  %411 = vmatmul.bf16.gmra.mxu0 %v325
  %v412 = vpop.f32.mrf.mxu0
  %v413 = vadd.f32 %v238, %v412
  %v414 = vpop.f32.mrf.mxu0
  %v415 = vadd.f32 %v240, %v414
  %416 = vmatmul.bf16.gmra.mxu0 %v326
  %v417 = vpop.f32.mrf.mxu0
  %v418 = vadd.f32 %v243, %v417
  %v419 = vpop.f32.mrf.mxu0
  %v420 = vadd.f32 %v245, %v419
  %421 = vmatmul.bf16.gmra.mxu0 %v327
  %v422 = vpop.f32.mrf.mxu0
  %v423 = vadd.f32 %v248, %v422
  %v424 = vpop.f32.mrf.mxu0
  %v425 = vadd.f32 %v250, %v424
  %426 = vmatmul.bf16.gmra.mxu0 %v328
  %v427 = vpop.f32.mrf.mxu0
  %v428 = vadd.f32 %v253, %v427
  %v429 = vpop.f32.mrf.mxu0
  %v430 = vadd.f32 %v255, %v429
  %431 = vmatmul.bf16.gmra.mxu0 %v329
  %v432 = vpop.f32.mrf.mxu0
  %v433 = vadd.f32 %v258, %v432
  %v434 = vpop.f32.mrf.mxu0
  %v435 = vadd.f32 %v260, %v434
  %436 = vmatmul.bf16.gmra.mxu0 %v330
  %v437 = vpop.f32.mrf.mxu0
  %v438 = vadd.f32 %v263, %v437
  %v439 = vpop.f32.mrf.mxu0
  %v440 = vadd.f32 %v265, %v439
  %441 = vmatmul.bf16.gmra.mxu0 %v331
  %v442 = vpop.f32.mrf.mxu0
  %v443 = vadd.f32 %v268, %v442
  %v444 = vpop.f32.mrf.mxu0
  %v445 = vadd.f32 %v270, %v444
  %446 = vmatmul.bf16.gmra.mxu0 %v332
  %v447 = vpop.f32.mrf.mxu0
  %v448 = vadd.f32 %v273, %v447
  %v449 = vpop.f32.mrf.mxu0
  %v450 = vadd.f32 %v275, %v449
  %451 = vmatmul.bf16.gmra.mxu0 %v333
  %v452 = vpop.f32.mrf.mxu0
  %v453 = vadd.f32 %v278, %v452
  %v454 = vpop.f32.mrf.mxu0
  %455 = vdwg.mxu0
  %v456 = vld [vmem:[%s2] sm:$0xf]
  %v457 = vld [vmem:[%s2 + $0x4] sm:$0xf]
  %v458 = vld [vmem:[%s2 + $0x8] sm:$0xf]
  %v459 = vld [vmem:[%s2 + $0xc] sm:$0xf]
  %v460 = vld [vmem:[%s2 + $0x10] sm:$0xf]
  %v461 = vld [vmem:[%s2 + $0x14] sm:$0xf]
  %v462 = vld [vmem:[%s2 + $0x18] sm:$0xf]
  %v463 = vld [vmem:[%s2 + $0x1c] sm:$0xf]
  %v464 = vld [vmem:[%s2 + $0x20] sm:$0xf]
  %v465 = vld [vmem:[%s2 + $0x24] sm:$0xf]
  %v466 = vld [vmem:[%s2 + $0x28] sm:$0xf]
  %v467 = vld [vmem:[%s2 + $0x2c] sm:$0xf]
  %v468 = vld [vmem:[%s2 + $0x30] sm:$0xf]
  %v469 = vld [vmem:[%s2 + $0x34] sm:$0xf]
  %v470 = vld [vmem:[%s2 + $0x38] sm:$0xf]
  %v471 = vld [vmem:[%s2 + $0x3c] sm:$0xf]
  %v472 = vld [vmem:[%s2 + $0x40] sm:$0xf]
  %v473 = vld [vmem:[%s2 + $0x44] sm:$0xf]
  %v474 = vld [vmem:[%s2 + $0x48] sm:$0xf]
  %v475 = vld [vmem:[%s2 + $0x4c] sm:$0xf]
  %v476 = vld [vmem:[%s2 + $0x50] sm:$0x1]
  %v477 = vld [vmem:[%s6] sm:$0xf]
  %v478 = vld [vmem:[%s6 + $0x4] sm:$0xf]
  %v479 = vld [vmem:[%s6 + $0x8] sm:$0xf]
  %v480 = vld [vmem:[%s6 + $0xc] sm:$0xf]
  %v481 = vld [vmem:[%s6 + $0x10] sm:$0xf]
  %v482 = vld [vmem:[%s6 + $0x14] sm:$0xf]
  %v483 = vld [vmem:[%s6 + $0x18] sm:$0xf]
  %v484 = vld [vmem:[%s6 + $0x1c] sm:$0xf]
  %v485 = vld [vmem:[%s6 + $0x20] sm:$0xf]
  %v486 = vld [vmem:[%s6 + $0x24] sm:$0xf]
  %v487 = vld [vmem:[%s6 + $0x28] sm:$0xf]
  %v488 = vld [vmem:[%s6 + $0x2c] sm:$0xf]
  %v489 = vld [vmem:[%s6 + $0x30] sm:$0xf]
  %v490 = vld [vmem:[%s6 + $0x34] sm:$0xf]
  %v491 = vld [vmem:[%s6 + $0x38] sm:$0xf]
  %v492 = vld [vmem:[%s6 + $0x3c] sm:$0xf]
  %v514 = vunpack.c.l.b16 %v456
  %v515 = vunpack.c.l.b16 %v457
  %v516 = vunpack.c.l.b16 %v458
  %v517 = vunpack.c.l.b16 %v459
  %v518 = vunpack.c.l.b16 %v460
  %v519 = vunpack.c.l.b16 %v461
  %v520 = vunpack.c.l.b16 %v462
  %v521 = vunpack.c.l.b16 %v463
  %v522 = vunpack.c.l.b16 %v464
  %v523 = vunpack.c.l.b16 %v465
  %v524 = vunpack.c.l.b16 %v466
  %v525 = vunpack.c.l.b16 %v467
  %v526 = vunpack.c.l.b16 %v468
  %v527 = vunpack.c.l.b16 %v469
  %v528 = vunpack.c.l.b16 %v470
  %v529 = vunpack.c.l.b16 %v471
  %v530 = vunpack.c.l.b16 %v472
  %v531 = vunpack.c.l.b16 %v473
  %v532 = vunpack.c.l.b16 %v474
  %v533 = vunpack.c.l.b16 %v475
  %v534 = vunpack.c.l.b16 %v476
  %v535 = vpack.c.b16 %v515, %v514
  %v536 = vpack.c.b16 %v517, %v516
  %v537 = vpack.c.b16 %v519, %v518
  %v538 = vpack.c.b16 %v521, %v520
  %v539 = vpack.c.b16 %v523, %v522
  %v540 = vpack.c.b16 %v525, %v524
  %v541 = vpack.c.b16 %v527, %v526
  %v542 = vpack.c.b16 %v529, %v528
  %v543 = vpack.c.b16 %v531, %v530
  %v544 = vpack.c.b16 %v533, %v532
  %v545 = vpack.c.b16 %v534, %v534
  %v573 = vunpack.c.l.b16 %v477
  %v574 = vunpack.c.l.b16 %v478
  %v575 = vunpack.c.l.b16 %v479
  %v576 = vunpack.c.l.b16 %v480
  %v577 = vunpack.c.l.b16 %v481
  %v578 = vunpack.c.l.b16 %v482
  %v579 = vunpack.c.l.b16 %v483
  %v580 = vunpack.c.l.b16 %v484
  %v581 = vunpack.c.l.b16 %v485
  %v582 = vunpack.c.l.b16 %v486
  %v583 = vunpack.c.l.b16 %v487
  %v584 = vunpack.c.l.b16 %v488
  %v585 = vunpack.c.l.b16 %v489
  %v586 = vunpack.c.l.b16 %v490
  %v587 = vunpack.c.l.b16 %v491
  %v588 = vunpack.c.l.b16 %v492
  %v589 = vpack.c.b16 %v574, %v573
  %v590 = vpack.c.b16 %v576, %v575
  %v591 = vpack.c.b16 %v578, %v577
  %v592 = vpack.c.b16 %v580, %v579
  %v593 = vpack.c.b16 %v582, %v581
  %v594 = vpack.c.b16 %v584, %v583
  %v595 = vpack.c.b16 %v586, %v585
  %v596 = vpack.c.b16 %v588, %v587
  %605 = vmatpush.bf16.msra.mxu0 %v596
  %606 = vmatpush.bf16.msra.mxu0 %v595
  %607 = vmatpush.bf16.msra.mxu0 %v594
  %608 = vmatpush.bf16.msra.mxu0 %v593
  %609 = vmatpush.bf16.msra.mxu0 %v592
  %610 = vmatpush.bf16.msra.mxu0 %v591
  %611 = vmatpush.bf16.msra.mxu0 %v590
  %612 = vmatpush.bf16.msra.mxu0 %v589
  %613 = vmatmul.bf16.gmra.mxu0 %v535
  %v614 = vpop.f32.mrf.mxu0
  %v615 = vadd.f32 0.0, %v614
  %v616 = vpop.f32.mrf.mxu0
  %v617 = vadd.f32 0.0, %v616
  %618 = vmatmul.bf16.gmra.mxu0 %v536
  %v619 = vpop.f32.mrf.mxu0
  %v620 = vadd.f32 0.0, %v619
  %v621 = vpop.f32.mrf.mxu0
  %v622 = vadd.f32 0.0, %v621
  %623 = vmatmul.bf16.gmra.mxu0 %v537
  %v624 = vpop.f32.mrf.mxu0
  %v625 = vadd.f32 0.0, %v624
  %v626 = vpop.f32.mrf.mxu0
  %v627 = vadd.f32 0.0, %v626
  %628 = vmatmul.bf16.gmra.mxu0 %v538
  %v629 = vpop.f32.mrf.mxu0
  %v630 = vadd.f32 0.0, %v629
  %v631 = vpop.f32.mrf.mxu0
  %v632 = vadd.f32 0.0, %v631
  %633 = vmatmul.bf16.gmra.mxu0 %v539
  %v634 = vpop.f32.mrf.mxu0
  %v635 = vadd.f32 0.0, %v634
  %v636 = vpop.f32.mrf.mxu0
  %v637 = vadd.f32 0.0, %v636
  %638 = vmatmul.bf16.gmra.mxu0 %v540
  %v639 = vpop.f32.mrf.mxu0
  %v640 = vadd.f32 0.0, %v639
  %v641 = vpop.f32.mrf.mxu0
  %v642 = vadd.f32 0.0, %v641
  %643 = vmatmul.bf16.gmra.mxu0 %v541
  %v644 = vpop.f32.mrf.mxu0
  %v645 = vadd.f32 0.0, %v644
  %v646 = vpop.f32.mrf.mxu0
  %v647 = vadd.f32 0.0, %v646
  %648 = vmatmul.bf16.gmra.mxu0 %v542
  %v649 = vpop.f32.mrf.mxu0
  %v650 = vadd.f32 0.0, %v649
  %v651 = vpop.f32.mrf.mxu0
  %v652 = vadd.f32 0.0, %v651
  %653 = vmatmul.bf16.gmra.mxu0 %v543
  %v654 = vpop.f32.mrf.mxu0
  %v655 = vadd.f32 0.0, %v654
  %v656 = vpop.f32.mrf.mxu0
  %v657 = vadd.f32 0.0, %v656
  %658 = vmatmul.bf16.gmra.mxu0 %v544
  %v659 = vpop.f32.mrf.mxu0
  %v660 = vadd.f32 0.0, %v659
  %v661 = vpop.f32.mrf.mxu0
  %v662 = vadd.f32 0.0, %v661
  %663 = vmatmul.bf16.gmra.mxu0 %v545
  %v664 = vpop.f32.mrf.mxu0
  %v665 = vadd.f32 0.0, %v664
  %v666 = vpop.f32.mrf.mxu0
  %667 = vdwg.mxu0
  %v668 = vadd.f32 %v403, %v615
  %v669 = vadd.f32 %v405, %v617
  %v670 = vadd.f32 %v408, %v620
  %v671 = vadd.f32 %v410, %v622
  %v672 = vadd.f32 %v413, %v625
  %v673 = vadd.f32 %v415, %v627
  %v674 = vadd.f32 %v418, %v630
  %v675 = vadd.f32 %v420, %v632
  %v676 = vadd.f32 %v423, %v635
  %v677 = vadd.f32 %v425, %v637
  %v678 = vadd.f32 %v428, %v640
  %v679 = vadd.f32 %v430, %v642
  %v680 = vadd.f32 %v433, %v645
  %v681 = vadd.f32 %v435, %v647
  %v682 = vadd.f32 %v438, %v650
  %v683 = vadd.f32 %v440, %v652
  %v684 = vadd.f32 %v443, %v655
  %v685 = vadd.f32 %v445, %v657
  %v686 = vadd.f32 %v448, %v660
  %v687 = vadd.f32 %v450, %v662
  %v688 = vadd.f32 %v453, %v665
  %v689 = vld [vmem:[%s3] sm:$0xf]
  %v690 = vld [vmem:[%s3 + $0x4] sm:$0xf]
  %v691 = vld [vmem:[%s3 + $0x8] sm:$0xf]
  %v692 = vld [vmem:[%s3 + $0xc] sm:$0xf]
  %v693 = vld [vmem:[%s3 + $0x10] sm:$0xf]
  %v694 = vld [vmem:[%s3 + $0x14] sm:$0xf]
  %v695 = vld [vmem:[%s3 + $0x18] sm:$0xf]
  %v696 = vld [vmem:[%s3 + $0x1c] sm:$0xf]
  %v697 = vld [vmem:[%s3 + $0x20] sm:$0xf]
  %v698 = vld [vmem:[%s3 + $0x24] sm:$0xf]
  %v699 = vld [vmem:[%s3 + $0x28] sm:$0xf]
  %v700 = vld [vmem:[%s3 + $0x2c] sm:$0xf]
  %v701 = vld [vmem:[%s3 + $0x30] sm:$0xf]
  %v702 = vld [vmem:[%s3 + $0x34] sm:$0xf]
  %v703 = vld [vmem:[%s3 + $0x38] sm:$0xf]
  %v704 = vld [vmem:[%s3 + $0x3c] sm:$0xf]
  %v705 = vld [vmem:[%s3 + $0x40] sm:$0xf]
  %v706 = vld [vmem:[%s3 + $0x44] sm:$0xf]
  %v707 = vld [vmem:[%s3 + $0x48] sm:$0xf]
  %v708 = vld [vmem:[%s3 + $0x4c] sm:$0xf]
  %v709 = vld [vmem:[%s3 + $0x50] sm:$0x1]
  %v710 = vld [vmem:[%s7] sm:$0xf]
  %v711 = vld [vmem:[%s7 + $0x4] sm:$0xf]
  %v712 = vld [vmem:[%s7 + $0x8] sm:$0xf]
  %v713 = vld [vmem:[%s7 + $0xc] sm:$0xf]
  %v714 = vld [vmem:[%s7 + $0x10] sm:$0xf]
  %v715 = vld [vmem:[%s7 + $0x14] sm:$0xf]
  %v716 = vld [vmem:[%s7 + $0x18] sm:$0xf]
  %v717 = vld [vmem:[%s7 + $0x1c] sm:$0xf]
  %v718 = vld [vmem:[%s7 + $0x20] sm:$0xf]
  %v719 = vld [vmem:[%s7 + $0x24] sm:$0xf]
  %v720 = vld [vmem:[%s7 + $0x28] sm:$0xf]
  %v721 = vld [vmem:[%s7 + $0x2c] sm:$0xf]
  %v722 = vld [vmem:[%s7 + $0x30] sm:$0xf]
  %v723 = vld [vmem:[%s7 + $0x34] sm:$0xf]
  %v724 = vld [vmem:[%s7 + $0x38] sm:$0xf]
  %v725 = vld [vmem:[%s7 + $0x3c] sm:$0xf]
  %v747 = vunpack.c.l.b16 %v689
  %v748 = vunpack.c.l.b16 %v690
  %v749 = vunpack.c.l.b16 %v691
  %v750 = vunpack.c.l.b16 %v692
  %v751 = vunpack.c.l.b16 %v693
  %v752 = vunpack.c.l.b16 %v694
  %v753 = vunpack.c.l.b16 %v695
  %v754 = vunpack.c.l.b16 %v696
  %v755 = vunpack.c.l.b16 %v697
  %v756 = vunpack.c.l.b16 %v698
  %v757 = vunpack.c.l.b16 %v699
  %v758 = vunpack.c.l.b16 %v700
  %v759 = vunpack.c.l.b16 %v701
  %v760 = vunpack.c.l.b16 %v702
  %v761 = vunpack.c.l.b16 %v703
  %v762 = vunpack.c.l.b16 %v704
  %v763 = vunpack.c.l.b16 %v705
  %v764 = vunpack.c.l.b16 %v706
  %v765 = vunpack.c.l.b16 %v707
  %v766 = vunpack.c.l.b16 %v708
  %v767 = vunpack.c.l.b16 %v709
  %v768 = vpack.c.b16 %v748, %v747
  %v769 = vpack.c.b16 %v750, %v749
  %v770 = vpack.c.b16 %v752, %v751
  %v771 = vpack.c.b16 %v754, %v753
  %v772 = vpack.c.b16 %v756, %v755
  %v773 = vpack.c.b16 %v758, %v757
  %v774 = vpack.c.b16 %v760, %v759
  %v775 = vpack.c.b16 %v762, %v761
  %v776 = vpack.c.b16 %v764, %v763
  %v777 = vpack.c.b16 %v766, %v765
  %v778 = vpack.c.b16 %v767, %v767
  %v806 = vunpack.c.l.b16 %v710
  %v807 = vunpack.c.l.b16 %v711
  %v808 = vunpack.c.l.b16 %v712
  %v809 = vunpack.c.l.b16 %v713
  %v810 = vunpack.c.l.b16 %v714
  %v811 = vunpack.c.l.b16 %v715
  %v812 = vunpack.c.l.b16 %v716
  %v813 = vunpack.c.l.b16 %v717
  %v814 = vunpack.c.l.b16 %v718
  %v815 = vunpack.c.l.b16 %v719
  %v816 = vunpack.c.l.b16 %v720
  %v817 = vunpack.c.l.b16 %v721
  %v818 = vunpack.c.l.b16 %v722
  %v819 = vunpack.c.l.b16 %v723
  %v820 = vunpack.c.l.b16 %v724
  %v821 = vunpack.c.l.b16 %v725
  %v822 = vpack.c.b16 %v807, %v806
  %v823 = vpack.c.b16 %v809, %v808
  %v824 = vpack.c.b16 %v811, %v810
  %v825 = vpack.c.b16 %v813, %v812
  %v826 = vpack.c.b16 %v815, %v814
  %v827 = vpack.c.b16 %v817, %v816
  %v828 = vpack.c.b16 %v819, %v818
  %v829 = vpack.c.b16 %v821, %v820
  %838 = vmatpush.bf16.msra.mxu0 %v829
  %839 = vmatpush.bf16.msra.mxu0 %v828
  %840 = vmatpush.bf16.msra.mxu0 %v827
  %841 = vmatpush.bf16.msra.mxu0 %v826
  %842 = vmatpush.bf16.msra.mxu0 %v825
  %843 = vmatpush.bf16.msra.mxu0 %v824
  %844 = vmatpush.bf16.msra.mxu0 %v823
  %845 = vmatpush.bf16.msra.mxu0 %v822
  %846 = vmatmul.bf16.gmra.mxu0 %v768
  %v847 = vpop.f32.mrf.mxu0
  %v848 = vadd.f32 0.0, %v847
  %v849 = vpop.f32.mrf.mxu0
  %v850 = vadd.f32 0.0, %v849
  %851 = vmatmul.bf16.gmra.mxu0 %v769
  %v852 = vpop.f32.mrf.mxu0
  %v853 = vadd.f32 0.0, %v852
  %v854 = vpop.f32.mrf.mxu0
  %v855 = vadd.f32 0.0, %v854
  %856 = vmatmul.bf16.gmra.mxu0 %v770
  %v857 = vpop.f32.mrf.mxu0
  %v858 = vadd.f32 0.0, %v857
  %v859 = vpop.f32.mrf.mxu0
  %v860 = vadd.f32 0.0, %v859
  %861 = vmatmul.bf16.gmra.mxu0 %v771
  %v862 = vpop.f32.mrf.mxu0
  %v863 = vadd.f32 0.0, %v862
  %v864 = vpop.f32.mrf.mxu0
  %v865 = vadd.f32 0.0, %v864
  %866 = vmatmul.bf16.gmra.mxu0 %v772
  %v867 = vpop.f32.mrf.mxu0
  %v868 = vadd.f32 0.0, %v867
  %v869 = vpop.f32.mrf.mxu0
  %v870 = vadd.f32 0.0, %v869
  %871 = vmatmul.bf16.gmra.mxu0 %v773
  %v872 = vpop.f32.mrf.mxu0
  %v873 = vadd.f32 0.0, %v872
  %v874 = vpop.f32.mrf.mxu0
  %v875 = vadd.f32 0.0, %v874
  %876 = vmatmul.bf16.gmra.mxu0 %v774
  %v877 = vpop.f32.mrf.mxu0
  %v878 = vadd.f32 0.0, %v877
  %v879 = vpop.f32.mrf.mxu0
  %v880 = vadd.f32 0.0, %v879
  %881 = vmatmul.bf16.gmra.mxu0 %v775
  %v882 = vpop.f32.mrf.mxu0
  %v883 = vadd.f32 0.0, %v882
  %v884 = vpop.f32.mrf.mxu0
  %v885 = vadd.f32 0.0, %v884
  %886 = vmatmul.bf16.gmra.mxu0 %v776
  %v887 = vpop.f32.mrf.mxu0
  %v888 = vadd.f32 0.0, %v887
  %v889 = vpop.f32.mrf.mxu0
  %v890 = vadd.f32 0.0, %v889
  %891 = vmatmul.bf16.gmra.mxu0 %v777
  %v892 = vpop.f32.mrf.mxu0
  %v893 = vadd.f32 0.0, %v892
  %v894 = vpop.f32.mrf.mxu0
  %v895 = vadd.f32 0.0, %v894
  %896 = vmatmul.bf16.gmra.mxu0 %v778
  %v897 = vpop.f32.mrf.mxu0
  %v898 = vadd.f32 0.0, %v897
  %v899 = vpop.f32.mrf.mxu0
  %900 = vdwg.mxu0
  %v901 = vadd.f32 %v668, %v848
  %v902 = vadd.f32 %v669, %v850
  %v903 = vadd.f32 %v670, %v853
  %v904 = vadd.f32 %v671, %v855
  %v905 = vadd.f32 %v672, %v858
  %v906 = vadd.f32 %v673, %v860
  %v907 = vadd.f32 %v674, %v863
  %v908 = vadd.f32 %v675, %v865
  %v909 = vadd.f32 %v676, %v868
  %v910 = vadd.f32 %v677, %v870
  %v911 = vadd.f32 %v678, %v873
  %v912 = vadd.f32 %v679, %v875
  %v913 = vadd.f32 %v680, %v878
  %v914 = vadd.f32 %v681, %v880
  %v915 = vadd.f32 %v682, %v883
  %v916 = vadd.f32 %v683, %v885
  %v917 = vadd.f32 %v684, %v888
  %v918 = vadd.f32 %v685, %v890
  %v919 = vadd.f32 %v686, %v893
  %v920 = vadd.f32 %v687, %v895
  %v921 = vadd.f32 %v688, %v898
  %v922 = vld [vmem:[%s8] sm:$0x1]
  %v924 = vperm.slane %v922, 0
  %v926 = vadd.f32 %v901, %v924
  %v927 = vadd.f32 %v902, %v924
  %v928 = vadd.f32 %v903, %v924
  %v929 = vadd.f32 %v904, %v924
  %v930 = vadd.f32 %v905, %v924
  %v931 = vadd.f32 %v906, %v924
  %v932 = vadd.f32 %v907, %v924
  %v933 = vadd.f32 %v908, %v924
  %v934 = vadd.f32 %v909, %v924
  %v935 = vadd.f32 %v910, %v924
  %v936 = vadd.f32 %v911, %v924
  %v937 = vadd.f32 %v912, %v924
  %v938 = vadd.f32 %v913, %v924
  %v939 = vadd.f32 %v914, %v924
  %v940 = vadd.f32 %v915, %v924
  %v941 = vadd.f32 %v916, %v924
  %v942 = vadd.f32 %v917, %v924
  %v943 = vadd.f32 %v918, %v924
  %v944 = vadd.f32 %v919, %v924
  %v945 = vadd.f32 %v920, %v924
  %v946 = vadd.f32 %v921, %v924
  %v947 = vmax.f32 %v926, 0.0
  %v948 = vmax.f32 %v927, 0.0
  %v949 = vmax.f32 %v928, 0.0
  %v950 = vmax.f32 %v929, 0.0
  %v951 = vmax.f32 %v930, 0.0
  %v952 = vmax.f32 %v931, 0.0
  %v953 = vmax.f32 %v932, 0.0
  %v954 = vmax.f32 %v933, 0.0
  %v955 = vmax.f32 %v934, 0.0
  %v956 = vmax.f32 %v935, 0.0
  %v957 = vmax.f32 %v936, 0.0
  %v958 = vmax.f32 %v937, 0.0
  %v959 = vmax.f32 %v938, 0.0
  %v960 = vmax.f32 %v939, 0.0
  %v961 = vmax.f32 %v940, 0.0
  %v962 = vmax.f32 %v941, 0.0
  %v963 = vmax.f32 %v942, 0.0
  %v964 = vmax.f32 %v943, 0.0
  %v965 = vmax.f32 %v944, 0.0
  %v966 = vmax.f32 %v945, 0.0
  %v967 = vmax.f32 %v946, 0.0
  %v968 = vpack.c.bf16 %v947, %v947
  %v969 = vpack.c.bf16 %v948, %v948
  %v970 = vpack.c.bf16 %v949, %v949
  %v971 = vpack.c.bf16 %v950, %v950
  %v972 = vpack.c.bf16 %v951, %v951
  %v973 = vpack.c.bf16 %v952, %v952
  %v974 = vpack.c.bf16 %v953, %v953
  %v975 = vpack.c.bf16 %v954, %v954
  %v976 = vpack.c.bf16 %v955, %v955
  %v977 = vpack.c.bf16 %v956, %v956
  %v978 = vpack.c.bf16 %v957, %v957
  %v979 = vpack.c.bf16 %v958, %v958
  %v980 = vpack.c.bf16 %v959, %v959
  %v981 = vpack.c.bf16 %v960, %v960
  %v982 = vpack.c.bf16 %v961, %v961
  %v983 = vpack.c.bf16 %v962, %v962
  %v984 = vpack.c.bf16 %v963, %v963
  %v985 = vpack.c.bf16 %v964, %v964
  %v986 = vpack.c.bf16 %v965, %v965
  %v987 = vpack.c.bf16 %v966, %v966
  %v988 = vpack.c.bf16 %v967, %v967
  %vm989 = vcmask 519168
  %990 = vst.msk [vmem:[%s9] sm:$0xf] %vm989, %v968
  %991 = vst.msk [vmem:[%s9 + $0x4] sm:$0xf] %vm989, %v969
  %992 = vst.msk [vmem:[%s9 + $0x8] sm:$0xf] %vm989, %v970
  %993 = vst.msk [vmem:[%s9 + $0xc] sm:$0xf] %vm989, %v971
  %994 = vst.msk [vmem:[%s9 + $0x10] sm:$0xf] %vm989, %v972
  %995 = vst.msk [vmem:[%s9 + $0x14] sm:$0xf] %vm989, %v973
  %996 = vst.msk [vmem:[%s9 + $0x18] sm:$0xf] %vm989, %v974
  %997 = vst.msk [vmem:[%s9 + $0x1c] sm:$0xf] %vm989, %v975
  %998 = vst.msk [vmem:[%s9 + $0x20] sm:$0xf] %vm989, %v976
  %999 = vst.msk [vmem:[%s9 + $0x24] sm:$0xf] %vm989, %v977
  %1000 = vst.msk [vmem:[%s9 + $0x28] sm:$0xf] %vm989, %v978
  %1001 = vst.msk [vmem:[%s9 + $0x2c] sm:$0xf] %vm989, %v979
  %1002 = vst.msk [vmem:[%s9 + $0x30] sm:$0xf] %vm989, %v980
  %1003 = vst.msk [vmem:[%s9 + $0x34] sm:$0xf] %vm989, %v981
  %1004 = vst.msk [vmem:[%s9 + $0x38] sm:$0xf] %vm989, %v982
  %1005 = vst.msk [vmem:[%s9 + $0x3c] sm:$0xf] %vm989, %v983
  %1006 = vst.msk [vmem:[%s9 + $0x40] sm:$0xf] %vm989, %v984
  %1007 = vst.msk [vmem:[%s9 + $0x44] sm:$0xf] %vm989, %v985
  %1008 = vst.msk [vmem:[%s9 + $0x48] sm:$0xf] %vm989, %v986
  %1009 = vst.msk [vmem:[%s9 + $0x4c] sm:$0xf] %vm989, %v987
  %vm1010 = vcmask 516096
  %1011 = vst.msk [vmem:[%s9 + $0x50] sm:$0x1] %vm1010, %v988
  // Predicated region
  $region38: #{forward.5} parent=0 // pred_check
    _
  $region39: #{forward.5} parent=0 // pred_check_branch
    %1013 = sbr.rel (0) target = $region41
  $region40: #{forward.5} parent=0 // pred_region
    _
  $region41: #{forward.5} parent=0 // pred_fallthru
    _
  // Predicated region
  $region42: #{forward.5} parent=0 // pred_check
    _
  $region43: #{forward.5} parent=0 // pred_check_branch
    %1015 = sbr.rel (0) target = $region45
  $region44: #{forward.5} parent=0 // pred_region
    _
  $region45: #{forward.5} parent=0 // pred_fallthru
    _

// kernel: forward.6
$region0: #{forward.6}
  #allocation0 [shape = 'u32[]', space=smem, size = 0x4, offset = 0x4, fixed_abs, tag = 'smem constant byte address 0x4 - core index']
  #allocation1 [shape = 'u32[72,128]{1,0:T(1,128)}', space=vmem, size = 0x9000, scoped, tag = 'internal scratch']
  %s0 = inlined_call_operand.vmem [shape: bf16[98,64], index: 0, kind: input, shape index: {}]
  %s1 = inlined_call_operand.vmem [shape: bf16[98,64], index: 1, kind: input, shape index: {}]
  %s2 = inlined_call_operand.vmem [shape: bf16[98,64], index: 2, kind: input, shape index: {}]
  %s3 = inlined_call_operand.vmem [shape: bf16[98,64], index: 3, kind: input, shape index: {}]
  %s4 = inlined_call_operand.vmem [shape: bf16[98,64], index: 4, kind: input, shape index: {}]
  %s5 = inlined_call_operand.vmem [shape: bf16[98,64], index: 5, kind: input, shape index: {}]
  %s6 = inlined_call_operand.vmem [shape: bf16[98,64], index: 6, kind: input, shape index: {}]
  %s7 = inlined_call_operand.vmem [shape: bf16[98,64], index: 7, kind: input, shape index: {}]
  %s8 = inlined_call_operand.vmem [shape: bf16[98,64], index: 8, kind: input, shape index: {}]
  %s9 = inlined_call_operand.vmem [shape: bf16[64,64], index: 9, kind: input, shape index: {}]
  %s10 = inlined_call_operand.vmem [shape: bf16[64,64], index: 10, kind: input, shape index: {}]
  %s11 = inlined_call_operand.vmem [shape: bf16[64,64], index: 11, kind: input, shape index: {}]
  %s12 = inlined_call_operand.vmem [shape: bf16[64,64], index: 12, kind: input, shape index: {}]
  %s13 = inlined_call_operand.vmem [shape: bf16[64,64], index: 13, kind: input, shape index: {}]
  %s14 = inlined_call_operand.vmem [shape: bf16[64,64], index: 14, kind: input, shape index: {}]
  %s15 = inlined_call_operand.vmem [shape: bf16[64,64], index: 15, kind: input, shape index: {}]
  %s16 = inlined_call_operand.vmem [shape: bf16[64,64], index: 16, kind: input, shape index: {}]
  %s17 = inlined_call_operand.vmem [shape: bf16[64,64], index: 17, kind: input, shape index: {}]
  %s18 = inlined_call_operand.vmem [shape: f32[1,64], index: 18, kind: input, shape index: {}]
  %s19 = inlined_call_operand.vmem [shape: bf16[98,64], index: 19, kind: output, shape index: {}]
  %s20 = sld [smem:[#allocation0]]
  $region86: #{forward.6} parent=0
    _
  %s22 = ssub.s32 1, %s20
  %s23 = scalar_select 0, %s22, %s20
  // Predicated region
  $region2: #{forward.6} parent=0 // pred_check
    _
  $region3: #{forward.6} parent=0 // pred_check_branch
    %25 = sbr.rel (0) target = $region5
  $region4: #{forward.6} parent=0 // pred_region
    _
  $region5: #{forward.6} parent=0 // pred_fallthru
    _
  // Predicated region
  $region6: #{forward.6} parent=0 // pred_check
    _
  $region7: #{forward.6} parent=0 // pred_check_branch
    %27 = sbr.rel (0) target = $region9
  $region8: #{forward.6} parent=0 // pred_region
    _
  $region9: #{forward.6} parent=0 // pred_fallthru
    _
  // Predicated region
  $region10: #{forward.6} parent=0 // pred_check
    _
  $region11: #{forward.6} parent=0 // pred_check_branch
    %29 = sbr.rel (0) target = $region13
  $region12: #{forward.6} parent=0 // pred_region
    _
  $region13: #{forward.6} parent=0 // pred_fallthru
    _
  // Predicated region
  $region14: #{forward.6} parent=0 // pred_check
    _
  $region15: #{forward.6} parent=0 // pred_check_branch
    %31 = sbr.rel (0) target = $region17
  $region16: #{forward.6} parent=0 // pred_region
    _
  $region17: #{forward.6} parent=0 // pred_fallthru
    _
  // Predicated region
  $region18: #{forward.6} parent=0 // pred_check
    _
  $region19: #{forward.6} parent=0 // pred_check_branch
    %33 = sbr.rel (0) target = $region21
  $region20: #{forward.6} parent=0 // pred_region
    _
  $region21: #{forward.6} parent=0 // pred_fallthru
    _
  // Predicated region
  $region22: #{forward.6} parent=0 // pred_check
    _
  $region23: #{forward.6} parent=0 // pred_check_branch
    %35 = sbr.rel (0) target = $region25
  $region24: #{forward.6} parent=0 // pred_region
    _
  $region25: #{forward.6} parent=0 // pred_fallthru
    _
  // Predicated region
  $region26: #{forward.6} parent=0 // pred_check
    _
  $region27: #{forward.6} parent=0 // pred_check_branch
    %37 = sbr.rel (0) target = $region29
  $region28: #{forward.6} parent=0 // pred_region
    _
  $region29: #{forward.6} parent=0 // pred_fallthru
    _
  // Predicated region
  $region30: #{forward.6} parent=0 // pred_check
    _
  $region31: #{forward.6} parent=0 // pred_check_branch
    %39 = sbr.rel (0) target = $region33
  $region32: #{forward.6} parent=0 // pred_region
    _
  $region33: #{forward.6} parent=0 // pred_fallthru
    _
  // Predicated region
  $region34: #{forward.6} parent=0 // pred_check
    _
  $region35: #{forward.6} parent=0 // pred_check_branch
    %41 = sbr.rel (0) target = $region37
  $region36: #{forward.6} parent=0 // pred_region
    _
  $region37: #{forward.6} parent=0 // pred_fallthru
    _
  // Predicated region
  $region38: #{forward.6} parent=0 // pred_check
    _
  $region39: #{forward.6} parent=0 // pred_check_branch
    %43 = sbr.rel (0) target = $region41
  $region40: #{forward.6} parent=0 // pred_region
    _
  $region41: #{forward.6} parent=0 // pred_fallthru
    _
  // Predicated region
  $region42: #{forward.6} parent=0 // pred_check
    _
  $region43: #{forward.6} parent=0 // pred_check_branch
    %45 = sbr.rel (0) target = $region45
  $region44: #{forward.6} parent=0 // pred_region
    _
  $region45: #{forward.6} parent=0 // pred_fallthru
    _
  // Predicated region
  $region46: #{forward.6} parent=0 // pred_check
    _
  $region47: #{forward.6} parent=0 // pred_check_branch
    %47 = sbr.rel (0) target = $region49
  $region48: #{forward.6} parent=0 // pred_region
    _
  $region49: #{forward.6} parent=0 // pred_fallthru
    _
  // Predicated region
  $region50: #{forward.6} parent=0 // pred_check
    _
  $region51: #{forward.6} parent=0 // pred_check_branch
    %49 = sbr.rel (0) target = $region53
  $region52: #{forward.6} parent=0 // pred_region
    _
  $region53: #{forward.6} parent=0 // pred_fallthru
    _
  // Predicated region
  $region54: #{forward.6} parent=0 // pred_check
    _
  $region55: #{forward.6} parent=0 // pred_check_branch
    %51 = sbr.rel (0) target = $region57
  $region56: #{forward.6} parent=0 // pred_region
    _
  $region57: #{forward.6} parent=0 // pred_fallthru
    _
  // Predicated region
  $region58: #{forward.6} parent=0 // pred_check
    _
  $region59: #{forward.6} parent=0 // pred_check_branch
    %53 = sbr.rel (0) target = $region61
  $region60: #{forward.6} parent=0 // pred_region
    _
  $region61: #{forward.6} parent=0 // pred_fallthru
    _
  // Predicated region
  $region62: #{forward.6} parent=0 // pred_check
    _
  $region63: #{forward.6} parent=0 // pred_check_branch
    %55 = sbr.rel (0) target = $region65
  $region64: #{forward.6} parent=0 // pred_region
    _
  $region65: #{forward.6} parent=0 // pred_fallthru
    _
  // Predicated region
  $region66: #{forward.6} parent=0 // pred_check
    _
  $region67: #{forward.6} parent=0 // pred_check_branch
    %57 = sbr.rel (0) target = $region69
  $region68: #{forward.6} parent=0 // pred_region
    _
  $region69: #{forward.6} parent=0 // pred_fallthru
    _
  // Predicated region
  $region70: #{forward.6} parent=0 // pred_check
    _
  $region71: #{forward.6} parent=0 // pred_check_branch
    %59 = sbr.rel (0) target = $region73
  $region72: #{forward.6} parent=0 // pred_region
    _
  $region73: #{forward.6} parent=0 // pred_fallthru
    _
  // Predicated region
  $region74: #{forward.6} parent=0 // pred_check
    _
  $region75: #{forward.6} parent=0 // pred_check_branch
    %61 = sbr.rel (0) target = $region77
  $region76: #{forward.6} parent=0 // pred_region
    _
  $region77: #{forward.6} parent=0 // pred_fallthru
    _
  %v63 = vld [vmem:[%s0] sm:$0xf]
  %v64 = vld [vmem:[%s0 + $0x4] sm:$0xf]
  %v65 = vld [vmem:[%s0 + $0x8] sm:$0xf]
  %v66 = vld [vmem:[%s0 + $0xc] sm:$0xf]
  %v67 = vld [vmem:[%s0 + $0x10] sm:$0xf]
  %v68 = vld [vmem:[%s0 + $0x14] sm:$0xf]
  %v69 = vld [vmem:[%s0 + $0x18] sm:$0xf]
  %v70 = vld [vmem:[%s0 + $0x1c] sm:$0xf]
  %v71 = vld [vmem:[%s0 + $0x20] sm:$0xf]
  %v72 = vld [vmem:[%s0 + $0x24] sm:$0xf]
  %v73 = vld [vmem:[%s0 + $0x28] sm:$0xf]
  %v74 = vld [vmem:[%s0 + $0x2c] sm:$0xf]
  %v75 = vld [vmem:[%s0 + $0x30] sm:$0x1]
  %v76 = vld [vmem:[%s9] sm:$0xf]
  %v77 = vld [vmem:[%s9 + $0x4] sm:$0xf]
  %v78 = vld [vmem:[%s9 + $0x8] sm:$0xf]
  %v79 = vld [vmem:[%s9 + $0xc] sm:$0xf]
  %v80 = vld [vmem:[%s9 + $0x10] sm:$0xf]
  %v81 = vld [vmem:[%s9 + $0x14] sm:$0xf]
  %v82 = vld [vmem:[%s9 + $0x18] sm:$0xf]
  %v83 = vld [vmem:[%s9 + $0x1c] sm:$0xf]
  %v84 = vld [vmem:[%s1] sm:$0xf]
  %v85 = vld [vmem:[%s1 + $0x4] sm:$0xf]
  %v86 = vld [vmem:[%s1 + $0x8] sm:$0xf]
  %v87 = vld [vmem:[%s1 + $0xc] sm:$0xf]
  %v88 = vld [vmem:[%s1 + $0x10] sm:$0xf]
  %v89 = vld [vmem:[%s1 + $0x14] sm:$0xf]
  %v90 = vld [vmem:[%s1 + $0x18] sm:$0xf]
  %v91 = vld [vmem:[%s1 + $0x1c] sm:$0xf]
  %v92 = vld [vmem:[%s1 + $0x20] sm:$0xf]
  %v93 = vld [vmem:[%s1 + $0x24] sm:$0xf]
  %v94 = vld [vmem:[%s1 + $0x28] sm:$0xf]
  %v95 = vld [vmem:[%s1 + $0x2c] sm:$0xf]
  %v96 = vld [vmem:[%s1 + $0x30] sm:$0x1]
  %v97 = vld [vmem:[%s10] sm:$0xf]
  %v98 = vld [vmem:[%s10 + $0x4] sm:$0xf]
  %v99 = vld [vmem:[%s10 + $0x8] sm:$0xf]
  %v100 = vld [vmem:[%s10 + $0xc] sm:$0xf]
  %v101 = vld [vmem:[%s10 + $0x10] sm:$0xf]
  %v102 = vld [vmem:[%s10 + $0x14] sm:$0xf]
  %v103 = vld [vmem:[%s10 + $0x18] sm:$0xf]
  %v104 = vld [vmem:[%s10 + $0x1c] sm:$0xf]
  %v118 = vunpack.c.l.b16 %v84
  %v119 = vunpack.c.l.b16 %v85
  %v120 = vunpack.c.l.b16 %v86
  %v121 = vunpack.c.l.b16 %v87
  %v122 = vunpack.c.l.b16 %v88
  %v123 = vunpack.c.l.b16 %v89
  %v124 = vunpack.c.l.b16 %v90
  %v125 = vunpack.c.l.b16 %v91
  %v126 = vunpack.c.l.b16 %v92
  %v127 = vunpack.c.l.b16 %v93
  %v128 = vunpack.c.l.b16 %v94
  %v129 = vunpack.c.l.b16 %v95
  %v130 = vunpack.c.l.b16 %v96
  %v131 = vpack.c.b16 %v119, %v118
  %v132 = vpack.c.b16 %v121, %v120
  %v133 = vpack.c.b16 %v123, %v122
  %v134 = vpack.c.b16 %v125, %v124
  %v135 = vpack.c.b16 %v127, %v126
  %v136 = vpack.c.b16 %v129, %v128
  %v137 = vpack.c.b16 %v130, %v130
  %v146 = vunpack.c.l.b16 %v97
  %v147 = vunpack.c.l.b16 %v98
  %v148 = vunpack.c.l.b16 %v99
  %v149 = vunpack.c.l.b16 %v100
  %v150 = vunpack.c.l.b16 %v101
  %v151 = vunpack.c.l.b16 %v102
  %v152 = vunpack.c.l.b16 %v103
  %v153 = vunpack.c.l.b16 %v104
  %v154 = vpack.c.b16 %v147, %v146
  %v155 = vpack.c.b16 %v149, %v148
  %v156 = vpack.c.b16 %v151, %v150
  %v157 = vpack.c.b16 %v153, %v152
  %vm162 = vcmask 523264
  %v164 = vsel %vm162, %v131, 0
  %v167 = vsel %vm162, %v132, 0
  %v170 = vsel %vm162, %v133, 0
  %v173 = vsel %vm162, %v134, 0
  %v176 = vsel %vm162, %v135, 0
  %v179 = vsel %vm162, %v136, 0
  %v182 = vsel %vm162, %v137, 0
  %184 = vmatpush.bf16.msra.mxu0 0
  %185 = vmatpush.bf16.msra.mxu0 0
  %186 = vmatpush.bf16.msra.mxu0 0
  %187 = vmatpush.bf16.msra.mxu0 0
  %188 = vmatpush.bf16.msra.mxu0 %v157
  %189 = vmatpush.bf16.msra.mxu0 %v156
  %190 = vmatpush.bf16.msra.mxu0 %v155
  %191 = vmatpush.bf16.msra.mxu0 %v154
  %192 = vmatmul.bf16.gmra.mxu0 %v164
  %v193 = vpop.f32.mrf.mxu0
  %v194 = vadd.f32 0.0, %v193
  %v195 = vpop.f32.mrf.mxu0
  %v196 = vadd.f32 0.0, %v195
  %197 = vmatmul.bf16.gmra.mxu0 %v167
  %v198 = vpop.f32.mrf.mxu0
  %v199 = vadd.f32 0.0, %v198
  %v200 = vpop.f32.mrf.mxu0
  %v201 = vadd.f32 0.0, %v200
  %202 = vmatmul.bf16.gmra.mxu0 %v170
  %v203 = vpop.f32.mrf.mxu0
  %v204 = vadd.f32 0.0, %v203
  %v205 = vpop.f32.mrf.mxu0
  %v206 = vadd.f32 0.0, %v205
  %207 = vmatmul.bf16.gmra.mxu0 %v173
  %v208 = vpop.f32.mrf.mxu0
  %v209 = vadd.f32 0.0, %v208
  %v210 = vpop.f32.mrf.mxu0
  %v211 = vadd.f32 0.0, %v210
  %212 = vmatmul.bf16.gmra.mxu0 %v176
  %v213 = vpop.f32.mrf.mxu0
  %v214 = vadd.f32 0.0, %v213
  %v215 = vpop.f32.mrf.mxu0
  %v216 = vadd.f32 0.0, %v215
  %217 = vmatmul.bf16.gmra.mxu0 %v179
  %v218 = vpop.f32.mrf.mxu0
  %v219 = vadd.f32 0.0, %v218
  %v220 = vpop.f32.mrf.mxu0
  %v221 = vadd.f32 0.0, %v220
  %222 = vmatmul.bf16.gmra.mxu0 %v182
  %v223 = vpop.f32.mrf.mxu0
  %v224 = vadd.f32 0.0, %v223
  %v225 = vpop.f32.mrf.mxu0
  %226 = vdwg.mxu0
  %v240 = vunpack.c.l.b16 %v63
  %v241 = vunpack.c.l.b16 %v64
  %v242 = vunpack.c.l.b16 %v65
  %v243 = vunpack.c.l.b16 %v66
  %v244 = vunpack.c.l.b16 %v67
  %v245 = vunpack.c.l.b16 %v68
  %v246 = vunpack.c.l.b16 %v69
  %v247 = vunpack.c.l.b16 %v70
  %v248 = vunpack.c.l.b16 %v71
  %v249 = vunpack.c.l.b16 %v72
  %v250 = vunpack.c.l.b16 %v73
  %v251 = vunpack.c.l.b16 %v74
  %v252 = vunpack.c.l.b16 %v75
  %v253 = vpack.c.b16 %v241, %v240
  %v254 = vpack.c.b16 %v243, %v242
  %v255 = vpack.c.b16 %v245, %v244
  %v256 = vpack.c.b16 %v247, %v246
  %v257 = vpack.c.b16 %v249, %v248
  %v258 = vpack.c.b16 %v251, %v250
  %v259 = vpack.c.b16 %v252, %v252
  %v268 = vunpack.c.l.b16 %v76
  %v269 = vunpack.c.l.b16 %v77
  %v270 = vunpack.c.l.b16 %v78
  %v271 = vunpack.c.l.b16 %v79
  %v272 = vunpack.c.l.b16 %v80
  %v273 = vunpack.c.l.b16 %v81
  %v274 = vunpack.c.l.b16 %v82
  %v275 = vunpack.c.l.b16 %v83
  %v276 = vpack.c.b16 %v269, %v268
  %v277 = vpack.c.b16 %v271, %v270
  %v278 = vpack.c.b16 %v273, %v272
  %v279 = vpack.c.b16 %v275, %v274
  %v285 = vsel %vm162, %v253, 0
  %v288 = vsel %vm162, %v254, 0
  %v291 = vsel %vm162, %v255, 0
  %v294 = vsel %vm162, %v256, 0
  %v297 = vsel %vm162, %v257, 0
  %v300 = vsel %vm162, %v258, 0
  %v303 = vsel %vm162, %v259, 0
  %305 = vmatpush.bf16.msra.mxu0 0
  %306 = vmatpush.bf16.msra.mxu0 0
  %307 = vmatpush.bf16.msra.mxu0 0
  %308 = vmatpush.bf16.msra.mxu0 0
  %309 = vmatpush.bf16.msra.mxu0 %v279
  %310 = vmatpush.bf16.msra.mxu0 %v278
  %311 = vmatpush.bf16.msra.mxu0 %v277
  %312 = vmatpush.bf16.msra.mxu0 %v276
  %313 = vmatmul.bf16.gmra.mxu0 %v285
  %v314 = vpop.f32.mrf.mxu0
  %v315 = vadd.f32 %v194, %v314
  %v316 = vpop.f32.mrf.mxu0
  %v317 = vadd.f32 %v196, %v316
  %318 = vmatmul.bf16.gmra.mxu0 %v288
  %v319 = vpop.f32.mrf.mxu0
  %v320 = vadd.f32 %v199, %v319
  %v321 = vpop.f32.mrf.mxu0
  %v322 = vadd.f32 %v201, %v321
  %323 = vmatmul.bf16.gmra.mxu0 %v291
  %v324 = vpop.f32.mrf.mxu0
  %v325 = vadd.f32 %v204, %v324
  %v326 = vpop.f32.mrf.mxu0
  %v327 = vadd.f32 %v206, %v326
  %328 = vmatmul.bf16.gmra.mxu0 %v294
  %v329 = vpop.f32.mrf.mxu0
  %v330 = vadd.f32 %v209, %v329
  %v331 = vpop.f32.mrf.mxu0
  %v332 = vadd.f32 %v211, %v331
  %333 = vmatmul.bf16.gmra.mxu0 %v297
  %v334 = vpop.f32.mrf.mxu0
  %v335 = vadd.f32 %v214, %v334
  %v336 = vpop.f32.mrf.mxu0
  %v337 = vadd.f32 %v216, %v336
  %338 = vmatmul.bf16.gmra.mxu0 %v300
  %v339 = vpop.f32.mrf.mxu0
  %v340 = vadd.f32 %v219, %v339
  %v341 = vpop.f32.mrf.mxu0
  %v342 = vadd.f32 %v221, %v341
  %343 = vmatmul.bf16.gmra.mxu0 %v303
  %v344 = vpop.f32.mrf.mxu0
  %v345 = vadd.f32 %v224, %v344
  %v346 = vpop.f32.mrf.mxu0
  %347 = vdwg.mxu0
  %v348 = vld [vmem:[%s2] sm:$0xf]
  %v349 = vld [vmem:[%s2 + $0x4] sm:$0xf]
  %v350 = vld [vmem:[%s2 + $0x8] sm:$0xf]
  %v351 = vld [vmem:[%s2 + $0xc] sm:$0xf]
  %v352 = vld [vmem:[%s2 + $0x10] sm:$0xf]
  %v353 = vld [vmem:[%s2 + $0x14] sm:$0xf]
  %v354 = vld [vmem:[%s2 + $0x18] sm:$0xf]
  %v355 = vld [vmem:[%s2 + $0x1c] sm:$0xf]
  %v356 = vld [vmem:[%s2 + $0x20] sm:$0xf]
  %v357 = vld [vmem:[%s2 + $0x24] sm:$0xf]
  %v358 = vld [vmem:[%s2 + $0x28] sm:$0xf]
  %v359 = vld [vmem:[%s2 + $0x2c] sm:$0xf]
  %v360 = vld [vmem:[%s2 + $0x30] sm:$0x1]
  %v361 = vld [vmem:[%s11] sm:$0xf]
  %v362 = vld [vmem:[%s11 + $0x4] sm:$0xf]
  %v363 = vld [vmem:[%s11 + $0x8] sm:$0xf]
  %v364 = vld [vmem:[%s11 + $0xc] sm:$0xf]
  %v365 = vld [vmem:[%s11 + $0x10] sm:$0xf]
  %v366 = vld [vmem:[%s11 + $0x14] sm:$0xf]
  %v367 = vld [vmem:[%s11 + $0x18] sm:$0xf]
  %v368 = vld [vmem:[%s11 + $0x1c] sm:$0xf]
  %v382 = vunpack.c.l.b16 %v348
  %v383 = vunpack.c.l.b16 %v349
  %v384 = vunpack.c.l.b16 %v350
  %v385 = vunpack.c.l.b16 %v351
  %v386 = vunpack.c.l.b16 %v352
  %v387 = vunpack.c.l.b16 %v353
  %v388 = vunpack.c.l.b16 %v354
  %v389 = vunpack.c.l.b16 %v355
  %v390 = vunpack.c.l.b16 %v356
  %v391 = vunpack.c.l.b16 %v357
  %v392 = vunpack.c.l.b16 %v358
  %v393 = vunpack.c.l.b16 %v359
  %v394 = vunpack.c.l.b16 %v360
  %v395 = vpack.c.b16 %v383, %v382
  %v396 = vpack.c.b16 %v385, %v384
  %v397 = vpack.c.b16 %v387, %v386
  %v398 = vpack.c.b16 %v389, %v388
  %v399 = vpack.c.b16 %v391, %v390
  %v400 = vpack.c.b16 %v393, %v392
  %v401 = vpack.c.b16 %v394, %v394
  %v410 = vunpack.c.l.b16 %v361
  %v411 = vunpack.c.l.b16 %v362
  %v412 = vunpack.c.l.b16 %v363
  %v413 = vunpack.c.l.b16 %v364
  %v414 = vunpack.c.l.b16 %v365
  %v415 = vunpack.c.l.b16 %v366
  %v416 = vunpack.c.l.b16 %v367
  %v417 = vunpack.c.l.b16 %v368
  %v418 = vpack.c.b16 %v411, %v410
  %v419 = vpack.c.b16 %v413, %v412
  %v420 = vpack.c.b16 %v415, %v414
  %v421 = vpack.c.b16 %v417, %v416
  %v427 = vsel %vm162, %v395, 0
  %v430 = vsel %vm162, %v396, 0
  %v433 = vsel %vm162, %v397, 0
  %v436 = vsel %vm162, %v398, 0
  %v439 = vsel %vm162, %v399, 0
  %v442 = vsel %vm162, %v400, 0
  %v445 = vsel %vm162, %v401, 0
  %447 = vmatpush.bf16.msra.mxu0 0
  %448 = vmatpush.bf16.msra.mxu0 0
  %449 = vmatpush.bf16.msra.mxu0 0
  %450 = vmatpush.bf16.msra.mxu0 0
  %451 = vmatpush.bf16.msra.mxu0 %v421
  %452 = vmatpush.bf16.msra.mxu0 %v420
  %453 = vmatpush.bf16.msra.mxu0 %v419
  %454 = vmatpush.bf16.msra.mxu0 %v418
  %455 = vmatmul.bf16.gmra.mxu0 %v427
  %v456 = vpop.f32.mrf.mxu0
  %v457 = vadd.f32 0.0, %v456
  %v458 = vpop.f32.mrf.mxu0
  %v459 = vadd.f32 0.0, %v458
  %460 = vmatmul.bf16.gmra.mxu0 %v430
  %v461 = vpop.f32.mrf.mxu0
  %v462 = vadd.f32 0.0, %v461
  %v463 = vpop.f32.mrf.mxu0
  %v464 = vadd.f32 0.0, %v463
  %465 = vmatmul.bf16.gmra.mxu0 %v433
  %v466 = vpop.f32.mrf.mxu0
  %v467 = vadd.f32 0.0, %v466
  %v468 = vpop.f32.mrf.mxu0
  %v469 = vadd.f32 0.0, %v468
  %470 = vmatmul.bf16.gmra.mxu0 %v436
  %v471 = vpop.f32.mrf.mxu0
  %v472 = vadd.f32 0.0, %v471
  %v473 = vpop.f32.mrf.mxu0
  %v474 = vadd.f32 0.0, %v473
  %475 = vmatmul.bf16.gmra.mxu0 %v439
  %v476 = vpop.f32.mrf.mxu0
  %v477 = vadd.f32 0.0, %v476
  %v478 = vpop.f32.mrf.mxu0
  %v479 = vadd.f32 0.0, %v478
  %480 = vmatmul.bf16.gmra.mxu0 %v442
  %v481 = vpop.f32.mrf.mxu0
  %v482 = vadd.f32 0.0, %v481
  %v483 = vpop.f32.mrf.mxu0
  %v484 = vadd.f32 0.0, %v483
  %485 = vmatmul.bf16.gmra.mxu0 %v445
  %v486 = vpop.f32.mrf.mxu0
  %v487 = vadd.f32 0.0, %v486
  %v488 = vpop.f32.mrf.mxu0
  %489 = vdwg.mxu0
  %v490 = vadd.f32 %v315, %v457
  %v491 = vadd.f32 %v317, %v459
  %v492 = vadd.f32 %v320, %v462
  %v493 = vadd.f32 %v322, %v464
  %v494 = vadd.f32 %v325, %v467
  %v495 = vadd.f32 %v327, %v469
  %v496 = vadd.f32 %v330, %v472
  %v497 = vadd.f32 %v332, %v474
  %v498 = vadd.f32 %v335, %v477
  %v499 = vadd.f32 %v337, %v479
  %v500 = vadd.f32 %v340, %v482
  %v501 = vadd.f32 %v342, %v484
  %v502 = vadd.f32 %v345, %v487
  %v503 = vld [vmem:[%s3] sm:$0xf]
  %v504 = vld [vmem:[%s3 + $0x4] sm:$0xf]
  %v505 = vld [vmem:[%s3 + $0x8] sm:$0xf]
  %v506 = vld [vmem:[%s3 + $0xc] sm:$0xf]
  %v507 = vld [vmem:[%s3 + $0x10] sm:$0xf]
  %v508 = vld [vmem:[%s3 + $0x14] sm:$0xf]
  %v509 = vld [vmem:[%s3 + $0x18] sm:$0xf]
  %v510 = vld [vmem:[%s3 + $0x1c] sm:$0xf]
  %v511 = vld [vmem:[%s3 + $0x20] sm:$0xf]
  %v512 = vld [vmem:[%s3 + $0x24] sm:$0xf]
  %v513 = vld [vmem:[%s3 + $0x28] sm:$0xf]
  %v514 = vld [vmem:[%s3 + $0x2c] sm:$0xf]
  %v515 = vld [vmem:[%s3 + $0x30] sm:$0x1]
  %v516 = vld [vmem:[%s12] sm:$0xf]
  %v517 = vld [vmem:[%s12 + $0x4] sm:$0xf]
  %v518 = vld [vmem:[%s12 + $0x8] sm:$0xf]
  %v519 = vld [vmem:[%s12 + $0xc] sm:$0xf]
  %v520 = vld [vmem:[%s12 + $0x10] sm:$0xf]
  %v521 = vld [vmem:[%s12 + $0x14] sm:$0xf]
  %v522 = vld [vmem:[%s12 + $0x18] sm:$0xf]
  %v523 = vld [vmem:[%s12 + $0x1c] sm:$0xf]
  %v537 = vunpack.c.l.b16 %v503
  %v538 = vunpack.c.l.b16 %v504
  %v539 = vunpack.c.l.b16 %v505
  %v540 = vunpack.c.l.b16 %v506
  %v541 = vunpack.c.l.b16 %v507
  %v542 = vunpack.c.l.b16 %v508
  %v543 = vunpack.c.l.b16 %v509
  %v544 = vunpack.c.l.b16 %v510
  %v545 = vunpack.c.l.b16 %v511
  %v546 = vunpack.c.l.b16 %v512
  %v547 = vunpack.c.l.b16 %v513
  %v548 = vunpack.c.l.b16 %v514
  %v549 = vunpack.c.l.b16 %v515
  %v550 = vpack.c.b16 %v538, %v537
  %v551 = vpack.c.b16 %v540, %v539
  %v552 = vpack.c.b16 %v542, %v541
  %v553 = vpack.c.b16 %v544, %v543
  %v554 = vpack.c.b16 %v546, %v545
  %v555 = vpack.c.b16 %v548, %v547
  %v556 = vpack.c.b16 %v549, %v549
  %v565 = vunpack.c.l.b16 %v516
  %v566 = vunpack.c.l.b16 %v517
  %v567 = vunpack.c.l.b16 %v518
  %v568 = vunpack.c.l.b16 %v519
  %v569 = vunpack.c.l.b16 %v520
  %v570 = vunpack.c.l.b16 %v521
  %v571 = vunpack.c.l.b16 %v522
  %v572 = vunpack.c.l.b16 %v523
  %v573 = vpack.c.b16 %v566, %v565
  %v574 = vpack.c.b16 %v568, %v567
  %v575 = vpack.c.b16 %v570, %v569
  %v576 = vpack.c.b16 %v572, %v571
  %v582 = vsel %vm162, %v550, 0
  %v585 = vsel %vm162, %v551, 0
  %v588 = vsel %vm162, %v552, 0
  %v591 = vsel %vm162, %v553, 0
  %v594 = vsel %vm162, %v554, 0
  %v597 = vsel %vm162, %v555, 0
  %v600 = vsel %vm162, %v556, 0
  %602 = vmatpush.bf16.msra.mxu0 0
  %603 = vmatpush.bf16.msra.mxu0 0
  %604 = vmatpush.bf16.msra.mxu0 0
  %605 = vmatpush.bf16.msra.mxu0 0
  %606 = vmatpush.bf16.msra.mxu0 %v576
  %607 = vmatpush.bf16.msra.mxu0 %v575
  %608 = vmatpush.bf16.msra.mxu0 %v574
  %609 = vmatpush.bf16.msra.mxu0 %v573
  %610 = vmatmul.bf16.gmra.mxu0 %v582
  %v611 = vpop.f32.mrf.mxu0
  %v612 = vadd.f32 0.0, %v611
  %v613 = vpop.f32.mrf.mxu0
  %v614 = vadd.f32 0.0, %v613
  %615 = vmatmul.bf16.gmra.mxu0 %v585
  %v616 = vpop.f32.mrf.mxu0
  %v617 = vadd.f32 0.0, %v616
  %v618 = vpop.f32.mrf.mxu0
  %v619 = vadd.f32 0.0, %v618
  %620 = vmatmul.bf16.gmra.mxu0 %v588
  %v621 = vpop.f32.mrf.mxu0
  %v622 = vadd.f32 0.0, %v621
  %v623 = vpop.f32.mrf.mxu0
  %v624 = vadd.f32 0.0, %v623
  %625 = vmatmul.bf16.gmra.mxu0 %v591
  %v626 = vpop.f32.mrf.mxu0
  %v627 = vadd.f32 0.0, %v626
  %v628 = vpop.f32.mrf.mxu0
  %v629 = vadd.f32 0.0, %v628
  %630 = vmatmul.bf16.gmra.mxu0 %v594
  %v631 = vpop.f32.mrf.mxu0
  %v632 = vadd.f32 0.0, %v631
  %v633 = vpop.f32.mrf.mxu0
  %v634 = vadd.f32 0.0, %v633
  %635 = vmatmul.bf16.gmra.mxu0 %v597
  %v636 = vpop.f32.mrf.mxu0
  %v637 = vadd.f32 0.0, %v636
  %v638 = vpop.f32.mrf.mxu0
  %v639 = vadd.f32 0.0, %v638
  %640 = vmatmul.bf16.gmra.mxu0 %v600
  %v641 = vpop.f32.mrf.mxu0
  %v642 = vadd.f32 0.0, %v641
  %v643 = vpop.f32.mrf.mxu0
  %644 = vdwg.mxu0
  %v645 = vadd.f32 %v490, %v612
  %v646 = vadd.f32 %v491, %v614
  %v647 = vadd.f32 %v492, %v617
  %v648 = vadd.f32 %v493, %v619
  %v649 = vadd.f32 %v494, %v622
  %v650 = vadd.f32 %v495, %v624
  %v651 = vadd.f32 %v496, %v627
  %v652 = vadd.f32 %v497, %v629
  %v653 = vadd.f32 %v498, %v632
  %v654 = vadd.f32 %v499, %v634
  %v655 = vadd.f32 %v500, %v637
  %v656 = vadd.f32 %v501, %v639
  %v657 = vadd.f32 %v502, %v642
  %v658 = vld [vmem:[%s4] sm:$0xf]
  %v659 = vld [vmem:[%s4 + $0x4] sm:$0xf]
  %v660 = vld [vmem:[%s4 + $0x8] sm:$0xf]
  %v661 = vld [vmem:[%s4 + $0xc] sm:$0xf]
  %v662 = vld [vmem:[%s4 + $0x10] sm:$0xf]
  %v663 = vld [vmem:[%s4 + $0x14] sm:$0xf]
  %v664 = vld [vmem:[%s4 + $0x18] sm:$0xf]
  %v665 = vld [vmem:[%s4 + $0x1c] sm:$0xf]
  %v666 = vld [vmem:[%s4 + $0x20] sm:$0xf]
  %v667 = vld [vmem:[%s4 + $0x24] sm:$0xf]
  %v668 = vld [vmem:[%s4 + $0x28] sm:$0xf]
  %v669 = vld [vmem:[%s4 + $0x2c] sm:$0xf]
  %v670 = vld [vmem:[%s4 + $0x30] sm:$0x1]
  %v671 = vld [vmem:[%s13] sm:$0xf]
  %v672 = vld [vmem:[%s13 + $0x4] sm:$0xf]
  %v673 = vld [vmem:[%s13 + $0x8] sm:$0xf]
  %v674 = vld [vmem:[%s13 + $0xc] sm:$0xf]
  %v675 = vld [vmem:[%s13 + $0x10] sm:$0xf]
  %v676 = vld [vmem:[%s13 + $0x14] sm:$0xf]
  %v677 = vld [vmem:[%s13 + $0x18] sm:$0xf]
  %v678 = vld [vmem:[%s13 + $0x1c] sm:$0xf]
  %v692 = vunpack.c.l.b16 %v658
  %v693 = vunpack.c.l.b16 %v659
  %v694 = vunpack.c.l.b16 %v660
  %v695 = vunpack.c.l.b16 %v661
  %v696 = vunpack.c.l.b16 %v662
  %v697 = vunpack.c.l.b16 %v663
  %v698 = vunpack.c.l.b16 %v664
  %v699 = vunpack.c.l.b16 %v665
  %v700 = vunpack.c.l.b16 %v666
  %v701 = vunpack.c.l.b16 %v667
  %v702 = vunpack.c.l.b16 %v668
  %v703 = vunpack.c.l.b16 %v669
  %v704 = vunpack.c.l.b16 %v670
  %v705 = vpack.c.b16 %v693, %v692
  %v706 = vpack.c.b16 %v695, %v694
  %v707 = vpack.c.b16 %v697, %v696
  %v708 = vpack.c.b16 %v699, %v698
  %v709 = vpack.c.b16 %v701, %v700
  %v710 = vpack.c.b16 %v703, %v702
  %v711 = vpack.c.b16 %v704, %v704
  %v720 = vunpack.c.l.b16 %v671
  %v721 = vunpack.c.l.b16 %v672
  %v722 = vunpack.c.l.b16 %v673
  %v723 = vunpack.c.l.b16 %v674
  %v724 = vunpack.c.l.b16 %v675
  %v725 = vunpack.c.l.b16 %v676
  %v726 = vunpack.c.l.b16 %v677
  %v727 = vunpack.c.l.b16 %v678
  %v728 = vpack.c.b16 %v721, %v720
  %v729 = vpack.c.b16 %v723, %v722
  %v730 = vpack.c.b16 %v725, %v724
  %v731 = vpack.c.b16 %v727, %v726
  %v737 = vsel %vm162, %v705, 0
  %v740 = vsel %vm162, %v706, 0
  %v743 = vsel %vm162, %v707, 0
  %v746 = vsel %vm162, %v708, 0
  %v749 = vsel %vm162, %v709, 0
  %v752 = vsel %vm162, %v710, 0
  %v755 = vsel %vm162, %v711, 0
  %757 = vmatpush.bf16.msra.mxu0 0
  %758 = vmatpush.bf16.msra.mxu0 0
  %759 = vmatpush.bf16.msra.mxu0 0
  %760 = vmatpush.bf16.msra.mxu0 0
  %761 = vmatpush.bf16.msra.mxu0 %v731
  %762 = vmatpush.bf16.msra.mxu0 %v730
  %763 = vmatpush.bf16.msra.mxu0 %v729
  %764 = vmatpush.bf16.msra.mxu0 %v728
  %765 = vmatmul.bf16.gmra.mxu0 %v737
  %v766 = vpop.f32.mrf.mxu0
  %v767 = vadd.f32 0.0, %v766
  %v768 = vpop.f32.mrf.mxu0
  %v769 = vadd.f32 0.0, %v768
  %770 = vmatmul.bf16.gmra.mxu0 %v740
  %v771 = vpop.f32.mrf.mxu0
  %v772 = vadd.f32 0.0, %v771
  %v773 = vpop.f32.mrf.mxu0
  %v774 = vadd.f32 0.0, %v773
  %775 = vmatmul.bf16.gmra.mxu0 %v743
  %v776 = vpop.f32.mrf.mxu0
  %v777 = vadd.f32 0.0, %v776
  %v778 = vpop.f32.mrf.mxu0
  %v779 = vadd.f32 0.0, %v778
  %780 = vmatmul.bf16.gmra.mxu0 %v746
  %v781 = vpop.f32.mrf.mxu0
  %v782 = vadd.f32 0.0, %v781
  %v783 = vpop.f32.mrf.mxu0
  %v784 = vadd.f32 0.0, %v783
  %785 = vmatmul.bf16.gmra.mxu0 %v749
  %v786 = vpop.f32.mrf.mxu0
  %v787 = vadd.f32 0.0, %v786
  %v788 = vpop.f32.mrf.mxu0
  %v789 = vadd.f32 0.0, %v788
  %790 = vmatmul.bf16.gmra.mxu0 %v752
  %v791 = vpop.f32.mrf.mxu0
  %v792 = vadd.f32 0.0, %v791
  %v793 = vpop.f32.mrf.mxu0
  %v794 = vadd.f32 0.0, %v793
  %795 = vmatmul.bf16.gmra.mxu0 %v755
  %v796 = vpop.f32.mrf.mxu0
  %v797 = vadd.f32 0.0, %v796
  %v798 = vpop.f32.mrf.mxu0
  %799 = vdwg.mxu0
  %v800 = vadd.f32 %v645, %v767
  %v801 = vadd.f32 %v646, %v769
  %v802 = vadd.f32 %v647, %v772
  %v803 = vadd.f32 %v648, %v774
  %v804 = vadd.f32 %v649, %v777
  %v805 = vadd.f32 %v650, %v779
  %v806 = vadd.f32 %v651, %v782
  %v807 = vadd.f32 %v652, %v784
  %v808 = vadd.f32 %v653, %v787
  %v809 = vadd.f32 %v654, %v789
  %v810 = vadd.f32 %v655, %v792
  %v811 = vadd.f32 %v656, %v794
  %v812 = vadd.f32 %v657, %v797
  %v813 = vld [vmem:[%s5] sm:$0xf]
  %v814 = vld [vmem:[%s5 + $0x4] sm:$0xf]
  %v815 = vld [vmem:[%s5 + $0x8] sm:$0xf]
  %v816 = vld [vmem:[%s5 + $0xc] sm:$0xf]
  %v817 = vld [vmem:[%s5 + $0x10] sm:$0xf]
  %v818 = vld [vmem:[%s5 + $0x14] sm:$0xf]
  %v819 = vld [vmem:[%s5 + $0x18] sm:$0xf]
  %v820 = vld [vmem:[%s5 + $0x1c] sm:$0xf]
  %v821 = vld [vmem:[%s5 + $0x20] sm:$0xf]
  %v822 = vld [vmem:[%s5 + $0x24] sm:$0xf]
  %v823 = vld [vmem:[%s5 + $0x28] sm:$0xf]
  %v824 = vld [vmem:[%s5 + $0x2c] sm:$0xf]
  %v825 = vld [vmem:[%s5 + $0x30] sm:$0x1]
  %v826 = vld [vmem:[%s14] sm:$0xf]
  %v827 = vld [vmem:[%s14 + $0x4] sm:$0xf]
  %v828 = vld [vmem:[%s14 + $0x8] sm:$0xf]
  %v829 = vld [vmem:[%s14 + $0xc] sm:$0xf]
  %v830 = vld [vmem:[%s14 + $0x10] sm:$0xf]
  %v831 = vld [vmem:[%s14 + $0x14] sm:$0xf]
  %v832 = vld [vmem:[%s14 + $0x18] sm:$0xf]
  %v833 = vld [vmem:[%s14 + $0x1c] sm:$0xf]
  %v847 = vunpack.c.l.b16 %v813
  %v848 = vunpack.c.l.b16 %v814
  %v849 = vunpack.c.l.b16 %v815
  %v850 = vunpack.c.l.b16 %v816
  %v851 = vunpack.c.l.b16 %v817
  %v852 = vunpack.c.l.b16 %v818
  %v853 = vunpack.c.l.b16 %v819
  %v854 = vunpack.c.l.b16 %v820
  %v855 = vunpack.c.l.b16 %v821
  %v856 = vunpack.c.l.b16 %v822
  %v857 = vunpack.c.l.b16 %v823
  %v858 = vunpack.c.l.b16 %v824
  %v859 = vunpack.c.l.b16 %v825
  %v860 = vpack.c.b16 %v848, %v847
  %v861 = vpack.c.b16 %v850, %v849
  %v862 = vpack.c.b16 %v852, %v851
  %v863 = vpack.c.b16 %v854, %v853
  %v864 = vpack.c.b16 %v856, %v855
  %v865 = vpack.c.b16 %v858, %v857
  %v866 = vpack.c.b16 %v859, %v859
  %v875 = vunpack.c.l.b16 %v826
  %v876 = vunpack.c.l.b16 %v827
  %v877 = vunpack.c.l.b16 %v828
  %v878 = vunpack.c.l.b16 %v829
  %v879 = vunpack.c.l.b16 %v830
  %v880 = vunpack.c.l.b16 %v831
  %v881 = vunpack.c.l.b16 %v832
  %v882 = vunpack.c.l.b16 %v833
  %v883 = vpack.c.b16 %v876, %v875
  %v884 = vpack.c.b16 %v878, %v877
  %v885 = vpack.c.b16 %v880, %v879
  %v886 = vpack.c.b16 %v882, %v881
  %v892 = vsel %vm162, %v860, 0
  %v895 = vsel %vm162, %v861, 0
  %v898 = vsel %vm162, %v862, 0
  %v901 = vsel %vm162, %v863, 0
  %v904 = vsel %vm162, %v864, 0
  %v907 = vsel %vm162, %v865, 0
  %v910 = vsel %vm162, %v866, 0
  %912 = vmatpush.bf16.msra.mxu0 0
  %913 = vmatpush.bf16.msra.mxu0 0
  %914 = vmatpush.bf16.msra.mxu0 0
  %915 = vmatpush.bf16.msra.mxu0 0
  %916 = vmatpush.bf16.msra.mxu0 %v886
  %917 = vmatpush.bf16.msra.mxu0 %v885
  %918 = vmatpush.bf16.msra.mxu0 %v884
  %919 = vmatpush.bf16.msra.mxu0 %v883
  %920 = vmatmul.bf16.gmra.mxu0 %v892
  %v921 = vpop.f32.mrf.mxu0
  %v922 = vadd.f32 0.0, %v921
  %v923 = vpop.f32.mrf.mxu0
  %v924 = vadd.f32 0.0, %v923
  %925 = vmatmul.bf16.gmra.mxu0 %v895
  %v926 = vpop.f32.mrf.mxu0
  %v927 = vadd.f32 0.0, %v926
  %v928 = vpop.f32.mrf.mxu0
  %v929 = vadd.f32 0.0, %v928
  %930 = vmatmul.bf16.gmra.mxu0 %v898
  %v931 = vpop.f32.mrf.mxu0
  %v932 = vadd.f32 0.0, %v931
  %v933 = vpop.f32.mrf.mxu0
  %v934 = vadd.f32 0.0, %v933
  %935 = vmatmul.bf16.gmra.mxu0 %v901
  %v936 = vpop.f32.mrf.mxu0
  %v937 = vadd.f32 0.0, %v936
  %v938 = vpop.f32.mrf.mxu0
  %v939 = vadd.f32 0.0, %v938
  %940 = vmatmul.bf16.gmra.mxu0 %v904
  %v941 = vpop.f32.mrf.mxu0
  %v942 = vadd.f32 0.0, %v941
  %v943 = vpop.f32.mrf.mxu0
  %v944 = vadd.f32 0.0, %v943
  %945 = vmatmul.bf16.gmra.mxu0 %v907
  %v946 = vpop.f32.mrf.mxu0
  %v947 = vadd.f32 0.0, %v946
  %v948 = vpop.f32.mrf.mxu0
  %v949 = vadd.f32 0.0, %v948
  %950 = vmatmul.bf16.gmra.mxu0 %v910
  %v951 = vpop.f32.mrf.mxu0
  %v952 = vadd.f32 0.0, %v951
  %v953 = vpop.f32.mrf.mxu0
  %954 = vdwg.mxu0
  %v955 = vadd.f32 %v800, %v922
  %v956 = vadd.f32 %v801, %v924
  %v957 = vadd.f32 %v802, %v927
  %v958 = vadd.f32 %v803, %v929
  %v959 = vadd.f32 %v804, %v932
  %v960 = vadd.f32 %v805, %v934
  %v961 = vadd.f32 %v806, %v937
  %v962 = vadd.f32 %v807, %v939
  %v963 = vadd.f32 %v808, %v942
  %v964 = vadd.f32 %v809, %v944
  %v965 = vadd.f32 %v810, %v947
  %v966 = vadd.f32 %v811, %v949
  %v967 = vadd.f32 %v812, %v952
  %v968 = vld [vmem:[%s6] sm:$0xf]
  %v969 = vld [vmem:[%s6 + $0x4] sm:$0xf]
  %v970 = vld [vmem:[%s6 + $0x8] sm:$0xf]
  %v971 = vld [vmem:[%s6 + $0xc] sm:$0xf]
  %v972 = vld [vmem:[%s6 + $0x10] sm:$0xf]
  %v973 = vld [vmem:[%s6 + $0x14] sm:$0xf]
  %v974 = vld [vmem:[%s6 + $0x18] sm:$0xf]
  %v975 = vld [vmem:[%s6 + $0x1c] sm:$0xf]
  %v976 = vld [vmem:[%s6 + $0x20] sm:$0xf]
  %v977 = vld [vmem:[%s6 + $0x24] sm:$0xf]
  %v978 = vld [vmem:[%s6 + $0x28] sm:$0xf]
  %v979 = vld [vmem:[%s6 + $0x2c] sm:$0xf]
  %v980 = vld [vmem:[%s6 + $0x30] sm:$0x1]
  %v981 = vld [vmem:[%s15] sm:$0xf]
  %v982 = vld [vmem:[%s15 + $0x4] sm:$0xf]
  %v983 = vld [vmem:[%s15 + $0x8] sm:$0xf]
  %v984 = vld [vmem:[%s15 + $0xc] sm:$0xf]
  %v985 = vld [vmem:[%s15 + $0x10] sm:$0xf]
  %v986 = vld [vmem:[%s15 + $0x14] sm:$0xf]
  %v987 = vld [vmem:[%s15 + $0x18] sm:$0xf]
  %v988 = vld [vmem:[%s15 + $0x1c] sm:$0xf]
  %v1002 = vunpack.c.l.b16 %v968
  %v1003 = vunpack.c.l.b16 %v969
  %v1004 = vunpack.c.l.b16 %v970
  %v1005 = vunpack.c.l.b16 %v971
  %v1006 = vunpack.c.l.b16 %v972
  %v1007 = vunpack.c.l.b16 %v973
  %v1008 = vunpack.c.l.b16 %v974
  %v1009 = vunpack.c.l.b16 %v975
  %v1010 = vunpack.c.l.b16 %v976
  %v1011 = vunpack.c.l.b16 %v977
  %v1012 = vunpack.c.l.b16 %v978
  %v1013 = vunpack.c.l.b16 %v979
  %v1014 = vunpack.c.l.b16 %v980
  %v1015 = vpack.c.b16 %v1003, %v1002
  %v1016 = vpack.c.b16 %v1005, %v1004
  %v1017 = vpack.c.b16 %v1007, %v1006
  %v1018 = vpack.c.b16 %v1009, %v1008
  %v1019 = vpack.c.b16 %v1011, %v1010
  %v1020 = vpack.c.b16 %v1013, %v1012
  %v1021 = vpack.c.b16 %v1014, %v1014
  %v1030 = vunpack.c.l.b16 %v981
  %v1031 = vunpack.c.l.b16 %v982
  %v1032 = vunpack.c.l.b16 %v983
  %v1033 = vunpack.c.l.b16 %v984
  %v1034 = vunpack.c.l.b16 %v985
  %v1035 = vunpack.c.l.b16 %v986
  %v1036 = vunpack.c.l.b16 %v987
  %v1037 = vunpack.c.l.b16 %v988
  %v1038 = vpack.c.b16 %v1031, %v1030
  %v1039 = vpack.c.b16 %v1033, %v1032
  %v1040 = vpack.c.b16 %v1035, %v1034
  %v1041 = vpack.c.b16 %v1037, %v1036
  %v1047 = vsel %vm162, %v1015, 0
  %v1050 = vsel %vm162, %v1016, 0
  %v1053 = vsel %vm162, %v1017, 0
  %v1056 = vsel %vm162, %v1018, 0
  %v1059 = vsel %vm162, %v1019, 0
  %v1062 = vsel %vm162, %v1020, 0
  %v1065 = vsel %vm162, %v1021, 0
  %1067 = vmatpush.bf16.msra.mxu0 0
  %1068 = vmatpush.bf16.msra.mxu0 0
  %1069 = vmatpush.bf16.msra.mxu0 0
  %1070 = vmatpush.bf16.msra.mxu0 0
  %1071 = vmatpush.bf16.msra.mxu0 %v1041
  %1072 = vmatpush.bf16.msra.mxu0 %v1040
  %1073 = vmatpush.bf16.msra.mxu0 %v1039
  %1074 = vmatpush.bf16.msra.mxu0 %v1038
  %1075 = vmatmul.bf16.gmra.mxu0 %v1047
  %v1076 = vpop.f32.mrf.mxu0
  %v1077 = vadd.f32 0.0, %v1076
  %v1078 = vpop.f32.mrf.mxu0
  %v1079 = vadd.f32 0.0, %v1078
  %1080 = vmatmul.bf16.gmra.mxu0 %v1050
  %v1081 = vpop.f32.mrf.mxu0
  %v1082 = vadd.f32 0.0, %v1081
  %v1083 = vpop.f32.mrf.mxu0
  %v1084 = vadd.f32 0.0, %v1083
  %1085 = vmatmul.bf16.gmra.mxu0 %v1053
  %v1086 = vpop.f32.mrf.mxu0
  %v1087 = vadd.f32 0.0, %v1086
  %v1088 = vpop.f32.mrf.mxu0
  %v1089 = vadd.f32 0.0, %v1088
  %1090 = vmatmul.bf16.gmra.mxu0 %v1056
  %v1091 = vpop.f32.mrf.mxu0
  %v1092 = vadd.f32 0.0, %v1091
  %v1093 = vpop.f32.mrf.mxu0
  %v1094 = vadd.f32 0.0, %v1093
  %1095 = vmatmul.bf16.gmra.mxu0 %v1059
  %v1096 = vpop.f32.mrf.mxu0
  %v1097 = vadd.f32 0.0, %v1096
  %v1098 = vpop.f32.mrf.mxu0
  %v1099 = vadd.f32 0.0, %v1098
  %1100 = vmatmul.bf16.gmra.mxu0 %v1062
  %v1101 = vpop.f32.mrf.mxu0
  %v1102 = vadd.f32 0.0, %v1101
  %v1103 = vpop.f32.mrf.mxu0
  %v1104 = vadd.f32 0.0, %v1103
  %1105 = vmatmul.bf16.gmra.mxu0 %v1065
  %v1106 = vpop.f32.mrf.mxu0
  %v1107 = vadd.f32 0.0, %v1106
  %v1108 = vpop.f32.mrf.mxu0
  %1109 = vdwg.mxu0
  %v1110 = vadd.f32 %v955, %v1077
  %v1111 = vadd.f32 %v956, %v1079
  %v1112 = vadd.f32 %v957, %v1082
  %v1113 = vadd.f32 %v958, %v1084
  %v1114 = vadd.f32 %v959, %v1087
  %v1115 = vadd.f32 %v960, %v1089
  %v1116 = vadd.f32 %v961, %v1092
  %v1117 = vadd.f32 %v962, %v1094
  %v1118 = vadd.f32 %v963, %v1097
  %v1119 = vadd.f32 %v964, %v1099
  %v1120 = vadd.f32 %v965, %v1102
  %v1121 = vadd.f32 %v966, %v1104
  %v1122 = vadd.f32 %v967, %v1107
  %v1123 = vld [vmem:[%s7] sm:$0xf]
  %v1124 = vld [vmem:[%s7 + $0x4] sm:$0xf]
  %v1125 = vld [vmem:[%s7 + $0x8] sm:$0xf]
  %v1126 = vld [vmem:[%s7 + $0xc] sm:$0xf]
  %v1127 = vld [vmem:[%s7 + $0x10] sm:$0xf]
  %v1128 = vld [vmem:[%s7 + $0x14] sm:$0xf]
  %v1129 = vld [vmem:[%s7 + $0x18] sm:$0xf]
  %v1130 = vld [vmem:[%s7 + $0x1c] sm:$0xf]
  %v1131 = vld [vmem:[%s7 + $0x20] sm:$0xf]
  %v1132 = vld [vmem:[%s7 + $0x24] sm:$0xf]
  %v1133 = vld [vmem:[%s7 + $0x28] sm:$0xf]
  %v1134 = vld [vmem:[%s7 + $0x2c] sm:$0xf]
  %v1135 = vld [vmem:[%s7 + $0x30] sm:$0x1]
  %v1136 = vld [vmem:[%s16] sm:$0xf]
  %v1137 = vld [vmem:[%s16 + $0x4] sm:$0xf]
  %v1138 = vld [vmem:[%s16 + $0x8] sm:$0xf]
  %v1139 = vld [vmem:[%s16 + $0xc] sm:$0xf]
  %v1140 = vld [vmem:[%s16 + $0x10] sm:$0xf]
  %v1141 = vld [vmem:[%s16 + $0x14] sm:$0xf]
  %v1142 = vld [vmem:[%s16 + $0x18] sm:$0xf]
  %v1143 = vld [vmem:[%s16 + $0x1c] sm:$0xf]
  %v1157 = vunpack.c.l.b16 %v1123
  %v1158 = vunpack.c.l.b16 %v1124
  %v1159 = vunpack.c.l.b16 %v1125
  %v1160 = vunpack.c.l.b16 %v1126
  %v1161 = vunpack.c.l.b16 %v1127
  %v1162 = vunpack.c.l.b16 %v1128
  %v1163 = vunpack.c.l.b16 %v1129
  %v1164 = vunpack.c.l.b16 %v1130
  %v1165 = vunpack.c.l.b16 %v1131
  %v1166 = vunpack.c.l.b16 %v1132
  %v1167 = vunpack.c.l.b16 %v1133
  %v1168 = vunpack.c.l.b16 %v1134
  %v1169 = vunpack.c.l.b16 %v1135
  %v1170 = vpack.c.b16 %v1158, %v1157
  %v1171 = vpack.c.b16 %v1160, %v1159
  %v1172 = vpack.c.b16 %v1162, %v1161
  %v1173 = vpack.c.b16 %v1164, %v1163
  %v1174 = vpack.c.b16 %v1166, %v1165
  %v1175 = vpack.c.b16 %v1168, %v1167
  %v1176 = vpack.c.b16 %v1169, %v1169
  %v1185 = vunpack.c.l.b16 %v1136
  %v1186 = vunpack.c.l.b16 %v1137
  %v1187 = vunpack.c.l.b16 %v1138
  %v1188 = vunpack.c.l.b16 %v1139
  %v1189 = vunpack.c.l.b16 %v1140
  %v1190 = vunpack.c.l.b16 %v1141
  %v1191 = vunpack.c.l.b16 %v1142
  %v1192 = vunpack.c.l.b16 %v1143
  %v1193 = vpack.c.b16 %v1186, %v1185
  %v1194 = vpack.c.b16 %v1188, %v1187
  %v1195 = vpack.c.b16 %v1190, %v1189
  %v1196 = vpack.c.b16 %v1192, %v1191
  %v1202 = vsel %vm162, %v1170, 0
  %v1205 = vsel %vm162, %v1171, 0
  %v1208 = vsel %vm162, %v1172, 0
  %v1211 = vsel %vm162, %v1173, 0
  %v1214 = vsel %vm162, %v1174, 0
  %v1217 = vsel %vm162, %v1175, 0
  %v1220 = vsel %vm162, %v1176, 0
  %1222 = vmatpush.bf16.msra.mxu0 0
  %1223 = vmatpush.bf16.msra.mxu0 0
  %1224 = vmatpush.bf16.msra.mxu0 0
  %1225 = vmatpush.bf16.msra.mxu0 0
  %1226 = vmatpush.bf16.msra.mxu0 %v1196
  %1227 = vmatpush.bf16.msra.mxu0 %v1195
  %1228 = vmatpush.bf16.msra.mxu0 %v1194
  %1229 = vmatpush.bf16.msra.mxu0 %v1193
  %1230 = vmatmul.bf16.gmra.mxu0 %v1202
  %v1231 = vpop.f32.mrf.mxu0
  %v1232 = vadd.f32 0.0, %v1231
  %v1233 = vpop.f32.mrf.mxu0
  %v1234 = vadd.f32 0.0, %v1233
  %1235 = vmatmul.bf16.gmra.mxu0 %v1205
  %v1236 = vpop.f32.mrf.mxu0
  %v1237 = vadd.f32 0.0, %v1236
  %v1238 = vpop.f32.mrf.mxu0
  %v1239 = vadd.f32 0.0, %v1238
  %1240 = vmatmul.bf16.gmra.mxu0 %v1208
  %v1241 = vpop.f32.mrf.mxu0
  %v1242 = vadd.f32 0.0, %v1241
  %v1243 = vpop.f32.mrf.mxu0
  %v1244 = vadd.f32 0.0, %v1243
  %1245 = vmatmul.bf16.gmra.mxu0 %v1211
  %v1246 = vpop.f32.mrf.mxu0
  %v1247 = vadd.f32 0.0, %v1246
  %v1248 = vpop.f32.mrf.mxu0
  %v1249 = vadd.f32 0.0, %v1248
  %1250 = vmatmul.bf16.gmra.mxu0 %v1214
  %v1251 = vpop.f32.mrf.mxu0
  %v1252 = vadd.f32 0.0, %v1251
  %v1253 = vpop.f32.mrf.mxu0
  %v1254 = vadd.f32 0.0, %v1253
  %1255 = vmatmul.bf16.gmra.mxu0 %v1217
  %v1256 = vpop.f32.mrf.mxu0
  %v1257 = vadd.f32 0.0, %v1256
  %v1258 = vpop.f32.mrf.mxu0
  %v1259 = vadd.f32 0.0, %v1258
  %1260 = vmatmul.bf16.gmra.mxu0 %v1220
  %v1261 = vpop.f32.mrf.mxu0
  %v1262 = vadd.f32 0.0, %v1261
  %v1263 = vpop.f32.mrf.mxu0
  %1264 = vdwg.mxu0
  %v1265 = vadd.f32 %v1110, %v1232
  %v1266 = vadd.f32 %v1111, %v1234
  %v1267 = vadd.f32 %v1112, %v1237
  %v1268 = vadd.f32 %v1113, %v1239
  %v1269 = vadd.f32 %v1114, %v1242
  %v1270 = vadd.f32 %v1115, %v1244
  %v1271 = vadd.f32 %v1116, %v1247
  %v1272 = vadd.f32 %v1117, %v1249
  %v1273 = vadd.f32 %v1118, %v1252
  %v1274 = vadd.f32 %v1119, %v1254
  %v1275 = vadd.f32 %v1120, %v1257
  %v1276 = vadd.f32 %v1121, %v1259
  %v1277 = vadd.f32 %v1122, %v1262
  %v1278 = vld [vmem:[%s8] sm:$0xf]
  %v1279 = vld [vmem:[%s8 + $0x4] sm:$0xf]
  %v1280 = vld [vmem:[%s8 + $0x8] sm:$0xf]
  %v1281 = vld [vmem:[%s8 + $0xc] sm:$0xf]
  %v1282 = vld [vmem:[%s8 + $0x10] sm:$0xf]
  %v1283 = vld [vmem:[%s8 + $0x14] sm:$0xf]
  %v1284 = vld [vmem:[%s8 + $0x18] sm:$0xf]
  %v1285 = vld [vmem:[%s8 + $0x1c] sm:$0xf]
  %v1286 = vld [vmem:[%s8 + $0x20] sm:$0xf]
  %v1287 = vld [vmem:[%s8 + $0x24] sm:$0xf]
  %v1288 = vld [vmem:[%s8 + $0x28] sm:$0xf]
  %v1289 = vld [vmem:[%s8 + $0x2c] sm:$0xf]
  %v1290 = vld [vmem:[%s8 + $0x30] sm:$0x1]
  %v1291 = vld [vmem:[%s17] sm:$0xf]
  %v1292 = vld [vmem:[%s17 + $0x4] sm:$0xf]
  %v1293 = vld [vmem:[%s17 + $0x8] sm:$0xf]
  %v1294 = vld [vmem:[%s17 + $0xc] sm:$0xf]
  %v1295 = vld [vmem:[%s17 + $0x10] sm:$0xf]
  %v1296 = vld [vmem:[%s17 + $0x14] sm:$0xf]
  %v1297 = vld [vmem:[%s17 + $0x18] sm:$0xf]
  %v1298 = vld [vmem:[%s17 + $0x1c] sm:$0xf]
  %v1312 = vunpack.c.l.b16 %v1278
  %v1313 = vunpack.c.l.b16 %v1279
  %v1314 = vunpack.c.l.b16 %v1280
  %v1315 = vunpack.c.l.b16 %v1281
  %v1316 = vunpack.c.l.b16 %v1282
  %v1317 = vunpack.c.l.b16 %v1283
  %v1318 = vunpack.c.l.b16 %v1284
  %v1319 = vunpack.c.l.b16 %v1285
  %v1320 = vunpack.c.l.b16 %v1286
  %v1321 = vunpack.c.l.b16 %v1287
  %v1322 = vunpack.c.l.b16 %v1288
  %v1323 = vunpack.c.l.b16 %v1289
  %v1324 = vunpack.c.l.b16 %v1290
  %v1325 = vpack.c.b16 %v1313, %v1312
  %v1326 = vpack.c.b16 %v1315, %v1314
  %v1327 = vpack.c.b16 %v1317, %v1316
  %v1328 = vpack.c.b16 %v1319, %v1318
  %v1329 = vpack.c.b16 %v1321, %v1320
  %v1330 = vpack.c.b16 %v1323, %v1322
  %v1331 = vpack.c.b16 %v1324, %v1324
  %v1340 = vunpack.c.l.b16 %v1291
  %v1341 = vunpack.c.l.b16 %v1292
  %v1342 = vunpack.c.l.b16 %v1293
  %v1343 = vunpack.c.l.b16 %v1294
  %v1344 = vunpack.c.l.b16 %v1295
  %v1345 = vunpack.c.l.b16 %v1296
  %v1346 = vunpack.c.l.b16 %v1297
  %v1347 = vunpack.c.l.b16 %v1298
  %v1348 = vpack.c.b16 %v1341, %v1340
  %v1349 = vpack.c.b16 %v1343, %v1342
  %v1350 = vpack.c.b16 %v1345, %v1344
  %v1351 = vpack.c.b16 %v1347, %v1346
  %v1357 = vsel %vm162, %v1325, 0
  %v1360 = vsel %vm162, %v1326, 0
  %v1363 = vsel %vm162, %v1327, 0
  %v1366 = vsel %vm162, %v1328, 0
  %v1369 = vsel %vm162, %v1329, 0
  %v1372 = vsel %vm162, %v1330, 0
  %v1375 = vsel %vm162, %v1331, 0
  %1377 = vmatpush.bf16.msra.mxu0 0
  %1378 = vmatpush.bf16.msra.mxu0 0
  %1379 = vmatpush.bf16.msra.mxu0 0
  %1380 = vmatpush.bf16.msra.mxu0 0
  %1381 = vmatpush.bf16.msra.mxu0 %v1351
  %1382 = vmatpush.bf16.msra.mxu0 %v1350
  %1383 = vmatpush.bf16.msra.mxu0 %v1349
  %1384 = vmatpush.bf16.msra.mxu0 %v1348
  %1385 = vmatmul.bf16.gmra.mxu0 %v1357
  %v1386 = vpop.f32.mrf.mxu0
  %v1387 = vadd.f32 0.0, %v1386
  %v1388 = vpop.f32.mrf.mxu0
  %v1389 = vadd.f32 0.0, %v1388
  %1390 = vmatmul.bf16.gmra.mxu0 %v1360
  %v1391 = vpop.f32.mrf.mxu0
  %v1392 = vadd.f32 0.0, %v1391
  %v1393 = vpop.f32.mrf.mxu0
  %v1394 = vadd.f32 0.0, %v1393
  %1395 = vmatmul.bf16.gmra.mxu0 %v1363
  %v1396 = vpop.f32.mrf.mxu0
  %v1397 = vadd.f32 0.0, %v1396
  %v1398 = vpop.f32.mrf.mxu0
  %v1399 = vadd.f32 0.0, %v1398
  %1400 = vmatmul.bf16.gmra.mxu0 %v1366
  %v1401 = vpop.f32.mrf.mxu0
  %v1402 = vadd.f32 0.0, %v1401
  %v1403 = vpop.f32.mrf.mxu0
  %v1404 = vadd.f32 0.0, %v1403
  %1405 = vmatmul.bf16.gmra.mxu0 %v1369
  %v1406 = vpop.f32.mrf.mxu0
  %v1407 = vadd.f32 0.0, %v1406
  %v1408 = vpop.f32.mrf.mxu0
  %v1409 = vadd.f32 0.0, %v1408
  %1410 = vmatmul.bf16.gmra.mxu0 %v1372
  %v1411 = vpop.f32.mrf.mxu0
  %v1412 = vadd.f32 0.0, %v1411
  %v1413 = vpop.f32.mrf.mxu0
  %v1414 = vadd.f32 0.0, %v1413
  %1415 = vmatmul.bf16.gmra.mxu0 %v1375
  %v1416 = vpop.f32.mrf.mxu0
  %v1417 = vadd.f32 0.0, %v1416
  %v1418 = vpop.f32.mrf.mxu0
  %1419 = vdwg.mxu0
  %v1420 = vadd.f32 %v1265, %v1387
  %v1421 = vadd.f32 %v1266, %v1389
  %v1422 = vadd.f32 %v1267, %v1392
  %v1423 = vadd.f32 %v1268, %v1394
  %v1424 = vadd.f32 %v1269, %v1397
  %v1425 = vadd.f32 %v1270, %v1399
  %v1426 = vadd.f32 %v1271, %v1402
  %v1427 = vadd.f32 %v1272, %v1404
  %v1428 = vadd.f32 %v1273, %v1407
  %v1429 = vadd.f32 %v1274, %v1409
  %v1430 = vadd.f32 %v1275, %v1412
  %v1431 = vadd.f32 %v1276, %v1414
  %v1432 = vadd.f32 %v1277, %v1417
  %v1433 = vld [vmem:[%s18] sm:$0x1]
  %v1435 = vperm.slane %v1433, 0
  %v1437 = vadd.f32 %v1420, %v1435
  %v1438 = vadd.f32 %v1421, %v1435
  %v1439 = vadd.f32 %v1422, %v1435
  %v1440 = vadd.f32 %v1423, %v1435
  %v1441 = vadd.f32 %v1424, %v1435
  %v1442 = vadd.f32 %v1425, %v1435
  %v1443 = vadd.f32 %v1426, %v1435
  %v1444 = vadd.f32 %v1427, %v1435
  %v1445 = vadd.f32 %v1428, %v1435
  %v1446 = vadd.f32 %v1429, %v1435
  %v1447 = vadd.f32 %v1430, %v1435
  %v1448 = vadd.f32 %v1431, %v1435
  %v1449 = vadd.f32 %v1432, %v1435
  %v1450 = vmax.f32 %v1437, 0.0
  %v1451 = vmax.f32 %v1438, 0.0
  %v1452 = vmax.f32 %v1439, 0.0
  %v1453 = vmax.f32 %v1440, 0.0
  %v1454 = vmax.f32 %v1441, 0.0
  %v1455 = vmax.f32 %v1442, 0.0
  %v1456 = vmax.f32 %v1443, 0.0
  %v1457 = vmax.f32 %v1444, 0.0
  %v1458 = vmax.f32 %v1445, 0.0
  %v1459 = vmax.f32 %v1446, 0.0
  %v1460 = vmax.f32 %v1447, 0.0
  %v1461 = vmax.f32 %v1448, 0.0
  %v1462 = vmax.f32 %v1449, 0.0
  %v1463 = vpack.c.bf16 %v1450, %v1450
  %v1464 = vpack.c.bf16 %v1451, %v1451
  %v1465 = vpack.c.bf16 %v1452, %v1452
  %v1466 = vpack.c.bf16 %v1453, %v1453
  %v1467 = vpack.c.bf16 %v1454, %v1454
  %v1468 = vpack.c.bf16 %v1455, %v1455
  %v1469 = vpack.c.bf16 %v1456, %v1456
  %v1470 = vpack.c.bf16 %v1457, %v1457
  %v1471 = vpack.c.bf16 %v1458, %v1458
  %v1472 = vpack.c.bf16 %v1459, %v1459
  %v1473 = vpack.c.bf16 %v1460, %v1460
  %v1474 = vpack.c.bf16 %v1461, %v1461
  %v1475 = vpack.c.bf16 %v1462, %v1462
  %vm1476 = vcmask 519168
  %1477 = vst.msk [vmem:[%s19] sm:$0xf] %vm1476, %v1463
  %1478 = vst.msk [vmem:[%s19 + $0x4] sm:$0xf] %vm1476, %v1464
  %1479 = vst.msk [vmem:[%s19 + $0x8] sm:$0xf] %vm1476, %v1465
  %1480 = vst.msk [vmem:[%s19 + $0xc] sm:$0xf] %vm1476, %v1466
  %1481 = vst.msk [vmem:[%s19 + $0x10] sm:$0xf] %vm1476, %v1467
  %1482 = vst.msk [vmem:[%s19 + $0x14] sm:$0xf] %vm1476, %v1468
  %1483 = vst.msk [vmem:[%s19 + $0x18] sm:$0xf] %vm1476, %v1469
  %1484 = vst.msk [vmem:[%s19 + $0x1c] sm:$0xf] %vm1476, %v1470
  %1485 = vst.msk [vmem:[%s19 + $0x20] sm:$0xf] %vm1476, %v1471
  %1486 = vst.msk [vmem:[%s19 + $0x24] sm:$0xf] %vm1476, %v1472
  %1487 = vst.msk [vmem:[%s19 + $0x28] sm:$0xf] %vm1476, %v1473
  %1488 = vst.msk [vmem:[%s19 + $0x2c] sm:$0xf] %vm1476, %v1474
  %vm1489 = vcmask 516096
  %1490 = vst.msk [vmem:[%s19 + $0x30] sm:$0x1] %vm1489, %v1475
  // Predicated region
  $region78: #{forward.6} parent=0 // pred_check
    _
  $region79: #{forward.6} parent=0 // pred_check_branch
    %1492 = sbr.rel (0) target = $region81
  $region80: #{forward.6} parent=0 // pred_region
    _
  $region81: #{forward.6} parent=0 // pred_fallthru
    _
  // Predicated region
  $region82: #{forward.6} parent=0 // pred_check
    _
  $region83: #{forward.6} parent=0 // pred_check_branch
    %1494 = sbr.rel (0) target = $region85
  $region84: #{forward.6} parent=0 // pred_region
    _
  $region85: #{forward.6} parent=0 // pred_fallthru
    _

// kernel: forward.7
$region0: #{forward.7}
  #allocation0 [shape = 'u32[]', space=smem, size = 0x4, offset = 0x4, fixed_abs, tag = 'smem constant byte address 0x4 - core index']
  #allocation1 [shape = 'u32[72,128]{1,0:T(1,128)}', space=vmem, size = 0x9000, scoped, tag = 'internal scratch']
  %s0 = inlined_call_operand.vmem [shape: bf16[2,3136], index: 0, kind: input, shape index: {}]
  %s1 = inlined_call_operand.vmem [shape: bf16[3136,512], index: 1, kind: input, shape index: {}]
  %s2 = inlined_call_operand.vmem [shape: f32[1,512], index: 2, kind: input, shape index: {}]
  %s3 = inlined_call_operand.vmem [shape: bf16[512,128], index: 3, kind: input, shape index: {}]
  %s4 = inlined_call_operand.vmem [shape: f32[1,128], index: 4, kind: input, shape index: {}]
  %s5 = inlined_call_operand.hbm [shape: f32[2,128], index: 5, kind: output, shape index: {}]
  %s6 = sld [smem:[#allocation0]]
  $region30: #{forward.7} parent=0
    _
  %s8 = ssub.s32 1, %s6
  %s9 = scalar_select 0, %s8, %s6
  $region1: #{forward.7} parent=0
    #allocation2 [shape = 'u8[1024]{0}', space=vmem, size = 0x400, scoped, tag = 'output window, operand 0, single buffered']
    #allocation3 [shape = 's32[1]{0}', space=sflag, size = 0x4, scoped, tag = 'scoped memory for forward.7']
    %10 = vsyncpa [#allocation3], 0
    // Predicated region
    $region2: #{forward.7} parent=1 // pred_check
      _
    $region3: #{forward.7} parent=1 // pred_check_branch
      %12 = sbr.rel (0) target = $region5
    $region4: #{forward.7} parent=1 // pred_region
      _
    $region5: #{forward.7} parent=1 // pred_fallthru
      _
    // Predicated region
    $region6: #{forward.7} parent=1 // pred_check
      _
    $region7: #{forward.7} parent=1 // pred_check_branch
      %14 = sbr.rel (0) target = $region9
    $region8: #{forward.7} parent=1 // pred_region
      _
    $region9: #{forward.7} parent=1 // pred_fallthru
      _
    // Predicated region
    $region10: #{forward.7} parent=1 // pred_check
      _
    $region11: #{forward.7} parent=1 // pred_check_branch
      %16 = sbr.rel (0) target = $region13
    $region12: #{forward.7} parent=1 // pred_region
      _
    $region13: #{forward.7} parent=1 // pred_fallthru
      _
    // Predicated region
    $region14: #{forward.7} parent=1 // pred_check
      _
    $region15: #{forward.7} parent=1 // pred_check_branch
      %18 = sbr.rel (0) target = $region17
    $region16: #{forward.7} parent=1 // pred_region
      _
    $region17: #{forward.7} parent=1 // pred_fallthru
      _
    // Predicated region
    $region18: #{forward.7} parent=1 // pred_check
      _
    $region19: #{forward.7} parent=1 // pred_check_branch
      %20 = sbr.rel (0) target = $region21
    $region20: #{forward.7} parent=1 // pred_region
      _
    $region21: #{forward.7} parent=1 // pred_fallthru
      _
    %v22 = vld [vmem:[%s0] sm:$0xff]
    %v23 = vld [vmem:[%s0 + $0x8] sm:$0xff]
    %v24 = vld [vmem:[%s0 + $0x10] sm:$0xff]
    %v25 = vld [vmem:[%s0 + $0x18] sm:$0x1]
    %v26 = vld [vmem:[%s1] sm:$0xff]
    %v27 = vld [vmem:[%s1 + $0x8] sm:$0xff]
    %v28 = vld [vmem:[%s1 + $0x10] sm:$0xff]
    %v29 = vld [vmem:[%s1 + $0x18] sm:$0xff]
    %v30 = vld [vmem:[%s1 + $0x20] sm:$0xff]
    %v31 = vld [vmem:[%s1 + $0x28] sm:$0xff]
    %v32 = vld [vmem:[%s1 + $0x30] sm:$0xff]
    %v33 = vld [vmem:[%s1 + $0x38] sm:$0xff]
    %v34 = vld [vmem:[%s1 + $0x40] sm:$0xff]
    %v35 = vld [vmem:[%s1 + $0x48] sm:$0xff]
    %v36 = vld [vmem:[%s1 + $0x50] sm:$0xff]
    %v37 = vld [vmem:[%s1 + $0x58] sm:$0xff]
    %v38 = vld [vmem:[%s1 + $0x60] sm:$0xff]
    %v39 = vld [vmem:[%s1 + $0x68] sm:$0xff]
    %v40 = vld [vmem:[%s1 + $0x70] sm:$0xff]
    %v41 = vld [vmem:[%s1 + $0x78] sm:$0xff]
    %v42 = vld [vmem:[%s1 + $0x80] sm:$0xff]
    %v43 = vld [vmem:[%s1 + $0x88] sm:$0xff]
    %v44 = vld [vmem:[%s1 + $0x90] sm:$0xff]
    %v45 = vld [vmem:[%s1 + $0x98] sm:$0xff]
    %v46 = vld [vmem:[%s1 + $0xa0] sm:$0xff]
    %v47 = vld [vmem:[%s1 + $0xa8] sm:$0xff]
    %v48 = vld [vmem:[%s1 + $0xb0] sm:$0xff]
    %v49 = vld [vmem:[%s1 + $0xb8] sm:$0xff]
    %v50 = vld [vmem:[%s1 + $0xc0] sm:$0xff]
    %v51 = vld [vmem:[%s1 + $0xc8] sm:$0xff]
    %v52 = vld [vmem:[%s1 + $0xd0] sm:$0xff]
    %v53 = vld [vmem:[%s1 + $0xd8] sm:$0xff]
    %v54 = vld [vmem:[%s1 + $0xe0] sm:$0xff]
    %v55 = vld [vmem:[%s1 + $0xe8] sm:$0xff]
    %v56 = vld [vmem:[%s1 + $0xf0] sm:$0xff]
    %v57 = vld [vmem:[%s1 + $0xf8] sm:$0xff]
    %v58 = vld [vmem:[%s1 + $0x100] sm:$0xff]
    %v59 = vld [vmem:[%s1 + $0x108] sm:$0xff]
    %v60 = vld [vmem:[%s1 + $0x110] sm:$0xff]
    %v61 = vld [vmem:[%s1 + $0x118] sm:$0xff]
    %v62 = vld [vmem:[%s1 + $0x120] sm:$0xff]
    %v63 = vld [vmem:[%s1 + $0x128] sm:$0xff]
    %v64 = vld [vmem:[%s1 + $0x130] sm:$0xff]
    %v65 = vld [vmem:[%s1 + $0x138] sm:$0xff]
    %v66 = vld [vmem:[%s1 + $0x140] sm:$0xff]
    %v67 = vld [vmem:[%s1 + $0x148] sm:$0xff]
    %v68 = vld [vmem:[%s1 + $0x150] sm:$0xff]
    %v69 = vld [vmem:[%s1 + $0x158] sm:$0xff]
    %v70 = vld [vmem:[%s1 + $0x160] sm:$0xff]
    %v71 = vld [vmem:[%s1 + $0x168] sm:$0xff]
    %v72 = vld [vmem:[%s1 + $0x170] sm:$0xff]
    %v73 = vld [vmem:[%s1 + $0x178] sm:$0xff]
    %v74 = vld [vmem:[%s1 + $0x180] sm:$0xff]
    %v75 = vld [vmem:[%s1 + $0x188] sm:$0xff]
    %v76 = vld [vmem:[%s1 + $0x190] sm:$0xff]
    %v77 = vld [vmem:[%s1 + $0x198] sm:$0xff]
    %v78 = vld [vmem:[%s1 + $0x1a0] sm:$0xff]
    %v79 = vld [vmem:[%s1 + $0x1a8] sm:$0xff]
    %v80 = vld [vmem:[%s1 + $0x1b0] sm:$0xff]
    %v81 = vld [vmem:[%s1 + $0x1b8] sm:$0xff]
    %v82 = vld [vmem:[%s1 + $0x1c0] sm:$0xff]
    %v83 = vld [vmem:[%s1 + $0x1c8] sm:$0xff]
    %v84 = vld [vmem:[%s1 + $0x1d0] sm:$0xff]
    %v85 = vld [vmem:[%s1 + $0x1d8] sm:$0xff]
    %v86 = vld [vmem:[%s1 + $0x1e0] sm:$0xff]
    %v87 = vld [vmem:[%s1 + $0x1e8] sm:$0xff]
    %v88 = vld [vmem:[%s1 + $0x1f0] sm:$0xff]
    %v89 = vld [vmem:[%s1 + $0x1f8] sm:$0xff]
    %v90 = vld [vmem:[%s1 + $0x200] sm:$0xff]
    %v91 = vld [vmem:[%s1 + $0x208] sm:$0xff]
    %v92 = vld [vmem:[%s1 + $0x210] sm:$0xff]
    %v93 = vld [vmem:[%s1 + $0x218] sm:$0xff]
    %v94 = vld [vmem:[%s1 + $0x220] sm:$0xff]
    %v95 = vld [vmem:[%s1 + $0x228] sm:$0xff]
    %v96 = vld [vmem:[%s1 + $0x230] sm:$0xff]
    %v97 = vld [vmem:[%s1 + $0x238] sm:$0xff]
    %v98 = vld [vmem:[%s1 + $0x240] sm:$0xff]
    %v99 = vld [vmem:[%s1 + $0x248] sm:$0xff]
    %v100 = vld [vmem:[%s1 + $0x250] sm:$0xff]
    %v101 = vld [vmem:[%s1 + $0x258] sm:$0xff]
    %v102 = vld [vmem:[%s1 + $0x260] sm:$0xff]
    %v103 = vld [vmem:[%s1 + $0x268] sm:$0xff]
    %v104 = vld [vmem:[%s1 + $0x270] sm:$0xff]
    %v105 = vld [vmem:[%s1 + $0x278] sm:$0xff]
    %v106 = vld [vmem:[%s1 + $0x280] sm:$0xff]
    %v107 = vld [vmem:[%s1 + $0x288] sm:$0xff]
    %v108 = vld [vmem:[%s1 + $0x290] sm:$0xff]
    %v109 = vld [vmem:[%s1 + $0x298] sm:$0xff]
    %v110 = vld [vmem:[%s1 + $0x2a0] sm:$0xff]
    %v111 = vld [vmem:[%s1 + $0x2a8] sm:$0xff]
    %v112 = vld [vmem:[%s1 + $0x2b0] sm:$0xff]
    %v113 = vld [vmem:[%s1 + $0x2b8] sm:$0xff]
    %v114 = vld [vmem:[%s1 + $0x2c0] sm:$0xff]
    %v115 = vld [vmem:[%s1 + $0x2c8] sm:$0xff]
    %v116 = vld [vmem:[%s1 + $0x2d0] sm:$0xff]
    %v117 = vld [vmem:[%s1 + $0x2d8] sm:$0xff]
    %v118 = vld [vmem:[%s1 + $0x2e0] sm:$0xff]
    %v119 = vld [vmem:[%s1 + $0x2e8] sm:$0xff]
    %v120 = vld [vmem:[%s1 + $0x2f0] sm:$0xff]
    %v121 = vld [vmem:[%s1 + $0x2f8] sm:$0xff]
    %v122 = vld [vmem:[%s1 + $0x300] sm:$0xff]
    %v123 = vld [vmem:[%s1 + $0x308] sm:$0xff]
    %v124 = vld [vmem:[%s1 + $0x310] sm:$0xff]
    %v125 = vld [vmem:[%s1 + $0x318] sm:$0xff]
    %v126 = vld [vmem:[%s1 + $0x320] sm:$0xff]
    %v127 = vld [vmem:[%s1 + $0x328] sm:$0xff]
    %v128 = vld [vmem:[%s1 + $0x330] sm:$0xff]
    %v129 = vld [vmem:[%s1 + $0x338] sm:$0xff]
    %v130 = vld [vmem:[%s1 + $0x340] sm:$0xff]
    %v131 = vld [vmem:[%s1 + $0x348] sm:$0xff]
    %v132 = vld [vmem:[%s1 + $0x350] sm:$0xff]
    %v133 = vld [vmem:[%s1 + $0x358] sm:$0xff]
    %v134 = vld [vmem:[%s1 + $0x360] sm:$0xff]
    %v135 = vld [vmem:[%s1 + $0x368] sm:$0xff]
    %v136 = vld [vmem:[%s1 + $0x370] sm:$0xff]
    %v137 = vld [vmem:[%s1 + $0x378] sm:$0xff]
    %v138 = vld [vmem:[%s1 + $0x380] sm:$0xff]
    %v139 = vld [vmem:[%s1 + $0x388] sm:$0xff]
    %v140 = vld [vmem:[%s1 + $0x390] sm:$0xff]
    %v141 = vld [vmem:[%s1 + $0x398] sm:$0xff]
    %v142 = vld [vmem:[%s1 + $0x3a0] sm:$0xff]
    %v143 = vld [vmem:[%s1 + $0x3a8] sm:$0xff]
    %v144 = vld [vmem:[%s1 + $0x3b0] sm:$0xff]
    %v145 = vld [vmem:[%s1 + $0x3b8] sm:$0xff]
    %v146 = vld [vmem:[%s1 + $0x3c0] sm:$0xff]
    %v147 = vld [vmem:[%s1 + $0x3c8] sm:$0xff]
    %v148 = vld [vmem:[%s1 + $0x3d0] sm:$0xff]
    %v149 = vld [vmem:[%s1 + $0x3d8] sm:$0xff]
    %v150 = vld [vmem:[%s1 + $0x3e0] sm:$0xff]
    %v151 = vld [vmem:[%s1 + $0x3e8] sm:$0xff]
    %v152 = vld [vmem:[%s1 + $0x3f0] sm:$0xff]
    %v153 = vld [vmem:[%s1 + $0x3f8] sm:$0xff]
    %v154 = vld [vmem:[%s1 + $0x400] sm:$0xff]
    %v155 = vld [vmem:[%s1 + $0x408] sm:$0xff]
    %v156 = vld [vmem:[%s1 + $0x410] sm:$0xff]
    %v157 = vld [vmem:[%s1 + $0x418] sm:$0xff]
    %v158 = vld [vmem:[%s1 + $0x420] sm:$0xff]
    %v159 = vld [vmem:[%s1 + $0x428] sm:$0xff]
    %v160 = vld [vmem:[%s1 + $0x430] sm:$0xff]
    %v161 = vld [vmem:[%s1 + $0x438] sm:$0xff]
    %v162 = vld [vmem:[%s1 + $0x440] sm:$0xff]
    %v163 = vld [vmem:[%s1 + $0x448] sm:$0xff]
    %v164 = vld [vmem:[%s1 + $0x450] sm:$0xff]
    %v165 = vld [vmem:[%s1 + $0x458] sm:$0xff]
    %v166 = vld [vmem:[%s1 + $0x460] sm:$0xff]
    %v167 = vld [vmem:[%s1 + $0x468] sm:$0xff]
    %v168 = vld [vmem:[%s1 + $0x470] sm:$0xff]
    %v169 = vld [vmem:[%s1 + $0x478] sm:$0xff]
    %v170 = vld [vmem:[%s1 + $0x480] sm:$0xff]
    %v171 = vld [vmem:[%s1 + $0x488] sm:$0xff]
    %v172 = vld [vmem:[%s1 + $0x490] sm:$0xff]
    %v173 = vld [vmem:[%s1 + $0x498] sm:$0xff]
    %v174 = vld [vmem:[%s1 + $0x4a0] sm:$0xff]
    %v175 = vld [vmem:[%s1 + $0x4a8] sm:$0xff]
    %v176 = vld [vmem:[%s1 + $0x4b0] sm:$0xff]
    %v177 = vld [vmem:[%s1 + $0x4b8] sm:$0xff]
    %v178 = vld [vmem:[%s1 + $0x4c0] sm:$0xff]
    %v179 = vld [vmem:[%s1 + $0x4c8] sm:$0xff]
    %v180 = vld [vmem:[%s1 + $0x4d0] sm:$0xff]
    %v181 = vld [vmem:[%s1 + $0x4d8] sm:$0xff]
    %v182 = vld [vmem:[%s1 + $0x4e0] sm:$0xff]
    %v183 = vld [vmem:[%s1 + $0x4e8] sm:$0xff]
    %v184 = vld [vmem:[%s1 + $0x4f0] sm:$0xff]
    %v185 = vld [vmem:[%s1 + $0x4f8] sm:$0xff]
    %v186 = vld [vmem:[%s1 + $0x500] sm:$0xff]
    %v187 = vld [vmem:[%s1 + $0x508] sm:$0xff]
    %v188 = vld [vmem:[%s1 + $0x510] sm:$0xff]
    %v189 = vld [vmem:[%s1 + $0x518] sm:$0xff]
    %v190 = vld [vmem:[%s1 + $0x520] sm:$0xff]
    %v191 = vld [vmem:[%s1 + $0x528] sm:$0xff]
    %v192 = vld [vmem:[%s1 + $0x530] sm:$0xff]
    %v193 = vld [vmem:[%s1 + $0x538] sm:$0xff]
    %v194 = vld [vmem:[%s1 + $0x540] sm:$0xff]
    %v195 = vld [vmem:[%s1 + $0x548] sm:$0xff]
    %v196 = vld [vmem:[%s1 + $0x550] sm:$0xff]
    %v197 = vld [vmem:[%s1 + $0x558] sm:$0xff]
    %v198 = vld [vmem:[%s1 + $0x560] sm:$0xff]
    %v199 = vld [vmem:[%s1 + $0x568] sm:$0xff]
    %v200 = vld [vmem:[%s1 + $0x570] sm:$0xff]
    %v201 = vld [vmem:[%s1 + $0x578] sm:$0xff]
    %v202 = vld [vmem:[%s1 + $0x580] sm:$0xff]
    %v203 = vld [vmem:[%s1 + $0x588] sm:$0xff]
    %v204 = vld [vmem:[%s1 + $0x590] sm:$0xff]
    %v205 = vld [vmem:[%s1 + $0x598] sm:$0xff]
    %v206 = vld [vmem:[%s1 + $0x5a0] sm:$0xff]
    %v207 = vld [vmem:[%s1 + $0x5a8] sm:$0xff]
    %v208 = vld [vmem:[%s1 + $0x5b0] sm:$0xff]
    %v209 = vld [vmem:[%s1 + $0x5b8] sm:$0xff]
    %v210 = vld [vmem:[%s1 + $0x5c0] sm:$0xff]
    %v211 = vld [vmem:[%s1 + $0x5c8] sm:$0xff]
    %v212 = vld [vmem:[%s1 + $0x5d0] sm:$0xff]
    %v213 = vld [vmem:[%s1 + $0x5d8] sm:$0xff]
    %v214 = vld [vmem:[%s1 + $0x5e0] sm:$0xff]
    %v215 = vld [vmem:[%s1 + $0x5e8] sm:$0xff]
    %v216 = vld [vmem:[%s1 + $0x5f0] sm:$0xff]
    %v217 = vld [vmem:[%s1 + $0x5f8] sm:$0xff]
    %v218 = vld [vmem:[%s1 + $0x600] sm:$0xff]
    %v219 = vld [vmem:[%s1 + $0x608] sm:$0xff]
    %v220 = vld [vmem:[%s1 + $0x610] sm:$0xff]
    %v221 = vld [vmem:[%s1 + $0x618] sm:$0xff]
    %v222 = vld [vmem:[%s1 + $0x620] sm:$0xff]
    %v223 = vld [vmem:[%s1 + $0x628] sm:$0xff]
    %v224 = vld [vmem:[%s1 + $0x630] sm:$0xff]
    %v225 = vld [vmem:[%s1 + $0x638] sm:$0xff]
    %v226 = vld [vmem:[%s1 + $0x640] sm:$0xff]
    %v227 = vld [vmem:[%s1 + $0x648] sm:$0xff]
    %v228 = vld [vmem:[%s1 + $0x650] sm:$0xff]
    %v229 = vld [vmem:[%s1 + $0x658] sm:$0xff]
    %v230 = vld [vmem:[%s1 + $0x660] sm:$0xff]
    %v231 = vld [vmem:[%s1 + $0x668] sm:$0xff]
    %v232 = vld [vmem:[%s1 + $0x670] sm:$0xff]
    %v233 = vld [vmem:[%s1 + $0x678] sm:$0xff]
    %v234 = vld [vmem:[%s1 + $0x680] sm:$0xff]
    %v235 = vld [vmem:[%s1 + $0x688] sm:$0xff]
    %v236 = vld [vmem:[%s1 + $0x690] sm:$0xff]
    %v237 = vld [vmem:[%s1 + $0x698] sm:$0xff]
    %v238 = vld [vmem:[%s1 + $0x6a0] sm:$0xff]
    %v239 = vld [vmem:[%s1 + $0x6a8] sm:$0xff]
    %v240 = vld [vmem:[%s1 + $0x6b0] sm:$0xff]
    %v241 = vld [vmem:[%s1 + $0x6b8] sm:$0xff]
    %v242 = vld [vmem:[%s1 + $0x6c0] sm:$0xff]
    %v243 = vld [vmem:[%s1 + $0x6c8] sm:$0xff]
    %v244 = vld [vmem:[%s1 + $0x6d0] sm:$0xff]
    %v245 = vld [vmem:[%s1 + $0x6d8] sm:$0xff]
    %v246 = vld [vmem:[%s1 + $0x6e0] sm:$0xff]
    %v247 = vld [vmem:[%s1 + $0x6e8] sm:$0xff]
    %v248 = vld [vmem:[%s1 + $0x6f0] sm:$0xff]
    %v249 = vld [vmem:[%s1 + $0x6f8] sm:$0xff]
    %v250 = vld [vmem:[%s1 + $0x700] sm:$0xff]
    %v251 = vld [vmem:[%s1 + $0x708] sm:$0xff]
    %v252 = vld [vmem:[%s1 + $0x710] sm:$0xff]
    %v253 = vld [vmem:[%s1 + $0x718] sm:$0xff]
    %v254 = vld [vmem:[%s1 + $0x720] sm:$0xff]
    %v255 = vld [vmem:[%s1 + $0x728] sm:$0xff]
    %v256 = vld [vmem:[%s1 + $0x730] sm:$0xff]
    %v257 = vld [vmem:[%s1 + $0x738] sm:$0xff]
    %v258 = vld [vmem:[%s1 + $0x740] sm:$0xff]
    %v259 = vld [vmem:[%s1 + $0x748] sm:$0xff]
    %v260 = vld [vmem:[%s1 + $0x750] sm:$0xff]
    %v261 = vld [vmem:[%s1 + $0x758] sm:$0xff]
    %v262 = vld [vmem:[%s1 + $0x760] sm:$0xff]
    %v263 = vld [vmem:[%s1 + $0x768] sm:$0xff]
    %v264 = vld [vmem:[%s1 + $0x770] sm:$0xff]
    %v265 = vld [vmem:[%s1 + $0x778] sm:$0xff]
    %v266 = vld [vmem:[%s1 + $0x780] sm:$0xff]
    %v267 = vld [vmem:[%s1 + $0x788] sm:$0xff]
    %v268 = vld [vmem:[%s1 + $0x790] sm:$0xff]
    %v269 = vld [vmem:[%s1 + $0x798] sm:$0xff]
    %v270 = vld [vmem:[%s1 + $0x7a0] sm:$0xff]
    %v271 = vld [vmem:[%s1 + $0x7a8] sm:$0xff]
    %v272 = vld [vmem:[%s1 + $0x7b0] sm:$0xff]
    %v273 = vld [vmem:[%s1 + $0x7b8] sm:$0xff]
    %v274 = vld [vmem:[%s1 + $0x7c0] sm:$0xff]
    %v275 = vld [vmem:[%s1 + $0x7c8] sm:$0xff]
    %v276 = vld [vmem:[%s1 + $0x7d0] sm:$0xff]
    %v277 = vld [vmem:[%s1 + $0x7d8] sm:$0xff]
    %v278 = vld [vmem:[%s1 + $0x7e0] sm:$0xff]
    %v279 = vld [vmem:[%s1 + $0x7e8] sm:$0xff]
    %v280 = vld [vmem:[%s1 + $0x7f0] sm:$0xff]
    %v281 = vld [vmem:[%s1 + $0x7f8] sm:$0xff]
    %v282 = vld [vmem:[%s1 + $0x800] sm:$0xff]
    %v283 = vld [vmem:[%s1 + $0x808] sm:$0xff]
    %v284 = vld [vmem:[%s1 + $0x810] sm:$0xff]
    %v285 = vld [vmem:[%s1 + $0x818] sm:$0xff]
    %v286 = vld [vmem:[%s1 + $0x820] sm:$0xff]
    %v287 = vld [vmem:[%s1 + $0x828] sm:$0xff]
    %v288 = vld [vmem:[%s1 + $0x830] sm:$0xff]
    %v289 = vld [vmem:[%s1 + $0x838] sm:$0xff]
    %v290 = vld [vmem:[%s1 + $0x840] sm:$0xff]
    %v291 = vld [vmem:[%s1 + $0x848] sm:$0xff]
    %v292 = vld [vmem:[%s1 + $0x850] sm:$0xff]
    %v293 = vld [vmem:[%s1 + $0x858] sm:$0xff]
    %v294 = vld [vmem:[%s1 + $0x860] sm:$0xff]
    %v295 = vld [vmem:[%s1 + $0x868] sm:$0xff]
    %v296 = vld [vmem:[%s1 + $0x870] sm:$0xff]
    %v297 = vld [vmem:[%s1 + $0x878] sm:$0xff]
    %v298 = vld [vmem:[%s1 + $0x880] sm:$0xff]
    %v299 = vld [vmem:[%s1 + $0x888] sm:$0xff]
    %v300 = vld [vmem:[%s1 + $0x890] sm:$0xff]
    %v301 = vld [vmem:[%s1 + $0x898] sm:$0xff]
    %v302 = vld [vmem:[%s1 + $0x8a0] sm:$0xff]
    %v303 = vld [vmem:[%s1 + $0x8a8] sm:$0xff]
    %v304 = vld [vmem:[%s1 + $0x8b0] sm:$0xff]
    %v305 = vld [vmem:[%s1 + $0x8b8] sm:$0xff]
    %v306 = vld [vmem:[%s1 + $0x8c0] sm:$0xff]
    %v307 = vld [vmem:[%s1 + $0x8c8] sm:$0xff]
    %v308 = vld [vmem:[%s1 + $0x8d0] sm:$0xff]
    %v309 = vld [vmem:[%s1 + $0x8d8] sm:$0xff]
    %v310 = vld [vmem:[%s1 + $0x8e0] sm:$0xff]
    %v311 = vld [vmem:[%s1 + $0x8e8] sm:$0xff]
    %v312 = vld [vmem:[%s1 + $0x8f0] sm:$0xff]
    %v313 = vld [vmem:[%s1 + $0x8f8] sm:$0xff]
    %v314 = vld [vmem:[%s1 + $0x900] sm:$0xff]
    %v315 = vld [vmem:[%s1 + $0x908] sm:$0xff]
    %v316 = vld [vmem:[%s1 + $0x910] sm:$0xff]
    %v317 = vld [vmem:[%s1 + $0x918] sm:$0xff]
    %v318 = vld [vmem:[%s1 + $0x920] sm:$0xff]
    %v319 = vld [vmem:[%s1 + $0x928] sm:$0xff]
    %v320 = vld [vmem:[%s1 + $0x930] sm:$0xff]
    %v321 = vld [vmem:[%s1 + $0x938] sm:$0xff]
    %v322 = vld [vmem:[%s1 + $0x940] sm:$0xff]
    %v323 = vld [vmem:[%s1 + $0x948] sm:$0xff]
    %v324 = vld [vmem:[%s1 + $0x950] sm:$0xff]
    %v325 = vld [vmem:[%s1 + $0x958] sm:$0xff]
    %v326 = vld [vmem:[%s1 + $0x960] sm:$0xff]
    %v327 = vld [vmem:[%s1 + $0x968] sm:$0xff]
    %v328 = vld [vmem:[%s1 + $0x970] sm:$0xff]
    %v329 = vld [vmem:[%s1 + $0x978] sm:$0xff]
    %v330 = vld [vmem:[%s1 + $0x980] sm:$0xff]
    %v331 = vld [vmem:[%s1 + $0x988] sm:$0xff]
    %v332 = vld [vmem:[%s1 + $0x990] sm:$0xff]
    %v333 = vld [vmem:[%s1 + $0x998] sm:$0xff]
    %v334 = vld [vmem:[%s1 + $0x9a0] sm:$0xff]
    %v335 = vld [vmem:[%s1 + $0x9a8] sm:$0xff]
    %v336 = vld [vmem:[%s1 + $0x9b0] sm:$0xff]
    %v337 = vld [vmem:[%s1 + $0x9b8] sm:$0xff]
    %v338 = vld [vmem:[%s1 + $0x9c0] sm:$0xff]
    %v339 = vld [vmem:[%s1 + $0x9c8] sm:$0xff]
    %v340 = vld [vmem:[%s1 + $0x9d0] sm:$0xff]
    %v341 = vld [vmem:[%s1 + $0x9d8] sm:$0xff]
    %v342 = vld [vmem:[%s1 + $0x9e0] sm:$0xff]
    %v343 = vld [vmem:[%s1 + $0x9e8] sm:$0xff]
    %v344 = vld [vmem:[%s1 + $0x9f0] sm:$0xff]
    %v345 = vld [vmem:[%s1 + $0x9f8] sm:$0xff]
    %v346 = vld [vmem:[%s1 + $0xa00] sm:$0xff]
    %v347 = vld [vmem:[%s1 + $0xa08] sm:$0xff]
    %v348 = vld [vmem:[%s1 + $0xa10] sm:$0xff]
    %v349 = vld [vmem:[%s1 + $0xa18] sm:$0xff]
    %v350 = vld [vmem:[%s1 + $0xa20] sm:$0xff]
    %v351 = vld [vmem:[%s1 + $0xa28] sm:$0xff]
    %v352 = vld [vmem:[%s1 + $0xa30] sm:$0xff]
    %v353 = vld [vmem:[%s1 + $0xa38] sm:$0xff]
    %v354 = vld [vmem:[%s1 + $0xa40] sm:$0xff]
    %v355 = vld [vmem:[%s1 + $0xa48] sm:$0xff]
    %v356 = vld [vmem:[%s1 + $0xa50] sm:$0xff]
    %v357 = vld [vmem:[%s1 + $0xa58] sm:$0xff]
    %v358 = vld [vmem:[%s1 + $0xa60] sm:$0xff]
    %v359 = vld [vmem:[%s1 + $0xa68] sm:$0xff]
    %v360 = vld [vmem:[%s1 + $0xa70] sm:$0xff]
    %v361 = vld [vmem:[%s1 + $0xa78] sm:$0xff]
    %v362 = vld [vmem:[%s1 + $0xa80] sm:$0xff]
    %v363 = vld [vmem:[%s1 + $0xa88] sm:$0xff]
    %v364 = vld [vmem:[%s1 + $0xa90] sm:$0xff]
    %v365 = vld [vmem:[%s1 + $0xa98] sm:$0xff]
    %v366 = vld [vmem:[%s1 + $0xaa0] sm:$0xff]
    %v367 = vld [vmem:[%s1 + $0xaa8] sm:$0xff]
    %v368 = vld [vmem:[%s1 + $0xab0] sm:$0xff]
    %v369 = vld [vmem:[%s1 + $0xab8] sm:$0xff]
    %v370 = vld [vmem:[%s1 + $0xac0] sm:$0xff]
    %v371 = vld [vmem:[%s1 + $0xac8] sm:$0xff]
    %v372 = vld [vmem:[%s1 + $0xad0] sm:$0xff]
    %v373 = vld [vmem:[%s1 + $0xad8] sm:$0xff]
    %v374 = vld [vmem:[%s1 + $0xae0] sm:$0xff]
    %v375 = vld [vmem:[%s1 + $0xae8] sm:$0xff]
    %v376 = vld [vmem:[%s1 + $0xaf0] sm:$0xff]
    %v377 = vld [vmem:[%s1 + $0xaf8] sm:$0xff]
    %v378 = vld [vmem:[%s1 + $0xb00] sm:$0xff]
    %v379 = vld [vmem:[%s1 + $0xb08] sm:$0xff]
    %v380 = vld [vmem:[%s1 + $0xb10] sm:$0xff]
    %v381 = vld [vmem:[%s1 + $0xb18] sm:$0xff]
    %v382 = vld [vmem:[%s1 + $0xb20] sm:$0xff]
    %v383 = vld [vmem:[%s1 + $0xb28] sm:$0xff]
    %v384 = vld [vmem:[%s1 + $0xb30] sm:$0xff]
    %v385 = vld [vmem:[%s1 + $0xb38] sm:$0xff]
    %v386 = vld [vmem:[%s1 + $0xb40] sm:$0xff]
    %v387 = vld [vmem:[%s1 + $0xb48] sm:$0xff]
    %v388 = vld [vmem:[%s1 + $0xb50] sm:$0xff]
    %v389 = vld [vmem:[%s1 + $0xb58] sm:$0xff]
    %v390 = vld [vmem:[%s1 + $0xb60] sm:$0xff]
    %v391 = vld [vmem:[%s1 + $0xb68] sm:$0xff]
    %v392 = vld [vmem:[%s1 + $0xb70] sm:$0xff]
    %v393 = vld [vmem:[%s1 + $0xb78] sm:$0xff]
    %v394 = vld [vmem:[%s1 + $0xb80] sm:$0xff]
    %v395 = vld [vmem:[%s1 + $0xb88] sm:$0xff]
    %v396 = vld [vmem:[%s1 + $0xb90] sm:$0xff]
    %v397 = vld [vmem:[%s1 + $0xb98] sm:$0xff]
    %v398 = vld [vmem:[%s1 + $0xba0] sm:$0xff]
    %v399 = vld [vmem:[%s1 + $0xba8] sm:$0xff]
    %v400 = vld [vmem:[%s1 + $0xbb0] sm:$0xff]
    %v401 = vld [vmem:[%s1 + $0xbb8] sm:$0xff]
    %v402 = vld [vmem:[%s1 + $0xbc0] sm:$0xff]
    %v403 = vld [vmem:[%s1 + $0xbc8] sm:$0xff]
    %v404 = vld [vmem:[%s1 + $0xbd0] sm:$0xff]
    %v405 = vld [vmem:[%s1 + $0xbd8] sm:$0xff]
    %v406 = vld [vmem:[%s1 + $0xbe0] sm:$0xff]
    %v407 = vld [vmem:[%s1 + $0xbe8] sm:$0xff]
    %v408 = vld [vmem:[%s1 + $0xbf0] sm:$0xff]
    %v409 = vld [vmem:[%s1 + $0xbf8] sm:$0xff]
    %v410 = vld [vmem:[%s1 + $0xc00] sm:$0xff]
    %v411 = vld [vmem:[%s1 + $0xc08] sm:$0xff]
    %v412 = vld [vmem:[%s1 + $0xc10] sm:$0xff]
    %v413 = vld [vmem:[%s1 + $0xc18] sm:$0xff]
    %v414 = vld [vmem:[%s1 + $0xc20] sm:$0xff]
    %v415 = vld [vmem:[%s1 + $0xc28] sm:$0xff]
    %v416 = vld [vmem:[%s1 + $0xc30] sm:$0xff]
    %v417 = vld [vmem:[%s1 + $0xc38] sm:$0xff]
    %v418 = vld [vmem:[%s1 + $0xc40] sm:$0xff]
    %v419 = vld [vmem:[%s1 + $0xc48] sm:$0xff]
    %v420 = vld [vmem:[%s1 + $0xc50] sm:$0xff]
    %v421 = vld [vmem:[%s1 + $0xc58] sm:$0xff]
    %v422 = vld [vmem:[%s1 + $0xc60] sm:$0xff]
    %v423 = vld [vmem:[%s1 + $0xc68] sm:$0xff]
    %v424 = vld [vmem:[%s1 + $0xc70] sm:$0xff]
    %v425 = vld [vmem:[%s1 + $0xc78] sm:$0xff]
    %v426 = vld [vmem:[%s1 + $0xc80] sm:$0xff]
    %v427 = vld [vmem:[%s1 + $0xc88] sm:$0xff]
    %v428 = vld [vmem:[%s1 + $0xc90] sm:$0xff]
    %v429 = vld [vmem:[%s1 + $0xc98] sm:$0xff]
    %v430 = vld [vmem:[%s1 + $0xca0] sm:$0xff]
    %v431 = vld [vmem:[%s1 + $0xca8] sm:$0xff]
    %v432 = vld [vmem:[%s1 + $0xcb0] sm:$0xff]
    %v433 = vld [vmem:[%s1 + $0xcb8] sm:$0xff]
    %v434 = vld [vmem:[%s1 + $0xcc0] sm:$0xff]
    %v435 = vld [vmem:[%s1 + $0xcc8] sm:$0xff]
    %v436 = vld [vmem:[%s1 + $0xcd0] sm:$0xff]
    %v437 = vld [vmem:[%s1 + $0xcd8] sm:$0xff]
    %v438 = vld [vmem:[%s1 + $0xce0] sm:$0xff]
    %v439 = vld [vmem:[%s1 + $0xce8] sm:$0xff]
    %v440 = vld [vmem:[%s1 + $0xcf0] sm:$0xff]
    %v441 = vld [vmem:[%s1 + $0xcf8] sm:$0xff]
    %v442 = vld [vmem:[%s1 + $0xd00] sm:$0xff]
    %v443 = vld [vmem:[%s1 + $0xd08] sm:$0xff]
    %v444 = vld [vmem:[%s1 + $0xd10] sm:$0xff]
    %v445 = vld [vmem:[%s1 + $0xd18] sm:$0xff]
    %v446 = vld [vmem:[%s1 + $0xd20] sm:$0xff]
    %v447 = vld [vmem:[%s1 + $0xd28] sm:$0xff]
    %v448 = vld [vmem:[%s1 + $0xd30] sm:$0xff]
    %v449 = vld [vmem:[%s1 + $0xd38] sm:$0xff]
    %v450 = vld [vmem:[%s1 + $0xd40] sm:$0xff]
    %v451 = vld [vmem:[%s1 + $0xd48] sm:$0xff]
    %v452 = vld [vmem:[%s1 + $0xd50] sm:$0xff]
    %v453 = vld [vmem:[%s1 + $0xd58] sm:$0xff]
    %v454 = vld [vmem:[%s1 + $0xd60] sm:$0xff]
    %v455 = vld [vmem:[%s1 + $0xd68] sm:$0xff]
    %v456 = vld [vmem:[%s1 + $0xd70] sm:$0xff]
    %v457 = vld [vmem:[%s1 + $0xd78] sm:$0xff]
    %v458 = vld [vmem:[%s1 + $0xd80] sm:$0xff]
    %v459 = vld [vmem:[%s1 + $0xd88] sm:$0xff]
    %v460 = vld [vmem:[%s1 + $0xd90] sm:$0xff]
    %v461 = vld [vmem:[%s1 + $0xd98] sm:$0xff]
    %v462 = vld [vmem:[%s1 + $0xda0] sm:$0xff]
    %v463 = vld [vmem:[%s1 + $0xda8] sm:$0xff]
    %v464 = vld [vmem:[%s1 + $0xdb0] sm:$0xff]
    %v465 = vld [vmem:[%s1 + $0xdb8] sm:$0xff]
    %v466 = vld [vmem:[%s1 + $0xdc0] sm:$0xff]
    %v467 = vld [vmem:[%s1 + $0xdc8] sm:$0xff]
    %v468 = vld [vmem:[%s1 + $0xdd0] sm:$0xff]
    %v469 = vld [vmem:[%s1 + $0xdd8] sm:$0xff]
    %v470 = vld [vmem:[%s1 + $0xde0] sm:$0xff]
    %v471 = vld [vmem:[%s1 + $0xde8] sm:$0xff]
    %v472 = vld [vmem:[%s1 + $0xdf0] sm:$0xff]
    %v473 = vld [vmem:[%s1 + $0xdf8] sm:$0xff]
    %v474 = vld [vmem:[%s1 + $0xe00] sm:$0xff]
    %v475 = vld [vmem:[%s1 + $0xe08] sm:$0xff]
    %v476 = vld [vmem:[%s1 + $0xe10] sm:$0xff]
    %v477 = vld [vmem:[%s1 + $0xe18] sm:$0xff]
    %v478 = vld [vmem:[%s1 + $0xe20] sm:$0xff]
    %v479 = vld [vmem:[%s1 + $0xe28] sm:$0xff]
    %v480 = vld [vmem:[%s1 + $0xe30] sm:$0xff]
    %v481 = vld [vmem:[%s1 + $0xe38] sm:$0xff]
    %v482 = vld [vmem:[%s1 + $0xe40] sm:$0xff]
    %v483 = vld [vmem:[%s1 + $0xe48] sm:$0xff]
    %v484 = vld [vmem:[%s1 + $0xe50] sm:$0xff]
    %v485 = vld [vmem:[%s1 + $0xe58] sm:$0xff]
    %v486 = vld [vmem:[%s1 + $0xe60] sm:$0xff]
    %v487 = vld [vmem:[%s1 + $0xe68] sm:$0xff]
    %v488 = vld [vmem:[%s1 + $0xe70] sm:$0xff]
    %v489 = vld [vmem:[%s1 + $0xe78] sm:$0xff]
    %v490 = vld [vmem:[%s1 + $0xe80] sm:$0xff]
    %v491 = vld [vmem:[%s1 + $0xe88] sm:$0xff]
    %v492 = vld [vmem:[%s1 + $0xe90] sm:$0xff]
    %v493 = vld [vmem:[%s1 + $0xe98] sm:$0xff]
    %v494 = vld [vmem:[%s1 + $0xea0] sm:$0xff]
    %v495 = vld [vmem:[%s1 + $0xea8] sm:$0xff]
    %v496 = vld [vmem:[%s1 + $0xeb0] sm:$0xff]
    %v497 = vld [vmem:[%s1 + $0xeb8] sm:$0xff]
    %v498 = vld [vmem:[%s1 + $0xec0] sm:$0xff]
    %v499 = vld [vmem:[%s1 + $0xec8] sm:$0xff]
    %v500 = vld [vmem:[%s1 + $0xed0] sm:$0xff]
    %v501 = vld [vmem:[%s1 + $0xed8] sm:$0xff]
    %v502 = vld [vmem:[%s1 + $0xee0] sm:$0xff]
    %v503 = vld [vmem:[%s1 + $0xee8] sm:$0xff]
    %v504 = vld [vmem:[%s1 + $0xef0] sm:$0xff]
    %v505 = vld [vmem:[%s1 + $0xef8] sm:$0xff]
    %v506 = vld [vmem:[%s1 + $0xf00] sm:$0xff]
    %v507 = vld [vmem:[%s1 + $0xf08] sm:$0xff]
    %v508 = vld [vmem:[%s1 + $0xf10] sm:$0xff]
    %v509 = vld [vmem:[%s1 + $0xf18] sm:$0xff]
    %v510 = vld [vmem:[%s1 + $0xf20] sm:$0xff]
    %v511 = vld [vmem:[%s1 + $0xf28] sm:$0xff]
    %v512 = vld [vmem:[%s1 + $0xf30] sm:$0xff]
    %v513 = vld [vmem:[%s1 + $0xf38] sm:$0xff]
    %v514 = vld [vmem:[%s1 + $0xf40] sm:$0xff]
    %v515 = vld [vmem:[%s1 + $0xf48] sm:$0xff]
    %v516 = vld [vmem:[%s1 + $0xf50] sm:$0xff]
    %v517 = vld [vmem:[%s1 + $0xf58] sm:$0xff]
    %v518 = vld [vmem:[%s1 + $0xf60] sm:$0xff]
    %v519 = vld [vmem:[%s1 + $0xf68] sm:$0xff]
    %v520 = vld [vmem:[%s1 + $0xf70] sm:$0xff]
    %v521 = vld [vmem:[%s1 + $0xf78] sm:$0xff]
    %v522 = vld [vmem:[%s1 + $0xf80] sm:$0xff]
    %v523 = vld [vmem:[%s1 + $0xf88] sm:$0xff]
    %v524 = vld [vmem:[%s1 + $0xf90] sm:$0xff]
    %v525 = vld [vmem:[%s1 + $0xf98] sm:$0xff]
    %v526 = vld [vmem:[%s1 + $0xfa0] sm:$0xff]
    %v527 = vld [vmem:[%s1 + $0xfa8] sm:$0xff]
    %v528 = vld [vmem:[%s1 + $0xfb0] sm:$0xff]
    %v529 = vld [vmem:[%s1 + $0xfb8] sm:$0xff]
    %v530 = vld [vmem:[%s1 + $0xfc0] sm:$0xff]
    %v531 = vld [vmem:[%s1 + $0xfc8] sm:$0xff]
    %v532 = vld [vmem:[%s1 + $0xfd0] sm:$0xff]
    %v533 = vld [vmem:[%s1 + $0xfd8] sm:$0xff]
    %v534 = vld [vmem:[%s1 + $0xfe0] sm:$0xff]
    %v535 = vld [vmem:[%s1 + $0xfe8] sm:$0xff]
    %v536 = vld [vmem:[%s1 + $0xff0] sm:$0xff]
    %v537 = vld [vmem:[%s1 + $0xff8] sm:$0xff]
    %v538 = vld [vmem:[%s1 + $0x1000] sm:$0xff]
    %v539 = vld [vmem:[%s1 + $0x1008] sm:$0xff]
    %v540 = vld [vmem:[%s1 + $0x1010] sm:$0xff]
    %v541 = vld [vmem:[%s1 + $0x1018] sm:$0xff]
    %v542 = vld [vmem:[%s1 + $0x1020] sm:$0xff]
    %v543 = vld [vmem:[%s1 + $0x1028] sm:$0xff]
    %v544 = vld [vmem:[%s1 + $0x1030] sm:$0xff]
    %v545 = vld [vmem:[%s1 + $0x1038] sm:$0xff]
    %v546 = vld [vmem:[%s1 + $0x1040] sm:$0xff]
    %v547 = vld [vmem:[%s1 + $0x1048] sm:$0xff]
    %v548 = vld [vmem:[%s1 + $0x1050] sm:$0xff]
    %v549 = vld [vmem:[%s1 + $0x1058] sm:$0xff]
    %v550 = vld [vmem:[%s1 + $0x1060] sm:$0xff]
    %v551 = vld [vmem:[%s1 + $0x1068] sm:$0xff]
    %v552 = vld [vmem:[%s1 + $0x1070] sm:$0xff]
    %v553 = vld [vmem:[%s1 + $0x1078] sm:$0xff]
    %v554 = vld [vmem:[%s1 + $0x1080] sm:$0xff]
    %v555 = vld [vmem:[%s1 + $0x1088] sm:$0xff]
    %v556 = vld [vmem:[%s1 + $0x1090] sm:$0xff]
    %v557 = vld [vmem:[%s1 + $0x1098] sm:$0xff]
    %v558 = vld [vmem:[%s1 + $0x10a0] sm:$0xff]
    %v559 = vld [vmem:[%s1 + $0x10a8] sm:$0xff]
    %v560 = vld [vmem:[%s1 + $0x10b0] sm:$0xff]
    %v561 = vld [vmem:[%s1 + $0x10b8] sm:$0xff]
    %v562 = vld [vmem:[%s1 + $0x10c0] sm:$0xff]
    %v563 = vld [vmem:[%s1 + $0x10c8] sm:$0xff]
    %v564 = vld [vmem:[%s1 + $0x10d0] sm:$0xff]
    %v565 = vld [vmem:[%s1 + $0x10d8] sm:$0xff]
    %v566 = vld [vmem:[%s1 + $0x10e0] sm:$0xff]
    %v567 = vld [vmem:[%s1 + $0x10e8] sm:$0xff]
    %v568 = vld [vmem:[%s1 + $0x10f0] sm:$0xff]
    %v569 = vld [vmem:[%s1 + $0x10f8] sm:$0xff]
    %v570 = vld [vmem:[%s1 + $0x1100] sm:$0xff]
    %v571 = vld [vmem:[%s1 + $0x1108] sm:$0xff]
    %v572 = vld [vmem:[%s1 + $0x1110] sm:$0xff]
    %v573 = vld [vmem:[%s1 + $0x1118] sm:$0xff]
    %v574 = vld [vmem:[%s1 + $0x1120] sm:$0xff]
    %v575 = vld [vmem:[%s1 + $0x1128] sm:$0xff]
    %v576 = vld [vmem:[%s1 + $0x1130] sm:$0xff]
    %v577 = vld [vmem:[%s1 + $0x1138] sm:$0xff]
    %v578 = vld [vmem:[%s1 + $0x1140] sm:$0xff]
    %v579 = vld [vmem:[%s1 + $0x1148] sm:$0xff]
    %v580 = vld [vmem:[%s1 + $0x1150] sm:$0xff]
    %v581 = vld [vmem:[%s1 + $0x1158] sm:$0xff]
    %v582 = vld [vmem:[%s1 + $0x1160] sm:$0xff]
    %v583 = vld [vmem:[%s1 + $0x1168] sm:$0xff]
    %v584 = vld [vmem:[%s1 + $0x1170] sm:$0xff]
    %v585 = vld [vmem:[%s1 + $0x1178] sm:$0xff]
    %v586 = vld [vmem:[%s1 + $0x1180] sm:$0xff]
    %v587 = vld [vmem:[%s1 + $0x1188] sm:$0xff]
    %v588 = vld [vmem:[%s1 + $0x1190] sm:$0xff]
    %v589 = vld [vmem:[%s1 + $0x1198] sm:$0xff]
    %v590 = vld [vmem:[%s1 + $0x11a0] sm:$0xff]
    %v591 = vld [vmem:[%s1 + $0x11a8] sm:$0xff]
    %v592 = vld [vmem:[%s1 + $0x11b0] sm:$0xff]
    %v593 = vld [vmem:[%s1 + $0x11b8] sm:$0xff]
    %v594 = vld [vmem:[%s1 + $0x11c0] sm:$0xff]
    %v595 = vld [vmem:[%s1 + $0x11c8] sm:$0xff]
    %v596 = vld [vmem:[%s1 + $0x11d0] sm:$0xff]
    %v597 = vld [vmem:[%s1 + $0x11d8] sm:$0xff]
    %v598 = vld [vmem:[%s1 + $0x11e0] sm:$0xff]
    %v599 = vld [vmem:[%s1 + $0x11e8] sm:$0xff]
    %v600 = vld [vmem:[%s1 + $0x11f0] sm:$0xff]
    %v601 = vld [vmem:[%s1 + $0x11f8] sm:$0xff]
    %v602 = vld [vmem:[%s1 + $0x1200] sm:$0xff]
    %v603 = vld [vmem:[%s1 + $0x1208] sm:$0xff]
    %v604 = vld [vmem:[%s1 + $0x1210] sm:$0xff]
    %v605 = vld [vmem:[%s1 + $0x1218] sm:$0xff]
    %v606 = vld [vmem:[%s1 + $0x1220] sm:$0xff]
    %v607 = vld [vmem:[%s1 + $0x1228] sm:$0xff]
    %v608 = vld [vmem:[%s1 + $0x1230] sm:$0xff]
    %v609 = vld [vmem:[%s1 + $0x1238] sm:$0xff]
    %v610 = vld [vmem:[%s1 + $0x1240] sm:$0xff]
    %v611 = vld [vmem:[%s1 + $0x1248] sm:$0xff]
    %v612 = vld [vmem:[%s1 + $0x1250] sm:$0xff]
    %v613 = vld [vmem:[%s1 + $0x1258] sm:$0xff]
    %v614 = vld [vmem:[%s1 + $0x1260] sm:$0xff]
    %v615 = vld [vmem:[%s1 + $0x1268] sm:$0xff]
    %v616 = vld [vmem:[%s1 + $0x1270] sm:$0xff]
    %v617 = vld [vmem:[%s1 + $0x1278] sm:$0xff]
    %v618 = vld [vmem:[%s1 + $0x1280] sm:$0xff]
    %v619 = vld [vmem:[%s1 + $0x1288] sm:$0xff]
    %v620 = vld [vmem:[%s1 + $0x1290] sm:$0xff]
    %v621 = vld [vmem:[%s1 + $0x1298] sm:$0xff]
    %v622 = vld [vmem:[%s1 + $0x12a0] sm:$0xff]
    %v623 = vld [vmem:[%s1 + $0x12a8] sm:$0xff]
    %v624 = vld [vmem:[%s1 + $0x12b0] sm:$0xff]
    %v625 = vld [vmem:[%s1 + $0x12b8] sm:$0xff]
    %v626 = vld [vmem:[%s1 + $0x12c0] sm:$0xff]
    %v627 = vld [vmem:[%s1 + $0x12c8] sm:$0xff]
    %v628 = vld [vmem:[%s1 + $0x12d0] sm:$0xff]
    %v629 = vld [vmem:[%s1 + $0x12d8] sm:$0xff]
    %v630 = vld [vmem:[%s1 + $0x12e0] sm:$0xff]
    %v631 = vld [vmem:[%s1 + $0x12e8] sm:$0xff]
    %v632 = vld [vmem:[%s1 + $0x12f0] sm:$0xff]
    %v633 = vld [vmem:[%s1 + $0x12f8] sm:$0xff]
    %v634 = vld [vmem:[%s1 + $0x1300] sm:$0xff]
    %v635 = vld [vmem:[%s1 + $0x1308] sm:$0xff]
    %v636 = vld [vmem:[%s1 + $0x1310] sm:$0xff]
    %v637 = vld [vmem:[%s1 + $0x1318] sm:$0xff]
    %v638 = vld [vmem:[%s1 + $0x1320] sm:$0xff]
    %v639 = vld [vmem:[%s1 + $0x1328] sm:$0xff]
    %v640 = vld [vmem:[%s1 + $0x1330] sm:$0xff]
    %v641 = vld [vmem:[%s1 + $0x1338] sm:$0xff]
    %v642 = vld [vmem:[%s1 + $0x1340] sm:$0xff]
    %v643 = vld [vmem:[%s1 + $0x1348] sm:$0xff]
    %v644 = vld [vmem:[%s1 + $0x1350] sm:$0xff]
    %v645 = vld [vmem:[%s1 + $0x1358] sm:$0xff]
    %v646 = vld [vmem:[%s1 + $0x1360] sm:$0xff]
    %v647 = vld [vmem:[%s1 + $0x1368] sm:$0xff]
    %v648 = vld [vmem:[%s1 + $0x1370] sm:$0xff]
    %v649 = vld [vmem:[%s1 + $0x1378] sm:$0xff]
    %v650 = vld [vmem:[%s1 + $0x1380] sm:$0xff]
    %v651 = vld [vmem:[%s1 + $0x1388] sm:$0xff]
    %v652 = vld [vmem:[%s1 + $0x1390] sm:$0xff]
    %v653 = vld [vmem:[%s1 + $0x1398] sm:$0xff]
    %v654 = vld [vmem:[%s1 + $0x13a0] sm:$0xff]
    %v655 = vld [vmem:[%s1 + $0x13a8] sm:$0xff]
    %v656 = vld [vmem:[%s1 + $0x13b0] sm:$0xff]
    %v657 = vld [vmem:[%s1 + $0x13b8] sm:$0xff]
    %v658 = vld [vmem:[%s1 + $0x13c0] sm:$0xff]
    %v659 = vld [vmem:[%s1 + $0x13c8] sm:$0xff]
    %v660 = vld [vmem:[%s1 + $0x13d0] sm:$0xff]
    %v661 = vld [vmem:[%s1 + $0x13d8] sm:$0xff]
    %v662 = vld [vmem:[%s1 + $0x13e0] sm:$0xff]
    %v663 = vld [vmem:[%s1 + $0x13e8] sm:$0xff]
    %v664 = vld [vmem:[%s1 + $0x13f0] sm:$0xff]
    %v665 = vld [vmem:[%s1 + $0x13f8] sm:$0xff]
    %v666 = vld [vmem:[%s1 + $0x1400] sm:$0xff]
    %v667 = vld [vmem:[%s1 + $0x1408] sm:$0xff]
    %v668 = vld [vmem:[%s1 + $0x1410] sm:$0xff]
    %v669 = vld [vmem:[%s1 + $0x1418] sm:$0xff]
    %v670 = vld [vmem:[%s1 + $0x1420] sm:$0xff]
    %v671 = vld [vmem:[%s1 + $0x1428] sm:$0xff]
    %v672 = vld [vmem:[%s1 + $0x1430] sm:$0xff]
    %v673 = vld [vmem:[%s1 + $0x1438] sm:$0xff]
    %v674 = vld [vmem:[%s1 + $0x1440] sm:$0xff]
    %v675 = vld [vmem:[%s1 + $0x1448] sm:$0xff]
    %v676 = vld [vmem:[%s1 + $0x1450] sm:$0xff]
    %v677 = vld [vmem:[%s1 + $0x1458] sm:$0xff]
    %v678 = vld [vmem:[%s1 + $0x1460] sm:$0xff]
    %v679 = vld [vmem:[%s1 + $0x1468] sm:$0xff]
    %v680 = vld [vmem:[%s1 + $0x1470] sm:$0xff]
    %v681 = vld [vmem:[%s1 + $0x1478] sm:$0xff]
    %v682 = vld [vmem:[%s1 + $0x1480] sm:$0xff]
    %v683 = vld [vmem:[%s1 + $0x1488] sm:$0xff]
    %v684 = vld [vmem:[%s1 + $0x1490] sm:$0xff]
    %v685 = vld [vmem:[%s1 + $0x1498] sm:$0xff]
    %v686 = vld [vmem:[%s1 + $0x14a0] sm:$0xff]
    %v687 = vld [vmem:[%s1 + $0x14a8] sm:$0xff]
    %v688 = vld [vmem:[%s1 + $0x14b0] sm:$0xff]
    %v689 = vld [vmem:[%s1 + $0x14b8] sm:$0xff]
    %v690 = vld [vmem:[%s1 + $0x14c0] sm:$0xff]
    %v691 = vld [vmem:[%s1 + $0x14c8] sm:$0xff]
    %v692 = vld [vmem:[%s1 + $0x14d0] sm:$0xff]
    %v693 = vld [vmem:[%s1 + $0x14d8] sm:$0xff]
    %v694 = vld [vmem:[%s1 + $0x14e0] sm:$0xff]
    %v695 = vld [vmem:[%s1 + $0x14e8] sm:$0xff]
    %v696 = vld [vmem:[%s1 + $0x14f0] sm:$0xff]
    %v697 = vld [vmem:[%s1 + $0x14f8] sm:$0xff]
    %v698 = vld [vmem:[%s1 + $0x1500] sm:$0xff]
    %v699 = vld [vmem:[%s1 + $0x1508] sm:$0xff]
    %v700 = vld [vmem:[%s1 + $0x1510] sm:$0xff]
    %v701 = vld [vmem:[%s1 + $0x1518] sm:$0xff]
    %v702 = vld [vmem:[%s1 + $0x1520] sm:$0xff]
    %v703 = vld [vmem:[%s1 + $0x1528] sm:$0xff]
    %v704 = vld [vmem:[%s1 + $0x1530] sm:$0xff]
    %v705 = vld [vmem:[%s1 + $0x1538] sm:$0xff]
    %v706 = vld [vmem:[%s1 + $0x1540] sm:$0xff]
    %v707 = vld [vmem:[%s1 + $0x1548] sm:$0xff]
    %v708 = vld [vmem:[%s1 + $0x1550] sm:$0xff]
    %v709 = vld [vmem:[%s1 + $0x1558] sm:$0xff]
    %v710 = vld [vmem:[%s1 + $0x1560] sm:$0xff]
    %v711 = vld [vmem:[%s1 + $0x1568] sm:$0xff]
    %v712 = vld [vmem:[%s1 + $0x1570] sm:$0xff]
    %v713 = vld [vmem:[%s1 + $0x1578] sm:$0xff]
    %v714 = vld [vmem:[%s1 + $0x1580] sm:$0xff]
    %v715 = vld [vmem:[%s1 + $0x1588] sm:$0xff]
    %v716 = vld [vmem:[%s1 + $0x1590] sm:$0xff]
    %v717 = vld [vmem:[%s1 + $0x1598] sm:$0xff]
    %v718 = vld [vmem:[%s1 + $0x15a0] sm:$0xff]
    %v719 = vld [vmem:[%s1 + $0x15a8] sm:$0xff]
    %v720 = vld [vmem:[%s1 + $0x15b0] sm:$0xff]
    %v721 = vld [vmem:[%s1 + $0x15b8] sm:$0xff]
    %v722 = vld [vmem:[%s1 + $0x15c0] sm:$0xff]
    %v723 = vld [vmem:[%s1 + $0x15c8] sm:$0xff]
    %v724 = vld [vmem:[%s1 + $0x15d0] sm:$0xff]
    %v725 = vld [vmem:[%s1 + $0x15d8] sm:$0xff]
    %v726 = vld [vmem:[%s1 + $0x15e0] sm:$0xff]
    %v727 = vld [vmem:[%s1 + $0x15e8] sm:$0xff]
    %v728 = vld [vmem:[%s1 + $0x15f0] sm:$0xff]
    %v729 = vld [vmem:[%s1 + $0x15f8] sm:$0xff]
    %v730 = vld [vmem:[%s1 + $0x1600] sm:$0xff]
    %v731 = vld [vmem:[%s1 + $0x1608] sm:$0xff]
    %v732 = vld [vmem:[%s1 + $0x1610] sm:$0xff]
    %v733 = vld [vmem:[%s1 + $0x1618] sm:$0xff]
    %v734 = vld [vmem:[%s1 + $0x1620] sm:$0xff]
    %v735 = vld [vmem:[%s1 + $0x1628] sm:$0xff]
    %v736 = vld [vmem:[%s1 + $0x1630] sm:$0xff]
    %v737 = vld [vmem:[%s1 + $0x1638] sm:$0xff]
    %v738 = vld [vmem:[%s1 + $0x1640] sm:$0xff]
    %v739 = vld [vmem:[%s1 + $0x1648] sm:$0xff]
    %v740 = vld [vmem:[%s1 + $0x1650] sm:$0xff]
    %v741 = vld [vmem:[%s1 + $0x1658] sm:$0xff]
    %v742 = vld [vmem:[%s1 + $0x1660] sm:$0xff]
    %v743 = vld [vmem:[%s1 + $0x1668] sm:$0xff]
    %v744 = vld [vmem:[%s1 + $0x1670] sm:$0xff]
    %v745 = vld [vmem:[%s1 + $0x1678] sm:$0xff]
    %v746 = vld [vmem:[%s1 + $0x1680] sm:$0xff]
    %v747 = vld [vmem:[%s1 + $0x1688] sm:$0xff]
    %v748 = vld [vmem:[%s1 + $0x1690] sm:$0xff]
    %v749 = vld [vmem:[%s1 + $0x1698] sm:$0xff]
    %v750 = vld [vmem:[%s1 + $0x16a0] sm:$0xff]
    %v751 = vld [vmem:[%s1 + $0x16a8] sm:$0xff]
    %v752 = vld [vmem:[%s1 + $0x16b0] sm:$0xff]
    %v753 = vld [vmem:[%s1 + $0x16b8] sm:$0xff]
    %v754 = vld [vmem:[%s1 + $0x16c0] sm:$0xff]
    %v755 = vld [vmem:[%s1 + $0x16c8] sm:$0xff]
    %v756 = vld [vmem:[%s1 + $0x16d0] sm:$0xff]
    %v757 = vld [vmem:[%s1 + $0x16d8] sm:$0xff]
    %v758 = vld [vmem:[%s1 + $0x16e0] sm:$0xff]
    %v759 = vld [vmem:[%s1 + $0x16e8] sm:$0xff]
    %v760 = vld [vmem:[%s1 + $0x16f0] sm:$0xff]
    %v761 = vld [vmem:[%s1 + $0x16f8] sm:$0xff]
    %v762 = vld [vmem:[%s1 + $0x1700] sm:$0xff]
    %v763 = vld [vmem:[%s1 + $0x1708] sm:$0xff]
    %v764 = vld [vmem:[%s1 + $0x1710] sm:$0xff]
    %v765 = vld [vmem:[%s1 + $0x1718] sm:$0xff]
    %v766 = vld [vmem:[%s1 + $0x1720] sm:$0xff]
    %v767 = vld [vmem:[%s1 + $0x1728] sm:$0xff]
    %v768 = vld [vmem:[%s1 + $0x1730] sm:$0xff]
    %v769 = vld [vmem:[%s1 + $0x1738] sm:$0xff]
    %v770 = vld [vmem:[%s1 + $0x1740] sm:$0xff]
    %v771 = vld [vmem:[%s1 + $0x1748] sm:$0xff]
    %v772 = vld [vmem:[%s1 + $0x1750] sm:$0xff]
    %v773 = vld [vmem:[%s1 + $0x1758] sm:$0xff]
    %v774 = vld [vmem:[%s1 + $0x1760] sm:$0xff]
    %v775 = vld [vmem:[%s1 + $0x1768] sm:$0xff]
    %v776 = vld [vmem:[%s1 + $0x1770] sm:$0xff]
    %v777 = vld [vmem:[%s1 + $0x1778] sm:$0xff]
    %v778 = vld [vmem:[%s1 + $0x1780] sm:$0xff]
    %v779 = vld [vmem:[%s1 + $0x1788] sm:$0xff]
    %v780 = vld [vmem:[%s1 + $0x1790] sm:$0xff]
    %v781 = vld [vmem:[%s1 + $0x1798] sm:$0xff]
    %v782 = vld [vmem:[%s1 + $0x17a0] sm:$0xff]
    %v783 = vld [vmem:[%s1 + $0x17a8] sm:$0xff]
    %v784 = vld [vmem:[%s1 + $0x17b0] sm:$0xff]
    %v785 = vld [vmem:[%s1 + $0x17b8] sm:$0xff]
    %v786 = vld [vmem:[%s1 + $0x17c0] sm:$0xff]
    %v787 = vld [vmem:[%s1 + $0x17c8] sm:$0xff]
    %v788 = vld [vmem:[%s1 + $0x17d0] sm:$0xff]
    %v789 = vld [vmem:[%s1 + $0x17d8] sm:$0xff]
    %v790 = vld [vmem:[%s1 + $0x17e0] sm:$0xff]
    %v791 = vld [vmem:[%s1 + $0x17e8] sm:$0xff]
    %v792 = vld [vmem:[%s1 + $0x17f0] sm:$0xff]
    %v793 = vld [vmem:[%s1 + $0x17f8] sm:$0xff]
    %v794 = vld [vmem:[%s1 + $0x1800] sm:$0xff]
    %v795 = vld [vmem:[%s1 + $0x1808] sm:$0xff]
    %v796 = vld [vmem:[%s1 + $0x1810] sm:$0xff]
    %v797 = vld [vmem:[%s1 + $0x1818] sm:$0xff]
    %v798 = vld [vmem:[%s1 + $0x1820] sm:$0xff]
    %v799 = vld [vmem:[%s1 + $0x1828] sm:$0xff]
    %v800 = vld [vmem:[%s1 + $0x1830] sm:$0xff]
    %v801 = vld [vmem:[%s1 + $0x1838] sm:$0xff]
    %v802 = vld [vmem:[%s1 + $0x1840] sm:$0xff]
    %v803 = vld [vmem:[%s1 + $0x1848] sm:$0xff]
    %v804 = vld [vmem:[%s1 + $0x1850] sm:$0xff]
    %v805 = vld [vmem:[%s1 + $0x1858] sm:$0xff]
    %v806 = vld [vmem:[%s1 + $0x1860] sm:$0xff]
    %v807 = vld [vmem:[%s1 + $0x1868] sm:$0xff]
    %v808 = vld [vmem:[%s1 + $0x1870] sm:$0xff]
    %v809 = vld [vmem:[%s1 + $0x1878] sm:$0xff]
    %v810 = vld [vmem:[%s2] sm:$0xf]
    %v812 = vperm.slane %v810, 0
    %v813 = vperm.slane %v810, 1
    %v814 = vperm.slane %v810, 2
    %v815 = vperm.slane %v810, 3
    %821 = vst [vmem:[#allocation1] ss:$9 sm:$0xff] %v22
    %v822 = vld [vmem:[#allocation1] sm:$0xff]
    %v823 = vld [vmem:[#allocation1 + $0x9] sm:$0xff]
    %v824 = vld [vmem:[#allocation1 + $0x12] sm:$0xff]
    %v825 = vld [vmem:[#allocation1 + $0x1b] sm:$0xff]
    %v826 = vld [vmem:[#allocation1 + $0x24] sm:$0xff]
    %v827 = vld [vmem:[#allocation1 + $0x2d] sm:$0xff]
    %v828 = vld [vmem:[#allocation1 + $0x36] sm:$0xff]
    %v829 = vld [vmem:[#allocation1 + $0x3f] sm:$0xff]
    %831 = vst [vmem:[#allocation1] ss:$9 sm:$0xff] %v23
    %v832 = vld [vmem:[#allocation1] sm:$0xff]
    %v833 = vld [vmem:[#allocation1 + $0x9] sm:$0xff]
    %v834 = vld [vmem:[#allocation1 + $0x12] sm:$0xff]
    %v835 = vld [vmem:[#allocation1 + $0x1b] sm:$0xff]
    %v836 = vld [vmem:[#allocation1 + $0x24] sm:$0xff]
    %v837 = vld [vmem:[#allocation1 + $0x2d] sm:$0xff]
    %v838 = vld [vmem:[#allocation1 + $0x36] sm:$0xff]
    %v839 = vld [vmem:[#allocation1 + $0x3f] sm:$0xff]
    %841 = vst [vmem:[#allocation1] ss:$9 sm:$0xff] %v24
    %v842 = vld [vmem:[#allocation1] sm:$0xff]
    %v843 = vld [vmem:[#allocation1 + $0x9] sm:$0xff]
    %v844 = vld [vmem:[#allocation1 + $0x12] sm:$0xff]
    %v845 = vld [vmem:[#allocation1 + $0x1b] sm:$0xff]
    %v846 = vld [vmem:[#allocation1 + $0x24] sm:$0xff]
    %v847 = vld [vmem:[#allocation1 + $0x2d] sm:$0xff]
    %v848 = vld [vmem:[#allocation1 + $0x36] sm:$0xff]
    %v849 = vld [vmem:[#allocation1 + $0x3f] sm:$0xff]
    %851 = vst [vmem:[#allocation1] ss:$9 sm:$0xff] %v25
    %v852 = vld [vmem:[#allocation1] sm:$0xff]
    %v1661 = vunpack.c.l.b16 %v26
    %v1662 = vunpack.c.h.b16 %v26
    %v1663 = vunpack.c.l.b16 %v27
    %v1664 = vunpack.c.h.b16 %v27
    %v1665 = vunpack.c.l.b16 %v28
    %v1666 = vunpack.c.h.b16 %v28
    %v1667 = vunpack.c.l.b16 %v29
    %v1668 = vunpack.c.h.b16 %v29
    %v1669 = vunpack.c.l.b16 %v30
    %v1670 = vunpack.c.h.b16 %v30
    %v1671 = vunpack.c.l.b16 %v31
    %v1672 = vunpack.c.h.b16 %v31
    %v1673 = vunpack.c.l.b16 %v32
    %v1674 = vunpack.c.h.b16 %v32
    %v1675 = vunpack.c.l.b16 %v33
    %v1676 = vunpack.c.h.b16 %v33
    %v1677 = vunpack.c.l.b16 %v34
    %v1678 = vunpack.c.h.b16 %v34
    %v1679 = vunpack.c.l.b16 %v35
    %v1680 = vunpack.c.h.b16 %v35
    %v1681 = vunpack.c.l.b16 %v36
    %v1682 = vunpack.c.h.b16 %v36
    %v1683 = vunpack.c.l.b16 %v37
    %v1684 = vunpack.c.h.b16 %v37
    %v1685 = vunpack.c.l.b16 %v38
    %v1686 = vunpack.c.h.b16 %v38
    %v1687 = vunpack.c.l.b16 %v39
    %v1688 = vunpack.c.h.b16 %v39
    %v1689 = vunpack.c.l.b16 %v40
    %v1690 = vunpack.c.h.b16 %v40
    %v1691 = vunpack.c.l.b16 %v41
    %v1692 = vunpack.c.h.b16 %v41
    %v1693 = vunpack.c.l.b16 %v42
    %v1694 = vunpack.c.h.b16 %v42
    %v1695 = vunpack.c.l.b16 %v43
    %v1696 = vunpack.c.h.b16 %v43
    %v1697 = vunpack.c.l.b16 %v44
    %v1698 = vunpack.c.h.b16 %v44
    %v1699 = vunpack.c.l.b16 %v45
    %v1700 = vunpack.c.h.b16 %v45
    %v1701 = vunpack.c.l.b16 %v46
    %v1702 = vunpack.c.h.b16 %v46
    %v1703 = vunpack.c.l.b16 %v47
    %v1704 = vunpack.c.h.b16 %v47
    %v1705 = vunpack.c.l.b16 %v48
    %v1706 = vunpack.c.h.b16 %v48
    %v1707 = vunpack.c.l.b16 %v49
    %v1708 = vunpack.c.h.b16 %v49
    %v1709 = vunpack.c.l.b16 %v50
    %v1710 = vunpack.c.h.b16 %v50
    %v1711 = vunpack.c.l.b16 %v51
    %v1712 = vunpack.c.h.b16 %v51
    %v1713 = vunpack.c.l.b16 %v52
    %v1714 = vunpack.c.h.b16 %v52
    %v1715 = vunpack.c.l.b16 %v53
    %v1716 = vunpack.c.h.b16 %v53
    %v1717 = vunpack.c.l.b16 %v54
    %v1718 = vunpack.c.h.b16 %v54
    %v1719 = vunpack.c.l.b16 %v55
    %v1720 = vunpack.c.h.b16 %v55
    %v1721 = vunpack.c.l.b16 %v56
    %v1722 = vunpack.c.h.b16 %v56
    %v1723 = vunpack.c.l.b16 %v57
    %v1724 = vunpack.c.h.b16 %v57
    %v1725 = vunpack.c.l.b16 %v58
    %v1726 = vunpack.c.h.b16 %v58
    %v1727 = vunpack.c.l.b16 %v59
    %v1728 = vunpack.c.h.b16 %v59
    %v1729 = vunpack.c.l.b16 %v60
    %v1730 = vunpack.c.h.b16 %v60
    %v1731 = vunpack.c.l.b16 %v61
    %v1732 = vunpack.c.h.b16 %v61
    %v1733 = vunpack.c.l.b16 %v62
    %v1734 = vunpack.c.h.b16 %v62
    %v1735 = vunpack.c.l.b16 %v63
    %v1736 = vunpack.c.h.b16 %v63
    %v1737 = vunpack.c.l.b16 %v64
    %v1738 = vunpack.c.h.b16 %v64
    %v1739 = vunpack.c.l.b16 %v65
    %v1740 = vunpack.c.h.b16 %v65
    %v1741 = vunpack.c.l.b16 %v66
    %v1742 = vunpack.c.h.b16 %v66
    %v1743 = vunpack.c.l.b16 %v67
    %v1744 = vunpack.c.h.b16 %v67
    %v1745 = vunpack.c.l.b16 %v68
    %v1746 = vunpack.c.h.b16 %v68
    %v1747 = vunpack.c.l.b16 %v69
    %v1748 = vunpack.c.h.b16 %v69
    %v1749 = vunpack.c.l.b16 %v70
    %v1750 = vunpack.c.h.b16 %v70
    %v1751 = vunpack.c.l.b16 %v71
    %v1752 = vunpack.c.h.b16 %v71
    %v1753 = vunpack.c.l.b16 %v72
    %v1754 = vunpack.c.h.b16 %v72
    %v1755 = vunpack.c.l.b16 %v73
    %v1756 = vunpack.c.h.b16 %v73
    %v1757 = vunpack.c.l.b16 %v74
    %v1758 = vunpack.c.h.b16 %v74
    %v1759 = vunpack.c.l.b16 %v75
    %v1760 = vunpack.c.h.b16 %v75
    %v1761 = vunpack.c.l.b16 %v76
    %v1762 = vunpack.c.h.b16 %v76
    %v1763 = vunpack.c.l.b16 %v77
    %v1764 = vunpack.c.h.b16 %v77
    %v1765 = vunpack.c.l.b16 %v78
    %v1766 = vunpack.c.h.b16 %v78
    %v1767 = vunpack.c.l.b16 %v79
    %v1768 = vunpack.c.h.b16 %v79
    %v1769 = vunpack.c.l.b16 %v80
    %v1770 = vunpack.c.h.b16 %v80
    %v1771 = vunpack.c.l.b16 %v81
    %v1772 = vunpack.c.h.b16 %v81
    %v1773 = vunpack.c.l.b16 %v82
    %v1774 = vunpack.c.h.b16 %v82
    %v1775 = vunpack.c.l.b16 %v83
    %v1776 = vunpack.c.h.b16 %v83
    %v1777 = vunpack.c.l.b16 %v84
    %v1778 = vunpack.c.h.b16 %v84
    %v1779 = vunpack.c.l.b16 %v85
    %v1780 = vunpack.c.h.b16 %v85
    %v1781 = vunpack.c.l.b16 %v86
    %v1782 = vunpack.c.h.b16 %v86
    %v1783 = vunpack.c.l.b16 %v87
    %v1784 = vunpack.c.h.b16 %v87
    %v1785 = vunpack.c.l.b16 %v88
    %v1786 = vunpack.c.h.b16 %v88
    %v1787 = vunpack.c.l.b16 %v89
    %v1788 = vunpack.c.h.b16 %v89
    %v1789 = vunpack.c.l.b16 %v90
    %v1790 = vunpack.c.h.b16 %v90
    %v1791 = vunpack.c.l.b16 %v91
    %v1792 = vunpack.c.h.b16 %v91
    %v1793 = vunpack.c.l.b16 %v92
    %v1794 = vunpack.c.h.b16 %v92
    %v1795 = vunpack.c.l.b16 %v93
    %v1796 = vunpack.c.h.b16 %v93
    %v1797 = vunpack.c.l.b16 %v94
    %v1798 = vunpack.c.h.b16 %v94
    %v1799 = vunpack.c.l.b16 %v95
    %v1800 = vunpack.c.h.b16 %v95
    %v1801 = vunpack.c.l.b16 %v96
    %v1802 = vunpack.c.h.b16 %v96
    %v1803 = vunpack.c.l.b16 %v97
    %v1804 = vunpack.c.h.b16 %v97
    %v1805 = vunpack.c.l.b16 %v98
    %v1806 = vunpack.c.h.b16 %v98
    %v1807 = vunpack.c.l.b16 %v99
    %v1808 = vunpack.c.h.b16 %v99
    %v1809 = vunpack.c.l.b16 %v100
    %v1810 = vunpack.c.h.b16 %v100
    %v1811 = vunpack.c.l.b16 %v101
    %v1812 = vunpack.c.h.b16 %v101
    %v1813 = vunpack.c.l.b16 %v102
    %v1814 = vunpack.c.h.b16 %v102
    %v1815 = vunpack.c.l.b16 %v103
    %v1816 = vunpack.c.h.b16 %v103
    %v1817 = vunpack.c.l.b16 %v104
    %v1818 = vunpack.c.h.b16 %v104
    %v1819 = vunpack.c.l.b16 %v105
    %v1820 = vunpack.c.h.b16 %v105
    %v1821 = vunpack.c.l.b16 %v106
    %v1822 = vunpack.c.h.b16 %v106
    %v1823 = vunpack.c.l.b16 %v107
    %v1824 = vunpack.c.h.b16 %v107
    %v1825 = vunpack.c.l.b16 %v108
    %v1826 = vunpack.c.h.b16 %v108
    %v1827 = vunpack.c.l.b16 %v109
    %v1828 = vunpack.c.h.b16 %v109
    %v1829 = vunpack.c.l.b16 %v110
    %v1830 = vunpack.c.h.b16 %v110
    %v1831 = vunpack.c.l.b16 %v111
    %v1832 = vunpack.c.h.b16 %v111
    %v1833 = vunpack.c.l.b16 %v112
    %v1834 = vunpack.c.h.b16 %v112
    %v1835 = vunpack.c.l.b16 %v113
    %v1836 = vunpack.c.h.b16 %v113
    %v1837 = vunpack.c.l.b16 %v114
    %v1838 = vunpack.c.h.b16 %v114
    %v1839 = vunpack.c.l.b16 %v115
    %v1840 = vunpack.c.h.b16 %v115
    %v1841 = vunpack.c.l.b16 %v116
    %v1842 = vunpack.c.h.b16 %v116
    %v1843 = vunpack.c.l.b16 %v117
    %v1844 = vunpack.c.h.b16 %v117
    %v1845 = vunpack.c.l.b16 %v118
    %v1846 = vunpack.c.h.b16 %v118
    %v1847 = vunpack.c.l.b16 %v119
    %v1848 = vunpack.c.h.b16 %v119
    %v1849 = vunpack.c.l.b16 %v120
    %v1850 = vunpack.c.h.b16 %v120
    %v1851 = vunpack.c.l.b16 %v121
    %v1852 = vunpack.c.h.b16 %v121
    %v1853 = vunpack.c.l.b16 %v122
    %v1854 = vunpack.c.h.b16 %v122
    %v1855 = vunpack.c.l.b16 %v123
    %v1856 = vunpack.c.h.b16 %v123
    %v1857 = vunpack.c.l.b16 %v124
    %v1858 = vunpack.c.h.b16 %v124
    %v1859 = vunpack.c.l.b16 %v125
    %v1860 = vunpack.c.h.b16 %v125
    %v1861 = vunpack.c.l.b16 %v126
    %v1862 = vunpack.c.h.b16 %v126
    %v1863 = vunpack.c.l.b16 %v127
    %v1864 = vunpack.c.h.b16 %v127
    %v1865 = vunpack.c.l.b16 %v128
    %v1866 = vunpack.c.h.b16 %v128
    %v1867 = vunpack.c.l.b16 %v129
    %v1868 = vunpack.c.h.b16 %v129
    %v1869 = vunpack.c.l.b16 %v130
    %v1870 = vunpack.c.h.b16 %v130
    %v1871 = vunpack.c.l.b16 %v131
    %v1872 = vunpack.c.h.b16 %v131
    %v1873 = vunpack.c.l.b16 %v132
    %v1874 = vunpack.c.h.b16 %v132
    %v1875 = vunpack.c.l.b16 %v133
    %v1876 = vunpack.c.h.b16 %v133
    %v1877 = vunpack.c.l.b16 %v134
    %v1878 = vunpack.c.h.b16 %v134
    %v1879 = vunpack.c.l.b16 %v135
    %v1880 = vunpack.c.h.b16 %v135
    %v1881 = vunpack.c.l.b16 %v136
    %v1882 = vunpack.c.h.b16 %v136
    %v1883 = vunpack.c.l.b16 %v137
    %v1884 = vunpack.c.h.b16 %v137
    %v1885 = vunpack.c.l.b16 %v138
    %v1886 = vunpack.c.h.b16 %v138
    %v1887 = vunpack.c.l.b16 %v139
    %v1888 = vunpack.c.h.b16 %v139
    %v1889 = vunpack.c.l.b16 %v140
    %v1890 = vunpack.c.h.b16 %v140
    %v1891 = vunpack.c.l.b16 %v141
    %v1892 = vunpack.c.h.b16 %v141
    %v1893 = vunpack.c.l.b16 %v142
    %v1894 = vunpack.c.h.b16 %v142
    %v1895 = vunpack.c.l.b16 %v143
    %v1896 = vunpack.c.h.b16 %v143
    %v1897 = vunpack.c.l.b16 %v144
    %v1898 = vunpack.c.h.b16 %v144
    %v1899 = vunpack.c.l.b16 %v145
    %v1900 = vunpack.c.h.b16 %v145
    %v1901 = vunpack.c.l.b16 %v146
    %v1902 = vunpack.c.h.b16 %v146
    %v1903 = vunpack.c.l.b16 %v147
    %v1904 = vunpack.c.h.b16 %v147
    %v1905 = vunpack.c.l.b16 %v148
    %v1906 = vunpack.c.h.b16 %v148
    %v1907 = vunpack.c.l.b16 %v149
    %v1908 = vunpack.c.h.b16 %v149
    %v1909 = vunpack.c.l.b16 %v150
    %v1910 = vunpack.c.h.b16 %v150
    %v1911 = vunpack.c.l.b16 %v151
    %v1912 = vunpack.c.h.b16 %v151
    %v1913 = vunpack.c.l.b16 %v152
    %v1914 = vunpack.c.h.b16 %v152
    %v1915 = vunpack.c.l.b16 %v153
    %v1916 = vunpack.c.h.b16 %v153
    %v1917 = vunpack.c.l.b16 %v154
    %v1918 = vunpack.c.h.b16 %v154
    %v1919 = vunpack.c.l.b16 %v155
    %v1920 = vunpack.c.h.b16 %v155
    %v1921 = vunpack.c.l.b16 %v156
    %v1922 = vunpack.c.h.b16 %v156
    %v1923 = vunpack.c.l.b16 %v157
    %v1924 = vunpack.c.h.b16 %v157
    %v1925 = vunpack.c.l.b16 %v158
    %v1926 = vunpack.c.h.b16 %v158
    %v1927 = vunpack.c.l.b16 %v159
    %v1928 = vunpack.c.h.b16 %v159
    %v1929 = vunpack.c.l.b16 %v160
    %v1930 = vunpack.c.h.b16 %v160
    %v1931 = vunpack.c.l.b16 %v161
    %v1932 = vunpack.c.h.b16 %v161
    %v1933 = vunpack.c.l.b16 %v162
    %v1934 = vunpack.c.h.b16 %v162
    %v1935 = vunpack.c.l.b16 %v163
    %v1936 = vunpack.c.h.b16 %v163
    %v1937 = vunpack.c.l.b16 %v164
    %v1938 = vunpack.c.h.b16 %v164
    %v1939 = vunpack.c.l.b16 %v165
    %v1940 = vunpack.c.h.b16 %v165
    %v1941 = vunpack.c.l.b16 %v166
    %v1942 = vunpack.c.h.b16 %v166
    %v1943 = vunpack.c.l.b16 %v167
    %v1944 = vunpack.c.h.b16 %v167
    %v1945 = vunpack.c.l.b16 %v168
    %v1946 = vunpack.c.h.b16 %v168
    %v1947 = vunpack.c.l.b16 %v169
    %v1948 = vunpack.c.h.b16 %v169
    %v1949 = vunpack.c.l.b16 %v170
    %v1950 = vunpack.c.h.b16 %v170
    %v1951 = vunpack.c.l.b16 %v171
    %v1952 = vunpack.c.h.b16 %v171
    %v1953 = vunpack.c.l.b16 %v172
    %v1954 = vunpack.c.h.b16 %v172
    %v1955 = vunpack.c.l.b16 %v173
    %v1956 = vunpack.c.h.b16 %v173
    %v1957 = vunpack.c.l.b16 %v174
    %v1958 = vunpack.c.h.b16 %v174
    %v1959 = vunpack.c.l.b16 %v175
    %v1960 = vunpack.c.h.b16 %v175
    %v1961 = vunpack.c.l.b16 %v176
    %v1962 = vunpack.c.h.b16 %v176
    %v1963 = vunpack.c.l.b16 %v177
    %v1964 = vunpack.c.h.b16 %v177
    %v1965 = vunpack.c.l.b16 %v178
    %v1966 = vunpack.c.h.b16 %v178
    %v1967 = vunpack.c.l.b16 %v179
    %v1968 = vunpack.c.h.b16 %v179
    %v1969 = vunpack.c.l.b16 %v180
    %v1970 = vunpack.c.h.b16 %v180
    %v1971 = vunpack.c.l.b16 %v181
    %v1972 = vunpack.c.h.b16 %v181
    %v1973 = vunpack.c.l.b16 %v182
    %v1974 = vunpack.c.h.b16 %v182
    %v1975 = vunpack.c.l.b16 %v183
    %v1976 = vunpack.c.h.b16 %v183
    %v1977 = vunpack.c.l.b16 %v184
    %v1978 = vunpack.c.h.b16 %v184
    %v1979 = vunpack.c.l.b16 %v185
    %v1980 = vunpack.c.h.b16 %v185
    %v1981 = vunpack.c.l.b16 %v186
    %v1982 = vunpack.c.h.b16 %v186
    %v1983 = vunpack.c.l.b16 %v187
    %v1984 = vunpack.c.h.b16 %v187
    %v1985 = vunpack.c.l.b16 %v188
    %v1986 = vunpack.c.h.b16 %v188
    %v1987 = vunpack.c.l.b16 %v189
    %v1988 = vunpack.c.h.b16 %v189
    %v1989 = vunpack.c.l.b16 %v190
    %v1990 = vunpack.c.h.b16 %v190
    %v1991 = vunpack.c.l.b16 %v191
    %v1992 = vunpack.c.h.b16 %v191
    %v1993 = vunpack.c.l.b16 %v192
    %v1994 = vunpack.c.h.b16 %v192
    %v1995 = vunpack.c.l.b16 %v193
    %v1996 = vunpack.c.h.b16 %v193
    %v1997 = vunpack.c.l.b16 %v194
    %v1998 = vunpack.c.h.b16 %v194
    %v1999 = vunpack.c.l.b16 %v195
    %v2000 = vunpack.c.h.b16 %v195
    %v2001 = vunpack.c.l.b16 %v196
    %v2002 = vunpack.c.h.b16 %v196
    %v2003 = vunpack.c.l.b16 %v197
    %v2004 = vunpack.c.h.b16 %v197
    %v2005 = vunpack.c.l.b16 %v198
    %v2006 = vunpack.c.h.b16 %v198
    %v2007 = vunpack.c.l.b16 %v199
    %v2008 = vunpack.c.h.b16 %v199
    %v2009 = vunpack.c.l.b16 %v200
    %v2010 = vunpack.c.h.b16 %v200
    %v2011 = vunpack.c.l.b16 %v201
    %v2012 = vunpack.c.h.b16 %v201
    %v2013 = vunpack.c.l.b16 %v202
    %v2014 = vunpack.c.h.b16 %v202
    %v2015 = vunpack.c.l.b16 %v203
    %v2016 = vunpack.c.h.b16 %v203
    %v2017 = vunpack.c.l.b16 %v204
    %v2018 = vunpack.c.h.b16 %v204
    %v2019 = vunpack.c.l.b16 %v205
    %v2020 = vunpack.c.h.b16 %v205
    %v2021 = vunpack.c.l.b16 %v206
    %v2022 = vunpack.c.h.b16 %v206
    %v2023 = vunpack.c.l.b16 %v207
    %v2024 = vunpack.c.h.b16 %v207
    %v2025 = vunpack.c.l.b16 %v208
    %v2026 = vunpack.c.h.b16 %v208
    %v2027 = vunpack.c.l.b16 %v209
    %v2028 = vunpack.c.h.b16 %v209
    %v2029 = vunpack.c.l.b16 %v210
    %v2030 = vunpack.c.h.b16 %v210
    %v2031 = vunpack.c.l.b16 %v211
    %v2032 = vunpack.c.h.b16 %v211
    %v2033 = vunpack.c.l.b16 %v212
    %v2034 = vunpack.c.h.b16 %v212
    %v2035 = vunpack.c.l.b16 %v213
    %v2036 = vunpack.c.h.b16 %v213
    %v2037 = vunpack.c.l.b16 %v214
    %v2038 = vunpack.c.h.b16 %v214
    %v2039 = vunpack.c.l.b16 %v215
    %v2040 = vunpack.c.h.b16 %v215
    %v2041 = vunpack.c.l.b16 %v216
    %v2042 = vunpack.c.h.b16 %v216
    %v2043 = vunpack.c.l.b16 %v217
    %v2044 = vunpack.c.h.b16 %v217
    %v2045 = vunpack.c.l.b16 %v218
    %v2046 = vunpack.c.h.b16 %v218
    %v2047 = vunpack.c.l.b16 %v219
    %v2048 = vunpack.c.h.b16 %v219
    %v2049 = vunpack.c.l.b16 %v220
    %v2050 = vunpack.c.h.b16 %v220
    %v2051 = vunpack.c.l.b16 %v221
    %v2052 = vunpack.c.h.b16 %v221
    %v2053 = vunpack.c.l.b16 %v222
    %v2054 = vunpack.c.h.b16 %v222
    %v2055 = vunpack.c.l.b16 %v223
    %v2056 = vunpack.c.h.b16 %v223
    %v2057 = vunpack.c.l.b16 %v224
    %v2058 = vunpack.c.h.b16 %v224
    %v2059 = vunpack.c.l.b16 %v225
    %v2060 = vunpack.c.h.b16 %v225
    %v2061 = vunpack.c.l.b16 %v226
    %v2062 = vunpack.c.h.b16 %v226
    %v2063 = vunpack.c.l.b16 %v227
    %v2064 = vunpack.c.h.b16 %v227
    %v2065 = vunpack.c.l.b16 %v228
    %v2066 = vunpack.c.h.b16 %v228
    %v2067 = vunpack.c.l.b16 %v229
    %v2068 = vunpack.c.h.b16 %v229
    %v2069 = vunpack.c.l.b16 %v230
    %v2070 = vunpack.c.h.b16 %v230
    %v2071 = vunpack.c.l.b16 %v231
    %v2072 = vunpack.c.h.b16 %v231
    %v2073 = vunpack.c.l.b16 %v232
    %v2074 = vunpack.c.h.b16 %v232
    %v2075 = vunpack.c.l.b16 %v233
    %v2076 = vunpack.c.h.b16 %v233
    %v2077 = vunpack.c.l.b16 %v234
    %v2078 = vunpack.c.h.b16 %v234
    %v2079 = vunpack.c.l.b16 %v235
    %v2080 = vunpack.c.h.b16 %v235
    %v2081 = vunpack.c.l.b16 %v236
    %v2082 = vunpack.c.h.b16 %v236
    %v2083 = vunpack.c.l.b16 %v237
    %v2084 = vunpack.c.h.b16 %v237
    %v2085 = vunpack.c.l.b16 %v238
    %v2086 = vunpack.c.h.b16 %v238
    %v2087 = vunpack.c.l.b16 %v239
    %v2088 = vunpack.c.h.b16 %v239
    %v2089 = vunpack.c.l.b16 %v240
    %v2090 = vunpack.c.h.b16 %v240
    %v2091 = vunpack.c.l.b16 %v241
    %v2092 = vunpack.c.h.b16 %v241
    %v2093 = vunpack.c.l.b16 %v242
    %v2094 = vunpack.c.h.b16 %v242
    %v2095 = vunpack.c.l.b16 %v243
    %v2096 = vunpack.c.h.b16 %v243
    %v2097 = vunpack.c.l.b16 %v244
    %v2098 = vunpack.c.h.b16 %v244
    %v2099 = vunpack.c.l.b16 %v245
    %v2100 = vunpack.c.h.b16 %v245
    %v2101 = vunpack.c.l.b16 %v246
    %v2102 = vunpack.c.h.b16 %v246
    %v2103 = vunpack.c.l.b16 %v247
    %v2104 = vunpack.c.h.b16 %v247
    %v2105 = vunpack.c.l.b16 %v248
    %v2106 = vunpack.c.h.b16 %v248
    %v2107 = vunpack.c.l.b16 %v249
    %v2108 = vunpack.c.h.b16 %v249
    %v2109 = vunpack.c.l.b16 %v250
    %v2110 = vunpack.c.h.b16 %v250
    %v2111 = vunpack.c.l.b16 %v251
    %v2112 = vunpack.c.h.b16 %v251
    %v2113 = vunpack.c.l.b16 %v252
    %v2114 = vunpack.c.h.b16 %v252
    %v2115 = vunpack.c.l.b16 %v253
    %v2116 = vunpack.c.h.b16 %v253
    %v2117 = vunpack.c.l.b16 %v254
    %v2118 = vunpack.c.h.b16 %v254
    %v2119 = vunpack.c.l.b16 %v255
    %v2120 = vunpack.c.h.b16 %v255
    %v2121 = vunpack.c.l.b16 %v256
    %v2122 = vunpack.c.h.b16 %v256
    %v2123 = vunpack.c.l.b16 %v257
    %v2124 = vunpack.c.h.b16 %v257
    %v2125 = vunpack.c.l.b16 %v258
    %v2126 = vunpack.c.h.b16 %v258
    %v2127 = vunpack.c.l.b16 %v259
    %v2128 = vunpack.c.h.b16 %v259
    %v2129 = vunpack.c.l.b16 %v260
    %v2130 = vunpack.c.h.b16 %v260
    %v2131 = vunpack.c.l.b16 %v261
    %v2132 = vunpack.c.h.b16 %v261
    %v2133 = vunpack.c.l.b16 %v262
    %v2134 = vunpack.c.h.b16 %v262
    %v2135 = vunpack.c.l.b16 %v263
    %v2136 = vunpack.c.h.b16 %v263
    %v2137 = vunpack.c.l.b16 %v264
    %v2138 = vunpack.c.h.b16 %v264
    %v2139 = vunpack.c.l.b16 %v265
    %v2140 = vunpack.c.h.b16 %v265
    %v2141 = vunpack.c.l.b16 %v266
    %v2142 = vunpack.c.h.b16 %v266
    %v2143 = vunpack.c.l.b16 %v267
    %v2144 = vunpack.c.h.b16 %v267
    %v2145 = vunpack.c.l.b16 %v268
    %v2146 = vunpack.c.h.b16 %v268
    %v2147 = vunpack.c.l.b16 %v269
    %v2148 = vunpack.c.h.b16 %v269
    %v2149 = vunpack.c.l.b16 %v270
    %v2150 = vunpack.c.h.b16 %v270
    %v2151 = vunpack.c.l.b16 %v271
    %v2152 = vunpack.c.h.b16 %v271
    %v2153 = vunpack.c.l.b16 %v272
    %v2154 = vunpack.c.h.b16 %v272
    %v2155 = vunpack.c.l.b16 %v273
    %v2156 = vunpack.c.h.b16 %v273
    %v2157 = vunpack.c.l.b16 %v274
    %v2158 = vunpack.c.h.b16 %v274
    %v2159 = vunpack.c.l.b16 %v275
    %v2160 = vunpack.c.h.b16 %v275
    %v2161 = vunpack.c.l.b16 %v276
    %v2162 = vunpack.c.h.b16 %v276
    %v2163 = vunpack.c.l.b16 %v277
    %v2164 = vunpack.c.h.b16 %v277
    %v2165 = vunpack.c.l.b16 %v278
    %v2166 = vunpack.c.h.b16 %v278
    %v2167 = vunpack.c.l.b16 %v279
    %v2168 = vunpack.c.h.b16 %v279
    %v2169 = vunpack.c.l.b16 %v280
    %v2170 = vunpack.c.h.b16 %v280
    %v2171 = vunpack.c.l.b16 %v281
    %v2172 = vunpack.c.h.b16 %v281
    %v2173 = vunpack.c.l.b16 %v282
    %v2174 = vunpack.c.h.b16 %v282
    %v2175 = vunpack.c.l.b16 %v283
    %v2176 = vunpack.c.h.b16 %v283
    %v2177 = vunpack.c.l.b16 %v284
    %v2178 = vunpack.c.h.b16 %v284
    %v2179 = vunpack.c.l.b16 %v285
    %v2180 = vunpack.c.h.b16 %v285
    %v2181 = vunpack.c.l.b16 %v286
    %v2182 = vunpack.c.h.b16 %v286
    %v2183 = vunpack.c.l.b16 %v287
    %v2184 = vunpack.c.h.b16 %v287
    %v2185 = vunpack.c.l.b16 %v288
    %v2186 = vunpack.c.h.b16 %v288
    %v2187 = vunpack.c.l.b16 %v289
    %v2188 = vunpack.c.h.b16 %v289
    %v2189 = vunpack.c.l.b16 %v290
    %v2190 = vunpack.c.h.b16 %v290
    %v2191 = vunpack.c.l.b16 %v291
    %v2192 = vunpack.c.h.b16 %v291
    %v2193 = vunpack.c.l.b16 %v292
    %v2194 = vunpack.c.h.b16 %v292
    %v2195 = vunpack.c.l.b16 %v293
    %v2196 = vunpack.c.h.b16 %v293
    %v2197 = vunpack.c.l.b16 %v294
    %v2198 = vunpack.c.h.b16 %v294
    %v2199 = vunpack.c.l.b16 %v295
    %v2200 = vunpack.c.h.b16 %v295
    %v2201 = vunpack.c.l.b16 %v296
    %v2202 = vunpack.c.h.b16 %v296
    %v2203 = vunpack.c.l.b16 %v297
    %v2204 = vunpack.c.h.b16 %v297
    %v2205 = vunpack.c.l.b16 %v298
    %v2206 = vunpack.c.h.b16 %v298
    %v2207 = vunpack.c.l.b16 %v299
    %v2208 = vunpack.c.h.b16 %v299
    %v2209 = vunpack.c.l.b16 %v300
    %v2210 = vunpack.c.h.b16 %v300
    %v2211 = vunpack.c.l.b16 %v301
    %v2212 = vunpack.c.h.b16 %v301
    %v2213 = vunpack.c.l.b16 %v302
    %v2214 = vunpack.c.h.b16 %v302
    %v2215 = vunpack.c.l.b16 %v303
    %v2216 = vunpack.c.h.b16 %v303
    %v2217 = vunpack.c.l.b16 %v304
    %v2218 = vunpack.c.h.b16 %v304
    %v2219 = vunpack.c.l.b16 %v305
    %v2220 = vunpack.c.h.b16 %v305
    %v2221 = vunpack.c.l.b16 %v306
    %v2222 = vunpack.c.h.b16 %v306
    %v2223 = vunpack.c.l.b16 %v307
    %v2224 = vunpack.c.h.b16 %v307
    %v2225 = vunpack.c.l.b16 %v308
    %v2226 = vunpack.c.h.b16 %v308
    %v2227 = vunpack.c.l.b16 %v309
    %v2228 = vunpack.c.h.b16 %v309
    %v2229 = vunpack.c.l.b16 %v310
    %v2230 = vunpack.c.h.b16 %v310
    %v2231 = vunpack.c.l.b16 %v311
    %v2232 = vunpack.c.h.b16 %v311
    %v2233 = vunpack.c.l.b16 %v312
    %v2234 = vunpack.c.h.b16 %v312
    %v2235 = vunpack.c.l.b16 %v313
    %v2236 = vunpack.c.h.b16 %v313
    %v2237 = vunpack.c.l.b16 %v314
    %v2238 = vunpack.c.h.b16 %v314
    %v2239 = vunpack.c.l.b16 %v315
    %v2240 = vunpack.c.h.b16 %v315
    %v2241 = vunpack.c.l.b16 %v316
    %v2242 = vunpack.c.h.b16 %v316
    %v2243 = vunpack.c.l.b16 %v317
    %v2244 = vunpack.c.h.b16 %v317
    %v2245 = vunpack.c.l.b16 %v318
    %v2246 = vunpack.c.h.b16 %v318
    %v2247 = vunpack.c.l.b16 %v319
    %v2248 = vunpack.c.h.b16 %v319
    %v2249 = vunpack.c.l.b16 %v320
    %v2250 = vunpack.c.h.b16 %v320
    %v2251 = vunpack.c.l.b16 %v321
    %v2252 = vunpack.c.h.b16 %v321
    %v2253 = vunpack.c.l.b16 %v322
    %v2254 = vunpack.c.h.b16 %v322
    %v2255 = vunpack.c.l.b16 %v323
    %v2256 = vunpack.c.h.b16 %v323
    %v2257 = vunpack.c.l.b16 %v324
    %v2258 = vunpack.c.h.b16 %v324
    %v2259 = vunpack.c.l.b16 %v325
    %v2260 = vunpack.c.h.b16 %v325
    %v2261 = vunpack.c.l.b16 %v326
    %v2262 = vunpack.c.h.b16 %v326
    %v2263 = vunpack.c.l.b16 %v327
    %v2264 = vunpack.c.h.b16 %v327
    %v2265 = vunpack.c.l.b16 %v328
    %v2266 = vunpack.c.h.b16 %v328
    %v2267 = vunpack.c.l.b16 %v329
    %v2268 = vunpack.c.h.b16 %v329
    %v2269 = vunpack.c.l.b16 %v330
    %v2270 = vunpack.c.h.b16 %v330
    %v2271 = vunpack.c.l.b16 %v331
    %v2272 = vunpack.c.h.b16 %v331
    %v2273 = vunpack.c.l.b16 %v332
    %v2274 = vunpack.c.h.b16 %v332
    %v2275 = vunpack.c.l.b16 %v333
    %v2276 = vunpack.c.h.b16 %v333
    %v2277 = vunpack.c.l.b16 %v334
    %v2278 = vunpack.c.h.b16 %v334
    %v2279 = vunpack.c.l.b16 %v335
    %v2280 = vunpack.c.h.b16 %v335
    %v2281 = vunpack.c.l.b16 %v336
    %v2282 = vunpack.c.h.b16 %v336
    %v2283 = vunpack.c.l.b16 %v337
    %v2284 = vunpack.c.h.b16 %v337
    %v2285 = vunpack.c.l.b16 %v338
    %v2286 = vunpack.c.h.b16 %v338
    %v2287 = vunpack.c.l.b16 %v339
    %v2288 = vunpack.c.h.b16 %v339
    %v2289 = vunpack.c.l.b16 %v340
    %v2290 = vunpack.c.h.b16 %v340
    %v2291 = vunpack.c.l.b16 %v341
    %v2292 = vunpack.c.h.b16 %v341
    %v2293 = vunpack.c.l.b16 %v342
    %v2294 = vunpack.c.h.b16 %v342
    %v2295 = vunpack.c.l.b16 %v343
    %v2296 = vunpack.c.h.b16 %v343
    %v2297 = vunpack.c.l.b16 %v344
    %v2298 = vunpack.c.h.b16 %v344
    %v2299 = vunpack.c.l.b16 %v345
    %v2300 = vunpack.c.h.b16 %v345
    %v2301 = vunpack.c.l.b16 %v346
    %v2302 = vunpack.c.h.b16 %v346
    %v2303 = vunpack.c.l.b16 %v347
    %v2304 = vunpack.c.h.b16 %v347
    %v2305 = vunpack.c.l.b16 %v348
    %v2306 = vunpack.c.h.b16 %v348
    %v2307 = vunpack.c.l.b16 %v349
    %v2308 = vunpack.c.h.b16 %v349
    %v2309 = vunpack.c.l.b16 %v350
    %v2310 = vunpack.c.h.b16 %v350
    %v2311 = vunpack.c.l.b16 %v351
    %v2312 = vunpack.c.h.b16 %v351
    %v2313 = vunpack.c.l.b16 %v352
    %v2314 = vunpack.c.h.b16 %v352
    %v2315 = vunpack.c.l.b16 %v353
    %v2316 = vunpack.c.h.b16 %v353
    %v2317 = vunpack.c.l.b16 %v354
    %v2318 = vunpack.c.h.b16 %v354
    %v2319 = vunpack.c.l.b16 %v355
    %v2320 = vunpack.c.h.b16 %v355
    %v2321 = vunpack.c.l.b16 %v356
    %v2322 = vunpack.c.h.b16 %v356
    %v2323 = vunpack.c.l.b16 %v357
    %v2324 = vunpack.c.h.b16 %v357
    %v2325 = vunpack.c.l.b16 %v358
    %v2326 = vunpack.c.h.b16 %v358
    %v2327 = vunpack.c.l.b16 %v359
    %v2328 = vunpack.c.h.b16 %v359
    %v2329 = vunpack.c.l.b16 %v360
    %v2330 = vunpack.c.h.b16 %v360
    %v2331 = vunpack.c.l.b16 %v361
    %v2332 = vunpack.c.h.b16 %v361
    %v2333 = vunpack.c.l.b16 %v362
    %v2334 = vunpack.c.h.b16 %v362
    %v2335 = vunpack.c.l.b16 %v363
    %v2336 = vunpack.c.h.b16 %v363
    %v2337 = vunpack.c.l.b16 %v364
    %v2338 = vunpack.c.h.b16 %v364
    %v2339 = vunpack.c.l.b16 %v365
    %v2340 = vunpack.c.h.b16 %v365
    %v2341 = vunpack.c.l.b16 %v366
    %v2342 = vunpack.c.h.b16 %v366
    %v2343 = vunpack.c.l.b16 %v367
    %v2344 = vunpack.c.h.b16 %v367
    %v2345 = vunpack.c.l.b16 %v368
    %v2346 = vunpack.c.h.b16 %v368
    %v2347 = vunpack.c.l.b16 %v369
    %v2348 = vunpack.c.h.b16 %v369
    %v2349 = vunpack.c.l.b16 %v370
    %v2350 = vunpack.c.h.b16 %v370
    %v2351 = vunpack.c.l.b16 %v371
    %v2352 = vunpack.c.h.b16 %v371
    %v2353 = vunpack.c.l.b16 %v372
    %v2354 = vunpack.c.h.b16 %v372
    %v2355 = vunpack.c.l.b16 %v373
    %v2356 = vunpack.c.h.b16 %v373
    %v2357 = vunpack.c.l.b16 %v374
    %v2358 = vunpack.c.h.b16 %v374
    %v2359 = vunpack.c.l.b16 %v375
    %v2360 = vunpack.c.h.b16 %v375
    %v2361 = vunpack.c.l.b16 %v376
    %v2362 = vunpack.c.h.b16 %v376
    %v2363 = vunpack.c.l.b16 %v377
    %v2364 = vunpack.c.h.b16 %v377
    %v2365 = vunpack.c.l.b16 %v378
    %v2366 = vunpack.c.h.b16 %v378
    %v2367 = vunpack.c.l.b16 %v379
    %v2368 = vunpack.c.h.b16 %v379
    %v2369 = vunpack.c.l.b16 %v380
    %v2370 = vunpack.c.h.b16 %v380
    %v2371 = vunpack.c.l.b16 %v381
    %v2372 = vunpack.c.h.b16 %v381
    %v2373 = vunpack.c.l.b16 %v382
    %v2374 = vunpack.c.h.b16 %v382
    %v2375 = vunpack.c.l.b16 %v383
    %v2376 = vunpack.c.h.b16 %v383
    %v2377 = vunpack.c.l.b16 %v384
    %v2378 = vunpack.c.h.b16 %v384
    %v2379 = vunpack.c.l.b16 %v385
    %v2380 = vunpack.c.h.b16 %v385
    %v2381 = vunpack.c.l.b16 %v386
    %v2382 = vunpack.c.h.b16 %v386
    %v2383 = vunpack.c.l.b16 %v387
    %v2384 = vunpack.c.h.b16 %v387
    %v2385 = vunpack.c.l.b16 %v388
    %v2386 = vunpack.c.h.b16 %v388
    %v2387 = vunpack.c.l.b16 %v389
    %v2388 = vunpack.c.h.b16 %v389
    %v2389 = vunpack.c.l.b16 %v390
    %v2390 = vunpack.c.h.b16 %v390
    %v2391 = vunpack.c.l.b16 %v391
    %v2392 = vunpack.c.h.b16 %v391
    %v2393 = vunpack.c.l.b16 %v392
    %v2394 = vunpack.c.h.b16 %v392
    %v2395 = vunpack.c.l.b16 %v393
    %v2396 = vunpack.c.h.b16 %v393
    %v2397 = vunpack.c.l.b16 %v394
    %v2398 = vunpack.c.h.b16 %v394
    %v2399 = vunpack.c.l.b16 %v395
    %v2400 = vunpack.c.h.b16 %v395
    %v2401 = vunpack.c.l.b16 %v396
    %v2402 = vunpack.c.h.b16 %v396
    %v2403 = vunpack.c.l.b16 %v397
    %v2404 = vunpack.c.h.b16 %v397
    %v2405 = vunpack.c.l.b16 %v398
    %v2406 = vunpack.c.h.b16 %v398
    %v2407 = vunpack.c.l.b16 %v399
    %v2408 = vunpack.c.h.b16 %v399
    %v2409 = vunpack.c.l.b16 %v400
    %v2410 = vunpack.c.h.b16 %v400
    %v2411 = vunpack.c.l.b16 %v401
    %v2412 = vunpack.c.h.b16 %v401
    %v2413 = vunpack.c.l.b16 %v402
    %v2414 = vunpack.c.h.b16 %v402
    %v2415 = vunpack.c.l.b16 %v403
    %v2416 = vunpack.c.h.b16 %v403
    %v2417 = vunpack.c.l.b16 %v404
    %v2418 = vunpack.c.h.b16 %v404
    %v2419 = vunpack.c.l.b16 %v405
    %v2420 = vunpack.c.h.b16 %v405
    %v2421 = vunpack.c.l.b16 %v406
    %v2422 = vunpack.c.h.b16 %v406
    %v2423 = vunpack.c.l.b16 %v407
    %v2424 = vunpack.c.h.b16 %v407
    %v2425 = vunpack.c.l.b16 %v408
    %v2426 = vunpack.c.h.b16 %v408
    %v2427 = vunpack.c.l.b16 %v409
    %v2428 = vunpack.c.h.b16 %v409
    %v2429 = vunpack.c.l.b16 %v410
    %v2430 = vunpack.c.h.b16 %v410
    %v2431 = vunpack.c.l.b16 %v411
    %v2432 = vunpack.c.h.b16 %v411
    %v2433 = vunpack.c.l.b16 %v412
    %v2434 = vunpack.c.h.b16 %v412
    %v2435 = vunpack.c.l.b16 %v413
    %v2436 = vunpack.c.h.b16 %v413
    %v2437 = vunpack.c.l.b16 %v414
    %v2438 = vunpack.c.h.b16 %v414
    %v2439 = vunpack.c.l.b16 %v415
    %v2440 = vunpack.c.h.b16 %v415
    %v2441 = vunpack.c.l.b16 %v416
    %v2442 = vunpack.c.h.b16 %v416
    %v2443 = vunpack.c.l.b16 %v417
    %v2444 = vunpack.c.h.b16 %v417
    %v2445 = vunpack.c.l.b16 %v418
    %v2446 = vunpack.c.h.b16 %v418
    %v2447 = vunpack.c.l.b16 %v419
    %v2448 = vunpack.c.h.b16 %v419
    %v2449 = vunpack.c.l.b16 %v420
    %v2450 = vunpack.c.h.b16 %v420
    %v2451 = vunpack.c.l.b16 %v421
    %v2452 = vunpack.c.h.b16 %v421
    %v2453 = vunpack.c.l.b16 %v422
    %v2454 = vunpack.c.h.b16 %v422
    %v2455 = vunpack.c.l.b16 %v423
    %v2456 = vunpack.c.h.b16 %v423
    %v2457 = vunpack.c.l.b16 %v424
    %v2458 = vunpack.c.h.b16 %v424
    %v2459 = vunpack.c.l.b16 %v425
    %v2460 = vunpack.c.h.b16 %v425
    %v2461 = vunpack.c.l.b16 %v426
    %v2462 = vunpack.c.h.b16 %v426
    %v2463 = vunpack.c.l.b16 %v427
    %v2464 = vunpack.c.h.b16 %v427
    %v2465 = vunpack.c.l.b16 %v428
    %v2466 = vunpack.c.h.b16 %v428
    %v2467 = vunpack.c.l.b16 %v429
    %v2468 = vunpack.c.h.b16 %v429
    %v2469 = vunpack.c.l.b16 %v430
    %v2470 = vunpack.c.h.b16 %v430
    %v2471 = vunpack.c.l.b16 %v431
    %v2472 = vunpack.c.h.b16 %v431
    %v2473 = vunpack.c.l.b16 %v432
    %v2474 = vunpack.c.h.b16 %v432
    %v2475 = vunpack.c.l.b16 %v433
    %v2476 = vunpack.c.h.b16 %v433
    %v2477 = vunpack.c.l.b16 %v434
    %v2478 = vunpack.c.h.b16 %v434
    %v2479 = vunpack.c.l.b16 %v435
    %v2480 = vunpack.c.h.b16 %v435
    %v2481 = vunpack.c.l.b16 %v436
    %v2482 = vunpack.c.h.b16 %v436
    %v2483 = vunpack.c.l.b16 %v437
    %v2484 = vunpack.c.h.b16 %v437
    %v2485 = vunpack.c.l.b16 %v438
    %v2486 = vunpack.c.h.b16 %v438
    %v2487 = vunpack.c.l.b16 %v439
    %v2488 = vunpack.c.h.b16 %v439
    %v2489 = vunpack.c.l.b16 %v440
    %v2490 = vunpack.c.h.b16 %v440
    %v2491 = vunpack.c.l.b16 %v441
    %v2492 = vunpack.c.h.b16 %v441
    %v2493 = vunpack.c.l.b16 %v442
    %v2494 = vunpack.c.h.b16 %v442
    %v2495 = vunpack.c.l.b16 %v443
    %v2496 = vunpack.c.h.b16 %v443
    %v2497 = vunpack.c.l.b16 %v444
    %v2498 = vunpack.c.h.b16 %v444
    %v2499 = vunpack.c.l.b16 %v445
    %v2500 = vunpack.c.h.b16 %v445
    %v2501 = vunpack.c.l.b16 %v446
    %v2502 = vunpack.c.h.b16 %v446
    %v2503 = vunpack.c.l.b16 %v447
    %v2504 = vunpack.c.h.b16 %v447
    %v2505 = vunpack.c.l.b16 %v448
    %v2506 = vunpack.c.h.b16 %v448
    %v2507 = vunpack.c.l.b16 %v449
    %v2508 = vunpack.c.h.b16 %v449
    %v2509 = vunpack.c.l.b16 %v450
    %v2510 = vunpack.c.h.b16 %v450
    %v2511 = vunpack.c.l.b16 %v451
    %v2512 = vunpack.c.h.b16 %v451
    %v2513 = vunpack.c.l.b16 %v452
    %v2514 = vunpack.c.h.b16 %v452
    %v2515 = vunpack.c.l.b16 %v453
    %v2516 = vunpack.c.h.b16 %v453
    %v2517 = vunpack.c.l.b16 %v454
    %v2518 = vunpack.c.h.b16 %v454
    %v2519 = vunpack.c.l.b16 %v455
    %v2520 = vunpack.c.h.b16 %v455
    %v2521 = vunpack.c.l.b16 %v456
    %v2522 = vunpack.c.h.b16 %v456
    %v2523 = vunpack.c.l.b16 %v457
    %v2524 = vunpack.c.h.b16 %v457
    %v2525 = vunpack.c.l.b16 %v458
    %v2526 = vunpack.c.h.b16 %v458
    %v2527 = vunpack.c.l.b16 %v459
    %v2528 = vunpack.c.h.b16 %v459
    %v2529 = vunpack.c.l.b16 %v460
    %v2530 = vunpack.c.h.b16 %v460
    %v2531 = vunpack.c.l.b16 %v461
    %v2532 = vunpack.c.h.b16 %v461
    %v2533 = vunpack.c.l.b16 %v462
    %v2534 = vunpack.c.h.b16 %v462
    %v2535 = vunpack.c.l.b16 %v463
    %v2536 = vunpack.c.h.b16 %v463
    %v2537 = vunpack.c.l.b16 %v464
    %v2538 = vunpack.c.h.b16 %v464
    %v2539 = vunpack.c.l.b16 %v465
    %v2540 = vunpack.c.h.b16 %v465
    %v2541 = vunpack.c.l.b16 %v466
    %v2542 = vunpack.c.h.b16 %v466
    %v2543 = vunpack.c.l.b16 %v467
    %v2544 = vunpack.c.h.b16 %v467
    %v2545 = vunpack.c.l.b16 %v468
    %v2546 = vunpack.c.h.b16 %v468
    %v2547 = vunpack.c.l.b16 %v469
    %v2548 = vunpack.c.h.b16 %v469
    %v2549 = vunpack.c.l.b16 %v470
    %v2550 = vunpack.c.h.b16 %v470
    %v2551 = vunpack.c.l.b16 %v471
    %v2552 = vunpack.c.h.b16 %v471
    %v2553 = vunpack.c.l.b16 %v472
    %v2554 = vunpack.c.h.b16 %v472
    %v2555 = vunpack.c.l.b16 %v473
    %v2556 = vunpack.c.h.b16 %v473
    %v2557 = vunpack.c.l.b16 %v474
    %v2558 = vunpack.c.h.b16 %v474
    %v2559 = vunpack.c.l.b16 %v475
    %v2560 = vunpack.c.h.b16 %v475
    %v2561 = vunpack.c.l.b16 %v476
    %v2562 = vunpack.c.h.b16 %v476
    %v2563 = vunpack.c.l.b16 %v477
    %v2564 = vunpack.c.h.b16 %v477
    %v2565 = vunpack.c.l.b16 %v478
    %v2566 = vunpack.c.h.b16 %v478
    %v2567 = vunpack.c.l.b16 %v479
    %v2568 = vunpack.c.h.b16 %v479
    %v2569 = vunpack.c.l.b16 %v480
    %v2570 = vunpack.c.h.b16 %v480
    %v2571 = vunpack.c.l.b16 %v481
    %v2572 = vunpack.c.h.b16 %v481
    %v2573 = vunpack.c.l.b16 %v482
    %v2574 = vunpack.c.h.b16 %v482
    %v2575 = vunpack.c.l.b16 %v483
    %v2576 = vunpack.c.h.b16 %v483
    %v2577 = vunpack.c.l.b16 %v484
    %v2578 = vunpack.c.h.b16 %v484
    %v2579 = vunpack.c.l.b16 %v485
    %v2580 = vunpack.c.h.b16 %v485
    %v2581 = vunpack.c.l.b16 %v486
    %v2582 = vunpack.c.h.b16 %v486
    %v2583 = vunpack.c.l.b16 %v487
    %v2584 = vunpack.c.h.b16 %v487
    %v2585 = vunpack.c.l.b16 %v488
    %v2586 = vunpack.c.h.b16 %v488
    %v2587 = vunpack.c.l.b16 %v489
    %v2588 = vunpack.c.h.b16 %v489
    %v2589 = vunpack.c.l.b16 %v490
    %v2590 = vunpack.c.h.b16 %v490
    %v2591 = vunpack.c.l.b16 %v491
    %v2592 = vunpack.c.h.b16 %v491
    %v2593 = vunpack.c.l.b16 %v492
    %v2594 = vunpack.c.h.b16 %v492
    %v2595 = vunpack.c.l.b16 %v493
    %v2596 = vunpack.c.h.b16 %v493
    %v2597 = vunpack.c.l.b16 %v494
    %v2598 = vunpack.c.h.b16 %v494
    %v2599 = vunpack.c.l.b16 %v495
    %v2600 = vunpack.c.h.b16 %v495
    %v2601 = vunpack.c.l.b16 %v496
    %v2602 = vunpack.c.h.b16 %v496
    %v2603 = vunpack.c.l.b16 %v497
    %v2604 = vunpack.c.h.b16 %v497
    %v2605 = vunpack.c.l.b16 %v498
    %v2606 = vunpack.c.h.b16 %v498
    %v2607 = vunpack.c.l.b16 %v499
    %v2608 = vunpack.c.h.b16 %v499
    %v2609 = vunpack.c.l.b16 %v500
    %v2610 = vunpack.c.h.b16 %v500
    %v2611 = vunpack.c.l.b16 %v501
    %v2612 = vunpack.c.h.b16 %v501
    %v2613 = vunpack.c.l.b16 %v502
    %v2614 = vunpack.c.h.b16 %v502
    %v2615 = vunpack.c.l.b16 %v503
    %v2616 = vunpack.c.h.b16 %v503
    %v2617 = vunpack.c.l.b16 %v504
    %v2618 = vunpack.c.h.b16 %v504
    %v2619 = vunpack.c.l.b16 %v505
    %v2620 = vunpack.c.h.b16 %v505
    %v2621 = vunpack.c.l.b16 %v506
    %v2622 = vunpack.c.h.b16 %v506
    %v2623 = vunpack.c.l.b16 %v507
    %v2624 = vunpack.c.h.b16 %v507
    %v2625 = vunpack.c.l.b16 %v508
    %v2626 = vunpack.c.h.b16 %v508
    %v2627 = vunpack.c.l.b16 %v509
    %v2628 = vunpack.c.h.b16 %v509
    %v2629 = vunpack.c.l.b16 %v510
    %v2630 = vunpack.c.h.b16 %v510
    %v2631 = vunpack.c.l.b16 %v511
    %v2632 = vunpack.c.h.b16 %v511
    %v2633 = vunpack.c.l.b16 %v512
    %v2634 = vunpack.c.h.b16 %v512
    %v2635 = vunpack.c.l.b16 %v513
    %v2636 = vunpack.c.h.b16 %v513
    %v2637 = vunpack.c.l.b16 %v514
    %v2638 = vunpack.c.h.b16 %v514
    %v2639 = vunpack.c.l.b16 %v515
    %v2640 = vunpack.c.h.b16 %v515
    %v2641 = vunpack.c.l.b16 %v516
    %v2642 = vunpack.c.h.b16 %v516
    %v2643 = vunpack.c.l.b16 %v517
    %v2644 = vunpack.c.h.b16 %v517
    %v2645 = vunpack.c.l.b16 %v518
    %v2646 = vunpack.c.h.b16 %v518
    %v2647 = vunpack.c.l.b16 %v519
    %v2648 = vunpack.c.h.b16 %v519
    %v2649 = vunpack.c.l.b16 %v520
    %v2650 = vunpack.c.h.b16 %v520
    %v2651 = vunpack.c.l.b16 %v521
    %v2652 = vunpack.c.h.b16 %v521
    %v2653 = vunpack.c.l.b16 %v522
    %v2654 = vunpack.c.h.b16 %v522
    %v2655 = vunpack.c.l.b16 %v523
    %v2656 = vunpack.c.h.b16 %v523
    %v2657 = vunpack.c.l.b16 %v524
    %v2658 = vunpack.c.h.b16 %v524
    %v2659 = vunpack.c.l.b16 %v525
    %v2660 = vunpack.c.h.b16 %v525
    %v2661 = vunpack.c.l.b16 %v526
    %v2662 = vunpack.c.h.b16 %v526
    %v2663 = vunpack.c.l.b16 %v527
    %v2664 = vunpack.c.h.b16 %v527
    %v2665 = vunpack.c.l.b16 %v528
    %v2666 = vunpack.c.h.b16 %v528
    %v2667 = vunpack.c.l.b16 %v529
    %v2668 = vunpack.c.h.b16 %v529
    %v2669 = vunpack.c.l.b16 %v530
    %v2670 = vunpack.c.h.b16 %v530
    %v2671 = vunpack.c.l.b16 %v531
    %v2672 = vunpack.c.h.b16 %v531
    %v2673 = vunpack.c.l.b16 %v532
    %v2674 = vunpack.c.h.b16 %v532
    %v2675 = vunpack.c.l.b16 %v533
    %v2676 = vunpack.c.h.b16 %v533
    %v2677 = vunpack.c.l.b16 %v534
    %v2678 = vunpack.c.h.b16 %v534
    %v2679 = vunpack.c.l.b16 %v535
    %v2680 = vunpack.c.h.b16 %v535
    %v2681 = vunpack.c.l.b16 %v536
    %v2682 = vunpack.c.h.b16 %v536
    %v2683 = vunpack.c.l.b16 %v537
    %v2684 = vunpack.c.h.b16 %v537
    %v2685 = vunpack.c.l.b16 %v538
    %v2686 = vunpack.c.h.b16 %v538
    %v2687 = vunpack.c.l.b16 %v539
    %v2688 = vunpack.c.h.b16 %v539
    %v2689 = vunpack.c.l.b16 %v540
    %v2690 = vunpack.c.h.b16 %v540
    %v2691 = vunpack.c.l.b16 %v541
    %v2692 = vunpack.c.h.b16 %v541
    %v2693 = vunpack.c.l.b16 %v542
    %v2694 = vunpack.c.h.b16 %v542
    %v2695 = vunpack.c.l.b16 %v543
    %v2696 = vunpack.c.h.b16 %v543
    %v2697 = vunpack.c.l.b16 %v544
    %v2698 = vunpack.c.h.b16 %v544
    %v2699 = vunpack.c.l.b16 %v545
    %v2700 = vunpack.c.h.b16 %v545
    %v2701 = vunpack.c.l.b16 %v546
    %v2702 = vunpack.c.h.b16 %v546
    %v2703 = vunpack.c.l.b16 %v547
    %v2704 = vunpack.c.h.b16 %v547
    %v2705 = vunpack.c.l.b16 %v548
    %v2706 = vunpack.c.h.b16 %v548
    %v2707 = vunpack.c.l.b16 %v549
    %v2708 = vunpack.c.h.b16 %v549
    %v2709 = vunpack.c.l.b16 %v550
    %v2710 = vunpack.c.h.b16 %v550
    %v2711 = vunpack.c.l.b16 %v551
    %v2712 = vunpack.c.h.b16 %v551
    %v2713 = vunpack.c.l.b16 %v552
    %v2714 = vunpack.c.h.b16 %v552
    %v2715 = vunpack.c.l.b16 %v553
    %v2716 = vunpack.c.h.b16 %v553
    %v2717 = vunpack.c.l.b16 %v554
    %v2718 = vunpack.c.h.b16 %v554
    %v2719 = vunpack.c.l.b16 %v555
    %v2720 = vunpack.c.h.b16 %v555
    %v2721 = vunpack.c.l.b16 %v556
    %v2722 = vunpack.c.h.b16 %v556
    %v2723 = vunpack.c.l.b16 %v557
    %v2724 = vunpack.c.h.b16 %v557
    %v2725 = vunpack.c.l.b16 %v558
    %v2726 = vunpack.c.h.b16 %v558
    %v2727 = vunpack.c.l.b16 %v559
    %v2728 = vunpack.c.h.b16 %v559
    %v2729 = vunpack.c.l.b16 %v560
    %v2730 = vunpack.c.h.b16 %v560
    %v2731 = vunpack.c.l.b16 %v561
    %v2732 = vunpack.c.h.b16 %v561
    %v2733 = vunpack.c.l.b16 %v562
    %v2734 = vunpack.c.h.b16 %v562
    %v2735 = vunpack.c.l.b16 %v563
    %v2736 = vunpack.c.h.b16 %v563
    %v2737 = vunpack.c.l.b16 %v564
    %v2738 = vunpack.c.h.b16 %v564
    %v2739 = vunpack.c.l.b16 %v565
    %v2740 = vunpack.c.h.b16 %v565
    %v2741 = vunpack.c.l.b16 %v566
    %v2742 = vunpack.c.h.b16 %v566
    %v2743 = vunpack.c.l.b16 %v567
    %v2744 = vunpack.c.h.b16 %v567
    %v2745 = vunpack.c.l.b16 %v568
    %v2746 = vunpack.c.h.b16 %v568
    %v2747 = vunpack.c.l.b16 %v569
    %v2748 = vunpack.c.h.b16 %v569
    %v2749 = vunpack.c.l.b16 %v570
    %v2750 = vunpack.c.h.b16 %v570
    %v2751 = vunpack.c.l.b16 %v571
    %v2752 = vunpack.c.h.b16 %v571
    %v2753 = vunpack.c.l.b16 %v572
    %v2754 = vunpack.c.h.b16 %v572
    %v2755 = vunpack.c.l.b16 %v573
    %v2756 = vunpack.c.h.b16 %v573
    %v2757 = vunpack.c.l.b16 %v574
    %v2758 = vunpack.c.h.b16 %v574
    %v2759 = vunpack.c.l.b16 %v575
    %v2760 = vunpack.c.h.b16 %v575
    %v2761 = vunpack.c.l.b16 %v576
    %v2762 = vunpack.c.h.b16 %v576
    %v2763 = vunpack.c.l.b16 %v577
    %v2764 = vunpack.c.h.b16 %v577
    %v2765 = vunpack.c.l.b16 %v578
    %v2766 = vunpack.c.h.b16 %v578
    %v2767 = vunpack.c.l.b16 %v579
    %v2768 = vunpack.c.h.b16 %v579
    %v2769 = vunpack.c.l.b16 %v580
    %v2770 = vunpack.c.h.b16 %v580
    %v2771 = vunpack.c.l.b16 %v581
    %v2772 = vunpack.c.h.b16 %v581
    %v2773 = vunpack.c.l.b16 %v582
    %v2774 = vunpack.c.h.b16 %v582
    %v2775 = vunpack.c.l.b16 %v583
    %v2776 = vunpack.c.h.b16 %v583
    %v2777 = vunpack.c.l.b16 %v584
    %v2778 = vunpack.c.h.b16 %v584
    %v2779 = vunpack.c.l.b16 %v585
    %v2780 = vunpack.c.h.b16 %v585
    %v2781 = vunpack.c.l.b16 %v586
    %v2782 = vunpack.c.h.b16 %v586
    %v2783 = vunpack.c.l.b16 %v587
    %v2784 = vunpack.c.h.b16 %v587
    %v2785 = vunpack.c.l.b16 %v588
    %v2786 = vunpack.c.h.b16 %v588
    %v2787 = vunpack.c.l.b16 %v589
    %v2788 = vunpack.c.h.b16 %v589
    %v2789 = vunpack.c.l.b16 %v590
    %v2790 = vunpack.c.h.b16 %v590
    %v2791 = vunpack.c.l.b16 %v591
    %v2792 = vunpack.c.h.b16 %v591
    %v2793 = vunpack.c.l.b16 %v592
    %v2794 = vunpack.c.h.b16 %v592
    %v2795 = vunpack.c.l.b16 %v593
    %v2796 = vunpack.c.h.b16 %v593
    %v2797 = vunpack.c.l.b16 %v594
    %v2798 = vunpack.c.h.b16 %v594
    %v2799 = vunpack.c.l.b16 %v595
    %v2800 = vunpack.c.h.b16 %v595
    %v2801 = vunpack.c.l.b16 %v596
    %v2802 = vunpack.c.h.b16 %v596
    %v2803 = vunpack.c.l.b16 %v597
    %v2804 = vunpack.c.h.b16 %v597
    %v2805 = vunpack.c.l.b16 %v598
    %v2806 = vunpack.c.h.b16 %v598
    %v2807 = vunpack.c.l.b16 %v599
    %v2808 = vunpack.c.h.b16 %v599
    %v2809 = vunpack.c.l.b16 %v600
    %v2810 = vunpack.c.h.b16 %v600
    %v2811 = vunpack.c.l.b16 %v601
    %v2812 = vunpack.c.h.b16 %v601
    %v2813 = vunpack.c.l.b16 %v602
    %v2814 = vunpack.c.h.b16 %v602
    %v2815 = vunpack.c.l.b16 %v603
    %v2816 = vunpack.c.h.b16 %v603
    %v2817 = vunpack.c.l.b16 %v604
    %v2818 = vunpack.c.h.b16 %v604
    %v2819 = vunpack.c.l.b16 %v605
    %v2820 = vunpack.c.h.b16 %v605
    %v2821 = vunpack.c.l.b16 %v606
    %v2822 = vunpack.c.h.b16 %v606
    %v2823 = vunpack.c.l.b16 %v607
    %v2824 = vunpack.c.h.b16 %v607
    %v2825 = vunpack.c.l.b16 %v608
    %v2826 = vunpack.c.h.b16 %v608
    %v2827 = vunpack.c.l.b16 %v609
    %v2828 = vunpack.c.h.b16 %v609
    %v2829 = vunpack.c.l.b16 %v610
    %v2830 = vunpack.c.h.b16 %v610
    %v2831 = vunpack.c.l.b16 %v611
    %v2832 = vunpack.c.h.b16 %v611
    %v2833 = vunpack.c.l.b16 %v612
    %v2834 = vunpack.c.h.b16 %v612
    %v2835 = vunpack.c.l.b16 %v613
    %v2836 = vunpack.c.h.b16 %v613
    %v2837 = vunpack.c.l.b16 %v614
    %v2838 = vunpack.c.h.b16 %v614
    %v2839 = vunpack.c.l.b16 %v615
    %v2840 = vunpack.c.h.b16 %v615
    %v2841 = vunpack.c.l.b16 %v616
    %v2842 = vunpack.c.h.b16 %v616
    %v2843 = vunpack.c.l.b16 %v617
    %v2844 = vunpack.c.h.b16 %v617
    %v2845 = vunpack.c.l.b16 %v618
    %v2846 = vunpack.c.h.b16 %v618
    %v2847 = vunpack.c.l.b16 %v619
    %v2848 = vunpack.c.h.b16 %v619
    %v2849 = vunpack.c.l.b16 %v620
    %v2850 = vunpack.c.h.b16 %v620
    %v2851 = vunpack.c.l.b16 %v621
    %v2852 = vunpack.c.h.b16 %v621
    %v2853 = vunpack.c.l.b16 %v622
    %v2854 = vunpack.c.h.b16 %v622
    %v2855 = vunpack.c.l.b16 %v623
    %v2856 = vunpack.c.h.b16 %v623
    %v2857 = vunpack.c.l.b16 %v624
    %v2858 = vunpack.c.h.b16 %v624
    %v2859 = vunpack.c.l.b16 %v625
    %v2860 = vunpack.c.h.b16 %v625
    %v2861 = vunpack.c.l.b16 %v626
    %v2862 = vunpack.c.h.b16 %v626
    %v2863 = vunpack.c.l.b16 %v627
    %v2864 = vunpack.c.h.b16 %v627
    %v2865 = vunpack.c.l.b16 %v628
    %v2866 = vunpack.c.h.b16 %v628
    %v2867 = vunpack.c.l.b16 %v629
    %v2868 = vunpack.c.h.b16 %v629
    %v2869 = vunpack.c.l.b16 %v630
    %v2870 = vunpack.c.h.b16 %v630
    %v2871 = vunpack.c.l.b16 %v631
    %v2872 = vunpack.c.h.b16 %v631
    %v2873 = vunpack.c.l.b16 %v632
    %v2874 = vunpack.c.h.b16 %v632
    %v2875 = vunpack.c.l.b16 %v633
    %v2876 = vunpack.c.h.b16 %v633
    %v2877 = vunpack.c.l.b16 %v634
    %v2878 = vunpack.c.h.b16 %v634
    %v2879 = vunpack.c.l.b16 %v635
    %v2880 = vunpack.c.h.b16 %v635
    %v2881 = vunpack.c.l.b16 %v636
    %v2882 = vunpack.c.h.b16 %v636
    %v2883 = vunpack.c.l.b16 %v637
    %v2884 = vunpack.c.h.b16 %v637
    %v2885 = vunpack.c.l.b16 %v638
    %v2886 = vunpack.c.h.b16 %v638
    %v2887 = vunpack.c.l.b16 %v639
    %v2888 = vunpack.c.h.b16 %v639
    %v2889 = vunpack.c.l.b16 %v640
    %v2890 = vunpack.c.h.b16 %v640
    %v2891 = vunpack.c.l.b16 %v641
    %v2892 = vunpack.c.h.b16 %v641
    %v2893 = vunpack.c.l.b16 %v642
    %v2894 = vunpack.c.h.b16 %v642
    %v2895 = vunpack.c.l.b16 %v643
    %v2896 = vunpack.c.h.b16 %v643
    %v2897 = vunpack.c.l.b16 %v644
    %v2898 = vunpack.c.h.b16 %v644
    %v2899 = vunpack.c.l.b16 %v645
    %v2900 = vunpack.c.h.b16 %v645
    %v2901 = vunpack.c.l.b16 %v646
    %v2902 = vunpack.c.h.b16 %v646
    %v2903 = vunpack.c.l.b16 %v647
    %v2904 = vunpack.c.h.b16 %v647
    %v2905 = vunpack.c.l.b16 %v648
    %v2906 = vunpack.c.h.b16 %v648
    %v2907 = vunpack.c.l.b16 %v649
    %v2908 = vunpack.c.h.b16 %v649
    %v2909 = vunpack.c.l.b16 %v650
    %v2910 = vunpack.c.h.b16 %v650
    %v2911 = vunpack.c.l.b16 %v651
    %v2912 = vunpack.c.h.b16 %v651
    %v2913 = vunpack.c.l.b16 %v652
    %v2914 = vunpack.c.h.b16 %v652
    %v2915 = vunpack.c.l.b16 %v653
    %v2916 = vunpack.c.h.b16 %v653
    %v2917 = vunpack.c.l.b16 %v654
    %v2918 = vunpack.c.h.b16 %v654
    %v2919 = vunpack.c.l.b16 %v655
    %v2920 = vunpack.c.h.b16 %v655
    %v2921 = vunpack.c.l.b16 %v656
    %v2922 = vunpack.c.h.b16 %v656
    %v2923 = vunpack.c.l.b16 %v657
    %v2924 = vunpack.c.h.b16 %v657
    %v2925 = vunpack.c.l.b16 %v658
    %v2926 = vunpack.c.h.b16 %v658
    %v2927 = vunpack.c.l.b16 %v659
    %v2928 = vunpack.c.h.b16 %v659
    %v2929 = vunpack.c.l.b16 %v660
    %v2930 = vunpack.c.h.b16 %v660
    %v2931 = vunpack.c.l.b16 %v661
    %v2932 = vunpack.c.h.b16 %v661
    %v2933 = vunpack.c.l.b16 %v662
    %v2934 = vunpack.c.h.b16 %v662
    %v2935 = vunpack.c.l.b16 %v663
    %v2936 = vunpack.c.h.b16 %v663
    %v2937 = vunpack.c.l.b16 %v664
    %v2938 = vunpack.c.h.b16 %v664
    %v2939 = vunpack.c.l.b16 %v665
    %v2940 = vunpack.c.h.b16 %v665
    %v2941 = vunpack.c.l.b16 %v666
    %v2942 = vunpack.c.h.b16 %v666
    %v2943 = vunpack.c.l.b16 %v667
    %v2944 = vunpack.c.h.b16 %v667
    %v2945 = vunpack.c.l.b16 %v668
    %v2946 = vunpack.c.h.b16 %v668
    %v2947 = vunpack.c.l.b16 %v669
    %v2948 = vunpack.c.h.b16 %v669
    %v2949 = vunpack.c.l.b16 %v670
    %v2950 = vunpack.c.h.b16 %v670
    %v2951 = vunpack.c.l.b16 %v671
    %v2952 = vunpack.c.h.b16 %v671
    %v2953 = vunpack.c.l.b16 %v672
    %v2954 = vunpack.c.h.b16 %v672
    %v2955 = vunpack.c.l.b16 %v673
    %v2956 = vunpack.c.h.b16 %v673
    %v2957 = vunpack.c.l.b16 %v674
    %v2958 = vunpack.c.h.b16 %v674
    %v2959 = vunpack.c.l.b16 %v675
    %v2960 = vunpack.c.h.b16 %v675
    %v2961 = vunpack.c.l.b16 %v676
    %v2962 = vunpack.c.h.b16 %v676
    %v2963 = vunpack.c.l.b16 %v677
    %v2964 = vunpack.c.h.b16 %v677
    %v2965 = vunpack.c.l.b16 %v678
    %v2966 = vunpack.c.h.b16 %v678
    %v2967 = vunpack.c.l.b16 %v679
    %v2968 = vunpack.c.h.b16 %v679
    %v2969 = vunpack.c.l.b16 %v680
    %v2970 = vunpack.c.h.b16 %v680
    %v2971 = vunpack.c.l.b16 %v681
    %v2972 = vunpack.c.h.b16 %v681
    %v2973 = vunpack.c.l.b16 %v682
    %v2974 = vunpack.c.h.b16 %v682
    %v2975 = vunpack.c.l.b16 %v683
    %v2976 = vunpack.c.h.b16 %v683
    %v2977 = vunpack.c.l.b16 %v684
    %v2978 = vunpack.c.h.b16 %v684
    %v2979 = vunpack.c.l.b16 %v685
    %v2980 = vunpack.c.h.b16 %v685
    %v2981 = vunpack.c.l.b16 %v686
    %v2982 = vunpack.c.h.b16 %v686
    %v2983 = vunpack.c.l.b16 %v687
    %v2984 = vunpack.c.h.b16 %v687
    %v2985 = vunpack.c.l.b16 %v688
    %v2986 = vunpack.c.h.b16 %v688
    %v2987 = vunpack.c.l.b16 %v689
    %v2988 = vunpack.c.h.b16 %v689
    %v2989 = vunpack.c.l.b16 %v690
    %v2990 = vunpack.c.h.b16 %v690
    %v2991 = vunpack.c.l.b16 %v691
    %v2992 = vunpack.c.h.b16 %v691
    %v2993 = vunpack.c.l.b16 %v692
    %v2994 = vunpack.c.h.b16 %v692
    %v2995 = vunpack.c.l.b16 %v693
    %v2996 = vunpack.c.h.b16 %v693
    %v2997 = vunpack.c.l.b16 %v694
    %v2998 = vunpack.c.h.b16 %v694
    %v2999 = vunpack.c.l.b16 %v695
    %v3000 = vunpack.c.h.b16 %v695
    %v3001 = vunpack.c.l.b16 %v696
    %v3002 = vunpack.c.h.b16 %v696
    %v3003 = vunpack.c.l.b16 %v697
    %v3004 = vunpack.c.h.b16 %v697
    %v3005 = vunpack.c.l.b16 %v698
    %v3006 = vunpack.c.h.b16 %v698
    %v3007 = vunpack.c.l.b16 %v699
    %v3008 = vunpack.c.h.b16 %v699
    %v3009 = vunpack.c.l.b16 %v700
    %v3010 = vunpack.c.h.b16 %v700
    %v3011 = vunpack.c.l.b16 %v701
    %v3012 = vunpack.c.h.b16 %v701
    %v3013 = vunpack.c.l.b16 %v702
    %v3014 = vunpack.c.h.b16 %v702
    %v3015 = vunpack.c.l.b16 %v703
    %v3016 = vunpack.c.h.b16 %v703
    %v3017 = vunpack.c.l.b16 %v704
    %v3018 = vunpack.c.h.b16 %v704
    %v3019 = vunpack.c.l.b16 %v705
    %v3020 = vunpack.c.h.b16 %v705
    %v3021 = vunpack.c.l.b16 %v706
    %v3022 = vunpack.c.h.b16 %v706
    %v3023 = vunpack.c.l.b16 %v707
    %v3024 = vunpack.c.h.b16 %v707
    %v3025 = vunpack.c.l.b16 %v708
    %v3026 = vunpack.c.h.b16 %v708
    %v3027 = vunpack.c.l.b16 %v709
    %v3028 = vunpack.c.h.b16 %v709
    %v3029 = vunpack.c.l.b16 %v710
    %v3030 = vunpack.c.h.b16 %v710
    %v3031 = vunpack.c.l.b16 %v711
    %v3032 = vunpack.c.h.b16 %v711
    %v3033 = vunpack.c.l.b16 %v712
    %v3034 = vunpack.c.h.b16 %v712
    %v3035 = vunpack.c.l.b16 %v713
    %v3036 = vunpack.c.h.b16 %v713
    %v3037 = vunpack.c.l.b16 %v714
    %v3038 = vunpack.c.h.b16 %v714
    %v3039 = vunpack.c.l.b16 %v715
    %v3040 = vunpack.c.h.b16 %v715
    %v3041 = vunpack.c.l.b16 %v716
    %v3042 = vunpack.c.h.b16 %v716
    %v3043 = vunpack.c.l.b16 %v717
    %v3044 = vunpack.c.h.b16 %v717
    %v3045 = vunpack.c.l.b16 %v718
    %v3046 = vunpack.c.h.b16 %v718
    %v3047 = vunpack.c.l.b16 %v719
    %v3048 = vunpack.c.h.b16 %v719
    %v3049 = vunpack.c.l.b16 %v720
    %v3050 = vunpack.c.h.b16 %v720
    %v3051 = vunpack.c.l.b16 %v721
    %v3052 = vunpack.c.h.b16 %v721
    %v3053 = vunpack.c.l.b16 %v722
    %v3054 = vunpack.c.h.b16 %v722
    %v3055 = vunpack.c.l.b16 %v723
    %v3056 = vunpack.c.h.b16 %v723
    %v3057 = vunpack.c.l.b16 %v724
    %v3058 = vunpack.c.h.b16 %v724
    %v3059 = vunpack.c.l.b16 %v725
    %v3060 = vunpack.c.h.b16 %v725
    %v3061 = vunpack.c.l.b16 %v726
    %v3062 = vunpack.c.h.b16 %v726
    %v3063 = vunpack.c.l.b16 %v727
    %v3064 = vunpack.c.h.b16 %v727
    %v3065 = vunpack.c.l.b16 %v728
    %v3066 = vunpack.c.h.b16 %v728
    %v3067 = vunpack.c.l.b16 %v729
    %v3068 = vunpack.c.h.b16 %v729
    %v3069 = vunpack.c.l.b16 %v730
    %v3070 = vunpack.c.h.b16 %v730
    %v3071 = vunpack.c.l.b16 %v731
    %v3072 = vunpack.c.h.b16 %v731
    %v3073 = vunpack.c.l.b16 %v732
    %v3074 = vunpack.c.h.b16 %v732
    %v3075 = vunpack.c.l.b16 %v733
    %v3076 = vunpack.c.h.b16 %v733
    %v3077 = vunpack.c.l.b16 %v734
    %v3078 = vunpack.c.h.b16 %v734
    %v3079 = vunpack.c.l.b16 %v735
    %v3080 = vunpack.c.h.b16 %v735
    %v3081 = vunpack.c.l.b16 %v736
    %v3082 = vunpack.c.h.b16 %v736
    %v3083 = vunpack.c.l.b16 %v737
    %v3084 = vunpack.c.h.b16 %v737
    %v3085 = vunpack.c.l.b16 %v738
    %v3086 = vunpack.c.h.b16 %v738
    %v3087 = vunpack.c.l.b16 %v739
    %v3088 = vunpack.c.h.b16 %v739
    %v3089 = vunpack.c.l.b16 %v740
    %v3090 = vunpack.c.h.b16 %v740
    %v3091 = vunpack.c.l.b16 %v741
    %v3092 = vunpack.c.h.b16 %v741
    %v3093 = vunpack.c.l.b16 %v742
    %v3094 = vunpack.c.h.b16 %v742
    %v3095 = vunpack.c.l.b16 %v743
    %v3096 = vunpack.c.h.b16 %v743
    %v3097 = vunpack.c.l.b16 %v744
    %v3098 = vunpack.c.h.b16 %v744
    %v3099 = vunpack.c.l.b16 %v745
    %v3100 = vunpack.c.h.b16 %v745
    %v3101 = vunpack.c.l.b16 %v746
    %v3102 = vunpack.c.h.b16 %v746
    %v3103 = vunpack.c.l.b16 %v747
    %v3104 = vunpack.c.h.b16 %v747
    %v3105 = vunpack.c.l.b16 %v748
    %v3106 = vunpack.c.h.b16 %v748
    %v3107 = vunpack.c.l.b16 %v749
    %v3108 = vunpack.c.h.b16 %v749
    %v3109 = vunpack.c.l.b16 %v750
    %v3110 = vunpack.c.h.b16 %v750
    %v3111 = vunpack.c.l.b16 %v751
    %v3112 = vunpack.c.h.b16 %v751
    %v3113 = vunpack.c.l.b16 %v752
    %v3114 = vunpack.c.h.b16 %v752
    %v3115 = vunpack.c.l.b16 %v753
    %v3116 = vunpack.c.h.b16 %v753
    %v3117 = vunpack.c.l.b16 %v754
    %v3118 = vunpack.c.h.b16 %v754
    %v3119 = vunpack.c.l.b16 %v755
    %v3120 = vunpack.c.h.b16 %v755
    %v3121 = vunpack.c.l.b16 %v756
    %v3122 = vunpack.c.h.b16 %v756
    %v3123 = vunpack.c.l.b16 %v757
    %v3124 = vunpack.c.h.b16 %v757
    %v3125 = vunpack.c.l.b16 %v758
    %v3126 = vunpack.c.h.b16 %v758
    %v3127 = vunpack.c.l.b16 %v759
    %v3128 = vunpack.c.h.b16 %v759
    %v3129 = vunpack.c.l.b16 %v760
    %v3130 = vunpack.c.h.b16 %v760
    %v3131 = vunpack.c.l.b16 %v761
    %v3132 = vunpack.c.h.b16 %v761
    %v3133 = vunpack.c.l.b16 %v762
    %v3134 = vunpack.c.h.b16 %v762
    %v3135 = vunpack.c.l.b16 %v763
    %v3136 = vunpack.c.h.b16 %v763
    %v3137 = vunpack.c.l.b16 %v764
    %v3138 = vunpack.c.h.b16 %v764
    %v3139 = vunpack.c.l.b16 %v765
    %v3140 = vunpack.c.h.b16 %v765
    %v3141 = vunpack.c.l.b16 %v766
    %v3142 = vunpack.c.h.b16 %v766
    %v3143 = vunpack.c.l.b16 %v767
    %v3144 = vunpack.c.h.b16 %v767
    %v3145 = vunpack.c.l.b16 %v768
    %v3146 = vunpack.c.h.b16 %v768
    %v3147 = vunpack.c.l.b16 %v769
    %v3148 = vunpack.c.h.b16 %v769
    %v3149 = vunpack.c.l.b16 %v770
    %v3150 = vunpack.c.h.b16 %v770
    %v3151 = vunpack.c.l.b16 %v771
    %v3152 = vunpack.c.h.b16 %v771
    %v3153 = vunpack.c.l.b16 %v772
    %v3154 = vunpack.c.h.b16 %v772
    %v3155 = vunpack.c.l.b16 %v773
    %v3156 = vunpack.c.h.b16 %v773
    %v3157 = vunpack.c.l.b16 %v774
    %v3158 = vunpack.c.h.b16 %v774
    %v3159 = vunpack.c.l.b16 %v775
    %v3160 = vunpack.c.h.b16 %v775
    %v3161 = vunpack.c.l.b16 %v776
    %v3162 = vunpack.c.h.b16 %v776
    %v3163 = vunpack.c.l.b16 %v777
    %v3164 = vunpack.c.h.b16 %v777
    %v3165 = vunpack.c.l.b16 %v778
    %v3166 = vunpack.c.h.b16 %v778
    %v3167 = vunpack.c.l.b16 %v779
    %v3168 = vunpack.c.h.b16 %v779
    %v3169 = vunpack.c.l.b16 %v780
    %v3170 = vunpack.c.h.b16 %v780
    %v3171 = vunpack.c.l.b16 %v781
    %v3172 = vunpack.c.h.b16 %v781
    %v3173 = vunpack.c.l.b16 %v782
    %v3174 = vunpack.c.h.b16 %v782
    %v3175 = vunpack.c.l.b16 %v783
    %v3176 = vunpack.c.h.b16 %v783
    %v3177 = vunpack.c.l.b16 %v784
    %v3178 = vunpack.c.h.b16 %v784
    %v3179 = vunpack.c.l.b16 %v785
    %v3180 = vunpack.c.h.b16 %v785
    %v3181 = vunpack.c.l.b16 %v786
    %v3182 = vunpack.c.h.b16 %v786
    %v3183 = vunpack.c.l.b16 %v787
    %v3184 = vunpack.c.h.b16 %v787
    %v3185 = vunpack.c.l.b16 %v788
    %v3186 = vunpack.c.h.b16 %v788
    %v3187 = vunpack.c.l.b16 %v789
    %v3188 = vunpack.c.h.b16 %v789
    %v3189 = vunpack.c.l.b16 %v790
    %v3190 = vunpack.c.h.b16 %v790
    %v3191 = vunpack.c.l.b16 %v791
    %v3192 = vunpack.c.h.b16 %v791
    %v3193 = vunpack.c.l.b16 %v792
    %v3194 = vunpack.c.h.b16 %v792
    %v3195 = vunpack.c.l.b16 %v793
    %v3196 = vunpack.c.h.b16 %v793
    %v3197 = vunpack.c.l.b16 %v794
    %v3198 = vunpack.c.h.b16 %v794
    %v3199 = vunpack.c.l.b16 %v795
    %v3200 = vunpack.c.h.b16 %v795
    %v3201 = vunpack.c.l.b16 %v796
    %v3202 = vunpack.c.h.b16 %v796
    %v3203 = vunpack.c.l.b16 %v797
    %v3204 = vunpack.c.h.b16 %v797
    %v3205 = vunpack.c.l.b16 %v798
    %v3206 = vunpack.c.h.b16 %v798
    %v3207 = vunpack.c.l.b16 %v799
    %v3208 = vunpack.c.h.b16 %v799
    %v3209 = vunpack.c.l.b16 %v800
    %v3210 = vunpack.c.h.b16 %v800
    %v3211 = vunpack.c.l.b16 %v801
    %v3212 = vunpack.c.h.b16 %v801
    %v3213 = vunpack.c.l.b16 %v802
    %v3214 = vunpack.c.h.b16 %v802
    %v3215 = vunpack.c.l.b16 %v803
    %v3216 = vunpack.c.h.b16 %v803
    %v3217 = vunpack.c.l.b16 %v804
    %v3218 = vunpack.c.h.b16 %v804
    %v3219 = vunpack.c.l.b16 %v805
    %v3220 = vunpack.c.h.b16 %v805
    %v3221 = vunpack.c.l.b16 %v806
    %v3222 = vunpack.c.h.b16 %v806
    %v3223 = vunpack.c.l.b16 %v807
    %v3224 = vunpack.c.h.b16 %v807
    %v3225 = vunpack.c.l.b16 %v808
    %v3226 = vunpack.c.h.b16 %v808
    %v3227 = vunpack.c.l.b16 %v809
    %v3228 = vunpack.c.h.b16 %v809
    %v3229 = vpack.c.b16 %v1665, %v1661
    %v3230 = vpack.c.b16 %v1666, %v1662
    %v3231 = vpack.c.b16 %v1667, %v1663
    %v3232 = vpack.c.b16 %v1668, %v1664
    %v3233 = vpack.c.b16 %v1673, %v1669
    %v3234 = vpack.c.b16 %v1674, %v1670
    %v3235 = vpack.c.b16 %v1675, %v1671
    %v3236 = vpack.c.b16 %v1676, %v1672
    %v3237 = vpack.c.b16 %v1681, %v1677
    %v3238 = vpack.c.b16 %v1682, %v1678
    %v3239 = vpack.c.b16 %v1683, %v1679
    %v3240 = vpack.c.b16 %v1684, %v1680
    %v3241 = vpack.c.b16 %v1689, %v1685
    %v3242 = vpack.c.b16 %v1690, %v1686
    %v3243 = vpack.c.b16 %v1691, %v1687
    %v3244 = vpack.c.b16 %v1692, %v1688
    %v3245 = vpack.c.b16 %v1697, %v1693
    %v3246 = vpack.c.b16 %v1698, %v1694
    %v3247 = vpack.c.b16 %v1699, %v1695
    %v3248 = vpack.c.b16 %v1700, %v1696
    %v3249 = vpack.c.b16 %v1705, %v1701
    %v3250 = vpack.c.b16 %v1706, %v1702
    %v3251 = vpack.c.b16 %v1707, %v1703
    %v3252 = vpack.c.b16 %v1708, %v1704
    %v3253 = vpack.c.b16 %v1713, %v1709
    %v3254 = vpack.c.b16 %v1714, %v1710
    %v3255 = vpack.c.b16 %v1715, %v1711
    %v3256 = vpack.c.b16 %v1716, %v1712
    %v3257 = vpack.c.b16 %v1721, %v1717
    %v3258 = vpack.c.b16 %v1722, %v1718
    %v3259 = vpack.c.b16 %v1723, %v1719
    %v3260 = vpack.c.b16 %v1724, %v1720
    %v3261 = vpack.c.b16 %v1729, %v1725
    %v3262 = vpack.c.b16 %v1730, %v1726
    %v3263 = vpack.c.b16 %v1731, %v1727
    %v3264 = vpack.c.b16 %v1732, %v1728
    %v3265 = vpack.c.b16 %v1737, %v1733
    %v3266 = vpack.c.b16 %v1738, %v1734
    %v3267 = vpack.c.b16 %v1739, %v1735
    %v3268 = vpack.c.b16 %v1740, %v1736
    %v3269 = vpack.c.b16 %v1745, %v1741
    %v3270 = vpack.c.b16 %v1746, %v1742
    %v3271 = vpack.c.b16 %v1747, %v1743
    %v3272 = vpack.c.b16 %v1748, %v1744
    %v3273 = vpack.c.b16 %v1753, %v1749
    %v3274 = vpack.c.b16 %v1754, %v1750
    %v3275 = vpack.c.b16 %v1755, %v1751
    %v3276 = vpack.c.b16 %v1756, %v1752
    %v3277 = vpack.c.b16 %v1761, %v1757
    %v3278 = vpack.c.b16 %v1762, %v1758
    %v3279 = vpack.c.b16 %v1763, %v1759
    %v3280 = vpack.c.b16 %v1764, %v1760
    %v3281 = vpack.c.b16 %v1769, %v1765
    %v3282 = vpack.c.b16 %v1770, %v1766
    %v3283 = vpack.c.b16 %v1771, %v1767
    %v3284 = vpack.c.b16 %v1772, %v1768
    %v3285 = vpack.c.b16 %v1777, %v1773
    %v3286 = vpack.c.b16 %v1778, %v1774
    %v3287 = vpack.c.b16 %v1779, %v1775
    %v3288 = vpack.c.b16 %v1780, %v1776
    %v3289 = vpack.c.b16 %v1785, %v1781
    %v3290 = vpack.c.b16 %v1786, %v1782
    %v3291 = vpack.c.b16 %v1787, %v1783
    %v3292 = vpack.c.b16 %v1788, %v1784
    %v3293 = vpack.c.b16 %v1793, %v1789
    %v3294 = vpack.c.b16 %v1794, %v1790
    %v3295 = vpack.c.b16 %v1795, %v1791
    %v3296 = vpack.c.b16 %v1796, %v1792
    %v3297 = vpack.c.b16 %v1801, %v1797
    %v3298 = vpack.c.b16 %v1802, %v1798
    %v3299 = vpack.c.b16 %v1803, %v1799
    %v3300 = vpack.c.b16 %v1804, %v1800
    %v3301 = vpack.c.b16 %v1809, %v1805
    %v3302 = vpack.c.b16 %v1810, %v1806
    %v3303 = vpack.c.b16 %v1811, %v1807
    %v3304 = vpack.c.b16 %v1812, %v1808
    %v3305 = vpack.c.b16 %v1817, %v1813
    %v3306 = vpack.c.b16 %v1818, %v1814
    %v3307 = vpack.c.b16 %v1819, %v1815
    %v3308 = vpack.c.b16 %v1820, %v1816
    %v3309 = vpack.c.b16 %v1825, %v1821
    %v3310 = vpack.c.b16 %v1826, %v1822
    %v3311 = vpack.c.b16 %v1827, %v1823
    %v3312 = vpack.c.b16 %v1828, %v1824
    %v3313 = vpack.c.b16 %v1833, %v1829
    %v3314 = vpack.c.b16 %v1834, %v1830
    %v3315 = vpack.c.b16 %v1835, %v1831
    %v3316 = vpack.c.b16 %v1836, %v1832
    %v3317 = vpack.c.b16 %v1841, %v1837
    %v3318 = vpack.c.b16 %v1842, %v1838
    %v3319 = vpack.c.b16 %v1843, %v1839
    %v3320 = vpack.c.b16 %v1844, %v1840
    %v3321 = vpack.c.b16 %v1849, %v1845
    %v3322 = vpack.c.b16 %v1850, %v1846
    %v3323 = vpack.c.b16 %v1851, %v1847
    %v3324 = vpack.c.b16 %v1852, %v1848
    %v3325 = vpack.c.b16 %v1857, %v1853
    %v3326 = vpack.c.b16 %v1858, %v1854
    %v3327 = vpack.c.b16 %v1859, %v1855
    %v3328 = vpack.c.b16 %v1860, %v1856
    %v3329 = vpack.c.b16 %v1865, %v1861
    %v3330 = vpack.c.b16 %v1866, %v1862
    %v3331 = vpack.c.b16 %v1867, %v1863
    %v3332 = vpack.c.b16 %v1868, %v1864
    %v3333 = vpack.c.b16 %v1873, %v1869
    %v3334 = vpack.c.b16 %v1874, %v1870
    %v3335 = vpack.c.b16 %v1875, %v1871
    %v3336 = vpack.c.b16 %v1876, %v1872
    %v3337 = vpack.c.b16 %v1881, %v1877
    %v3338 = vpack.c.b16 %v1882, %v1878
    %v3339 = vpack.c.b16 %v1883, %v1879
    %v3340 = vpack.c.b16 %v1884, %v1880
    %v3341 = vpack.c.b16 %v1889, %v1885
    %v3342 = vpack.c.b16 %v1890, %v1886
    %v3343 = vpack.c.b16 %v1891, %v1887
    %v3344 = vpack.c.b16 %v1892, %v1888
    %v3345 = vpack.c.b16 %v1897, %v1893
    %v3346 = vpack.c.b16 %v1898, %v1894
    %v3347 = vpack.c.b16 %v1899, %v1895
    %v3348 = vpack.c.b16 %v1900, %v1896
    %v3349 = vpack.c.b16 %v1905, %v1901
    %v3350 = vpack.c.b16 %v1906, %v1902
    %v3351 = vpack.c.b16 %v1907, %v1903
    %v3352 = vpack.c.b16 %v1908, %v1904
    %v3353 = vpack.c.b16 %v1913, %v1909
    %v3354 = vpack.c.b16 %v1914, %v1910
    %v3355 = vpack.c.b16 %v1915, %v1911
    %v3356 = vpack.c.b16 %v1916, %v1912
    %v3357 = vpack.c.b16 %v1921, %v1917
    %v3358 = vpack.c.b16 %v1922, %v1918
    %v3359 = vpack.c.b16 %v1923, %v1919
    %v3360 = vpack.c.b16 %v1924, %v1920
    %v3361 = vpack.c.b16 %v1929, %v1925
    %v3362 = vpack.c.b16 %v1930, %v1926
    %v3363 = vpack.c.b16 %v1931, %v1927
    %v3364 = vpack.c.b16 %v1932, %v1928
    %v3365 = vpack.c.b16 %v1937, %v1933
    %v3366 = vpack.c.b16 %v1938, %v1934
    %v3367 = vpack.c.b16 %v1939, %v1935
    %v3368 = vpack.c.b16 %v1940, %v1936
    %v3369 = vpack.c.b16 %v1945, %v1941
    %v3370 = vpack.c.b16 %v1946, %v1942
    %v3371 = vpack.c.b16 %v1947, %v1943
    %v3372 = vpack.c.b16 %v1948, %v1944
    %v3373 = vpack.c.b16 %v1953, %v1949
    %v3374 = vpack.c.b16 %v1954, %v1950
    %v3375 = vpack.c.b16 %v1955, %v1951
    %v3376 = vpack.c.b16 %v1956, %v1952
    %v3377 = vpack.c.b16 %v1961, %v1957
    %v3378 = vpack.c.b16 %v1962, %v1958
    %v3379 = vpack.c.b16 %v1963, %v1959
    %v3380 = vpack.c.b16 %v1964, %v1960
    %v3381 = vpack.c.b16 %v1969, %v1965
    %v3382 = vpack.c.b16 %v1970, %v1966
    %v3383 = vpack.c.b16 %v1971, %v1967
    %v3384 = vpack.c.b16 %v1972, %v1968
    %v3385 = vpack.c.b16 %v1977, %v1973
    %v3386 = vpack.c.b16 %v1978, %v1974
    %v3387 = vpack.c.b16 %v1979, %v1975
    %v3388 = vpack.c.b16 %v1980, %v1976
    %v3389 = vpack.c.b16 %v1985, %v1981
    %v3390 = vpack.c.b16 %v1986, %v1982
    %v3391 = vpack.c.b16 %v1987, %v1983
    %v3392 = vpack.c.b16 %v1988, %v1984
    %v3393 = vpack.c.b16 %v1993, %v1989
    %v3394 = vpack.c.b16 %v1994, %v1990
    %v3395 = vpack.c.b16 %v1995, %v1991
    %v3396 = vpack.c.b16 %v1996, %v1992
    %v3397 = vpack.c.b16 %v2001, %v1997
    %v3398 = vpack.c.b16 %v2002, %v1998
    %v3399 = vpack.c.b16 %v2003, %v1999
    %v3400 = vpack.c.b16 %v2004, %v2000
    %v3401 = vpack.c.b16 %v2009, %v2005
    %v3402 = vpack.c.b16 %v2010, %v2006
    %v3403 = vpack.c.b16 %v2011, %v2007
    %v3404 = vpack.c.b16 %v2012, %v2008
    %v3405 = vpack.c.b16 %v2017, %v2013
    %v3406 = vpack.c.b16 %v2018, %v2014
    %v3407 = vpack.c.b16 %v2019, %v2015
    %v3408 = vpack.c.b16 %v2020, %v2016
    %v3409 = vpack.c.b16 %v2025, %v2021
    %v3410 = vpack.c.b16 %v2026, %v2022
    %v3411 = vpack.c.b16 %v2027, %v2023
    %v3412 = vpack.c.b16 %v2028, %v2024
    %v3413 = vpack.c.b16 %v2033, %v2029
    %v3414 = vpack.c.b16 %v2034, %v2030
    %v3415 = vpack.c.b16 %v2035, %v2031
    %v3416 = vpack.c.b16 %v2036, %v2032
    %v3417 = vpack.c.b16 %v2041, %v2037
    %v3418 = vpack.c.b16 %v2042, %v2038
    %v3419 = vpack.c.b16 %v2043, %v2039
    %v3420 = vpack.c.b16 %v2044, %v2040
    %v3421 = vpack.c.b16 %v2049, %v2045
    %v3422 = vpack.c.b16 %v2050, %v2046
    %v3423 = vpack.c.b16 %v2051, %v2047
    %v3424 = vpack.c.b16 %v2052, %v2048
    %v3425 = vpack.c.b16 %v2057, %v2053
    %v3426 = vpack.c.b16 %v2058, %v2054
    %v3427 = vpack.c.b16 %v2059, %v2055
    %v3428 = vpack.c.b16 %v2060, %v2056
    %v3429 = vpack.c.b16 %v2065, %v2061
    %v3430 = vpack.c.b16 %v2066, %v2062
    %v3431 = vpack.c.b16 %v2067, %v2063
    %v3432 = vpack.c.b16 %v2068, %v2064
    %v3433 = vpack.c.b16 %v2073, %v2069
    %v3434 = vpack.c.b16 %v2074, %v2070
    %v3435 = vpack.c.b16 %v2075, %v2071
    %v3436 = vpack.c.b16 %v2076, %v2072
    %v3437 = vpack.c.b16 %v2081, %v2077
    %v3438 = vpack.c.b16 %v2082, %v2078
    %v3439 = vpack.c.b16 %v2083, %v2079
    %v3440 = vpack.c.b16 %v2084, %v2080
    %v3441 = vpack.c.b16 %v2089, %v2085
    %v3442 = vpack.c.b16 %v2090, %v2086
    %v3443 = vpack.c.b16 %v2091, %v2087
    %v3444 = vpack.c.b16 %v2092, %v2088
    %v3445 = vpack.c.b16 %v2097, %v2093
    %v3446 = vpack.c.b16 %v2098, %v2094
    %v3447 = vpack.c.b16 %v2099, %v2095
    %v3448 = vpack.c.b16 %v2100, %v2096
    %v3449 = vpack.c.b16 %v2105, %v2101
    %v3450 = vpack.c.b16 %v2106, %v2102
    %v3451 = vpack.c.b16 %v2107, %v2103
    %v3452 = vpack.c.b16 %v2108, %v2104
    %v3453 = vpack.c.b16 %v2113, %v2109
    %v3454 = vpack.c.b16 %v2114, %v2110
    %v3455 = vpack.c.b16 %v2115, %v2111
    %v3456 = vpack.c.b16 %v2116, %v2112
    %v3457 = vpack.c.b16 %v2121, %v2117
    %v3458 = vpack.c.b16 %v2122, %v2118
    %v3459 = vpack.c.b16 %v2123, %v2119
    %v3460 = vpack.c.b16 %v2124, %v2120
    %v3461 = vpack.c.b16 %v2129, %v2125
    %v3462 = vpack.c.b16 %v2130, %v2126
    %v3463 = vpack.c.b16 %v2131, %v2127
    %v3464 = vpack.c.b16 %v2132, %v2128
    %v3465 = vpack.c.b16 %v2137, %v2133
    %v3466 = vpack.c.b16 %v2138, %v2134
    %v3467 = vpack.c.b16 %v2139, %v2135
    %v3468 = vpack.c.b16 %v2140, %v2136
    %v3469 = vpack.c.b16 %v2145, %v2141
    %v3470 = vpack.c.b16 %v2146, %v2142
    %v3471 = vpack.c.b16 %v2147, %v2143
    %v3472 = vpack.c.b16 %v2148, %v2144
    %v3473 = vpack.c.b16 %v2153, %v2149
    %v3474 = vpack.c.b16 %v2154, %v2150
    %v3475 = vpack.c.b16 %v2155, %v2151
    %v3476 = vpack.c.b16 %v2156, %v2152
    %v3477 = vpack.c.b16 %v2161, %v2157
    %v3478 = vpack.c.b16 %v2162, %v2158
    %v3479 = vpack.c.b16 %v2163, %v2159
    %v3480 = vpack.c.b16 %v2164, %v2160
    %v3481 = vpack.c.b16 %v2169, %v2165
    %v3482 = vpack.c.b16 %v2170, %v2166
    %v3483 = vpack.c.b16 %v2171, %v2167
    %v3484 = vpack.c.b16 %v2172, %v2168
    %v3485 = vpack.c.b16 %v2177, %v2173
    %v3486 = vpack.c.b16 %v2178, %v2174
    %v3487 = vpack.c.b16 %v2179, %v2175
    %v3488 = vpack.c.b16 %v2180, %v2176
    %v3489 = vpack.c.b16 %v2185, %v2181
    %v3490 = vpack.c.b16 %v2186, %v2182
    %v3491 = vpack.c.b16 %v2187, %v2183
    %v3492 = vpack.c.b16 %v2188, %v2184
    %v3493 = vpack.c.b16 %v2193, %v2189
    %v3494 = vpack.c.b16 %v2194, %v2190
    %v3495 = vpack.c.b16 %v2195, %v2191
    %v3496 = vpack.c.b16 %v2196, %v2192
    %v3497 = vpack.c.b16 %v2201, %v2197
    %v3498 = vpack.c.b16 %v2202, %v2198
    %v3499 = vpack.c.b16 %v2203, %v2199
    %v3500 = vpack.c.b16 %v2204, %v2200
    %v3501 = vpack.c.b16 %v2209, %v2205
    %v3502 = vpack.c.b16 %v2210, %v2206
    %v3503 = vpack.c.b16 %v2211, %v2207
    %v3504 = vpack.c.b16 %v2212, %v2208
    %v3505 = vpack.c.b16 %v2217, %v2213
    %v3506 = vpack.c.b16 %v2218, %v2214
    %v3507 = vpack.c.b16 %v2219, %v2215
    %v3508 = vpack.c.b16 %v2220, %v2216
    %v3509 = vpack.c.b16 %v2225, %v2221
    %v3510 = vpack.c.b16 %v2226, %v2222
    %v3511 = vpack.c.b16 %v2227, %v2223
    %v3512 = vpack.c.b16 %v2228, %v2224
    %v3513 = vpack.c.b16 %v2233, %v2229
    %v3514 = vpack.c.b16 %v2234, %v2230
    %v3515 = vpack.c.b16 %v2235, %v2231
    %v3516 = vpack.c.b16 %v2236, %v2232
    %v3517 = vpack.c.b16 %v2241, %v2237
    %v3518 = vpack.c.b16 %v2242, %v2238
    %v3519 = vpack.c.b16 %v2243, %v2239
    %v3520 = vpack.c.b16 %v2244, %v2240
    %v3521 = vpack.c.b16 %v2249, %v2245
    %v3522 = vpack.c.b16 %v2250, %v2246
    %v3523 = vpack.c.b16 %v2251, %v2247
    %v3524 = vpack.c.b16 %v2252, %v2248
    %v3525 = vpack.c.b16 %v2257, %v2253
    %v3526 = vpack.c.b16 %v2258, %v2254
    %v3527 = vpack.c.b16 %v2259, %v2255
    %v3528 = vpack.c.b16 %v2260, %v2256
    %v3529 = vpack.c.b16 %v2265, %v2261
    %v3530 = vpack.c.b16 %v2266, %v2262
    %v3531 = vpack.c.b16 %v2267, %v2263
    %v3532 = vpack.c.b16 %v2268, %v2264
    %v3533 = vpack.c.b16 %v2273, %v2269
    %v3534 = vpack.c.b16 %v2274, %v2270
    %v3535 = vpack.c.b16 %v2275, %v2271
    %v3536 = vpack.c.b16 %v2276, %v2272
    %v3537 = vpack.c.b16 %v2281, %v2277
    %v3538 = vpack.c.b16 %v2282, %v2278
    %v3539 = vpack.c.b16 %v2283, %v2279
    %v3540 = vpack.c.b16 %v2284, %v2280
    %v3541 = vpack.c.b16 %v2289, %v2285
    %v3542 = vpack.c.b16 %v2290, %v2286
    %v3543 = vpack.c.b16 %v2291, %v2287
    %v3544 = vpack.c.b16 %v2292, %v2288
    %v3545 = vpack.c.b16 %v2297, %v2293
    %v3546 = vpack.c.b16 %v2298, %v2294
    %v3547 = vpack.c.b16 %v2299, %v2295
    %v3548 = vpack.c.b16 %v2300, %v2296
    %v3549 = vpack.c.b16 %v2305, %v2301
    %v3550 = vpack.c.b16 %v2306, %v2302
    %v3551 = vpack.c.b16 %v2307, %v2303
    %v3552 = vpack.c.b16 %v2308, %v2304
    %v3553 = vpack.c.b16 %v2313, %v2309
    %v3554 = vpack.c.b16 %v2314, %v2310
    %v3555 = vpack.c.b16 %v2315, %v2311
    %v3556 = vpack.c.b16 %v2316, %v2312
    %v3557 = vpack.c.b16 %v2321, %v2317
    %v3558 = vpack.c.b16 %v2322, %v2318
    %v3559 = vpack.c.b16 %v2323, %v2319
    %v3560 = vpack.c.b16 %v2324, %v2320
    %v3561 = vpack.c.b16 %v2329, %v2325
    %v3562 = vpack.c.b16 %v2330, %v2326
    %v3563 = vpack.c.b16 %v2331, %v2327
    %v3564 = vpack.c.b16 %v2332, %v2328
    %v3565 = vpack.c.b16 %v2337, %v2333
    %v3566 = vpack.c.b16 %v2338, %v2334
    %v3567 = vpack.c.b16 %v2339, %v2335
    %v3568 = vpack.c.b16 %v2340, %v2336
    %v3569 = vpack.c.b16 %v2345, %v2341
    %v3570 = vpack.c.b16 %v2346, %v2342
    %v3571 = vpack.c.b16 %v2347, %v2343
    %v3572 = vpack.c.b16 %v2348, %v2344
    %v3573 = vpack.c.b16 %v2353, %v2349
    %v3574 = vpack.c.b16 %v2354, %v2350
    %v3575 = vpack.c.b16 %v2355, %v2351
    %v3576 = vpack.c.b16 %v2356, %v2352
    %v3577 = vpack.c.b16 %v2361, %v2357
    %v3578 = vpack.c.b16 %v2362, %v2358
    %v3579 = vpack.c.b16 %v2363, %v2359
    %v3580 = vpack.c.b16 %v2364, %v2360
    %v3581 = vpack.c.b16 %v2369, %v2365
    %v3582 = vpack.c.b16 %v2370, %v2366
    %v3583 = vpack.c.b16 %v2371, %v2367
    %v3584 = vpack.c.b16 %v2372, %v2368
    %v3585 = vpack.c.b16 %v2377, %v2373
    %v3586 = vpack.c.b16 %v2378, %v2374
    %v3587 = vpack.c.b16 %v2379, %v2375
    %v3588 = vpack.c.b16 %v2380, %v2376
    %v3589 = vpack.c.b16 %v2385, %v2381
    %v3590 = vpack.c.b16 %v2386, %v2382
    %v3591 = vpack.c.b16 %v2387, %v2383
    %v3592 = vpack.c.b16 %v2388, %v2384
    %v3593 = vpack.c.b16 %v2393, %v2389
    %v3594 = vpack.c.b16 %v2394, %v2390
    %v3595 = vpack.c.b16 %v2395, %v2391
    %v3596 = vpack.c.b16 %v2396, %v2392
    %v3597 = vpack.c.b16 %v2401, %v2397
    %v3598 = vpack.c.b16 %v2402, %v2398
    %v3599 = vpack.c.b16 %v2403, %v2399
    %v3600 = vpack.c.b16 %v2404, %v2400
    %v3601 = vpack.c.b16 %v2409, %v2405
    %v3602 = vpack.c.b16 %v2410, %v2406
    %v3603 = vpack.c.b16 %v2411, %v2407
    %v3604 = vpack.c.b16 %v2412, %v2408
    %v3605 = vpack.c.b16 %v2417, %v2413
    %v3606 = vpack.c.b16 %v2418, %v2414
    %v3607 = vpack.c.b16 %v2419, %v2415
    %v3608 = vpack.c.b16 %v2420, %v2416
    %v3609 = vpack.c.b16 %v2425, %v2421
    %v3610 = vpack.c.b16 %v2426, %v2422
    %v3611 = vpack.c.b16 %v2427, %v2423
    %v3612 = vpack.c.b16 %v2428, %v2424
    %v3613 = vpack.c.b16 %v2433, %v2429
    %v3614 = vpack.c.b16 %v2434, %v2430
    %v3615 = vpack.c.b16 %v2435, %v2431
    %v3616 = vpack.c.b16 %v2436, %v2432
    %v3617 = vpack.c.b16 %v2441, %v2437
    %v3618 = vpack.c.b16 %v2442, %v2438
    %v3619 = vpack.c.b16 %v2443, %v2439
    %v3620 = vpack.c.b16 %v2444, %v2440
    %v3621 = vpack.c.b16 %v2449, %v2445
    %v3622 = vpack.c.b16 %v2450, %v2446
    %v3623 = vpack.c.b16 %v2451, %v2447
    %v3624 = vpack.c.b16 %v2452, %v2448
    %v3625 = vpack.c.b16 %v2457, %v2453
    %v3626 = vpack.c.b16 %v2458, %v2454
    %v3627 = vpack.c.b16 %v2459, %v2455
    %v3628 = vpack.c.b16 %v2460, %v2456
    %v3629 = vpack.c.b16 %v2465, %v2461
    %v3630 = vpack.c.b16 %v2466, %v2462
    %v3631 = vpack.c.b16 %v2467, %v2463
    %v3632 = vpack.c.b16 %v2468, %v2464
    %v3633 = vpack.c.b16 %v2473, %v2469
    %v3634 = vpack.c.b16 %v2474, %v2470
    %v3635 = vpack.c.b16 %v2475, %v2471
    %v3636 = vpack.c.b16 %v2476, %v2472
    %v3637 = vpack.c.b16 %v2481, %v2477
    %v3638 = vpack.c.b16 %v2482, %v2478
    %v3639 = vpack.c.b16 %v2483, %v2479
    %v3640 = vpack.c.b16 %v2484, %v2480
    %v3641 = vpack.c.b16 %v2489, %v2485
    %v3642 = vpack.c.b16 %v2490, %v2486
    %v3643 = vpack.c.b16 %v2491, %v2487
    %v3644 = vpack.c.b16 %v2492, %v2488
    %v3645 = vpack.c.b16 %v2497, %v2493
    %v3646 = vpack.c.b16 %v2498, %v2494
    %v3647 = vpack.c.b16 %v2499, %v2495
    %v3648 = vpack.c.b16 %v2500, %v2496
    %v3649 = vpack.c.b16 %v2505, %v2501
    %v3650 = vpack.c.b16 %v2506, %v2502
    %v3651 = vpack.c.b16 %v2507, %v2503
    %v3652 = vpack.c.b16 %v2508, %v2504
    %v3653 = vpack.c.b16 %v2513, %v2509
    %v3654 = vpack.c.b16 %v2514, %v2510
    %v3655 = vpack.c.b16 %v2515, %v2511
    %v3656 = vpack.c.b16 %v2516, %v2512
    %v3657 = vpack.c.b16 %v2521, %v2517
    %v3658 = vpack.c.b16 %v2522, %v2518
    %v3659 = vpack.c.b16 %v2523, %v2519
    %v3660 = vpack.c.b16 %v2524, %v2520
    %v3661 = vpack.c.b16 %v2529, %v2525
    %v3662 = vpack.c.b16 %v2530, %v2526
    %v3663 = vpack.c.b16 %v2531, %v2527
    %v3664 = vpack.c.b16 %v2532, %v2528
    %v3665 = vpack.c.b16 %v2537, %v2533
    %v3666 = vpack.c.b16 %v2538, %v2534
    %v3667 = vpack.c.b16 %v2539, %v2535
    %v3668 = vpack.c.b16 %v2540, %v2536
    %v3669 = vpack.c.b16 %v2545, %v2541
    %v3670 = vpack.c.b16 %v2546, %v2542
    %v3671 = vpack.c.b16 %v2547, %v2543
    %v3672 = vpack.c.b16 %v2548, %v2544
    %v3673 = vpack.c.b16 %v2553, %v2549
    %v3674 = vpack.c.b16 %v2554, %v2550
    %v3675 = vpack.c.b16 %v2555, %v2551
    %v3676 = vpack.c.b16 %v2556, %v2552
    %v3677 = vpack.c.b16 %v2561, %v2557
    %v3678 = vpack.c.b16 %v2562, %v2558
    %v3679 = vpack.c.b16 %v2563, %v2559
    %v3680 = vpack.c.b16 %v2564, %v2560
    %v3681 = vpack.c.b16 %v2569, %v2565
    %v3682 = vpack.c.b16 %v2570, %v2566
    %v3683 = vpack.c.b16 %v2571, %v2567
    %v3684 = vpack.c.b16 %v2572, %v2568
    %v3685 = vpack.c.b16 %v2577, %v2573
    %v3686 = vpack.c.b16 %v2578, %v2574
    %v3687 = vpack.c.b16 %v2579, %v2575
    %v3688 = vpack.c.b16 %v2580, %v2576
    %v3689 = vpack.c.b16 %v2585, %v2581
    %v3690 = vpack.c.b16 %v2586, %v2582
    %v3691 = vpack.c.b16 %v2587, %v2583
    %v3692 = vpack.c.b16 %v2588, %v2584
    %v3693 = vpack.c.b16 %v2593, %v2589
    %v3694 = vpack.c.b16 %v2594, %v2590
    %v3695 = vpack.c.b16 %v2595, %v2591
    %v3696 = vpack.c.b16 %v2596, %v2592
    %v3697 = vpack.c.b16 %v2601, %v2597
    %v3698 = vpack.c.b16 %v2602, %v2598
    %v3699 = vpack.c.b16 %v2603, %v2599
    %v3700 = vpack.c.b16 %v2604, %v2600
    %v3701 = vpack.c.b16 %v2609, %v2605
    %v3702 = vpack.c.b16 %v2610, %v2606
    %v3703 = vpack.c.b16 %v2611, %v2607
    %v3704 = vpack.c.b16 %v2612, %v2608
    %v3705 = vpack.c.b16 %v2617, %v2613
    %v3706 = vpack.c.b16 %v2618, %v2614
    %v3707 = vpack.c.b16 %v2619, %v2615
    %v3708 = vpack.c.b16 %v2620, %v2616
    %v3709 = vpack.c.b16 %v2625, %v2621
    %v3710 = vpack.c.b16 %v2626, %v2622
    %v3711 = vpack.c.b16 %v2627, %v2623
    %v3712 = vpack.c.b16 %v2628, %v2624
    %v3713 = vpack.c.b16 %v2633, %v2629
    %v3714 = vpack.c.b16 %v2634, %v2630
    %v3715 = vpack.c.b16 %v2635, %v2631
    %v3716 = vpack.c.b16 %v2636, %v2632
    %v3717 = vpack.c.b16 %v2641, %v2637
    %v3718 = vpack.c.b16 %v2642, %v2638
    %v3719 = vpack.c.b16 %v2643, %v2639
    %v3720 = vpack.c.b16 %v2644, %v2640
    %v3721 = vpack.c.b16 %v2649, %v2645
    %v3722 = vpack.c.b16 %v2650, %v2646
    %v3723 = vpack.c.b16 %v2651, %v2647
    %v3724 = vpack.c.b16 %v2652, %v2648
    %v3725 = vpack.c.b16 %v2657, %v2653
    %v3726 = vpack.c.b16 %v2658, %v2654
    %v3727 = vpack.c.b16 %v2659, %v2655
    %v3728 = vpack.c.b16 %v2660, %v2656
    %v3729 = vpack.c.b16 %v2665, %v2661
    %v3730 = vpack.c.b16 %v2666, %v2662
    %v3731 = vpack.c.b16 %v2667, %v2663
    %v3732 = vpack.c.b16 %v2668, %v2664
    %v3733 = vpack.c.b16 %v2673, %v2669
    %v3734 = vpack.c.b16 %v2674, %v2670
    %v3735 = vpack.c.b16 %v2675, %v2671
    %v3736 = vpack.c.b16 %v2676, %v2672
    %v3737 = vpack.c.b16 %v2681, %v2677
    %v3738 = vpack.c.b16 %v2682, %v2678
    %v3739 = vpack.c.b16 %v2683, %v2679
    %v3740 = vpack.c.b16 %v2684, %v2680
    %v3741 = vpack.c.b16 %v2689, %v2685
    %v3742 = vpack.c.b16 %v2690, %v2686
    %v3743 = vpack.c.b16 %v2691, %v2687
    %v3744 = vpack.c.b16 %v2692, %v2688
    %v3745 = vpack.c.b16 %v2697, %v2693
    %v3746 = vpack.c.b16 %v2698, %v2694
    %v3747 = vpack.c.b16 %v2699, %v2695
    %v3748 = vpack.c.b16 %v2700, %v2696
    %v3749 = vpack.c.b16 %v2705, %v2701
    %v3750 = vpack.c.b16 %v2706, %v2702
    %v3751 = vpack.c.b16 %v2707, %v2703
    %v3752 = vpack.c.b16 %v2708, %v2704
    %v3753 = vpack.c.b16 %v2713, %v2709
    %v3754 = vpack.c.b16 %v2714, %v2710
    %v3755 = vpack.c.b16 %v2715, %v2711
    %v3756 = vpack.c.b16 %v2716, %v2712
    %v3757 = vpack.c.b16 %v2721, %v2717
    %v3758 = vpack.c.b16 %v2722, %v2718
    %v3759 = vpack.c.b16 %v2723, %v2719
    %v3760 = vpack.c.b16 %v2724, %v2720
    %v3761 = vpack.c.b16 %v2729, %v2725
    %v3762 = vpack.c.b16 %v2730, %v2726
    %v3763 = vpack.c.b16 %v2731, %v2727
    %v3764 = vpack.c.b16 %v2732, %v2728
    %v3765 = vpack.c.b16 %v2737, %v2733
    %v3766 = vpack.c.b16 %v2738, %v2734
    %v3767 = vpack.c.b16 %v2739, %v2735
    %v3768 = vpack.c.b16 %v2740, %v2736
    %v3769 = vpack.c.b16 %v2745, %v2741
    %v3770 = vpack.c.b16 %v2746, %v2742
    %v3771 = vpack.c.b16 %v2747, %v2743
    %v3772 = vpack.c.b16 %v2748, %v2744
    %v3773 = vpack.c.b16 %v2753, %v2749
    %v3774 = vpack.c.b16 %v2754, %v2750
    %v3775 = vpack.c.b16 %v2755, %v2751
    %v3776 = vpack.c.b16 %v2756, %v2752
    %v3777 = vpack.c.b16 %v2761, %v2757
    %v3778 = vpack.c.b16 %v2762, %v2758
    %v3779 = vpack.c.b16 %v2763, %v2759
    %v3780 = vpack.c.b16 %v2764, %v2760
    %v3781 = vpack.c.b16 %v2769, %v2765
    %v3782 = vpack.c.b16 %v2770, %v2766
    %v3783 = vpack.c.b16 %v2771, %v2767
    %v3784 = vpack.c.b16 %v2772, %v2768
    %v3785 = vpack.c.b16 %v2777, %v2773
    %v3786 = vpack.c.b16 %v2778, %v2774
    %v3787 = vpack.c.b16 %v2779, %v2775
    %v3788 = vpack.c.b16 %v2780, %v2776
    %v3789 = vpack.c.b16 %v2785, %v2781
    %v3790 = vpack.c.b16 %v2786, %v2782
    %v3791 = vpack.c.b16 %v2787, %v2783
    %v3792 = vpack.c.b16 %v2788, %v2784
    %v3793 = vpack.c.b16 %v2793, %v2789
    %v3794 = vpack.c.b16 %v2794, %v2790
    %v3795 = vpack.c.b16 %v2795, %v2791
    %v3796 = vpack.c.b16 %v2796, %v2792
    %v3797 = vpack.c.b16 %v2801, %v2797
    %v3798 = vpack.c.b16 %v2802, %v2798
    %v3799 = vpack.c.b16 %v2803, %v2799
    %v3800 = vpack.c.b16 %v2804, %v2800
    %v3801 = vpack.c.b16 %v2809, %v2805
    %v3802 = vpack.c.b16 %v2810, %v2806
    %v3803 = vpack.c.b16 %v2811, %v2807
    %v3804 = vpack.c.b16 %v2812, %v2808
    %v3805 = vpack.c.b16 %v2817, %v2813
    %v3806 = vpack.c.b16 %v2818, %v2814
    %v3807 = vpack.c.b16 %v2819, %v2815
    %v3808 = vpack.c.b16 %v2820, %v2816
    %v3809 = vpack.c.b16 %v2825, %v2821
    %v3810 = vpack.c.b16 %v2826, %v2822
    %v3811 = vpack.c.b16 %v2827, %v2823
    %v3812 = vpack.c.b16 %v2828, %v2824
    %v3813 = vpack.c.b16 %v2833, %v2829
    %v3814 = vpack.c.b16 %v2834, %v2830
    %v3815 = vpack.c.b16 %v2835, %v2831
    %v3816 = vpack.c.b16 %v2836, %v2832
    %v3817 = vpack.c.b16 %v2841, %v2837
    %v3818 = vpack.c.b16 %v2842, %v2838
    %v3819 = vpack.c.b16 %v2843, %v2839
    %v3820 = vpack.c.b16 %v2844, %v2840
    %v3821 = vpack.c.b16 %v2849, %v2845
    %v3822 = vpack.c.b16 %v2850, %v2846
    %v3823 = vpack.c.b16 %v2851, %v2847
    %v3824 = vpack.c.b16 %v2852, %v2848
    %v3825 = vpack.c.b16 %v2857, %v2853
    %v3826 = vpack.c.b16 %v2858, %v2854
    %v3827 = vpack.c.b16 %v2859, %v2855
    %v3828 = vpack.c.b16 %v2860, %v2856
    %v3829 = vpack.c.b16 %v2865, %v2861
    %v3830 = vpack.c.b16 %v2866, %v2862
    %v3831 = vpack.c.b16 %v2867, %v2863
    %v3832 = vpack.c.b16 %v2868, %v2864
    %v3833 = vpack.c.b16 %v2873, %v2869
    %v3834 = vpack.c.b16 %v2874, %v2870
    %v3835 = vpack.c.b16 %v2875, %v2871
    %v3836 = vpack.c.b16 %v2876, %v2872
    %v3837 = vpack.c.b16 %v2881, %v2877
    %v3838 = vpack.c.b16 %v2882, %v2878
    %v3839 = vpack.c.b16 %v2883, %v2879
    %v3840 = vpack.c.b16 %v2884, %v2880
    %v3841 = vpack.c.b16 %v2889, %v2885
    %v3842 = vpack.c.b16 %v2890, %v2886
    %v3843 = vpack.c.b16 %v2891, %v2887
    %v3844 = vpack.c.b16 %v2892, %v2888
    %v3845 = vpack.c.b16 %v2897, %v2893
    %v3846 = vpack.c.b16 %v2898, %v2894
    %v3847 = vpack.c.b16 %v2899, %v2895
    %v3848 = vpack.c.b16 %v2900, %v2896
    %v3849 = vpack.c.b16 %v2905, %v2901
    %v3850 = vpack.c.b16 %v2906, %v2902
    %v3851 = vpack.c.b16 %v2907, %v2903
    %v3852 = vpack.c.b16 %v2908, %v2904
    %v3853 = vpack.c.b16 %v2913, %v2909
    %v3854 = vpack.c.b16 %v2914, %v2910
    %v3855 = vpack.c.b16 %v2915, %v2911
    %v3856 = vpack.c.b16 %v2916, %v2912
    %v3857 = vpack.c.b16 %v2921, %v2917
    %v3858 = vpack.c.b16 %v2922, %v2918
    %v3859 = vpack.c.b16 %v2923, %v2919
    %v3860 = vpack.c.b16 %v2924, %v2920
    %v3861 = vpack.c.b16 %v2929, %v2925
    %v3862 = vpack.c.b16 %v2930, %v2926
    %v3863 = vpack.c.b16 %v2931, %v2927
    %v3864 = vpack.c.b16 %v2932, %v2928
    %v3865 = vpack.c.b16 %v2937, %v2933
    %v3866 = vpack.c.b16 %v2938, %v2934
    %v3867 = vpack.c.b16 %v2939, %v2935
    %v3868 = vpack.c.b16 %v2940, %v2936
    %v3869 = vpack.c.b16 %v2945, %v2941
    %v3870 = vpack.c.b16 %v2946, %v2942
    %v3871 = vpack.c.b16 %v2947, %v2943
    %v3872 = vpack.c.b16 %v2948, %v2944
    %v3873 = vpack.c.b16 %v2953, %v2949
    %v3874 = vpack.c.b16 %v2954, %v2950
    %v3875 = vpack.c.b16 %v2955, %v2951
    %v3876 = vpack.c.b16 %v2956, %v2952
    %v3877 = vpack.c.b16 %v2961, %v2957
    %v3878 = vpack.c.b16 %v2962, %v2958
    %v3879 = vpack.c.b16 %v2963, %v2959
    %v3880 = vpack.c.b16 %v2964, %v2960
    %v3881 = vpack.c.b16 %v2969, %v2965
    %v3882 = vpack.c.b16 %v2970, %v2966
    %v3883 = vpack.c.b16 %v2971, %v2967
    %v3884 = vpack.c.b16 %v2972, %v2968
    %v3885 = vpack.c.b16 %v2977, %v2973
    %v3886 = vpack.c.b16 %v2978, %v2974
    %v3887 = vpack.c.b16 %v2979, %v2975
    %v3888 = vpack.c.b16 %v2980, %v2976
    %v3889 = vpack.c.b16 %v2985, %v2981
    %v3890 = vpack.c.b16 %v2986, %v2982
    %v3891 = vpack.c.b16 %v2987, %v2983
    %v3892 = vpack.c.b16 %v2988, %v2984
    %v3893 = vpack.c.b16 %v2993, %v2989
    %v3894 = vpack.c.b16 %v2994, %v2990
    %v3895 = vpack.c.b16 %v2995, %v2991
    %v3896 = vpack.c.b16 %v2996, %v2992
    %v3897 = vpack.c.b16 %v3001, %v2997
    %v3898 = vpack.c.b16 %v3002, %v2998
    %v3899 = vpack.c.b16 %v3003, %v2999
    %v3900 = vpack.c.b16 %v3004, %v3000
    %v3901 = vpack.c.b16 %v3009, %v3005
    %v3902 = vpack.c.b16 %v3010, %v3006
    %v3903 = vpack.c.b16 %v3011, %v3007
    %v3904 = vpack.c.b16 %v3012, %v3008
    %v3905 = vpack.c.b16 %v3017, %v3013
    %v3906 = vpack.c.b16 %v3018, %v3014
    %v3907 = vpack.c.b16 %v3019, %v3015
    %v3908 = vpack.c.b16 %v3020, %v3016
    %v3909 = vpack.c.b16 %v3025, %v3021
    %v3910 = vpack.c.b16 %v3026, %v3022
    %v3911 = vpack.c.b16 %v3027, %v3023
    %v3912 = vpack.c.b16 %v3028, %v3024
    %v3913 = vpack.c.b16 %v3033, %v3029
    %v3914 = vpack.c.b16 %v3034, %v3030
    %v3915 = vpack.c.b16 %v3035, %v3031
    %v3916 = vpack.c.b16 %v3036, %v3032
    %v3917 = vpack.c.b16 %v3041, %v3037
    %v3918 = vpack.c.b16 %v3042, %v3038
    %v3919 = vpack.c.b16 %v3043, %v3039
    %v3920 = vpack.c.b16 %v3044, %v3040
    %v3921 = vpack.c.b16 %v3049, %v3045
    %v3922 = vpack.c.b16 %v3050, %v3046
    %v3923 = vpack.c.b16 %v3051, %v3047
    %v3924 = vpack.c.b16 %v3052, %v3048
    %v3925 = vpack.c.b16 %v3057, %v3053
    %v3926 = vpack.c.b16 %v3058, %v3054
    %v3927 = vpack.c.b16 %v3059, %v3055
    %v3928 = vpack.c.b16 %v3060, %v3056
    %v3929 = vpack.c.b16 %v3065, %v3061
    %v3930 = vpack.c.b16 %v3066, %v3062
    %v3931 = vpack.c.b16 %v3067, %v3063
    %v3932 = vpack.c.b16 %v3068, %v3064
    %v3933 = vpack.c.b16 %v3073, %v3069
    %v3934 = vpack.c.b16 %v3074, %v3070
    %v3935 = vpack.c.b16 %v3075, %v3071
    %v3936 = vpack.c.b16 %v3076, %v3072
    %v3937 = vpack.c.b16 %v3081, %v3077
    %v3938 = vpack.c.b16 %v3082, %v3078
    %v3939 = vpack.c.b16 %v3083, %v3079
    %v3940 = vpack.c.b16 %v3084, %v3080
    %v3941 = vpack.c.b16 %v3089, %v3085
    %v3942 = vpack.c.b16 %v3090, %v3086
    %v3943 = vpack.c.b16 %v3091, %v3087
    %v3944 = vpack.c.b16 %v3092, %v3088
    %v3945 = vpack.c.b16 %v3097, %v3093
    %v3946 = vpack.c.b16 %v3098, %v3094
    %v3947 = vpack.c.b16 %v3099, %v3095
    %v3948 = vpack.c.b16 %v3100, %v3096
    %v3949 = vpack.c.b16 %v3105, %v3101
    %v3950 = vpack.c.b16 %v3106, %v3102
    %v3951 = vpack.c.b16 %v3107, %v3103
    %v3952 = vpack.c.b16 %v3108, %v3104
    %v3953 = vpack.c.b16 %v3113, %v3109
    %v3954 = vpack.c.b16 %v3114, %v3110
    %v3955 = vpack.c.b16 %v3115, %v3111
    %v3956 = vpack.c.b16 %v3116, %v3112
    %v3957 = vpack.c.b16 %v3121, %v3117
    %v3958 = vpack.c.b16 %v3122, %v3118
    %v3959 = vpack.c.b16 %v3123, %v3119
    %v3960 = vpack.c.b16 %v3124, %v3120
    %v3961 = vpack.c.b16 %v3129, %v3125
    %v3962 = vpack.c.b16 %v3130, %v3126
    %v3963 = vpack.c.b16 %v3131, %v3127
    %v3964 = vpack.c.b16 %v3132, %v3128
    %v3965 = vpack.c.b16 %v3137, %v3133
    %v3966 = vpack.c.b16 %v3138, %v3134
    %v3967 = vpack.c.b16 %v3139, %v3135
    %v3968 = vpack.c.b16 %v3140, %v3136
    %v3969 = vpack.c.b16 %v3145, %v3141
    %v3970 = vpack.c.b16 %v3146, %v3142
    %v3971 = vpack.c.b16 %v3147, %v3143
    %v3972 = vpack.c.b16 %v3148, %v3144
    %v3973 = vpack.c.b16 %v3153, %v3149
    %v3974 = vpack.c.b16 %v3154, %v3150
    %v3975 = vpack.c.b16 %v3155, %v3151
    %v3976 = vpack.c.b16 %v3156, %v3152
    %v3977 = vpack.c.b16 %v3161, %v3157
    %v3978 = vpack.c.b16 %v3162, %v3158
    %v3979 = vpack.c.b16 %v3163, %v3159
    %v3980 = vpack.c.b16 %v3164, %v3160
    %v3981 = vpack.c.b16 %v3169, %v3165
    %v3982 = vpack.c.b16 %v3170, %v3166
    %v3983 = vpack.c.b16 %v3171, %v3167
    %v3984 = vpack.c.b16 %v3172, %v3168
    %v3985 = vpack.c.b16 %v3177, %v3173
    %v3986 = vpack.c.b16 %v3178, %v3174
    %v3987 = vpack.c.b16 %v3179, %v3175
    %v3988 = vpack.c.b16 %v3180, %v3176
    %v3989 = vpack.c.b16 %v3185, %v3181
    %v3990 = vpack.c.b16 %v3186, %v3182
    %v3991 = vpack.c.b16 %v3187, %v3183
    %v3992 = vpack.c.b16 %v3188, %v3184
    %v3993 = vpack.c.b16 %v3193, %v3189
    %v3994 = vpack.c.b16 %v3194, %v3190
    %v3995 = vpack.c.b16 %v3195, %v3191
    %v3996 = vpack.c.b16 %v3196, %v3192
    %v3997 = vpack.c.b16 %v3201, %v3197
    %v3998 = vpack.c.b16 %v3202, %v3198
    %v3999 = vpack.c.b16 %v3203, %v3199
    %v4000 = vpack.c.b16 %v3204, %v3200
    %v4001 = vpack.c.b16 %v3209, %v3205
    %v4002 = vpack.c.b16 %v3210, %v3206
    %v4003 = vpack.c.b16 %v3211, %v3207
    %v4004 = vpack.c.b16 %v3212, %v3208
    %v4005 = vpack.c.b16 %v3217, %v3213
    %v4006 = vpack.c.b16 %v3218, %v3214
    %v4007 = vpack.c.b16 %v3219, %v3215
    %v4008 = vpack.c.b16 %v3220, %v3216
    %v4009 = vpack.c.b16 %v3225, %v3221
    %v4010 = vpack.c.b16 %v3226, %v3222
    %v4011 = vpack.c.b16 %v3227, %v3223
    %v4012 = vpack.c.b16 %v3228, %v3224
    %vm4797 = vcmask 523264
    %v4798 = vsel %vm4797, %v852, 0
    %4800 = vmatpush.bf16.msra.mxu0 %v3257
    %4801 = vmatpush.bf16.msra.mxu0 %v3253
    %4802 = vmatpush.bf16.msra.mxu0 %v3249
    %4803 = vmatpush.bf16.msra.mxu0 %v3245
    %4804 = vmatpush.bf16.msra.mxu0 %v3241
    %4805 = vmatpush.bf16.msra.mxu0 %v3237
    %4806 = vmatpush.bf16.msra.mxu0 %v3233
    %4807 = vmatpush.bf16.msra.mxu0 %v3229
    %4808 = vmatmul.bf16.gmra.mxu0 %v822
    %v4809 = vpop.f32.mrf.mxu0
    %v4810 = vadd.f32 %v812, %v4809
    %v4811 = vpop.f32.mrf.mxu0
    %4812 = vdwg.mxu0
    %4813 = vmatpush.bf16.msra.mxu0 %v3289
    %4814 = vmatpush.bf16.msra.mxu0 %v3285
    %4815 = vmatpush.bf16.msra.mxu0 %v3281
    %4816 = vmatpush.bf16.msra.mxu0 %v3277
    %4817 = vmatpush.bf16.msra.mxu0 %v3273
    %4818 = vmatpush.bf16.msra.mxu0 %v3269
    %4819 = vmatpush.bf16.msra.mxu0 %v3265
    %4820 = vmatpush.bf16.msra.mxu0 %v3261
    %4821 = vmatmul.bf16.gmra.mxu0 %v823
    %v4822 = vpop.f32.mrf.mxu0
    %v4823 = vadd.f32 %v4810, %v4822
    %v4824 = vpop.f32.mrf.mxu0
    %4825 = vdwg.mxu0
    %4826 = vmatpush.bf16.msra.mxu0 %v3321
    %4827 = vmatpush.bf16.msra.mxu0 %v3317
    %4828 = vmatpush.bf16.msra.mxu0 %v3313
    %4829 = vmatpush.bf16.msra.mxu0 %v3309
    %4830 = vmatpush.bf16.msra.mxu0 %v3305
    %4831 = vmatpush.bf16.msra.mxu0 %v3301
    %4832 = vmatpush.bf16.msra.mxu0 %v3297
    %4833 = vmatpush.bf16.msra.mxu0 %v3293
    %4834 = vmatmul.bf16.gmra.mxu0 %v824
    %v4835 = vpop.f32.mrf.mxu0
    %v4836 = vadd.f32 %v4823, %v4835
    %v4837 = vpop.f32.mrf.mxu0
    %4838 = vdwg.mxu0
    %4839 = vmatpush.bf16.msra.mxu0 %v3353
    %4840 = vmatpush.bf16.msra.mxu0 %v3349
    %4841 = vmatpush.bf16.msra.mxu0 %v3345
    %4842 = vmatpush.bf16.msra.mxu0 %v3341
    %4843 = vmatpush.bf16.msra.mxu0 %v3337
    %4844 = vmatpush.bf16.msra.mxu0 %v3333
    %4845 = vmatpush.bf16.msra.mxu0 %v3329
    %4846 = vmatpush.bf16.msra.mxu0 %v3325
    %4847 = vmatmul.bf16.gmra.mxu0 %v825
    %v4848 = vpop.f32.mrf.mxu0
    %v4849 = vadd.f32 %v4836, %v4848
    %v4850 = vpop.f32.mrf.mxu0
    %4851 = vdwg.mxu0
    %4852 = vmatpush.bf16.msra.mxu0 %v3385
    %4853 = vmatpush.bf16.msra.mxu0 %v3381
    %4854 = vmatpush.bf16.msra.mxu0 %v3377
    %4855 = vmatpush.bf16.msra.mxu0 %v3373
    %4856 = vmatpush.bf16.msra.mxu0 %v3369
    %4857 = vmatpush.bf16.msra.mxu0 %v3365
    %4858 = vmatpush.bf16.msra.mxu0 %v3361
    %4859 = vmatpush.bf16.msra.mxu0 %v3357
    %4860 = vmatmul.bf16.gmra.mxu0 %v826
    %v4861 = vpop.f32.mrf.mxu0
    %v4862 = vadd.f32 %v4849, %v4861
    %v4863 = vpop.f32.mrf.mxu0
    %4864 = vdwg.mxu0
    %4865 = vmatpush.bf16.msra.mxu0 %v3417
    %4866 = vmatpush.bf16.msra.mxu0 %v3413
    %4867 = vmatpush.bf16.msra.mxu0 %v3409
    %4868 = vmatpush.bf16.msra.mxu0 %v3405
    %4869 = vmatpush.bf16.msra.mxu0 %v3401
    %4870 = vmatpush.bf16.msra.mxu0 %v3397
    %4871 = vmatpush.bf16.msra.mxu0 %v3393
    %4872 = vmatpush.bf16.msra.mxu0 %v3389
    %4873 = vmatmul.bf16.gmra.mxu0 %v827
    %v4874 = vpop.f32.mrf.mxu0
    %v4875 = vadd.f32 %v4862, %v4874
    %v4876 = vpop.f32.mrf.mxu0
    %4877 = vdwg.mxu0
    %4878 = vmatpush.bf16.msra.mxu0 %v3449
    %4879 = vmatpush.bf16.msra.mxu0 %v3445
    %4880 = vmatpush.bf16.msra.mxu0 %v3441
    %4881 = vmatpush.bf16.msra.mxu0 %v3437
    %4882 = vmatpush.bf16.msra.mxu0 %v3433
    %4883 = vmatpush.bf16.msra.mxu0 %v3429
    %4884 = vmatpush.bf16.msra.mxu0 %v3425
    %4885 = vmatpush.bf16.msra.mxu0 %v3421
    %4886 = vmatmul.bf16.gmra.mxu0 %v828
    %v4887 = vpop.f32.mrf.mxu0
    %v4888 = vadd.f32 %v4875, %v4887
    %v4889 = vpop.f32.mrf.mxu0
    %4890 = vdwg.mxu0
    %4891 = vmatpush.bf16.msra.mxu0 %v3481
    %4892 = vmatpush.bf16.msra.mxu0 %v3477
    %4893 = vmatpush.bf16.msra.mxu0 %v3473
    %4894 = vmatpush.bf16.msra.mxu0 %v3469
    %4895 = vmatpush.bf16.msra.mxu0 %v3465
    %4896 = vmatpush.bf16.msra.mxu0 %v3461
    %4897 = vmatpush.bf16.msra.mxu0 %v3457
    %4898 = vmatpush.bf16.msra.mxu0 %v3453
    %4899 = vmatmul.bf16.gmra.mxu0 %v829
    %v4900 = vpop.f32.mrf.mxu0
    %v4901 = vadd.f32 %v4888, %v4900
    %v4902 = vpop.f32.mrf.mxu0
    %4903 = vdwg.mxu0
    %4904 = vmatpush.bf16.msra.mxu0 %v3513
    %4905 = vmatpush.bf16.msra.mxu0 %v3509
    %4906 = vmatpush.bf16.msra.mxu0 %v3505
    %4907 = vmatpush.bf16.msra.mxu0 %v3501
    %4908 = vmatpush.bf16.msra.mxu0 %v3497
    %4909 = vmatpush.bf16.msra.mxu0 %v3493
    %4910 = vmatpush.bf16.msra.mxu0 %v3489
    %4911 = vmatpush.bf16.msra.mxu0 %v3485
    %4912 = vmatmul.bf16.gmra.mxu0 %v832
    %v4913 = vpop.f32.mrf.mxu0
    %v4914 = vadd.f32 %v4901, %v4913
    %v4915 = vpop.f32.mrf.mxu0
    %4916 = vdwg.mxu0
    %4917 = vmatpush.bf16.msra.mxu0 %v3545
    %4918 = vmatpush.bf16.msra.mxu0 %v3541
    %4919 = vmatpush.bf16.msra.mxu0 %v3537
    %4920 = vmatpush.bf16.msra.mxu0 %v3533
    %4921 = vmatpush.bf16.msra.mxu0 %v3529
    %4922 = vmatpush.bf16.msra.mxu0 %v3525
    %4923 = vmatpush.bf16.msra.mxu0 %v3521
    %4924 = vmatpush.bf16.msra.mxu0 %v3517
    %4925 = vmatmul.bf16.gmra.mxu0 %v833
    %v4926 = vpop.f32.mrf.mxu0
    %v4927 = vadd.f32 %v4914, %v4926
    %v4928 = vpop.f32.mrf.mxu0
    %4929 = vdwg.mxu0
    %4930 = vmatpush.bf16.msra.mxu0 %v3577
    %4931 = vmatpush.bf16.msra.mxu0 %v3573
    %4932 = vmatpush.bf16.msra.mxu0 %v3569
    %4933 = vmatpush.bf16.msra.mxu0 %v3565
    %4934 = vmatpush.bf16.msra.mxu0 %v3561
    %4935 = vmatpush.bf16.msra.mxu0 %v3557
    %4936 = vmatpush.bf16.msra.mxu0 %v3553
    %4937 = vmatpush.bf16.msra.mxu0 %v3549
    %4938 = vmatmul.bf16.gmra.mxu0 %v834
    %v4939 = vpop.f32.mrf.mxu0
    %v4940 = vadd.f32 %v4927, %v4939
    %v4941 = vpop.f32.mrf.mxu0
    %4942 = vdwg.mxu0
    %4943 = vmatpush.bf16.msra.mxu0 %v3609
    %4944 = vmatpush.bf16.msra.mxu0 %v3605
    %4945 = vmatpush.bf16.msra.mxu0 %v3601
    %4946 = vmatpush.bf16.msra.mxu0 %v3597
    %4947 = vmatpush.bf16.msra.mxu0 %v3593
    %4948 = vmatpush.bf16.msra.mxu0 %v3589
    %4949 = vmatpush.bf16.msra.mxu0 %v3585
    %4950 = vmatpush.bf16.msra.mxu0 %v3581
    %4951 = vmatmul.bf16.gmra.mxu0 %v835
    %v4952 = vpop.f32.mrf.mxu0
    %v4953 = vadd.f32 %v4940, %v4952
    %v4954 = vpop.f32.mrf.mxu0
    %4955 = vdwg.mxu0
    %4956 = vmatpush.bf16.msra.mxu0 %v3641
    %4957 = vmatpush.bf16.msra.mxu0 %v3637
    %4958 = vmatpush.bf16.msra.mxu0 %v3633
    %4959 = vmatpush.bf16.msra.mxu0 %v3629
    %4960 = vmatpush.bf16.msra.mxu0 %v3625
    %4961 = vmatpush.bf16.msra.mxu0 %v3621
    %4962 = vmatpush.bf16.msra.mxu0 %v3617
    %4963 = vmatpush.bf16.msra.mxu0 %v3613
    %4964 = vmatmul.bf16.gmra.mxu0 %v836
    %v4965 = vpop.f32.mrf.mxu0
    %v4966 = vadd.f32 %v4953, %v4965
    %v4967 = vpop.f32.mrf.mxu0
    %4968 = vdwg.mxu0
    %4969 = vmatpush.bf16.msra.mxu0 %v3673
    %4970 = vmatpush.bf16.msra.mxu0 %v3669
    %4971 = vmatpush.bf16.msra.mxu0 %v3665
    %4972 = vmatpush.bf16.msra.mxu0 %v3661
    %4973 = vmatpush.bf16.msra.mxu0 %v3657
    %4974 = vmatpush.bf16.msra.mxu0 %v3653
    %4975 = vmatpush.bf16.msra.mxu0 %v3649
    %4976 = vmatpush.bf16.msra.mxu0 %v3645
    %4977 = vmatmul.bf16.gmra.mxu0 %v837
    %v4978 = vpop.f32.mrf.mxu0
    %v4979 = vadd.f32 %v4966, %v4978
    %v4980 = vpop.f32.mrf.mxu0
    %4981 = vdwg.mxu0
    %4982 = vmatpush.bf16.msra.mxu0 %v3705
    %4983 = vmatpush.bf16.msra.mxu0 %v3701
    %4984 = vmatpush.bf16.msra.mxu0 %v3697
    %4985 = vmatpush.bf16.msra.mxu0 %v3693
    %4986 = vmatpush.bf16.msra.mxu0 %v3689
    %4987 = vmatpush.bf16.msra.mxu0 %v3685
    %4988 = vmatpush.bf16.msra.mxu0 %v3681
    %4989 = vmatpush.bf16.msra.mxu0 %v3677
    %4990 = vmatmul.bf16.gmra.mxu0 %v838
    %v4991 = vpop.f32.mrf.mxu0
    %v4992 = vadd.f32 %v4979, %v4991
    %v4993 = vpop.f32.mrf.mxu0
    %4994 = vdwg.mxu0
    %4995 = vmatpush.bf16.msra.mxu0 %v3737
    %4996 = vmatpush.bf16.msra.mxu0 %v3733
    %4997 = vmatpush.bf16.msra.mxu0 %v3729
    %4998 = vmatpush.bf16.msra.mxu0 %v3725
    %4999 = vmatpush.bf16.msra.mxu0 %v3721
    %5000 = vmatpush.bf16.msra.mxu0 %v3717
    %5001 = vmatpush.bf16.msra.mxu0 %v3713
    %5002 = vmatpush.bf16.msra.mxu0 %v3709
    %5003 = vmatmul.bf16.gmra.mxu0 %v839
    %v5004 = vpop.f32.mrf.mxu0
    %v5005 = vadd.f32 %v4992, %v5004
    %v5006 = vpop.f32.mrf.mxu0
    %5007 = vdwg.mxu0
    %5008 = vmatpush.bf16.msra.mxu0 %v3769
    %5009 = vmatpush.bf16.msra.mxu0 %v3765
    %5010 = vmatpush.bf16.msra.mxu0 %v3761
    %5011 = vmatpush.bf16.msra.mxu0 %v3757
    %5012 = vmatpush.bf16.msra.mxu0 %v3753
    %5013 = vmatpush.bf16.msra.mxu0 %v3749
    %5014 = vmatpush.bf16.msra.mxu0 %v3745
    %5015 = vmatpush.bf16.msra.mxu0 %v3741
    %5016 = vmatmul.bf16.gmra.mxu0 %v842
    %v5017 = vpop.f32.mrf.mxu0
    %v5018 = vadd.f32 %v5005, %v5017
    %v5019 = vpop.f32.mrf.mxu0
    %5020 = vdwg.mxu0
    %5021 = vmatpush.bf16.msra.mxu0 %v3801
    %5022 = vmatpush.bf16.msra.mxu0 %v3797
    %5023 = vmatpush.bf16.msra.mxu0 %v3793
    %5024 = vmatpush.bf16.msra.mxu0 %v3789
    %5025 = vmatpush.bf16.msra.mxu0 %v3785
    %5026 = vmatpush.bf16.msra.mxu0 %v3781
    %5027 = vmatpush.bf16.msra.mxu0 %v3777
    %5028 = vmatpush.bf16.msra.mxu0 %v3773
    %5029 = vmatmul.bf16.gmra.mxu0 %v843
    %v5030 = vpop.f32.mrf.mxu0
    %v5031 = vadd.f32 %v5018, %v5030
    %v5032 = vpop.f32.mrf.mxu0
    %5033 = vdwg.mxu0
    %5034 = vmatpush.bf16.msra.mxu0 %v3833
    %5035 = vmatpush.bf16.msra.mxu0 %v3829
    %5036 = vmatpush.bf16.msra.mxu0 %v3825
    %5037 = vmatpush.bf16.msra.mxu0 %v3821
    %5038 = vmatpush.bf16.msra.mxu0 %v3817
    %5039 = vmatpush.bf16.msra.mxu0 %v3813
    %5040 = vmatpush.bf16.msra.mxu0 %v3809
    %5041 = vmatpush.bf16.msra.mxu0 %v3805
    %5042 = vmatmul.bf16.gmra.mxu0 %v844
    %v5043 = vpop.f32.mrf.mxu0
    %v5044 = vadd.f32 %v5031, %v5043
    %v5045 = vpop.f32.mrf.mxu0
    %5046 = vdwg.mxu0
    %5047 = vmatpush.bf16.msra.mxu0 %v3865
    %5048 = vmatpush.bf16.msra.mxu0 %v3861
    %5049 = vmatpush.bf16.msra.mxu0 %v3857
    %5050 = vmatpush.bf16.msra.mxu0 %v3853
    %5051 = vmatpush.bf16.msra.mxu0 %v3849
    %5052 = vmatpush.bf16.msra.mxu0 %v3845
    %5053 = vmatpush.bf16.msra.mxu0 %v3841
    %5054 = vmatpush.bf16.msra.mxu0 %v3837
    %5055 = vmatmul.bf16.gmra.mxu0 %v845
    %v5056 = vpop.f32.mrf.mxu0
    %v5057 = vadd.f32 %v5044, %v5056
    %v5058 = vpop.f32.mrf.mxu0
    %5059 = vdwg.mxu0
    %5060 = vmatpush.bf16.msra.mxu0 %v3897
    %5061 = vmatpush.bf16.msra.mxu0 %v3893
    %5062 = vmatpush.bf16.msra.mxu0 %v3889
    %5063 = vmatpush.bf16.msra.mxu0 %v3885
    %5064 = vmatpush.bf16.msra.mxu0 %v3881
    %5065 = vmatpush.bf16.msra.mxu0 %v3877
    %5066 = vmatpush.bf16.msra.mxu0 %v3873
    %5067 = vmatpush.bf16.msra.mxu0 %v3869
    %5068 = vmatmul.bf16.gmra.mxu0 %v846
    %v5069 = vpop.f32.mrf.mxu0
    %v5070 = vadd.f32 %v5057, %v5069
    %v5071 = vpop.f32.mrf.mxu0
    %5072 = vdwg.mxu0
    %5073 = vmatpush.bf16.msra.mxu0 %v3929
    %5074 = vmatpush.bf16.msra.mxu0 %v3925
    %5075 = vmatpush.bf16.msra.mxu0 %v3921
    %5076 = vmatpush.bf16.msra.mxu0 %v3917
    %5077 = vmatpush.bf16.msra.mxu0 %v3913
    %5078 = vmatpush.bf16.msra.mxu0 %v3909
    %5079 = vmatpush.bf16.msra.mxu0 %v3905
    %5080 = vmatpush.bf16.msra.mxu0 %v3901
    %5081 = vmatmul.bf16.gmra.mxu0 %v847
    %v5082 = vpop.f32.mrf.mxu0
    %v5083 = vadd.f32 %v5070, %v5082
    %v5084 = vpop.f32.mrf.mxu0
    %5085 = vdwg.mxu0
    %5086 = vmatpush.bf16.msra.mxu0 %v3961
    %5087 = vmatpush.bf16.msra.mxu0 %v3957
    %5088 = vmatpush.bf16.msra.mxu0 %v3953
    %5089 = vmatpush.bf16.msra.mxu0 %v3949
    %5090 = vmatpush.bf16.msra.mxu0 %v3945
    %5091 = vmatpush.bf16.msra.mxu0 %v3941
    %5092 = vmatpush.bf16.msra.mxu0 %v3937
    %5093 = vmatpush.bf16.msra.mxu0 %v3933
    %5094 = vmatmul.bf16.gmra.mxu0 %v848
    %v5095 = vpop.f32.mrf.mxu0
    %v5096 = vadd.f32 %v5083, %v5095
    %v5097 = vpop.f32.mrf.mxu0
    %5098 = vdwg.mxu0
    %5099 = vmatpush.bf16.msra.mxu0 %v3993
    %5100 = vmatpush.bf16.msra.mxu0 %v3989
    %5101 = vmatpush.bf16.msra.mxu0 %v3985
    %5102 = vmatpush.bf16.msra.mxu0 %v3981
    %5103 = vmatpush.bf16.msra.mxu0 %v3977
    %5104 = vmatpush.bf16.msra.mxu0 %v3973
    %5105 = vmatpush.bf16.msra.mxu0 %v3969
    %5106 = vmatpush.bf16.msra.mxu0 %v3965
    %5107 = vmatmul.bf16.gmra.mxu0 %v849
    %v5108 = vpop.f32.mrf.mxu0
    %v5109 = vadd.f32 %v5096, %v5108
    %v5110 = vpop.f32.mrf.mxu0
    %5111 = vdwg.mxu0
    %5112 = vmatpush.bf16.msra.mxu0 0
    %5113 = vmatpush.bf16.msra.mxu0 0
    %5114 = vmatpush.bf16.msra.mxu0 0
    %5115 = vmatpush.bf16.msra.mxu0 0
    %5116 = vmatpush.bf16.msra.mxu0 %v4009
    %5117 = vmatpush.bf16.msra.mxu0 %v4005
    %5118 = vmatpush.bf16.msra.mxu0 %v4001
    %5119 = vmatpush.bf16.msra.mxu0 %v3997
    %5120 = vmatmul.bf16.gmra.mxu0 %v4798
    %v5121 = vpop.f32.mrf.mxu0
    %v5122 = vadd.f32 %v5109, %v5121
    %v5123 = vpop.f32.mrf.mxu0
    %5124 = vdwg.mxu0
    %5125 = vmatpush.bf16.msra.mxu0 %v3258
    %5126 = vmatpush.bf16.msra.mxu0 %v3254
    %5127 = vmatpush.bf16.msra.mxu0 %v3250
    %5128 = vmatpush.bf16.msra.mxu0 %v3246
    %5129 = vmatpush.bf16.msra.mxu0 %v3242
    %5130 = vmatpush.bf16.msra.mxu0 %v3238
    %5131 = vmatpush.bf16.msra.mxu0 %v3234
    %5132 = vmatpush.bf16.msra.mxu0 %v3230
    %5133 = vmatmul.bf16.gmra.mxu0 %v822
    %v5134 = vpop.f32.mrf.mxu0
    %v5135 = vadd.f32 %v813, %v5134
    %v5136 = vpop.f32.mrf.mxu0
    %5137 = vdwg.mxu0
    %5138 = vmatpush.bf16.msra.mxu0 %v3290
    %5139 = vmatpush.bf16.msra.mxu0 %v3286
    %5140 = vmatpush.bf16.msra.mxu0 %v3282
    %5141 = vmatpush.bf16.msra.mxu0 %v3278
    %5142 = vmatpush.bf16.msra.mxu0 %v3274
    %5143 = vmatpush.bf16.msra.mxu0 %v3270
    %5144 = vmatpush.bf16.msra.mxu0 %v3266
    %5145 = vmatpush.bf16.msra.mxu0 %v3262
    %5146 = vmatmul.bf16.gmra.mxu0 %v823
    %v5147 = vpop.f32.mrf.mxu0
    %v5148 = vadd.f32 %v5135, %v5147
    %v5149 = vpop.f32.mrf.mxu0
    %5150 = vdwg.mxu0
    %5151 = vmatpush.bf16.msra.mxu0 %v3322
    %5152 = vmatpush.bf16.msra.mxu0 %v3318
    %5153 = vmatpush.bf16.msra.mxu0 %v3314
    %5154 = vmatpush.bf16.msra.mxu0 %v3310
    %5155 = vmatpush.bf16.msra.mxu0 %v3306
    %5156 = vmatpush.bf16.msra.mxu0 %v3302
    %5157 = vmatpush.bf16.msra.mxu0 %v3298
    %5158 = vmatpush.bf16.msra.mxu0 %v3294
    %5159 = vmatmul.bf16.gmra.mxu0 %v824
    %v5160 = vpop.f32.mrf.mxu0
    %v5161 = vadd.f32 %v5148, %v5160
    %v5162 = vpop.f32.mrf.mxu0
    %5163 = vdwg.mxu0
    %5164 = vmatpush.bf16.msra.mxu0 %v3354
    %5165 = vmatpush.bf16.msra.mxu0 %v3350
    %5166 = vmatpush.bf16.msra.mxu0 %v3346
    %5167 = vmatpush.bf16.msra.mxu0 %v3342
    %5168 = vmatpush.bf16.msra.mxu0 %v3338
    %5169 = vmatpush.bf16.msra.mxu0 %v3334
    %5170 = vmatpush.bf16.msra.mxu0 %v3330
    %5171 = vmatpush.bf16.msra.mxu0 %v3326
    %5172 = vmatmul.bf16.gmra.mxu0 %v825
    %v5173 = vpop.f32.mrf.mxu0
    %v5174 = vadd.f32 %v5161, %v5173
    %v5175 = vpop.f32.mrf.mxu0
    %5176 = vdwg.mxu0
    %5177 = vmatpush.bf16.msra.mxu0 %v3386
    %5178 = vmatpush.bf16.msra.mxu0 %v3382
    %5179 = vmatpush.bf16.msra.mxu0 %v3378
    %5180 = vmatpush.bf16.msra.mxu0 %v3374
    %5181 = vmatpush.bf16.msra.mxu0 %v3370
    %5182 = vmatpush.bf16.msra.mxu0 %v3366
    %5183 = vmatpush.bf16.msra.mxu0 %v3362
    %5184 = vmatpush.bf16.msra.mxu0 %v3358
    %5185 = vmatmul.bf16.gmra.mxu0 %v826
    %v5186 = vpop.f32.mrf.mxu0
    %v5187 = vadd.f32 %v5174, %v5186
    %v5188 = vpop.f32.mrf.mxu0
    %5189 = vdwg.mxu0
    %5190 = vmatpush.bf16.msra.mxu0 %v3418
    %5191 = vmatpush.bf16.msra.mxu0 %v3414
    %5192 = vmatpush.bf16.msra.mxu0 %v3410
    %5193 = vmatpush.bf16.msra.mxu0 %v3406
    %5194 = vmatpush.bf16.msra.mxu0 %v3402
    %5195 = vmatpush.bf16.msra.mxu0 %v3398
    %5196 = vmatpush.bf16.msra.mxu0 %v3394
    %5197 = vmatpush.bf16.msra.mxu0 %v3390
    %5198 = vmatmul.bf16.gmra.mxu0 %v827
    %v5199 = vpop.f32.mrf.mxu0
    %v5200 = vadd.f32 %v5187, %v5199
    %v5201 = vpop.f32.mrf.mxu0
    %5202 = vdwg.mxu0
    %5203 = vmatpush.bf16.msra.mxu0 %v3450
    %5204 = vmatpush.bf16.msra.mxu0 %v3446
    %5205 = vmatpush.bf16.msra.mxu0 %v3442
    %5206 = vmatpush.bf16.msra.mxu0 %v3438
    %5207 = vmatpush.bf16.msra.mxu0 %v3434
    %5208 = vmatpush.bf16.msra.mxu0 %v3430
    %5209 = vmatpush.bf16.msra.mxu0 %v3426
    %5210 = vmatpush.bf16.msra.mxu0 %v3422
    %5211 = vmatmul.bf16.gmra.mxu0 %v828
    %v5212 = vpop.f32.mrf.mxu0
    %v5213 = vadd.f32 %v5200, %v5212
    %v5214 = vpop.f32.mrf.mxu0
    %5215 = vdwg.mxu0
    %5216 = vmatpush.bf16.msra.mxu0 %v3482
    %5217 = vmatpush.bf16.msra.mxu0 %v3478
    %5218 = vmatpush.bf16.msra.mxu0 %v3474
    %5219 = vmatpush.bf16.msra.mxu0 %v3470
    %5220 = vmatpush.bf16.msra.mxu0 %v3466
    %5221 = vmatpush.bf16.msra.mxu0 %v3462
    %5222 = vmatpush.bf16.msra.mxu0 %v3458
    %5223 = vmatpush.bf16.msra.mxu0 %v3454
    %5224 = vmatmul.bf16.gmra.mxu0 %v829
    %v5225 = vpop.f32.mrf.mxu0
    %v5226 = vadd.f32 %v5213, %v5225
    %v5227 = vpop.f32.mrf.mxu0
    %5228 = vdwg.mxu0
    %5229 = vmatpush.bf16.msra.mxu0 %v3514
    %5230 = vmatpush.bf16.msra.mxu0 %v3510
    %5231 = vmatpush.bf16.msra.mxu0 %v3506
    %5232 = vmatpush.bf16.msra.mxu0 %v3502
    %5233 = vmatpush.bf16.msra.mxu0 %v3498
    %5234 = vmatpush.bf16.msra.mxu0 %v3494
    %5235 = vmatpush.bf16.msra.mxu0 %v3490
    %5236 = vmatpush.bf16.msra.mxu0 %v3486
    %5237 = vmatmul.bf16.gmra.mxu0 %v832
    %v5238 = vpop.f32.mrf.mxu0
    %v5239 = vadd.f32 %v5226, %v5238
    %v5240 = vpop.f32.mrf.mxu0
    %5241 = vdwg.mxu0
    %5242 = vmatpush.bf16.msra.mxu0 %v3546
    %5243 = vmatpush.bf16.msra.mxu0 %v3542
    %5244 = vmatpush.bf16.msra.mxu0 %v3538
    %5245 = vmatpush.bf16.msra.mxu0 %v3534
    %5246 = vmatpush.bf16.msra.mxu0 %v3530
    %5247 = vmatpush.bf16.msra.mxu0 %v3526
    %5248 = vmatpush.bf16.msra.mxu0 %v3522
    %5249 = vmatpush.bf16.msra.mxu0 %v3518
    %5250 = vmatmul.bf16.gmra.mxu0 %v833
    %v5251 = vpop.f32.mrf.mxu0
    %v5252 = vadd.f32 %v5239, %v5251
    %v5253 = vpop.f32.mrf.mxu0
    %5254 = vdwg.mxu0
    %5255 = vmatpush.bf16.msra.mxu0 %v3578
    %5256 = vmatpush.bf16.msra.mxu0 %v3574
    %5257 = vmatpush.bf16.msra.mxu0 %v3570
    %5258 = vmatpush.bf16.msra.mxu0 %v3566
    %5259 = vmatpush.bf16.msra.mxu0 %v3562
    %5260 = vmatpush.bf16.msra.mxu0 %v3558
    %5261 = vmatpush.bf16.msra.mxu0 %v3554
    %5262 = vmatpush.bf16.msra.mxu0 %v3550
    %5263 = vmatmul.bf16.gmra.mxu0 %v834
    %v5264 = vpop.f32.mrf.mxu0
    %v5265 = vadd.f32 %v5252, %v5264
    %v5266 = vpop.f32.mrf.mxu0
    %5267 = vdwg.mxu0
    %5268 = vmatpush.bf16.msra.mxu0 %v3610
    %5269 = vmatpush.bf16.msra.mxu0 %v3606
    %5270 = vmatpush.bf16.msra.mxu0 %v3602
    %5271 = vmatpush.bf16.msra.mxu0 %v3598
    %5272 = vmatpush.bf16.msra.mxu0 %v3594
    %5273 = vmatpush.bf16.msra.mxu0 %v3590
    %5274 = vmatpush.bf16.msra.mxu0 %v3586
    %5275 = vmatpush.bf16.msra.mxu0 %v3582
    %5276 = vmatmul.bf16.gmra.mxu0 %v835
    %v5277 = vpop.f32.mrf.mxu0
    %v5278 = vadd.f32 %v5265, %v5277
    %v5279 = vpop.f32.mrf.mxu0
    %5280 = vdwg.mxu0
    %5281 = vmatpush.bf16.msra.mxu0 %v3642
    %5282 = vmatpush.bf16.msra.mxu0 %v3638
    %5283 = vmatpush.bf16.msra.mxu0 %v3634
    %5284 = vmatpush.bf16.msra.mxu0 %v3630
    %5285 = vmatpush.bf16.msra.mxu0 %v3626
    %5286 = vmatpush.bf16.msra.mxu0 %v3622
    %5287 = vmatpush.bf16.msra.mxu0 %v3618
    %5288 = vmatpush.bf16.msra.mxu0 %v3614
    %5289 = vmatmul.bf16.gmra.mxu0 %v836
    %v5290 = vpop.f32.mrf.mxu0
    %v5291 = vadd.f32 %v5278, %v5290
    %v5292 = vpop.f32.mrf.mxu0
    %5293 = vdwg.mxu0
    %5294 = vmatpush.bf16.msra.mxu0 %v3674
    %5295 = vmatpush.bf16.msra.mxu0 %v3670
    %5296 = vmatpush.bf16.msra.mxu0 %v3666
    %5297 = vmatpush.bf16.msra.mxu0 %v3662
    %5298 = vmatpush.bf16.msra.mxu0 %v3658
    %5299 = vmatpush.bf16.msra.mxu0 %v3654
    %5300 = vmatpush.bf16.msra.mxu0 %v3650
    %5301 = vmatpush.bf16.msra.mxu0 %v3646
    %5302 = vmatmul.bf16.gmra.mxu0 %v837
    %v5303 = vpop.f32.mrf.mxu0
    %v5304 = vadd.f32 %v5291, %v5303
    %v5305 = vpop.f32.mrf.mxu0
    %5306 = vdwg.mxu0
    %5307 = vmatpush.bf16.msra.mxu0 %v3706
    %5308 = vmatpush.bf16.msra.mxu0 %v3702
    %5309 = vmatpush.bf16.msra.mxu0 %v3698
    %5310 = vmatpush.bf16.msra.mxu0 %v3694
    %5311 = vmatpush.bf16.msra.mxu0 %v3690
    %5312 = vmatpush.bf16.msra.mxu0 %v3686
    %5313 = vmatpush.bf16.msra.mxu0 %v3682
    %5314 = vmatpush.bf16.msra.mxu0 %v3678
    %5315 = vmatmul.bf16.gmra.mxu0 %v838
    %v5316 = vpop.f32.mrf.mxu0
    %v5317 = vadd.f32 %v5304, %v5316
    %v5318 = vpop.f32.mrf.mxu0
    %5319 = vdwg.mxu0
    %5320 = vmatpush.bf16.msra.mxu0 %v3738
    %5321 = vmatpush.bf16.msra.mxu0 %v3734
    %5322 = vmatpush.bf16.msra.mxu0 %v3730
    %5323 = vmatpush.bf16.msra.mxu0 %v3726
    %5324 = vmatpush.bf16.msra.mxu0 %v3722
    %5325 = vmatpush.bf16.msra.mxu0 %v3718
    %5326 = vmatpush.bf16.msra.mxu0 %v3714
    %5327 = vmatpush.bf16.msra.mxu0 %v3710
    %5328 = vmatmul.bf16.gmra.mxu0 %v839
    %v5329 = vpop.f32.mrf.mxu0
    %v5330 = vadd.f32 %v5317, %v5329
    %v5331 = vpop.f32.mrf.mxu0
    %5332 = vdwg.mxu0
    %5333 = vmatpush.bf16.msra.mxu0 %v3770
    %5334 = vmatpush.bf16.msra.mxu0 %v3766
    %5335 = vmatpush.bf16.msra.mxu0 %v3762
    %5336 = vmatpush.bf16.msra.mxu0 %v3758
    %5337 = vmatpush.bf16.msra.mxu0 %v3754
    %5338 = vmatpush.bf16.msra.mxu0 %v3750
    %5339 = vmatpush.bf16.msra.mxu0 %v3746
    %5340 = vmatpush.bf16.msra.mxu0 %v3742
    %5341 = vmatmul.bf16.gmra.mxu0 %v842
    %v5342 = vpop.f32.mrf.mxu0
    %v5343 = vadd.f32 %v5330, %v5342
    %v5344 = vpop.f32.mrf.mxu0
    %5345 = vdwg.mxu0
    %5346 = vmatpush.bf16.msra.mxu0 %v3802
    %5347 = vmatpush.bf16.msra.mxu0 %v3798
    %5348 = vmatpush.bf16.msra.mxu0 %v3794
    %5349 = vmatpush.bf16.msra.mxu0 %v3790
    %5350 = vmatpush.bf16.msra.mxu0 %v3786
    %5351 = vmatpush.bf16.msra.mxu0 %v3782
    %5352 = vmatpush.bf16.msra.mxu0 %v3778
    %5353 = vmatpush.bf16.msra.mxu0 %v3774
    %5354 = vmatmul.bf16.gmra.mxu0 %v843
    %v5355 = vpop.f32.mrf.mxu0
    %v5356 = vadd.f32 %v5343, %v5355
    %v5357 = vpop.f32.mrf.mxu0
    %5358 = vdwg.mxu0
    %5359 = vmatpush.bf16.msra.mxu0 %v3834
    %5360 = vmatpush.bf16.msra.mxu0 %v3830
    %5361 = vmatpush.bf16.msra.mxu0 %v3826
    %5362 = vmatpush.bf16.msra.mxu0 %v3822
    %5363 = vmatpush.bf16.msra.mxu0 %v3818
    %5364 = vmatpush.bf16.msra.mxu0 %v3814
    %5365 = vmatpush.bf16.msra.mxu0 %v3810
    %5366 = vmatpush.bf16.msra.mxu0 %v3806
    %5367 = vmatmul.bf16.gmra.mxu0 %v844
    %v5368 = vpop.f32.mrf.mxu0
    %v5369 = vadd.f32 %v5356, %v5368
    %v5370 = vpop.f32.mrf.mxu0
    %5371 = vdwg.mxu0
    %5372 = vmatpush.bf16.msra.mxu0 %v3866
    %5373 = vmatpush.bf16.msra.mxu0 %v3862
    %5374 = vmatpush.bf16.msra.mxu0 %v3858
    %5375 = vmatpush.bf16.msra.mxu0 %v3854
    %5376 = vmatpush.bf16.msra.mxu0 %v3850
    %5377 = vmatpush.bf16.msra.mxu0 %v3846
    %5378 = vmatpush.bf16.msra.mxu0 %v3842
    %5379 = vmatpush.bf16.msra.mxu0 %v3838
    %5380 = vmatmul.bf16.gmra.mxu0 %v845
    %v5381 = vpop.f32.mrf.mxu0
    %v5382 = vadd.f32 %v5369, %v5381
    %v5383 = vpop.f32.mrf.mxu0
    %5384 = vdwg.mxu0
    %5385 = vmatpush.bf16.msra.mxu0 %v3898
    %5386 = vmatpush.bf16.msra.mxu0 %v3894
    %5387 = vmatpush.bf16.msra.mxu0 %v3890
    %5388 = vmatpush.bf16.msra.mxu0 %v3886
    %5389 = vmatpush.bf16.msra.mxu0 %v3882
    %5390 = vmatpush.bf16.msra.mxu0 %v3878
    %5391 = vmatpush.bf16.msra.mxu0 %v3874
    %5392 = vmatpush.bf16.msra.mxu0 %v3870
    %5393 = vmatmul.bf16.gmra.mxu0 %v846
    %v5394 = vpop.f32.mrf.mxu0
    %v5395 = vadd.f32 %v5382, %v5394
    %v5396 = vpop.f32.mrf.mxu0
    %5397 = vdwg.mxu0
    %5398 = vmatpush.bf16.msra.mxu0 %v3930
    %5399 = vmatpush.bf16.msra.mxu0 %v3926
    %5400 = vmatpush.bf16.msra.mxu0 %v3922
    %5401 = vmatpush.bf16.msra.mxu0 %v3918
    %5402 = vmatpush.bf16.msra.mxu0 %v3914
    %5403 = vmatpush.bf16.msra.mxu0 %v3910
    %5404 = vmatpush.bf16.msra.mxu0 %v3906
    %5405 = vmatpush.bf16.msra.mxu0 %v3902
    %5406 = vmatmul.bf16.gmra.mxu0 %v847
    %v5407 = vpop.f32.mrf.mxu0
    %v5408 = vadd.f32 %v5395, %v5407
    %v5409 = vpop.f32.mrf.mxu0
    %5410 = vdwg.mxu0
    %5411 = vmatpush.bf16.msra.mxu0 %v3962
    %5412 = vmatpush.bf16.msra.mxu0 %v3958
    %5413 = vmatpush.bf16.msra.mxu0 %v3954
    %5414 = vmatpush.bf16.msra.mxu0 %v3950
    %5415 = vmatpush.bf16.msra.mxu0 %v3946
    %5416 = vmatpush.bf16.msra.mxu0 %v3942
    %5417 = vmatpush.bf16.msra.mxu0 %v3938
    %5418 = vmatpush.bf16.msra.mxu0 %v3934
    %5419 = vmatmul.bf16.gmra.mxu0 %v848
    %v5420 = vpop.f32.mrf.mxu0
    %v5421 = vadd.f32 %v5408, %v5420
    %v5422 = vpop.f32.mrf.mxu0
    %5423 = vdwg.mxu0
    %5424 = vmatpush.bf16.msra.mxu0 %v3994
    %5425 = vmatpush.bf16.msra.mxu0 %v3990
    %5426 = vmatpush.bf16.msra.mxu0 %v3986
    %5427 = vmatpush.bf16.msra.mxu0 %v3982
    %5428 = vmatpush.bf16.msra.mxu0 %v3978
    %5429 = vmatpush.bf16.msra.mxu0 %v3974
    %5430 = vmatpush.bf16.msra.mxu0 %v3970
    %5431 = vmatpush.bf16.msra.mxu0 %v3966
    %5432 = vmatmul.bf16.gmra.mxu0 %v849
    %v5433 = vpop.f32.mrf.mxu0
    %v5434 = vadd.f32 %v5421, %v5433
    %v5435 = vpop.f32.mrf.mxu0
    %5436 = vdwg.mxu0
    %5437 = vmatpush.bf16.msra.mxu0 0
    %5438 = vmatpush.bf16.msra.mxu0 0
    %5439 = vmatpush.bf16.msra.mxu0 0
    %5440 = vmatpush.bf16.msra.mxu0 0
    %5441 = vmatpush.bf16.msra.mxu0 %v4010
    %5442 = vmatpush.bf16.msra.mxu0 %v4006
    %5443 = vmatpush.bf16.msra.mxu0 %v4002
    %5444 = vmatpush.bf16.msra.mxu0 %v3998
    %5445 = vmatmul.bf16.gmra.mxu0 %v4798
    %v5446 = vpop.f32.mrf.mxu0
    %v5447 = vadd.f32 %v5434, %v5446
    %v5448 = vpop.f32.mrf.mxu0
    %5449 = vdwg.mxu0
    %5450 = vmatpush.bf16.msra.mxu0 %v3259
    %5451 = vmatpush.bf16.msra.mxu0 %v3255
    %5452 = vmatpush.bf16.msra.mxu0 %v3251
    %5453 = vmatpush.bf16.msra.mxu0 %v3247
    %5454 = vmatpush.bf16.msra.mxu0 %v3243
    %5455 = vmatpush.bf16.msra.mxu0 %v3239
    %5456 = vmatpush.bf16.msra.mxu0 %v3235
    %5457 = vmatpush.bf16.msra.mxu0 %v3231
    %5458 = vmatmul.bf16.gmra.mxu0 %v822
    %v5459 = vpop.f32.mrf.mxu0
    %v5460 = vadd.f32 %v814, %v5459
    %v5461 = vpop.f32.mrf.mxu0
    %5462 = vdwg.mxu0
    %5463 = vmatpush.bf16.msra.mxu0 %v3291
    %5464 = vmatpush.bf16.msra.mxu0 %v3287
    %5465 = vmatpush.bf16.msra.mxu0 %v3283
    %5466 = vmatpush.bf16.msra.mxu0 %v3279
    %5467 = vmatpush.bf16.msra.mxu0 %v3275
    %5468 = vmatpush.bf16.msra.mxu0 %v3271
    %5469 = vmatpush.bf16.msra.mxu0 %v3267
    %5470 = vmatpush.bf16.msra.mxu0 %v3263
    %5471 = vmatmul.bf16.gmra.mxu0 %v823
    %v5472 = vpop.f32.mrf.mxu0
    %v5473 = vadd.f32 %v5460, %v5472
    %v5474 = vpop.f32.mrf.mxu0
    %5475 = vdwg.mxu0
    %5476 = vmatpush.bf16.msra.mxu0 %v3323
    %5477 = vmatpush.bf16.msra.mxu0 %v3319
    %5478 = vmatpush.bf16.msra.mxu0 %v3315
    %5479 = vmatpush.bf16.msra.mxu0 %v3311
    %5480 = vmatpush.bf16.msra.mxu0 %v3307
    %5481 = vmatpush.bf16.msra.mxu0 %v3303
    %5482 = vmatpush.bf16.msra.mxu0 %v3299
    %5483 = vmatpush.bf16.msra.mxu0 %v3295
    %5484 = vmatmul.bf16.gmra.mxu0 %v824
    %v5485 = vpop.f32.mrf.mxu0
    %v5486 = vadd.f32 %v5473, %v5485
    %v5487 = vpop.f32.mrf.mxu0
    %5488 = vdwg.mxu0
    %5489 = vmatpush.bf16.msra.mxu0 %v3355
    %5490 = vmatpush.bf16.msra.mxu0 %v3351
    %5491 = vmatpush.bf16.msra.mxu0 %v3347
    %5492 = vmatpush.bf16.msra.mxu0 %v3343
    %5493 = vmatpush.bf16.msra.mxu0 %v3339
    %5494 = vmatpush.bf16.msra.mxu0 %v3335
    %5495 = vmatpush.bf16.msra.mxu0 %v3331
    %5496 = vmatpush.bf16.msra.mxu0 %v3327
    %5497 = vmatmul.bf16.gmra.mxu0 %v825
    %v5498 = vpop.f32.mrf.mxu0
    %v5499 = vadd.f32 %v5486, %v5498
    %v5500 = vpop.f32.mrf.mxu0
    %5501 = vdwg.mxu0
    %5502 = vmatpush.bf16.msra.mxu0 %v3387
    %5503 = vmatpush.bf16.msra.mxu0 %v3383
    %5504 = vmatpush.bf16.msra.mxu0 %v3379
    %5505 = vmatpush.bf16.msra.mxu0 %v3375
    %5506 = vmatpush.bf16.msra.mxu0 %v3371
    %5507 = vmatpush.bf16.msra.mxu0 %v3367
    %5508 = vmatpush.bf16.msra.mxu0 %v3363
    %5509 = vmatpush.bf16.msra.mxu0 %v3359
    %5510 = vmatmul.bf16.gmra.mxu0 %v826
    %v5511 = vpop.f32.mrf.mxu0
    %v5512 = vadd.f32 %v5499, %v5511
    %v5513 = vpop.f32.mrf.mxu0
    %5514 = vdwg.mxu0
    %5515 = vmatpush.bf16.msra.mxu0 %v3419
    %5516 = vmatpush.bf16.msra.mxu0 %v3415
    %5517 = vmatpush.bf16.msra.mxu0 %v3411
    %5518 = vmatpush.bf16.msra.mxu0 %v3407
    %5519 = vmatpush.bf16.msra.mxu0 %v3403
    %5520 = vmatpush.bf16.msra.mxu0 %v3399
    %5521 = vmatpush.bf16.msra.mxu0 %v3395
    %5522 = vmatpush.bf16.msra.mxu0 %v3391
    %5523 = vmatmul.bf16.gmra.mxu0 %v827
    %v5524 = vpop.f32.mrf.mxu0
    %v5525 = vadd.f32 %v5512, %v5524
    %v5526 = vpop.f32.mrf.mxu0
    %5527 = vdwg.mxu0
    %5528 = vmatpush.bf16.msra.mxu0 %v3451
    %5529 = vmatpush.bf16.msra.mxu0 %v3447
    %5530 = vmatpush.bf16.msra.mxu0 %v3443
    %5531 = vmatpush.bf16.msra.mxu0 %v3439
    %5532 = vmatpush.bf16.msra.mxu0 %v3435
    %5533 = vmatpush.bf16.msra.mxu0 %v3431
    %5534 = vmatpush.bf16.msra.mxu0 %v3427
    %5535 = vmatpush.bf16.msra.mxu0 %v3423
    %5536 = vmatmul.bf16.gmra.mxu0 %v828
    %v5537 = vpop.f32.mrf.mxu0
    %v5538 = vadd.f32 %v5525, %v5537
    %v5539 = vpop.f32.mrf.mxu0
    %5540 = vdwg.mxu0
    %5541 = vmatpush.bf16.msra.mxu0 %v3483
    %5542 = vmatpush.bf16.msra.mxu0 %v3479
    %5543 = vmatpush.bf16.msra.mxu0 %v3475
    %5544 = vmatpush.bf16.msra.mxu0 %v3471
    %5545 = vmatpush.bf16.msra.mxu0 %v3467
    %5546 = vmatpush.bf16.msra.mxu0 %v3463
    %5547 = vmatpush.bf16.msra.mxu0 %v3459
    %5548 = vmatpush.bf16.msra.mxu0 %v3455
    %5549 = vmatmul.bf16.gmra.mxu0 %v829
    %v5550 = vpop.f32.mrf.mxu0
    %v5551 = vadd.f32 %v5538, %v5550
    %v5552 = vpop.f32.mrf.mxu0
    %5553 = vdwg.mxu0
    %5554 = vmatpush.bf16.msra.mxu0 %v3515
    %5555 = vmatpush.bf16.msra.mxu0 %v3511
    %5556 = vmatpush.bf16.msra.mxu0 %v3507
    %5557 = vmatpush.bf16.msra.mxu0 %v3503
    %5558 = vmatpush.bf16.msra.mxu0 %v3499
    %5559 = vmatpush.bf16.msra.mxu0 %v3495
    %5560 = vmatpush.bf16.msra.mxu0 %v3491
    %5561 = vmatpush.bf16.msra.mxu0 %v3487
    %5562 = vmatmul.bf16.gmra.mxu0 %v832
    %v5563 = vpop.f32.mrf.mxu0
    %v5564 = vadd.f32 %v5551, %v5563
    %v5565 = vpop.f32.mrf.mxu0
    %5566 = vdwg.mxu0
    %5567 = vmatpush.bf16.msra.mxu0 %v3547
    %5568 = vmatpush.bf16.msra.mxu0 %v3543
    %5569 = vmatpush.bf16.msra.mxu0 %v3539
    %5570 = vmatpush.bf16.msra.mxu0 %v3535
    %5571 = vmatpush.bf16.msra.mxu0 %v3531
    %5572 = vmatpush.bf16.msra.mxu0 %v3527
    %5573 = vmatpush.bf16.msra.mxu0 %v3523
    %5574 = vmatpush.bf16.msra.mxu0 %v3519
    %5575 = vmatmul.bf16.gmra.mxu0 %v833
    %v5576 = vpop.f32.mrf.mxu0
    %v5577 = vadd.f32 %v5564, %v5576
    %v5578 = vpop.f32.mrf.mxu0
    %5579 = vdwg.mxu0
    %5580 = vmatpush.bf16.msra.mxu0 %v3579
    %5581 = vmatpush.bf16.msra.mxu0 %v3575
    %5582 = vmatpush.bf16.msra.mxu0 %v3571
    %5583 = vmatpush.bf16.msra.mxu0 %v3567
    %5584 = vmatpush.bf16.msra.mxu0 %v3563
    %5585 = vmatpush.bf16.msra.mxu0 %v3559
    %5586 = vmatpush.bf16.msra.mxu0 %v3555
    %5587 = vmatpush.bf16.msra.mxu0 %v3551
    %5588 = vmatmul.bf16.gmra.mxu0 %v834
    %v5589 = vpop.f32.mrf.mxu0
    %v5590 = vadd.f32 %v5577, %v5589
    %v5591 = vpop.f32.mrf.mxu0
    %5592 = vdwg.mxu0
    %5593 = vmatpush.bf16.msra.mxu0 %v3611
    %5594 = vmatpush.bf16.msra.mxu0 %v3607
    %5595 = vmatpush.bf16.msra.mxu0 %v3603
    %5596 = vmatpush.bf16.msra.mxu0 %v3599
    %5597 = vmatpush.bf16.msra.mxu0 %v3595
    %5598 = vmatpush.bf16.msra.mxu0 %v3591
    %5599 = vmatpush.bf16.msra.mxu0 %v3587
    %5600 = vmatpush.bf16.msra.mxu0 %v3583
    %5601 = vmatmul.bf16.gmra.mxu0 %v835
    %v5602 = vpop.f32.mrf.mxu0
    %v5603 = vadd.f32 %v5590, %v5602
    %v5604 = vpop.f32.mrf.mxu0
    %5605 = vdwg.mxu0
    %5606 = vmatpush.bf16.msra.mxu0 %v3643
    %5607 = vmatpush.bf16.msra.mxu0 %v3639
    %5608 = vmatpush.bf16.msra.mxu0 %v3635
    %5609 = vmatpush.bf16.msra.mxu0 %v3631
    %5610 = vmatpush.bf16.msra.mxu0 %v3627
    %5611 = vmatpush.bf16.msra.mxu0 %v3623
    %5612 = vmatpush.bf16.msra.mxu0 %v3619
    %5613 = vmatpush.bf16.msra.mxu0 %v3615
    %5614 = vmatmul.bf16.gmra.mxu0 %v836
    %v5615 = vpop.f32.mrf.mxu0
    %v5616 = vadd.f32 %v5603, %v5615
    %v5617 = vpop.f32.mrf.mxu0
    %5618 = vdwg.mxu0
    %5619 = vmatpush.bf16.msra.mxu0 %v3675
    %5620 = vmatpush.bf16.msra.mxu0 %v3671
    %5621 = vmatpush.bf16.msra.mxu0 %v3667
    %5622 = vmatpush.bf16.msra.mxu0 %v3663
    %5623 = vmatpush.bf16.msra.mxu0 %v3659
    %5624 = vmatpush.bf16.msra.mxu0 %v3655
    %5625 = vmatpush.bf16.msra.mxu0 %v3651
    %5626 = vmatpush.bf16.msra.mxu0 %v3647
    %5627 = vmatmul.bf16.gmra.mxu0 %v837
    %v5628 = vpop.f32.mrf.mxu0
    %v5629 = vadd.f32 %v5616, %v5628
    %v5630 = vpop.f32.mrf.mxu0
    %5631 = vdwg.mxu0
    %5632 = vmatpush.bf16.msra.mxu0 %v3707
    %5633 = vmatpush.bf16.msra.mxu0 %v3703
    %5634 = vmatpush.bf16.msra.mxu0 %v3699
    %5635 = vmatpush.bf16.msra.mxu0 %v3695
    %5636 = vmatpush.bf16.msra.mxu0 %v3691
    %5637 = vmatpush.bf16.msra.mxu0 %v3687
    %5638 = vmatpush.bf16.msra.mxu0 %v3683
    %5639 = vmatpush.bf16.msra.mxu0 %v3679
    %5640 = vmatmul.bf16.gmra.mxu0 %v838
    %v5641 = vpop.f32.mrf.mxu0
    %v5642 = vadd.f32 %v5629, %v5641
    %v5643 = vpop.f32.mrf.mxu0
    %5644 = vdwg.mxu0
    %5645 = vmatpush.bf16.msra.mxu0 %v3739
    %5646 = vmatpush.bf16.msra.mxu0 %v3735
    %5647 = vmatpush.bf16.msra.mxu0 %v3731
    %5648 = vmatpush.bf16.msra.mxu0 %v3727
    %5649 = vmatpush.bf16.msra.mxu0 %v3723
    %5650 = vmatpush.bf16.msra.mxu0 %v3719
    %5651 = vmatpush.bf16.msra.mxu0 %v3715
    %5652 = vmatpush.bf16.msra.mxu0 %v3711
    %5653 = vmatmul.bf16.gmra.mxu0 %v839
    %v5654 = vpop.f32.mrf.mxu0
    %v5655 = vadd.f32 %v5642, %v5654
    %v5656 = vpop.f32.mrf.mxu0
    %5657 = vdwg.mxu0
    %5658 = vmatpush.bf16.msra.mxu0 %v3771
    %5659 = vmatpush.bf16.msra.mxu0 %v3767
    %5660 = vmatpush.bf16.msra.mxu0 %v3763
    %5661 = vmatpush.bf16.msra.mxu0 %v3759
    %5662 = vmatpush.bf16.msra.mxu0 %v3755
    %5663 = vmatpush.bf16.msra.mxu0 %v3751
    %5664 = vmatpush.bf16.msra.mxu0 %v3747
    %5665 = vmatpush.bf16.msra.mxu0 %v3743
    %5666 = vmatmul.bf16.gmra.mxu0 %v842
    %v5667 = vpop.f32.mrf.mxu0
    %v5668 = vadd.f32 %v5655, %v5667
    %v5669 = vpop.f32.mrf.mxu0
    %5670 = vdwg.mxu0
    %5671 = vmatpush.bf16.msra.mxu0 %v3803
    %5672 = vmatpush.bf16.msra.mxu0 %v3799
    %5673 = vmatpush.bf16.msra.mxu0 %v3795
    %5674 = vmatpush.bf16.msra.mxu0 %v3791
    %5675 = vmatpush.bf16.msra.mxu0 %v3787
    %5676 = vmatpush.bf16.msra.mxu0 %v3783
    %5677 = vmatpush.bf16.msra.mxu0 %v3779
    %5678 = vmatpush.bf16.msra.mxu0 %v3775
    %5679 = vmatmul.bf16.gmra.mxu0 %v843
    %v5680 = vpop.f32.mrf.mxu0
    %v5681 = vadd.f32 %v5668, %v5680
    %v5682 = vpop.f32.mrf.mxu0
    %5683 = vdwg.mxu0
    %5684 = vmatpush.bf16.msra.mxu0 %v3835
    %5685 = vmatpush.bf16.msra.mxu0 %v3831
    %5686 = vmatpush.bf16.msra.mxu0 %v3827
    %5687 = vmatpush.bf16.msra.mxu0 %v3823
    %5688 = vmatpush.bf16.msra.mxu0 %v3819
    %5689 = vmatpush.bf16.msra.mxu0 %v3815
    %5690 = vmatpush.bf16.msra.mxu0 %v3811
    %5691 = vmatpush.bf16.msra.mxu0 %v3807
    %5692 = vmatmul.bf16.gmra.mxu0 %v844
    %v5693 = vpop.f32.mrf.mxu0
    %v5694 = vadd.f32 %v5681, %v5693
    %v5695 = vpop.f32.mrf.mxu0
    %5696 = vdwg.mxu0
    %5697 = vmatpush.bf16.msra.mxu0 %v3867
    %5698 = vmatpush.bf16.msra.mxu0 %v3863
    %5699 = vmatpush.bf16.msra.mxu0 %v3859
    %5700 = vmatpush.bf16.msra.mxu0 %v3855
    %5701 = vmatpush.bf16.msra.mxu0 %v3851
    %5702 = vmatpush.bf16.msra.mxu0 %v3847
    %5703 = vmatpush.bf16.msra.mxu0 %v3843
    %5704 = vmatpush.bf16.msra.mxu0 %v3839
    %5705 = vmatmul.bf16.gmra.mxu0 %v845
    %v5706 = vpop.f32.mrf.mxu0
    %v5707 = vadd.f32 %v5694, %v5706
    %v5708 = vpop.f32.mrf.mxu0
    %5709 = vdwg.mxu0
    %5710 = vmatpush.bf16.msra.mxu0 %v3899
    %5711 = vmatpush.bf16.msra.mxu0 %v3895
    %5712 = vmatpush.bf16.msra.mxu0 %v3891
    %5713 = vmatpush.bf16.msra.mxu0 %v3887
    %5714 = vmatpush.bf16.msra.mxu0 %v3883
    %5715 = vmatpush.bf16.msra.mxu0 %v3879
    %5716 = vmatpush.bf16.msra.mxu0 %v3875
    %5717 = vmatpush.bf16.msra.mxu0 %v3871
    %5718 = vmatmul.bf16.gmra.mxu0 %v846
    %v5719 = vpop.f32.mrf.mxu0
    %v5720 = vadd.f32 %v5707, %v5719
    %v5721 = vpop.f32.mrf.mxu0
    %5722 = vdwg.mxu0
    %5723 = vmatpush.bf16.msra.mxu0 %v3931
    %5724 = vmatpush.bf16.msra.mxu0 %v3927
    %5725 = vmatpush.bf16.msra.mxu0 %v3923
    %5726 = vmatpush.bf16.msra.mxu0 %v3919
    %5727 = vmatpush.bf16.msra.mxu0 %v3915
    %5728 = vmatpush.bf16.msra.mxu0 %v3911
    %5729 = vmatpush.bf16.msra.mxu0 %v3907
    %5730 = vmatpush.bf16.msra.mxu0 %v3903
    %5731 = vmatmul.bf16.gmra.mxu0 %v847
    %v5732 = vpop.f32.mrf.mxu0
    %v5733 = vadd.f32 %v5720, %v5732
    %v5734 = vpop.f32.mrf.mxu0
    %5735 = vdwg.mxu0
    %5736 = vmatpush.bf16.msra.mxu0 %v3963
    %5737 = vmatpush.bf16.msra.mxu0 %v3959
    %5738 = vmatpush.bf16.msra.mxu0 %v3955
    %5739 = vmatpush.bf16.msra.mxu0 %v3951
    %5740 = vmatpush.bf16.msra.mxu0 %v3947
    %5741 = vmatpush.bf16.msra.mxu0 %v3943
    %5742 = vmatpush.bf16.msra.mxu0 %v3939
    %5743 = vmatpush.bf16.msra.mxu0 %v3935
    %5744 = vmatmul.bf16.gmra.mxu0 %v848
    %v5745 = vpop.f32.mrf.mxu0
    %v5746 = vadd.f32 %v5733, %v5745
    %v5747 = vpop.f32.mrf.mxu0
    %5748 = vdwg.mxu0
    %5749 = vmatpush.bf16.msra.mxu0 %v3995
    %5750 = vmatpush.bf16.msra.mxu0 %v3991
    %5751 = vmatpush.bf16.msra.mxu0 %v3987
    %5752 = vmatpush.bf16.msra.mxu0 %v3983
    %5753 = vmatpush.bf16.msra.mxu0 %v3979
    %5754 = vmatpush.bf16.msra.mxu0 %v3975
    %5755 = vmatpush.bf16.msra.mxu0 %v3971
    %5756 = vmatpush.bf16.msra.mxu0 %v3967
    %5757 = vmatmul.bf16.gmra.mxu0 %v849
    %v5758 = vpop.f32.mrf.mxu0
    %v5759 = vadd.f32 %v5746, %v5758
    %v5760 = vpop.f32.mrf.mxu0
    %5761 = vdwg.mxu0
    %5762 = vmatpush.bf16.msra.mxu0 0
    %5763 = vmatpush.bf16.msra.mxu0 0
    %5764 = vmatpush.bf16.msra.mxu0 0
    %5765 = vmatpush.bf16.msra.mxu0 0
    %5766 = vmatpush.bf16.msra.mxu0 %v4011
    %5767 = vmatpush.bf16.msra.mxu0 %v4007
    %5768 = vmatpush.bf16.msra.mxu0 %v4003
    %5769 = vmatpush.bf16.msra.mxu0 %v3999
    %5770 = vmatmul.bf16.gmra.mxu0 %v4798
    %v5771 = vpop.f32.mrf.mxu0
    %v5772 = vadd.f32 %v5759, %v5771
    %v5773 = vpop.f32.mrf.mxu0
    %5774 = vdwg.mxu0
    %5775 = vmatpush.bf16.msra.mxu0 %v3260
    %5776 = vmatpush.bf16.msra.mxu0 %v3256
    %5777 = vmatpush.bf16.msra.mxu0 %v3252
    %5778 = vmatpush.bf16.msra.mxu0 %v3248
    %5779 = vmatpush.bf16.msra.mxu0 %v3244
    %5780 = vmatpush.bf16.msra.mxu0 %v3240
    %5781 = vmatpush.bf16.msra.mxu0 %v3236
    %5782 = vmatpush.bf16.msra.mxu0 %v3232
    %5783 = vmatmul.bf16.gmra.mxu0 %v822
    %v5784 = vpop.f32.mrf.mxu0
    %v5785 = vadd.f32 %v815, %v5784
    %v5786 = vpop.f32.mrf.mxu0
    %5787 = vdwg.mxu0
    %5788 = vmatpush.bf16.msra.mxu0 %v3292
    %5789 = vmatpush.bf16.msra.mxu0 %v3288
    %5790 = vmatpush.bf16.msra.mxu0 %v3284
    %5791 = vmatpush.bf16.msra.mxu0 %v3280
    %5792 = vmatpush.bf16.msra.mxu0 %v3276
    %5793 = vmatpush.bf16.msra.mxu0 %v3272
    %5794 = vmatpush.bf16.msra.mxu0 %v3268
    %5795 = vmatpush.bf16.msra.mxu0 %v3264
    %5796 = vmatmul.bf16.gmra.mxu0 %v823
    %v5797 = vpop.f32.mrf.mxu0
    %v5798 = vadd.f32 %v5785, %v5797
    %v5799 = vpop.f32.mrf.mxu0
    %5800 = vdwg.mxu0
    %5801 = vmatpush.bf16.msra.mxu0 %v3324
    %5802 = vmatpush.bf16.msra.mxu0 %v3320
    %5803 = vmatpush.bf16.msra.mxu0 %v3316
    %5804 = vmatpush.bf16.msra.mxu0 %v3312
    %5805 = vmatpush.bf16.msra.mxu0 %v3308
    %5806 = vmatpush.bf16.msra.mxu0 %v3304
    %5807 = vmatpush.bf16.msra.mxu0 %v3300
    %5808 = vmatpush.bf16.msra.mxu0 %v3296
    %5809 = vmatmul.bf16.gmra.mxu0 %v824
    %v5810 = vpop.f32.mrf.mxu0
    %v5811 = vadd.f32 %v5798, %v5810
    %v5812 = vpop.f32.mrf.mxu0
    %5813 = vdwg.mxu0
    %5814 = vmatpush.bf16.msra.mxu0 %v3356
    %5815 = vmatpush.bf16.msra.mxu0 %v3352
    %5816 = vmatpush.bf16.msra.mxu0 %v3348
    %5817 = vmatpush.bf16.msra.mxu0 %v3344
    %5818 = vmatpush.bf16.msra.mxu0 %v3340
    %5819 = vmatpush.bf16.msra.mxu0 %v3336
    %5820 = vmatpush.bf16.msra.mxu0 %v3332
    %5821 = vmatpush.bf16.msra.mxu0 %v3328
    %5822 = vmatmul.bf16.gmra.mxu0 %v825
    %v5823 = vpop.f32.mrf.mxu0
    %v5824 = vadd.f32 %v5811, %v5823
    %v5825 = vpop.f32.mrf.mxu0
    %5826 = vdwg.mxu0
    %5827 = vmatpush.bf16.msra.mxu0 %v3388
    %5828 = vmatpush.bf16.msra.mxu0 %v3384
    %5829 = vmatpush.bf16.msra.mxu0 %v3380
    %5830 = vmatpush.bf16.msra.mxu0 %v3376
    %5831 = vmatpush.bf16.msra.mxu0 %v3372
    %5832 = vmatpush.bf16.msra.mxu0 %v3368
    %5833 = vmatpush.bf16.msra.mxu0 %v3364
    %5834 = vmatpush.bf16.msra.mxu0 %v3360
    %5835 = vmatmul.bf16.gmra.mxu0 %v826
    %v5836 = vpop.f32.mrf.mxu0
    %v5837 = vadd.f32 %v5824, %v5836
    %v5838 = vpop.f32.mrf.mxu0
    %5839 = vdwg.mxu0
    %5840 = vmatpush.bf16.msra.mxu0 %v3420
    %5841 = vmatpush.bf16.msra.mxu0 %v3416
    %5842 = vmatpush.bf16.msra.mxu0 %v3412
    %5843 = vmatpush.bf16.msra.mxu0 %v3408
    %5844 = vmatpush.bf16.msra.mxu0 %v3404
    %5845 = vmatpush.bf16.msra.mxu0 %v3400
    %5846 = vmatpush.bf16.msra.mxu0 %v3396
    %5847 = vmatpush.bf16.msra.mxu0 %v3392
    %5848 = vmatmul.bf16.gmra.mxu0 %v827
    %v5849 = vpop.f32.mrf.mxu0
    %v5850 = vadd.f32 %v5837, %v5849
    %v5851 = vpop.f32.mrf.mxu0
    %5852 = vdwg.mxu0
    %5853 = vmatpush.bf16.msra.mxu0 %v3452
    %5854 = vmatpush.bf16.msra.mxu0 %v3448
    %5855 = vmatpush.bf16.msra.mxu0 %v3444
    %5856 = vmatpush.bf16.msra.mxu0 %v3440
    %5857 = vmatpush.bf16.msra.mxu0 %v3436
    %5858 = vmatpush.bf16.msra.mxu0 %v3432
    %5859 = vmatpush.bf16.msra.mxu0 %v3428
    %5860 = vmatpush.bf16.msra.mxu0 %v3424
    %5861 = vmatmul.bf16.gmra.mxu0 %v828
    %v5862 = vpop.f32.mrf.mxu0
    %v5863 = vadd.f32 %v5850, %v5862
    %v5864 = vpop.f32.mrf.mxu0
    %5865 = vdwg.mxu0
    %5866 = vmatpush.bf16.msra.mxu0 %v3484
    %5867 = vmatpush.bf16.msra.mxu0 %v3480
    %5868 = vmatpush.bf16.msra.mxu0 %v3476
    %5869 = vmatpush.bf16.msra.mxu0 %v3472
    %5870 = vmatpush.bf16.msra.mxu0 %v3468
    %5871 = vmatpush.bf16.msra.mxu0 %v3464
    %5872 = vmatpush.bf16.msra.mxu0 %v3460
    %5873 = vmatpush.bf16.msra.mxu0 %v3456
    %5874 = vmatmul.bf16.gmra.mxu0 %v829
    %v5875 = vpop.f32.mrf.mxu0
    %v5876 = vadd.f32 %v5863, %v5875
    %v5877 = vpop.f32.mrf.mxu0
    %5878 = vdwg.mxu0
    %5879 = vmatpush.bf16.msra.mxu0 %v3516
    %5880 = vmatpush.bf16.msra.mxu0 %v3512
    %5881 = vmatpush.bf16.msra.mxu0 %v3508
    %5882 = vmatpush.bf16.msra.mxu0 %v3504
    %5883 = vmatpush.bf16.msra.mxu0 %v3500
    %5884 = vmatpush.bf16.msra.mxu0 %v3496
    %5885 = vmatpush.bf16.msra.mxu0 %v3492
    %5886 = vmatpush.bf16.msra.mxu0 %v3488
    %5887 = vmatmul.bf16.gmra.mxu0 %v832
    %v5888 = vpop.f32.mrf.mxu0
    %v5889 = vadd.f32 %v5876, %v5888
    %v5890 = vpop.f32.mrf.mxu0
    %5891 = vdwg.mxu0
    %5892 = vmatpush.bf16.msra.mxu0 %v3548
    %5893 = vmatpush.bf16.msra.mxu0 %v3544
    %5894 = vmatpush.bf16.msra.mxu0 %v3540
    %5895 = vmatpush.bf16.msra.mxu0 %v3536
    %5896 = vmatpush.bf16.msra.mxu0 %v3532
    %5897 = vmatpush.bf16.msra.mxu0 %v3528
    %5898 = vmatpush.bf16.msra.mxu0 %v3524
    %5899 = vmatpush.bf16.msra.mxu0 %v3520
    %5900 = vmatmul.bf16.gmra.mxu0 %v833
    %v5901 = vpop.f32.mrf.mxu0
    %v5902 = vadd.f32 %v5889, %v5901
    %v5903 = vpop.f32.mrf.mxu0
    %5904 = vdwg.mxu0
    %5905 = vmatpush.bf16.msra.mxu0 %v3580
    %5906 = vmatpush.bf16.msra.mxu0 %v3576
    %5907 = vmatpush.bf16.msra.mxu0 %v3572
    %5908 = vmatpush.bf16.msra.mxu0 %v3568
    %5909 = vmatpush.bf16.msra.mxu0 %v3564
    %5910 = vmatpush.bf16.msra.mxu0 %v3560
    %5911 = vmatpush.bf16.msra.mxu0 %v3556
    %5912 = vmatpush.bf16.msra.mxu0 %v3552
    %5913 = vmatmul.bf16.gmra.mxu0 %v834
    %v5914 = vpop.f32.mrf.mxu0
    %v5915 = vadd.f32 %v5902, %v5914
    %v5916 = vpop.f32.mrf.mxu0
    %5917 = vdwg.mxu0
    %5918 = vmatpush.bf16.msra.mxu0 %v3612
    %5919 = vmatpush.bf16.msra.mxu0 %v3608
    %5920 = vmatpush.bf16.msra.mxu0 %v3604
    %5921 = vmatpush.bf16.msra.mxu0 %v3600
    %5922 = vmatpush.bf16.msra.mxu0 %v3596
    %5923 = vmatpush.bf16.msra.mxu0 %v3592
    %5924 = vmatpush.bf16.msra.mxu0 %v3588
    %5925 = vmatpush.bf16.msra.mxu0 %v3584
    %5926 = vmatmul.bf16.gmra.mxu0 %v835
    %v5927 = vpop.f32.mrf.mxu0
    %v5928 = vadd.f32 %v5915, %v5927
    %v5929 = vpop.f32.mrf.mxu0
    %5930 = vdwg.mxu0
    %5931 = vmatpush.bf16.msra.mxu0 %v3644
    %5932 = vmatpush.bf16.msra.mxu0 %v3640
    %5933 = vmatpush.bf16.msra.mxu0 %v3636
    %5934 = vmatpush.bf16.msra.mxu0 %v3632
    %5935 = vmatpush.bf16.msra.mxu0 %v3628
    %5936 = vmatpush.bf16.msra.mxu0 %v3624
    %5937 = vmatpush.bf16.msra.mxu0 %v3620
    %5938 = vmatpush.bf16.msra.mxu0 %v3616
    %5939 = vmatmul.bf16.gmra.mxu0 %v836
    %v5940 = vpop.f32.mrf.mxu0
    %v5941 = vadd.f32 %v5928, %v5940
    %v5942 = vpop.f32.mrf.mxu0
    %5943 = vdwg.mxu0
    %5944 = vmatpush.bf16.msra.mxu0 %v3676
    %5945 = vmatpush.bf16.msra.mxu0 %v3672
    %5946 = vmatpush.bf16.msra.mxu0 %v3668
    %5947 = vmatpush.bf16.msra.mxu0 %v3664
    %5948 = vmatpush.bf16.msra.mxu0 %v3660
    %5949 = vmatpush.bf16.msra.mxu0 %v3656
    %5950 = vmatpush.bf16.msra.mxu0 %v3652
    %5951 = vmatpush.bf16.msra.mxu0 %v3648
    %5952 = vmatmul.bf16.gmra.mxu0 %v837
    %v5953 = vpop.f32.mrf.mxu0
    %v5954 = vadd.f32 %v5941, %v5953
    %v5955 = vpop.f32.mrf.mxu0
    %5956 = vdwg.mxu0
    %5957 = vmatpush.bf16.msra.mxu0 %v3708
    %5958 = vmatpush.bf16.msra.mxu0 %v3704
    %5959 = vmatpush.bf16.msra.mxu0 %v3700
    %5960 = vmatpush.bf16.msra.mxu0 %v3696
    %5961 = vmatpush.bf16.msra.mxu0 %v3692
    %5962 = vmatpush.bf16.msra.mxu0 %v3688
    %5963 = vmatpush.bf16.msra.mxu0 %v3684
    %5964 = vmatpush.bf16.msra.mxu0 %v3680
    %5965 = vmatmul.bf16.gmra.mxu0 %v838
    %v5966 = vpop.f32.mrf.mxu0
    %v5967 = vadd.f32 %v5954, %v5966
    %v5968 = vpop.f32.mrf.mxu0
    %5969 = vdwg.mxu0
    %5970 = vmatpush.bf16.msra.mxu0 %v3740
    %5971 = vmatpush.bf16.msra.mxu0 %v3736
    %5972 = vmatpush.bf16.msra.mxu0 %v3732
    %5973 = vmatpush.bf16.msra.mxu0 %v3728
    %5974 = vmatpush.bf16.msra.mxu0 %v3724
    %5975 = vmatpush.bf16.msra.mxu0 %v3720
    %5976 = vmatpush.bf16.msra.mxu0 %v3716
    %5977 = vmatpush.bf16.msra.mxu0 %v3712
    %5978 = vmatmul.bf16.gmra.mxu0 %v839
    %v5979 = vpop.f32.mrf.mxu0
    %v5980 = vadd.f32 %v5967, %v5979
    %v5981 = vpop.f32.mrf.mxu0
    %5982 = vdwg.mxu0
    %5983 = vmatpush.bf16.msra.mxu0 %v3772
    %5984 = vmatpush.bf16.msra.mxu0 %v3768
    %5985 = vmatpush.bf16.msra.mxu0 %v3764
    %5986 = vmatpush.bf16.msra.mxu0 %v3760
    %5987 = vmatpush.bf16.msra.mxu0 %v3756
    %5988 = vmatpush.bf16.msra.mxu0 %v3752
    %5989 = vmatpush.bf16.msra.mxu0 %v3748
    %5990 = vmatpush.bf16.msra.mxu0 %v3744
    %5991 = vmatmul.bf16.gmra.mxu0 %v842
    %v5992 = vpop.f32.mrf.mxu0
    %v5993 = vadd.f32 %v5980, %v5992
    %v5994 = vpop.f32.mrf.mxu0
    %5995 = vdwg.mxu0
    %5996 = vmatpush.bf16.msra.mxu0 %v3804
    %5997 = vmatpush.bf16.msra.mxu0 %v3800
    %5998 = vmatpush.bf16.msra.mxu0 %v3796
    %5999 = vmatpush.bf16.msra.mxu0 %v3792
    %6000 = vmatpush.bf16.msra.mxu0 %v3788
    %6001 = vmatpush.bf16.msra.mxu0 %v3784
    %6002 = vmatpush.bf16.msra.mxu0 %v3780
    %6003 = vmatpush.bf16.msra.mxu0 %v3776
    %6004 = vmatmul.bf16.gmra.mxu0 %v843
    %v6005 = vpop.f32.mrf.mxu0
    %v6006 = vadd.f32 %v5993, %v6005
    %v6007 = vpop.f32.mrf.mxu0
    %6008 = vdwg.mxu0
    %6009 = vmatpush.bf16.msra.mxu0 %v3836
    %6010 = vmatpush.bf16.msra.mxu0 %v3832
    %6011 = vmatpush.bf16.msra.mxu0 %v3828
    %6012 = vmatpush.bf16.msra.mxu0 %v3824
    %6013 = vmatpush.bf16.msra.mxu0 %v3820
    %6014 = vmatpush.bf16.msra.mxu0 %v3816
    %6015 = vmatpush.bf16.msra.mxu0 %v3812
    %6016 = vmatpush.bf16.msra.mxu0 %v3808
    %6017 = vmatmul.bf16.gmra.mxu0 %v844
    %v6018 = vpop.f32.mrf.mxu0
    %v6019 = vadd.f32 %v6006, %v6018
    %v6020 = vpop.f32.mrf.mxu0
    %6021 = vdwg.mxu0
    %6022 = vmatpush.bf16.msra.mxu0 %v3868
    %6023 = vmatpush.bf16.msra.mxu0 %v3864
    %6024 = vmatpush.bf16.msra.mxu0 %v3860
    %6025 = vmatpush.bf16.msra.mxu0 %v3856
    %6026 = vmatpush.bf16.msra.mxu0 %v3852
    %6027 = vmatpush.bf16.msra.mxu0 %v3848
    %6028 = vmatpush.bf16.msra.mxu0 %v3844
    %6029 = vmatpush.bf16.msra.mxu0 %v3840
    %6030 = vmatmul.bf16.gmra.mxu0 %v845
    %v6031 = vpop.f32.mrf.mxu0
    %v6032 = vadd.f32 %v6019, %v6031
    %v6033 = vpop.f32.mrf.mxu0
    %6034 = vdwg.mxu0
    %6035 = vmatpush.bf16.msra.mxu0 %v3900
    %6036 = vmatpush.bf16.msra.mxu0 %v3896
    %6037 = vmatpush.bf16.msra.mxu0 %v3892
    %6038 = vmatpush.bf16.msra.mxu0 %v3888
    %6039 = vmatpush.bf16.msra.mxu0 %v3884
    %6040 = vmatpush.bf16.msra.mxu0 %v3880
    %6041 = vmatpush.bf16.msra.mxu0 %v3876
    %6042 = vmatpush.bf16.msra.mxu0 %v3872
    %6043 = vmatmul.bf16.gmra.mxu0 %v846
    %v6044 = vpop.f32.mrf.mxu0
    %v6045 = vadd.f32 %v6032, %v6044
    %v6046 = vpop.f32.mrf.mxu0
    %6047 = vdwg.mxu0
    %6048 = vmatpush.bf16.msra.mxu0 %v3932
    %6049 = vmatpush.bf16.msra.mxu0 %v3928
    %6050 = vmatpush.bf16.msra.mxu0 %v3924
    %6051 = vmatpush.bf16.msra.mxu0 %v3920
    %6052 = vmatpush.bf16.msra.mxu0 %v3916
    %6053 = vmatpush.bf16.msra.mxu0 %v3912
    %6054 = vmatpush.bf16.msra.mxu0 %v3908
    %6055 = vmatpush.bf16.msra.mxu0 %v3904
    %6056 = vmatmul.bf16.gmra.mxu0 %v847
    %v6057 = vpop.f32.mrf.mxu0
    %v6058 = vadd.f32 %v6045, %v6057
    %v6059 = vpop.f32.mrf.mxu0
    %6060 = vdwg.mxu0
    %6061 = vmatpush.bf16.msra.mxu0 %v3964
    %6062 = vmatpush.bf16.msra.mxu0 %v3960
    %6063 = vmatpush.bf16.msra.mxu0 %v3956
    %6064 = vmatpush.bf16.msra.mxu0 %v3952
    %6065 = vmatpush.bf16.msra.mxu0 %v3948
    %6066 = vmatpush.bf16.msra.mxu0 %v3944
    %6067 = vmatpush.bf16.msra.mxu0 %v3940
    %6068 = vmatpush.bf16.msra.mxu0 %v3936
    %6069 = vmatmul.bf16.gmra.mxu0 %v848
    %v6070 = vpop.f32.mrf.mxu0
    %v6071 = vadd.f32 %v6058, %v6070
    %v6072 = vpop.f32.mrf.mxu0
    %6073 = vdwg.mxu0
    %6074 = vmatpush.bf16.msra.mxu0 %v3996
    %6075 = vmatpush.bf16.msra.mxu0 %v3992
    %6076 = vmatpush.bf16.msra.mxu0 %v3988
    %6077 = vmatpush.bf16.msra.mxu0 %v3984
    %6078 = vmatpush.bf16.msra.mxu0 %v3980
    %6079 = vmatpush.bf16.msra.mxu0 %v3976
    %6080 = vmatpush.bf16.msra.mxu0 %v3972
    %6081 = vmatpush.bf16.msra.mxu0 %v3968
    %6082 = vmatmul.bf16.gmra.mxu0 %v849
    %v6083 = vpop.f32.mrf.mxu0
    %v6084 = vadd.f32 %v6071, %v6083
    %v6085 = vpop.f32.mrf.mxu0
    %6086 = vdwg.mxu0
    %6087 = vmatpush.bf16.msra.mxu0 0
    %6088 = vmatpush.bf16.msra.mxu0 0
    %6089 = vmatpush.bf16.msra.mxu0 0
    %6090 = vmatpush.bf16.msra.mxu0 0
    %6091 = vmatpush.bf16.msra.mxu0 %v4012
    %6092 = vmatpush.bf16.msra.mxu0 %v4008
    %6093 = vmatpush.bf16.msra.mxu0 %v4004
    %6094 = vmatpush.bf16.msra.mxu0 %v4000
    %6095 = vmatmul.bf16.gmra.mxu0 %v4798
    %v6096 = vpop.f32.mrf.mxu0
    %v6097 = vadd.f32 %v6084, %v6096
    %v6098 = vpop.f32.mrf.mxu0
    %6099 = vdwg.mxu0
    %v6100 = vmax.f32 %v5122, 0.0
    %v6101 = vmax.f32 %v5447, 0.0
    %v6102 = vmax.f32 %v5772, 0.0
    %v6103 = vmax.f32 %v6097, 0.0
    %v6104 = vpack.c.bf16 %v6100, %v6100
    %v6105 = vpack.c.bf16 %v6101, %v6101
    %v6106 = vpack.c.bf16 %v6102, %v6102
    %v6107 = vpack.c.bf16 %v6103, %v6103
    %v6108 = vld [vmem:[%s3] sm:$0xf]
    %v6109 = vld [vmem:[%s3 + $0x4] sm:$0xf]
    %v6110 = vld [vmem:[%s3 + $0x8] sm:$0xf]
    %v6111 = vld [vmem:[%s3 + $0xc] sm:$0xf]
    %v6112 = vld [vmem:[%s3 + $0x10] sm:$0xf]
    %v6113 = vld [vmem:[%s3 + $0x14] sm:$0xf]
    %v6114 = vld [vmem:[%s3 + $0x18] sm:$0xf]
    %v6115 = vld [vmem:[%s3 + $0x1c] sm:$0xf]
    %v6116 = vld [vmem:[%s3 + $0x20] sm:$0xf]
    %v6117 = vld [vmem:[%s3 + $0x24] sm:$0xf]
    %v6118 = vld [vmem:[%s3 + $0x28] sm:$0xf]
    %v6119 = vld [vmem:[%s3 + $0x2c] sm:$0xf]
    %v6120 = vld [vmem:[%s3 + $0x30] sm:$0xf]
    %v6121 = vld [vmem:[%s3 + $0x34] sm:$0xf]
    %v6122 = vld [vmem:[%s3 + $0x38] sm:$0xf]
    %v6123 = vld [vmem:[%s3 + $0x3c] sm:$0xf]
    %v6124 = vld [vmem:[%s3 + $0x40] sm:$0xf]
    %v6125 = vld [vmem:[%s3 + $0x44] sm:$0xf]
    %v6126 = vld [vmem:[%s3 + $0x48] sm:$0xf]
    %v6127 = vld [vmem:[%s3 + $0x4c] sm:$0xf]
    %v6128 = vld [vmem:[%s3 + $0x50] sm:$0xf]
    %v6129 = vld [vmem:[%s3 + $0x54] sm:$0xf]
    %v6130 = vld [vmem:[%s3 + $0x58] sm:$0xf]
    %v6131 = vld [vmem:[%s3 + $0x5c] sm:$0xf]
    %v6132 = vld [vmem:[%s3 + $0x60] sm:$0xf]
    %v6133 = vld [vmem:[%s3 + $0x64] sm:$0xf]
    %v6134 = vld [vmem:[%s3 + $0x68] sm:$0xf]
    %v6135 = vld [vmem:[%s3 + $0x6c] sm:$0xf]
    %v6136 = vld [vmem:[%s3 + $0x70] sm:$0xf]
    %v6137 = vld [vmem:[%s3 + $0x74] sm:$0xf]
    %v6138 = vld [vmem:[%s3 + $0x78] sm:$0xf]
    %v6139 = vld [vmem:[%s3 + $0x7c] sm:$0xf]
    %v6140 = vld [vmem:[%s3 + $0x80] sm:$0xf]
    %v6141 = vld [vmem:[%s3 + $0x84] sm:$0xf]
    %v6142 = vld [vmem:[%s3 + $0x88] sm:$0xf]
    %v6143 = vld [vmem:[%s3 + $0x8c] sm:$0xf]
    %v6144 = vld [vmem:[%s3 + $0x90] sm:$0xf]
    %v6145 = vld [vmem:[%s3 + $0x94] sm:$0xf]
    %v6146 = vld [vmem:[%s3 + $0x98] sm:$0xf]
    %v6147 = vld [vmem:[%s3 + $0x9c] sm:$0xf]
    %v6148 = vld [vmem:[%s3 + $0xa0] sm:$0xf]
    %v6149 = vld [vmem:[%s3 + $0xa4] sm:$0xf]
    %v6150 = vld [vmem:[%s3 + $0xa8] sm:$0xf]
    %v6151 = vld [vmem:[%s3 + $0xac] sm:$0xf]
    %v6152 = vld [vmem:[%s3 + $0xb0] sm:$0xf]
    %v6153 = vld [vmem:[%s3 + $0xb4] sm:$0xf]
    %v6154 = vld [vmem:[%s3 + $0xb8] sm:$0xf]
    %v6155 = vld [vmem:[%s3 + $0xbc] sm:$0xf]
    %v6156 = vld [vmem:[%s3 + $0xc0] sm:$0xf]
    %v6157 = vld [vmem:[%s3 + $0xc4] sm:$0xf]
    %v6158 = vld [vmem:[%s3 + $0xc8] sm:$0xf]
    %v6159 = vld [vmem:[%s3 + $0xcc] sm:$0xf]
    %v6160 = vld [vmem:[%s3 + $0xd0] sm:$0xf]
    %v6161 = vld [vmem:[%s3 + $0xd4] sm:$0xf]
    %v6162 = vld [vmem:[%s3 + $0xd8] sm:$0xf]
    %v6163 = vld [vmem:[%s3 + $0xdc] sm:$0xf]
    %v6164 = vld [vmem:[%s3 + $0xe0] sm:$0xf]
    %v6165 = vld [vmem:[%s3 + $0xe4] sm:$0xf]
    %v6166 = vld [vmem:[%s3 + $0xe8] sm:$0xf]
    %v6167 = vld [vmem:[%s3 + $0xec] sm:$0xf]
    %v6168 = vld [vmem:[%s3 + $0xf0] sm:$0xf]
    %v6169 = vld [vmem:[%s3 + $0xf4] sm:$0xf]
    %v6170 = vld [vmem:[%s3 + $0xf8] sm:$0xf]
    %v6171 = vld [vmem:[%s3 + $0xfc] sm:$0xf]
    %v6172 = vld [vmem:[%s4] sm:$0x1]
    %v6174 = vperm.slane %v6172, 0
    %v6240 = vunpack.c.l.b16 %v6108
    %v6241 = vunpack.c.l.b16 %v6109
    %v6242 = vunpack.c.l.b16 %v6110
    %v6243 = vunpack.c.l.b16 %v6111
    %v6244 = vunpack.c.l.b16 %v6112
    %v6245 = vunpack.c.l.b16 %v6113
    %v6246 = vunpack.c.l.b16 %v6114
    %v6247 = vunpack.c.l.b16 %v6115
    %v6248 = vunpack.c.l.b16 %v6116
    %v6249 = vunpack.c.l.b16 %v6117
    %v6250 = vunpack.c.l.b16 %v6118
    %v6251 = vunpack.c.l.b16 %v6119
    %v6252 = vunpack.c.l.b16 %v6120
    %v6253 = vunpack.c.l.b16 %v6121
    %v6254 = vunpack.c.l.b16 %v6122
    %v6255 = vunpack.c.l.b16 %v6123
    %v6256 = vunpack.c.l.b16 %v6124
    %v6257 = vunpack.c.l.b16 %v6125
    %v6258 = vunpack.c.l.b16 %v6126
    %v6259 = vunpack.c.l.b16 %v6127
    %v6260 = vunpack.c.l.b16 %v6128
    %v6261 = vunpack.c.l.b16 %v6129
    %v6262 = vunpack.c.l.b16 %v6130
    %v6263 = vunpack.c.l.b16 %v6131
    %v6264 = vunpack.c.l.b16 %v6132
    %v6265 = vunpack.c.l.b16 %v6133
    %v6266 = vunpack.c.l.b16 %v6134
    %v6267 = vunpack.c.l.b16 %v6135
    %v6268 = vunpack.c.l.b16 %v6136
    %v6269 = vunpack.c.l.b16 %v6137
    %v6270 = vunpack.c.l.b16 %v6138
    %v6271 = vunpack.c.l.b16 %v6139
    %v6272 = vunpack.c.l.b16 %v6140
    %v6273 = vunpack.c.l.b16 %v6141
    %v6274 = vunpack.c.l.b16 %v6142
    %v6275 = vunpack.c.l.b16 %v6143
    %v6276 = vunpack.c.l.b16 %v6144
    %v6277 = vunpack.c.l.b16 %v6145
    %v6278 = vunpack.c.l.b16 %v6146
    %v6279 = vunpack.c.l.b16 %v6147
    %v6280 = vunpack.c.l.b16 %v6148
    %v6281 = vunpack.c.l.b16 %v6149
    %v6282 = vunpack.c.l.b16 %v6150
    %v6283 = vunpack.c.l.b16 %v6151
    %v6284 = vunpack.c.l.b16 %v6152
    %v6285 = vunpack.c.l.b16 %v6153
    %v6286 = vunpack.c.l.b16 %v6154
    %v6287 = vunpack.c.l.b16 %v6155
    %v6288 = vunpack.c.l.b16 %v6156
    %v6289 = vunpack.c.l.b16 %v6157
    %v6290 = vunpack.c.l.b16 %v6158
    %v6291 = vunpack.c.l.b16 %v6159
    %v6292 = vunpack.c.l.b16 %v6160
    %v6293 = vunpack.c.l.b16 %v6161
    %v6294 = vunpack.c.l.b16 %v6162
    %v6295 = vunpack.c.l.b16 %v6163
    %v6296 = vunpack.c.l.b16 %v6164
    %v6297 = vunpack.c.l.b16 %v6165
    %v6298 = vunpack.c.l.b16 %v6166
    %v6299 = vunpack.c.l.b16 %v6167
    %v6300 = vunpack.c.l.b16 %v6168
    %v6301 = vunpack.c.l.b16 %v6169
    %v6302 = vunpack.c.l.b16 %v6170
    %v6303 = vunpack.c.l.b16 %v6171
    %v6304 = vpack.c.b16 %v6241, %v6240
    %v6305 = vpack.c.b16 %v6243, %v6242
    %v6306 = vpack.c.b16 %v6245, %v6244
    %v6307 = vpack.c.b16 %v6247, %v6246
    %v6308 = vpack.c.b16 %v6249, %v6248
    %v6309 = vpack.c.b16 %v6251, %v6250
    %v6310 = vpack.c.b16 %v6253, %v6252
    %v6311 = vpack.c.b16 %v6255, %v6254
    %v6312 = vpack.c.b16 %v6257, %v6256
    %v6313 = vpack.c.b16 %v6259, %v6258
    %v6314 = vpack.c.b16 %v6261, %v6260
    %v6315 = vpack.c.b16 %v6263, %v6262
    %v6316 = vpack.c.b16 %v6265, %v6264
    %v6317 = vpack.c.b16 %v6267, %v6266
    %v6318 = vpack.c.b16 %v6269, %v6268
    %v6319 = vpack.c.b16 %v6271, %v6270
    %v6320 = vpack.c.b16 %v6273, %v6272
    %v6321 = vpack.c.b16 %v6275, %v6274
    %v6322 = vpack.c.b16 %v6277, %v6276
    %v6323 = vpack.c.b16 %v6279, %v6278
    %v6324 = vpack.c.b16 %v6281, %v6280
    %v6325 = vpack.c.b16 %v6283, %v6282
    %v6326 = vpack.c.b16 %v6285, %v6284
    %v6327 = vpack.c.b16 %v6287, %v6286
    %v6328 = vpack.c.b16 %v6289, %v6288
    %v6329 = vpack.c.b16 %v6291, %v6290
    %v6330 = vpack.c.b16 %v6293, %v6292
    %v6331 = vpack.c.b16 %v6295, %v6294
    %v6332 = vpack.c.b16 %v6297, %v6296
    %v6333 = vpack.c.b16 %v6299, %v6298
    %v6334 = vpack.c.b16 %v6301, %v6300
    %v6335 = vpack.c.b16 %v6303, %v6302
    %6368 = vmatpush.bf16.msra.mxu0 %v6311
    %6369 = vmatpush.bf16.msra.mxu0 %v6310
    %6370 = vmatpush.bf16.msra.mxu0 %v6309
    %6371 = vmatpush.bf16.msra.mxu0 %v6308
    %6372 = vmatpush.bf16.msra.mxu0 %v6307
    %6373 = vmatpush.bf16.msra.mxu0 %v6306
    %6374 = vmatpush.bf16.msra.mxu0 %v6305
    %6375 = vmatpush.bf16.msra.mxu0 %v6304
    %6376 = vmatmul.bf16.gmra.mxu0 %v6104
    %v6377 = vpop.f32.mrf.mxu0
    %v6378 = vadd.f32 %v6174, %v6377
    %v6379 = vpop.f32.mrf.mxu0
    %6380 = vdwg.mxu0
    %6381 = vmatpush.bf16.msra.mxu0 %v6319
    %6382 = vmatpush.bf16.msra.mxu0 %v6318
    %6383 = vmatpush.bf16.msra.mxu0 %v6317
    %6384 = vmatpush.bf16.msra.mxu0 %v6316
    %6385 = vmatpush.bf16.msra.mxu0 %v6315
    %6386 = vmatpush.bf16.msra.mxu0 %v6314
    %6387 = vmatpush.bf16.msra.mxu0 %v6313
    %6388 = vmatpush.bf16.msra.mxu0 %v6312
    %6389 = vmatmul.bf16.gmra.mxu0 %v6105
    %v6390 = vpop.f32.mrf.mxu0
    %v6391 = vadd.f32 %v6378, %v6390
    %v6392 = vpop.f32.mrf.mxu0
    %6393 = vdwg.mxu0
    %6394 = vmatpush.bf16.msra.mxu0 %v6327
    %6395 = vmatpush.bf16.msra.mxu0 %v6326
    %6396 = vmatpush.bf16.msra.mxu0 %v6325
    %6397 = vmatpush.bf16.msra.mxu0 %v6324
    %6398 = vmatpush.bf16.msra.mxu0 %v6323
    %6399 = vmatpush.bf16.msra.mxu0 %v6322
    %6400 = vmatpush.bf16.msra.mxu0 %v6321
    %6401 = vmatpush.bf16.msra.mxu0 %v6320
    %6402 = vmatmul.bf16.gmra.mxu0 %v6106
    %v6403 = vpop.f32.mrf.mxu0
    %v6404 = vadd.f32 %v6391, %v6403
    %v6405 = vpop.f32.mrf.mxu0
    %6406 = vdwg.mxu0
    %6407 = vmatpush.bf16.msra.mxu0 %v6335
    %6408 = vmatpush.bf16.msra.mxu0 %v6334
    %6409 = vmatpush.bf16.msra.mxu0 %v6333
    %6410 = vmatpush.bf16.msra.mxu0 %v6332
    %6411 = vmatpush.bf16.msra.mxu0 %v6331
    %6412 = vmatpush.bf16.msra.mxu0 %v6330
    %6413 = vmatpush.bf16.msra.mxu0 %v6329
    %6414 = vmatpush.bf16.msra.mxu0 %v6328
    %6415 = vmatmul.bf16.gmra.mxu0 %v6107
    %v6416 = vpop.f32.mrf.mxu0
    %v6417 = vadd.f32 %v6404, %v6416
    %v6418 = vpop.f32.mrf.mxu0
    %6419 = vdwg.mxu0
    %6420 = vst [vmem:[#allocation2] sm:$0x3] %v6417
    // Predicated region
    $region22: #{forward.7} parent=1 // pred_check
      _
    $region23: #{forward.7} parent=1 // pred_check_branch
      %6422 = sbr.rel (0) target = $region25
    $region24: #{forward.7} parent=1 // pred_region
      %6424 = vsyncadd [#allocation3], 0
      %s6426 = sshll.u32 [#allocation2], 4
      %s6427 = int_to_ptr.vmem [resolvable:$true] %s6426
      %s6428 = sshll.u32 %s5, 4
      %s6429 = int_to_ptr.hbm [resolvable:$true] %s6428
      %6431 = dma.vmem_to_hbm [thread:$0]  %s6427, 32, %s6429, [#allocation3]
    $region25: #{forward.7} parent=1 // pred_fallthru
      _
    // Predicated region
    $region26: #{forward.7} parent=1 // pred_check
      _
    $region27: #{forward.7} parent=1 // pred_check_branch
      %6433 = sbr.rel (0) target = $region29
    $region28: #{forward.7} parent=1 // pred_region
      %6435 = dma.done [#allocation3], 32
    $region29: #{forward.7} parent=1 // pred_fallthru
      _
    %6436 = vsyncpa [#allocation3], 1

</llo_original>
